<compile_context>
chip_gen: v7x
topology: tpu7x:2x2x1
jax: 0.10.0
libtpu: 0.0.40
codegen_flags: <defaults>
</compile_context>

<pallas_src>
import functools

import jax
import jax.numpy as jnp
from jax.experimental import pallas as pl
from jax.experimental.pallas import tpu as pltpu


def _gelu(x):
    # tanh-approx GELU: tanh lowers to the EUP (its own VLIW slot) instead of
    # erf's VPU polynomial.  ~1e-3 abs deviation vs nn.GELU()'s exact form.
    c = 0.7978845608028654  # sqrt(2/pi)
    return 0.5 * x * (1.0 + jnp.tanh(c * (x + 0.044715 * (x * x * x))))


_MASK_IDX = {-2: 0, -1: 1, 1: 2, 2: 3}


# ----------------------------------------------------------------------------
# Fused kernel: full ConvMixer forward for B images per grid step.
# ----------------------------------------------------------------------------
def _convmixer_kernel(*refs, depth, B, Hp, Wp, pad):
    xp_ref, wpe_ref, pe_aff_ref, mask_ref = refs[0:4]
    blk_refs = refs[4:4 + 4 * depth]
    wlin_ref, blin_ref, out_ref, pad_ref, r16_ref = refs[4 + 4 * depth:]

    C = wpe_ref.shape[1]
    P = Hp * Wp
    BP = B * P
    ZW = P + 4 * Wp                       # rows covered by one kw-shifted window

    # Zero the halo rows of every image's depthwise padding scratch.  Done
    # unconditionally each grid step (with "parallel" semantics each core owns
    # its own scratch state); interiors are overwritten below before any read.
    halo_zeros = jnp.zeros((pad, C), jnp.float32)
    for b in range(B):
        pad_ref[b, 0:pad, :] = halo_zeros
        pad_ref[b, pad + P:2 * pad + P, :] = halo_zeros

    # ---- patch embedding (k=2,s=2 conv == per-patch matmul, bf16 MXU) ------
    pe_aff = pe_aff_ref[...]
    y = jnp.dot(xp_ref[...].reshape(BP, xp_ref.shape[-1]), wpe_ref[...],
                preferred_element_type=jnp.float32)             # (BP, C) f32
    y = _gelu(y + pe_aff[0:1, :])
    y = y * pe_aff[1:2, :] + pe_aff[2:3, :]
    for b in range(B):
        pad_ref[b, pad:pad + P, :] = y[b * P:(b + 1) * P, :]    # aligned stores

    # ---- ConvMixer blocks ----------------------------------------------------
    y_final = None
    for d in range(depth):
        dw_w_ref, dw_aff_ref, pw_w_ref, pw_aff_ref = blk_refs[4 * d:4 * d + 4]
        dw_aff = dw_aff_ref[...]
        last = d == depth - 1

        # Residual( depthwise 5x5 (pad=2) -> GELU -> BN ), one image at a time
        # so the tap-loop working set stays in vregs; the block input lives in
        # pad_ref and is re-read for the residual add (no long-lived y value).
        for b in range(B):
            acc = jnp.zeros((P, C), jnp.float32)
            for kw in range(5):
                dwo = kw - 2
                start = pad - 2 * Wp + dwo
                z = pad_ref[b, start:start + ZW, :]             # one unaligned read per kw
                if dwo != 0:
                    # precomputed 0/1 mask kills taps whose W index would wrap
                    z = z * mask_ref[_MASK_IDX[dwo]]
                for kh in range(5):
                    tap = dw_w_ref[kh * 5 + kw:kh * 5 + kw + 1, :]   # (1, C)
                    off = kh * Wp                                    # 8-aligned slice
                    acc = acc + z[off:off + P, :] * tap
            acc = _gelu(acc + dw_aff[0:1, :])
            acc = acc * dw_aff[1:2, :] + dw_aff[2:3, :]
            acc = acc + pad_ref[b, pad:pad + P, :]              # residual add
            r16_ref[b * P:(b + 1) * P, :] = acc.astype(jnp.bfloat16)

        # pointwise 1x1 conv == (B*P, C) @ (C, C) bf16 MXU matmul, f32 acc
        pw_aff = pw_aff_ref[...]
        z = jnp.dot(r16_ref[...], pw_w_ref[...],
                    preferred_element_type=jnp.float32)
        z = _gelu(z + pw_aff[0:1, :])
        if not last:
            z = z * pw_aff[1:2, :] + pw_aff[2:3, :]
            for b in range(B):
                pad_ref[b, pad:pad + P, :] = z[b * P:(b + 1) * P, :]
        else:
            # last block's BN scale/shift is folded into the classifier weights
            y_final = z

    # ---- AdaptiveAvgPool2d((1,1)) + Flatten + Linear (BN-folded weights,
    # classes padded to a full 128-lane tile for a lane-dense store) ----------
    for b in range(B):
        pooled = jnp.mean(y_final[b * P:(b + 1) * P, :], axis=0, keepdims=True)
        out_ref[0, b:b + 1, :] = (
            jnp.dot(pooled, wlin_ref[...], preferred_element_type=jnp.float32)
            + blin_ref[...])


# ----------------------------------------------------------------------------
# Parameter preparation and forward glue
# ----------------------------------------------------------------------------
def bn_fold(bn, eps=1e-5):
    scale = bn["gamma"] / jnp.sqrt(bn["var"] + eps)
    shift = bn["beta"] - bn["mean"] * scale
    return scale, shift


def _pack_affine(bias, scale, shift):
    # rows 0..2 = bias / BN-scale / BN-shift, padded to 8 sublanes.
    packed = jnp.zeros((8, bias.shape[0]), jnp.float32)
    return packed.at[0].set(bias).at[1].set(scale).at[2].set(shift)


def _full_spec(shape):
    zeros = (0,) * len(shape)
    return pl.BlockSpec(shape, lambda n: zeros)


def convmixer_forward(x, params, patch_size=2, images_per_step=4):
    """x: NCHW float32 (PyTorch convention). Returns (N, n_classes) logits."""
    N, Cin, H, W = x.shape
    dim = params["patch_w"].shape[0]
    ps = patch_size
    Hp, Wp = H // ps, W // ps
    P = Hp * Wp
    Kp = Cin * ps * ps
    Kpad = 128                              # pad tiny patch-embed K to one lane tile
    n_classes = params["lin_w"].shape[0]
    NCp = -(-n_classes // 128) * 128        # lane-dense classifier output
    depth = len(params["blocks"])
    assert depth >= 1

    # Vertical halo for the in-kernel depthwise zero padding: multiple of 8
    # (aligned interior store) and >= 2*Wp + 2 so every 5x5 tap offset stays
    # inside the scratch buffer.
    pad = -(-(2 * Wp + 2) // 8) * 8
    ZW = P + 4 * Wp

    # Images per grid step: B*P rows feed the pointwise MXU matmul (B=4 fills
    # the 256-row v6e/v7x MXU at P=64), while keeping >= 2 grid steps so both
    # v7x TensorCores get work under dimension_semantics=("parallel",).
    B = max(1, min(images_per_step, N // 2)) if N >= 2 else 1
    Npad = -(-N // B) * B
    steps = Npad // B

    # Patch extraction (tiny; XLA): (N, P, Cin*ps*ps) channels-last rows,
    # zero-padded to Kpad lanes and cast to bf16 for the MXU.
    xp = (x.reshape(N, Cin, Hp, ps, Wp, ps)
           .transpose(0, 2, 4, 1, 3, 5)
           .reshape(N, P, Kp))
    if Npad > N:
        xp = jnp.concatenate(
            [xp, jnp.zeros((Npad - N, P, Kp), xp.dtype)], axis=0)
    xp = jnp.pad(xp, ((0, 0), (0, 0), (0, Kpad - Kp))).astype(jnp.bfloat16)

    w_patch = jnp.pad(params["patch_w"].reshape(dim, Kp).T,
                      ((0, Kpad - Kp), (0, 0))).astype(jnp.bfloat16)
    pe_aff = _pack_affine(params["patch_b"], *bn_fold(params["bn0"]))

    # W-wrap masks for the flattened depthwise layout, built once here
    # (hoisted out of the kernel's per-block / per-kw loops).
    q = jnp.arange(ZW, dtype=jnp.int32) % Wp
    wrap_masks = jnp.stack(
        [jnp.broadcast_to(((q + d >= 0) & (q + d < Wp))
                          .astype(jnp.float32)[:, None], (ZW, dim))
         for d in (-2, -1, 1, 2)])                               # (4, ZW, dim)

    args = [xp, w_patch, pe_aff, wrap_masks]
    in_specs = [
        pl.BlockSpec((B, P, Kpad), lambda n: (n, 0, 0)),
        _full_spec((Kpad, dim)),
        _full_spec((8, dim)),
        _full_spec((4, ZW, dim)),
    ]
    for blk in params["blocks"]:
        dw_w = blk["dw_w"].reshape(dim, 25).T                           # (25, dim) f32
        dw_aff = _pack_affine(blk["dw_b"], *bn_fold(blk["bn_dw"]))
        pw_w = blk["pw_w"].reshape(dim, dim).T.astype(jnp.bfloat16)     # (dim, dim) bf16
        pw_aff = _pack_affine(blk["pw_b"], *bn_fold(blk["bn_pw"]))
        args += [dw_w, dw_aff, pw_w, pw_aff]
        in_specs += [_full_spec((25, dim)), _full_spec((8, dim)),
                     _full_spec((dim, dim)), _full_spec((8, dim))]

    # Classifier with the last block's BN folded in and classes zero-padded
    # to NCp lanes (sliced off after the call).
    s_last, t_last = bn_fold(params["blocks"][-1]["bn_pw"])
    w_lin = params["lin_w"].T                                           # (dim, ncls)
    w_lin_f = s_last[:, None] * w_lin
    b_lin_f = t_last @ w_lin + params["lin_b"]
    w_lin_p = jnp.zeros((dim, NCp), jnp.float32).at[:, :n_classes].set(w_lin_f)
    b_lin_p = jnp.zeros((1, NCp), jnp.float32).at[0, :n_classes].set(b_lin_f)
    args += [w_lin_p, b_lin_p]
    in_specs += [_full_spec((dim, NCp)), _full_spec((1, NCp))]

    kernel = functools.partial(_convmixer_kernel, depth=depth, B=B,
                               Hp=Hp, Wp=Wp, pad=pad)
    out = pl.pallas_call(
        kernel,
        out_shape=jax.ShapeDtypeStruct((steps, B, NCp), jnp.float32),
        grid_spec=pltpu.PrefetchScalarGridSpec(
            num_scalar_prefetch=0,
            grid=(steps,),
            in_specs=in_specs,
            out_specs=pl.BlockSpec((1, B, NCp), lambda n: (n, 0, 0)),
            scratch_shapes=[
                pltpu.VMEM((B, 2 * pad + P, dim), jnp.float32),   # haloed activations
                pltpu.VMEM((B * P, dim), jnp.bfloat16),           # pointwise matmul LHS
            ],
        ),
        compiler_params=pltpu.CompilerParams(
            dimension_semantics=("parallel",)),
    )(*args)
    return out.reshape(Npad, NCp)[:N, :n_classes]


# ----------------------------------------------------------------------------
# Deterministic synthetic parameters
# ----------------------------------------------------------------------------
def init_params(key, dim=256, depth=2, kernel_size=5, patch_size=2,
                in_ch=3, n_classes=10):
    keys = iter(jax.random.split(key, 16 + 16 * depth))

    def nrm(shape, s=0.05):
        return s * jax.random.normal(next(keys), shape, jnp.float32)

    def bn(c):
        return dict(
            gamma=1.0 + nrm((c,)),
            beta=nrm((c,)),
            mean=nrm((c,)),
            var=1.0 + 0.1 * jax.random.uniform(next(keys), (c,), jnp.float32),
        )

    params = dict(
        patch_w=nrm((dim, in_ch, patch_size, patch_size), 0.2),
        patch_b=nrm((dim,)),
        bn0=bn(dim),
        blocks=[],
        lin_w=nrm((n_classes, dim), 0.1),
        lin_b=nrm((n_classes,)),
    )
    for _ in range(depth):
        params["blocks"].append(dict(
            dw_w=nrm((dim, 1, kernel_size, kernel_size), 0.1),
            dw_b=nrm((dim,)),
            bn_dw=bn(dim),
            pw_w=nrm((dim, dim, 1, 1), 0.05),
            pw_b=nrm((dim,)),
            bn_pw=bn(dim),
        ))
    return params


if __name__ == "__main__":
    key = jax.random.PRNGKey(0)
    pkey, xkey = jax.random.split(key)

    depth = 2
    params = init_params(pkey, dim=256, depth=depth, kernel_size=5,
                         patch_size=2, in_ch=3, n_classes=10)
    x = jax.random.normal(xkey, (2, 3, 16, 16), jnp.float32)  # NCHW like PyTorch

    fwd = jax.jit(convmixer_forward)
    out = jax.block_until_ready(fwd(x, params))

    assert out.shape == (2, 10), out.shape
    assert bool(jnp.all(jnp.isfinite(out)))
    print("KERNEL_OK")
</pallas_src>

<mosaic_0001>
module attributes {stable_mosaic.version = 11 : i64} {
  func.func @_convmixer_kernel(%arg0: i32, %arg1: memref<1x64x128xbf16, #tpu.memory_space<vmem>>, %arg2: memref<128x256xbf16, #tpu.memory_space<vmem>>, %arg3: memref<8x256xf32, #tpu.memory_space<vmem>>, %arg4: memref<4x96x256xf32, #tpu.memory_space<vmem>>, %arg5: memref<25x256xf32, #tpu.memory_space<vmem>>, %arg6: memref<8x256xf32, #tpu.memory_space<vmem>>, %arg7: memref<256x256xbf16, #tpu.memory_space<vmem>>, %arg8: memref<8x256xf32, #tpu.memory_space<vmem>>, %arg9: memref<25x256xf32, #tpu.memory_space<vmem>>, %arg10: memref<8x256xf32, #tpu.memory_space<vmem>>, %arg11: memref<256x256xbf16, #tpu.memory_space<vmem>>, %arg12: memref<8x256xf32, #tpu.memory_space<vmem>>, %arg13: memref<256x128xf32, #tpu.memory_space<vmem>>, %arg14: memref<1x128xf32, #tpu.memory_space<vmem>>, %arg15: memref<1x1x128xf32, #tpu.memory_space<vmem>>, %arg16: memref<1x112x256xf32, #tpu.memory_space<vmem>>, %arg17: memref<64x256xbf16, #tpu.memory_space<vmem>>) attributes {dimension_semantics = [#tpu.dimension_semantics<parallel>], iteration_bounds = array<i64: 2>, scalar_prefetch = 0 : i64, scratch_operands = 2 : i64, tpu.core_type = #tpu.core_type<tc>, window_params = [{transform_indices = @transform_0, window_bounds = array<i64: 1, 64, 128>}, {pipeline_mode = #tpu.pipeline_mode<synchronous>, transform_indices = @transform_1, window_bounds = array<i64: 128, 256>}, {pipeline_mode = #tpu.pipeline_mode<synchronous>, transform_indices = @transform_2, window_bounds = array<i64: 8, 256>}, {pipeline_mode = #tpu.pipeline_mode<synchronous>, transform_indices = @transform_3, window_bounds = array<i64: 4, 96, 256>}, {pipeline_mode = #tpu.pipeline_mode<synchronous>, transform_indices = @transform_4, window_bounds = array<i64: 25, 256>}, {pipeline_mode = #tpu.pipeline_mode<synchronous>, transform_indices = @transform_5, window_bounds = array<i64: 8, 256>}, {pipeline_mode = #tpu.pipeline_mode<synchronous>, transform_indices = @transform_6, window_bounds = array<i64: 256, 256>}, {pipeline_mode = #tpu.pipeline_mode<synchronous>, transform_indices = @transform_7, window_bounds = array<i64: 8, 256>}, {pipeline_mode = #tpu.pipeline_mode<synchronous>, transform_indices = @transform_8, window_bounds = array<i64: 25, 256>}, {pipeline_mode = #tpu.pipeline_mode<synchronous>, transform_indices = @transform_9, window_bounds = array<i64: 8, 256>}, {pipeline_mode = #tpu.pipeline_mode<synchronous>, transform_indices = @transform_10, window_bounds = array<i64: 256, 256>}, {pipeline_mode = #tpu.pipeline_mode<synchronous>, transform_indices = @transform_11, window_bounds = array<i64: 8, 256>}, {pipeline_mode = #tpu.pipeline_mode<synchronous>, transform_indices = @transform_12, window_bounds = array<i64: 256, 128>}, {pipeline_mode = #tpu.pipeline_mode<synchronous>, transform_indices = @transform_13, window_bounds = array<i64: 1, 128>}, {transform_indices = @transform_14, window_bounds = array<i64: 1, 1, 128>}]} {
    %cst = arith.constant 0.000000e+00 : f32
    %0 = vector.broadcast %cst : f32 to vector<24x256xf32>
    %c0 = arith.constant 0 : index
    %c0_0 = arith.constant 0 : index
    %c0_1 = arith.constant 0 : index
    %1 = vector.load %arg16[%c0, %c0_0, %c0_1] : memref<1x112x256xf32, #tpu.memory_space<vmem>>, vector<1x24x256xf32>
    %2 = vector.shape_cast %1 : vector<1x24x256xf32> to vector<24x256xf32>
    %3 = vector.shape_cast %0 : vector<24x256xf32> to vector<1x24x256xf32>
    tpu.vector_store %arg16[%c0, %c0_0, %c0_1], %3 {strides = array<i32>} : memref<1x112x256xf32, #tpu.memory_space<vmem>>, vector<1x24x256xf32>,
    %c0_2 = arith.constant 0 : index
    %c88 = arith.constant 88 : index
    %c0_3 = arith.constant 0 : index
    %4 = vector.load %arg16[%c0_2, %c88, %c0_3] : memref<1x112x256xf32, #tpu.memory_space<vmem>>, vector<1x24x256xf32>
    %5 = vector.shape_cast %4 : vector<1x24x256xf32> to vector<24x256xf32>
    %6 = vector.shape_cast %0 : vector<24x256xf32> to vector<1x24x256xf32>
    tpu.vector_store %arg16[%c0_2, %c88, %c0_3], %6 {strides = array<i32>} : memref<1x112x256xf32, #tpu.memory_space<vmem>>, vector<1x24x256xf32>,
    %c0_4 = arith.constant 0 : index
    %c0_5 = arith.constant 0 : index
    %7 = vector.load %arg3[%c0_4, %c0_5] : memref<8x256xf32, #tpu.memory_space<vmem>>, vector<8x256xf32>
    %c0_6 = arith.constant 0 : index
    %c0_7 = arith.constant 0 : index
    %c0_8 = arith.constant 0 : index
    %8 = vector.load %arg1[%c0_6, %c0_7, %c0_8] : memref<1x64x128xbf16, #tpu.memory_space<vmem>>, vector<1x64x128xbf16>
    %9 = vector.shape_cast %8 : vector<1x64x128xbf16> to vector<64x128xbf16>
    %c0_9 = arith.constant 0 : index
    %c0_10 = arith.constant 0 : index
    %10 = vector.load %arg2[%c0_9, %c0_10] : memref<128x256xbf16, #tpu.memory_space<vmem>>, vector<128x256xbf16>
    %cst_11 = arith.constant dense<0.000000e+00> : vector<64x256xf32>
    %11 = tpu.matmul %9, %10, %cst_11 {dimension_numbers = #tpu.dot_dimension_numbers<[1], [0], [0], [1], [0, 0, 1, 1], [], []>} : vector<64x128xbf16>, vector<128x256xbf16>, vector<64x256xf32> -> vector<64x256xf32>
    %12 = vector.extract_strided_slice %7 {offsets = [0, 0], sizes = [1, 256], strides = [1, 1]} : vector<8x256xf32> to vector<1x256xf32>
    %13 = vector.broadcast %12 : vector<1x256xf32> to vector<64x256xf32>
    %14 = arith.addf %11, %13 : vector<64x256xf32>
    %cst_12 = arith.constant 5.000000e-01 : f32
    %15 = vector.broadcast %cst_12 : f32 to vector<64x256xf32>
    %16 = arith.mulf %15, %14 : vector<64x256xf32>
    %17 = arith.mulf %14, %14 : vector<64x256xf32>
    %18 = arith.mulf %17, %14 : vector<64x256xf32>
    %cst_13 = arith.constant 4.471500e-02 : f32
    %19 = vector.broadcast %cst_13 : f32 to vector<64x256xf32>
    %20 = arith.mulf %19, %18 : vector<64x256xf32>
    %21 = arith.addf %14, %20 : vector<64x256xf32>
    %cst_14 = arith.constant 0.797884583 : f32
    %22 = vector.broadcast %cst_14 : f32 to vector<64x256xf32>
    %23 = arith.mulf %22, %21 : vector<64x256xf32>
    %24 = math.tanh %23 : vector<64x256xf32>
    %cst_15 = arith.constant 1.000000e+00 : f32
    %25 = vector.broadcast %cst_15 : f32 to vector<64x256xf32>
    %26 = arith.addf %25, %24 : vector<64x256xf32>
    %27 = arith.mulf %16, %26 : vector<64x256xf32>
    %28 = vector.extract_strided_slice %7 {offsets = [1, 0], sizes = [1, 256], strides = [1, 1]} : vector<8x256xf32> to vector<1x256xf32>
    %29 = vector.broadcast %28 : vector<1x256xf32> to vector<64x256xf32>
    %30 = arith.mulf %27, %29 : vector<64x256xf32>
    %31 = vector.extract_strided_slice %7 {offsets = [2, 0], sizes = [1, 256], strides = [1, 1]} : vector<8x256xf32> to vector<1x256xf32>
    %32 = vector.broadcast %31 : vector<1x256xf32> to vector<64x256xf32>
    %33 = arith.addf %30, %32 : vector<64x256xf32>
    %c0_16 = arith.constant 0 : index
    %c24 = arith.constant 24 : index
    %c0_17 = arith.constant 0 : index
    %34 = vector.load %arg16[%c0_16, %c24, %c0_17] : memref<1x112x256xf32, #tpu.memory_space<vmem>>, vector<1x64x256xf32>
    %35 = vector.shape_cast %34 : vector<1x64x256xf32> to vector<64x256xf32>
    %36 = vector.shape_cast %33 : vector<64x256xf32> to vector<1x64x256xf32>
    tpu.vector_store %arg16[%c0_16, %c24, %c0_17], %36 {strides = array<i32>} : memref<1x112x256xf32, #tpu.memory_space<vmem>>, vector<1x64x256xf32>,
    %c0_18 = arith.constant 0 : index
    %c0_19 = arith.constant 0 : index
    %37 = vector.load %arg6[%c0_18, %c0_19] : memref<8x256xf32, #tpu.memory_space<vmem>>, vector<8x256xf32>
    %cst_20 = arith.constant 0.000000e+00 : f32
    %38 = vector.broadcast %cst_20 : f32 to vector<64x256xf32>
    %c0_21 = arith.constant 0 : index
    %c6 = arith.constant 6 : index
    %c0_22 = arith.constant 0 : index
    %39 = vector.load %arg16[%c0_21, %c6, %c0_22] : memref<1x112x256xf32, #tpu.memory_space<vmem>>, vector<1x96x256xf32>
    %40 = vector.shape_cast %39 : vector<1x96x256xf32> to vector<96x256xf32>
    %c0_23 = arith.constant 0 : index
    %c0_24 = arith.constant 0 : index
    %c0_25 = arith.constant 0 : index
    %41 = vector.load %arg4[%c0_23, %c0_24, %c0_25] : memref<4x96x256xf32, #tpu.memory_space<vmem>>, vector<1x96x256xf32>
    %42 = vector.shape_cast %41 : vector<1x96x256xf32> to vector<96x256xf32>
    %43 = arith.mulf %40, %42 : vector<96x256xf32>
    %c0_26 = arith.constant 0 : index
    %c0_27 = arith.constant 0 : index
    %44 = vector.load %arg5[%c0_26, %c0_27] : memref<25x256xf32, #tpu.memory_space<vmem>>, vector<1x256xf32>
    %45 = vector.extract_strided_slice %43 {offsets = [0, 0], sizes = [64, 256], strides = [1, 1]} : vector<96x256xf32> to vector<64x256xf32>
    %46 = vector.broadcast %44 : vector<1x256xf32> to vector<64x256xf32>
    %47 = arith.mulf %45, %46 : vector<64x256xf32>
    %48 = arith.addf %38, %47 : vector<64x256xf32>
    %c5 = arith.constant 5 : index
    %c0_28 = arith.constant 0 : index
    %49 = vector.load %arg5[%c5, %c0_28] : memref<25x256xf32, #tpu.memory_space<vmem>>, vector<1x256xf32>
    %50 = vector.extract_strided_slice %43 {offsets = [8, 0], sizes = [64, 256], strides = [1, 1]} : vector<96x256xf32> to vector<64x256xf32>
    %51 = vector.broadcast %49 : vector<1x256xf32> to vector<64x256xf32>
    %52 = arith.mulf %50, %51 : vector<64x256xf32>
    %53 = arith.addf %48, %52 : vector<64x256xf32>
    %c10 = arith.constant 10 : index
    %c0_29 = arith.constant 0 : index
    %54 = vector.load %arg5[%c10, %c0_29] : memref<25x256xf32, #tpu.memory_space<vmem>>, vector<1x256xf32>
    %55 = vector.extract_strided_slice %43 {offsets = [16, 0], sizes = [64, 256], strides = [1, 1]} : vector<96x256xf32> to vector<64x256xf32>
    %56 = vector.broadcast %54 : vector<1x256xf32> to vector<64x256xf32>
    %57 = arith.mulf %55, %56 : vector<64x256xf32>
    %58 = arith.addf %53, %57 : vector<64x256xf32>
    %c15 = arith.constant 15 : index
    %c0_30 = arith.constant 0 : index
    %59 = vector.load %arg5[%c15, %c0_30] : memref<25x256xf32, #tpu.memory_space<vmem>>, vector<1x256xf32>
    %60 = vector.extract_strided_slice %43 {offsets = [24, 0], sizes = [64, 256], strides = [1, 1]} : vector<96x256xf32> to vector<64x256xf32>
    %61 = vector.broadcast %59 : vector<1x256xf32> to vector<64x256xf32>
    %62 = arith.mulf %60, %61 : vector<64x256xf32>
    %63 = arith.addf %58, %62 : vector<64x256xf32>
    %c20 = arith.constant 20 : index
    %c0_31 = arith.constant 0 : index
    %64 = vector.load %arg5[%c20, %c0_31] : memref<25x256xf32, #tpu.memory_space<vmem>>, vector<1x256xf32>
    %65 = vector.extract_strided_slice %43 {offsets = [32, 0], sizes = [64, 256], strides = [1, 1]} : vector<96x256xf32> to vector<64x256xf32>
    %66 = vector.broadcast %64 : vector<1x256xf32> to vector<64x256xf32>
    %67 = arith.mulf %65, %66 : vector<64x256xf32>
    %68 = arith.addf %63, %67 : vector<64x256xf32>
    %c0_32 = arith.constant 0 : index
    %c7 = arith.constant 7 : index
    %c0_33 = arith.constant 0 : index
    %69 = vector.load %arg16[%c0_32, %c7, %c0_33] : memref<1x112x256xf32, #tpu.memory_space<vmem>>, vector<1x96x256xf32>
    %70 = vector.shape_cast %69 : vector<1x96x256xf32> to vector<96x256xf32>
    %c1 = arith.constant 1 : index
    %c0_34 = arith.constant 0 : index
    %c0_35 = arith.constant 0 : index
    %71 = vector.load %arg4[%c1, %c0_34, %c0_35] : memref<4x96x256xf32, #tpu.memory_space<vmem>>, vector<1x96x256xf32>
    %72 = vector.shape_cast %71 : vector<1x96x256xf32> to vector<96x256xf32>
    %73 = arith.mulf %70, %72 : vector<96x256xf32>
    %c1_36 = arith.constant 1 : index
    %c0_37 = arith.constant 0 : index
    %74 = vector.load %arg5[%c1_36, %c0_37] : memref<25x256xf32, #tpu.memory_space<vmem>>, vector<1x256xf32>
    %75 = vector.extract_strided_slice %73 {offsets = [0, 0], sizes = [64, 256], strides = [1, 1]} : vector<96x256xf32> to vector<64x256xf32>
    %76 = vector.broadcast %74 : vector<1x256xf32> to vector<64x256xf32>
    %77 = arith.mulf %75, %76 : vector<64x256xf32>
    %78 = arith.addf %68, %77 : vector<64x256xf32>
    %c6_38 = arith.constant 6 : index
    %c0_39 = arith.constant 0 : index
    %79 = vector.load %arg5[%c6_38, %c0_39] : memref<25x256xf32, #tpu.memory_space<vmem>>, vector<1x256xf32>
    %80 = vector.extract_strided_slice %73 {offsets = [8, 0], sizes = [64, 256], strides = [1, 1]} : vector<96x256xf32> to vector<64x256xf32>
    %81 = vector.broadcast %79 : vector<1x256xf32> to vector<64x256xf32>
    %82 = arith.mulf %80, %81 : vector<64x256xf32>
    %83 = arith.addf %78, %82 : vector<64x256xf32>
    %c11 = arith.constant 11 : index
    %c0_40 = arith.constant 0 : index
    %84 = vector.load %arg5[%c11, %c0_40] : memref<25x256xf32, #tpu.memory_space<vmem>>, vector<1x256xf32>
    %85 = vector.extract_strided_slice %73 {offsets = [16, 0], sizes = [64, 256], strides = [1, 1]} : vector<96x256xf32> to vector<64x256xf32>
    %86 = vector.broadcast %84 : vector<1x256xf32> to vector<64x256xf32>
    %87 = arith.mulf %85, %86 : vector<64x256xf32>
    %88 = arith.addf %83, %87 : vector<64x256xf32>
    %c16 = arith.constant 16 : index
    %c0_41 = arith.constant 0 : index
    %89 = vector.load %arg5[%c16, %c0_41] : memref<25x256xf32, #tpu.memory_space<vmem>>, vector<1x256xf32>
    %90 = vector.extract_strided_slice %73 {offsets = [24, 0], sizes = [64, 256], strides = [1, 1]} : vector<96x256xf32> to vector<64x256xf32>
    %91 = vector.broadcast %89 : vector<1x256xf32> to vector<64x256xf32>
    %92 = arith.mulf %90, %91 : vector<64x256xf32>
    %93 = arith.addf %88, %92 : vector<64x256xf32>
    %c21 = arith.constant 21 : index
    %c0_42 = arith.constant 0 : index
    %94 = vector.load %arg5[%c21, %c0_42] : memref<25x256xf32, #tpu.memory_space<vmem>>, vector<1x256xf32>
    %95 = vector.extract_strided_slice %73 {offsets = [32, 0], sizes = [64, 256], strides = [1, 1]} : vector<96x256xf32> to vector<64x256xf32>
    %96 = vector.broadcast %94 : vector<1x256xf32> to vector<64x256xf32>
    %97 = arith.mulf %95, %96 : vector<64x256xf32>
    %98 = arith.addf %93, %97 : vector<64x256xf32>
    %c0_43 = arith.constant 0 : index
    %c8 = arith.constant 8 : index
    %c0_44 = arith.constant 0 : index
    %99 = vector.load %arg16[%c0_43, %c8, %c0_44] : memref<1x112x256xf32, #tpu.memory_space<vmem>>, vector<1x96x256xf32>
    %100 = vector.shape_cast %99 : vector<1x96x256xf32> to vector<96x256xf32>
    %c2 = arith.constant 2 : index
    %c0_45 = arith.constant 0 : index
    %101 = vector.load %arg5[%c2, %c0_45] : memref<25x256xf32, #tpu.memory_space<vmem>>, vector<1x256xf32>
    %102 = vector.extract_strided_slice %100 {offsets = [0, 0], sizes = [64, 256], strides = [1, 1]} : vector<96x256xf32> to vector<64x256xf32>
    %103 = vector.broadcast %101 : vector<1x256xf32> to vector<64x256xf32>
    %104 = arith.mulf %102, %103 : vector<64x256xf32>
    %105 = arith.addf %98, %104 : vector<64x256xf32>
    %c7_46 = arith.constant 7 : index
    %c0_47 = arith.constant 0 : index
    %106 = vector.load %arg5[%c7_46, %c0_47] : memref<25x256xf32, #tpu.memory_space<vmem>>, vector<1x256xf32>
    %107 = vector.extract_strided_slice %100 {offsets = [8, 0], sizes = [64, 256], strides = [1, 1]} : vector<96x256xf32> to vector<64x256xf32>
    %108 = vector.broadcast %106 : vector<1x256xf32> to vector<64x256xf32>
    %109 = arith.mulf %107, %108 : vector<64x256xf32>
    %110 = arith.addf %105, %109 : vector<64x256xf32>
    %c12 = arith.constant 12 : index
    %c0_48 = arith.constant 0 : index
    %111 = vector.load %arg5[%c12, %c0_48] : memref<25x256xf32, #tpu.memory_space<vmem>>, vector<1x256xf32>
    %112 = vector.extract_strided_slice %100 {offsets = [16, 0], sizes = [64, 256], strides = [1, 1]} : vector<96x256xf32> to vector<64x256xf32>
    %113 = vector.broadcast %111 : vector<1x256xf32> to vector<64x256xf32>
    %114 = arith.mulf %112, %113 : vector<64x256xf32>
    %115 = arith.addf %110, %114 : vector<64x256xf32>
    %c17 = arith.constant 17 : index
    %c0_49 = arith.constant 0 : index
    %116 = vector.load %arg5[%c17, %c0_49] : memref<25x256xf32, #tpu.memory_space<vmem>>, vector<1x256xf32>
    %117 = vector.extract_strided_slice %100 {offsets = [24, 0], sizes = [64, 256], strides = [1, 1]} : vector<96x256xf32> to vector<64x256xf32>
    %118 = vector.broadcast %116 : vector<1x256xf32> to vector<64x256xf32>
    %119 = arith.mulf %117, %118 : vector<64x256xf32>
    %120 = arith.addf %115, %119 : vector<64x256xf32>
    %c22 = arith.constant 22 : index
    %c0_50 = arith.constant 0 : index
    %121 = vector.load %arg5[%c22, %c0_50] : memref<25x256xf32, #tpu.memory_space<vmem>>, vector<1x256xf32>
    %122 = vector.extract_strided_slice %100 {offsets = [32, 0], sizes = [64, 256], strides = [1, 1]} : vector<96x256xf32> to vector<64x256xf32>
    %123 = vector.broadcast %121 : vector<1x256xf32> to vector<64x256xf32>
    %124 = arith.mulf %122, %123 : vector<64x256xf32>
    %125 = arith.addf %120, %124 : vector<64x256xf32>
    %c0_51 = arith.constant 0 : index
    %c9 = arith.constant 9 : index
    %c0_52 = arith.constant 0 : index
    %126 = vector.load %arg16[%c0_51, %c9, %c0_52] : memref<1x112x256xf32, #tpu.memory_space<vmem>>, vector<1x96x256xf32>
    %127 = vector.shape_cast %126 : vector<1x96x256xf32> to vector<96x256xf32>
    %c2_53 = arith.constant 2 : index
    %c0_54 = arith.constant 0 : index
    %c0_55 = arith.constant 0 : index
    %128 = vector.load %arg4[%c2_53, %c0_54, %c0_55] : memref<4x96x256xf32, #tpu.memory_space<vmem>>, vector<1x96x256xf32>
    %129 = vector.shape_cast %128 : vector<1x96x256xf32> to vector<96x256xf32>
    %130 = arith.mulf %127, %129 : vector<96x256xf32>
    %c3 = arith.constant 3 : index
    %c0_56 = arith.constant 0 : index
    %131 = vector.load %arg5[%c3, %c0_56] : memref<25x256xf32, #tpu.memory_space<vmem>>, vector<1x256xf32>
    %132 = vector.extract_strided_slice %130 {offsets = [0, 0], sizes = [64, 256], strides = [1, 1]} : vector<96x256xf32> to vector<64x256xf32>
    %133 = vector.broadcast %131 : vector<1x256xf32> to vector<64x256xf32>
    %134 = arith.mulf %132, %133 : vector<64x256xf32>
    %135 = arith.addf %125, %134 : vector<64x256xf32>
    %c8_57 = arith.constant 8 : index
    %c0_58 = arith.constant 0 : index
    %136 = vector.load %arg5[%c8_57, %c0_58] : memref<25x256xf32, #tpu.memory_space<vmem>>, vector<1x256xf32>
    %137 = vector.extract_strided_slice %130 {offsets = [8, 0], sizes = [64, 256], strides = [1, 1]} : vector<96x256xf32> to vector<64x256xf32>
    %138 = vector.broadcast %136 : vector<1x256xf32> to vector<64x256xf32>
    %139 = arith.mulf %137, %138 : vector<64x256xf32>
    %140 = arith.addf %135, %139 : vector<64x256xf32>
    %c13 = arith.constant 13 : index
    %c0_59 = arith.constant 0 : index
    %141 = vector.load %arg5[%c13, %c0_59] : memref<25x256xf32, #tpu.memory_space<vmem>>, vector<1x256xf32>
    %142 = vector.extract_strided_slice %130 {offsets = [16, 0], sizes = [64, 256], strides = [1, 1]} : vector<96x256xf32> to vector<64x256xf32>
    %143 = vector.broadcast %141 : vector<1x256xf32> to vector<64x256xf32>
    %144 = arith.mulf %142, %143 : vector<64x256xf32>
    %145 = arith.addf %140, %144 : vector<64x256xf32>
    %c18 = arith.constant 18 : index
    %c0_60 = arith.constant 0 : index
    %146 = vector.load %arg5[%c18, %c0_60] : memref<25x256xf32, #tpu.memory_space<vmem>>, vector<1x256xf32>
    %147 = vector.extract_strided_slice %130 {offsets = [24, 0], sizes = [64, 256], strides = [1, 1]} : vector<96x256xf32> to vector<64x256xf32>
    %148 = vector.broadcast %146 : vector<1x256xf32> to vector<64x256xf32>
    %149 = arith.mulf %147, %148 : vector<64x256xf32>
    %150 = arith.addf %145, %149 : vector<64x256xf32>
    %c23 = arith.constant 23 : index
    %c0_61 = arith.constant 0 : index
    %151 = vector.load %arg5[%c23, %c0_61] : memref<25x256xf32, #tpu.memory_space<vmem>>, vector<1x256xf32>
    %152 = vector.extract_strided_slice %130 {offsets = [32, 0], sizes = [64, 256], strides = [1, 1]} : vector<96x256xf32> to vector<64x256xf32>
    %153 = vector.broadcast %151 : vector<1x256xf32> to vector<64x256xf32>
    %154 = arith.mulf %152, %153 : vector<64x256xf32>
    %155 = arith.addf %150, %154 : vector<64x256xf32>
    %c0_62 = arith.constant 0 : index
    %c10_63 = arith.constant 10 : index
    %c0_64 = arith.constant 0 : index
    %156 = vector.load %arg16[%c0_62, %c10_63, %c0_64] : memref<1x112x256xf32, #tpu.memory_space<vmem>>, vector<1x96x256xf32>
    %157 = vector.shape_cast %156 : vector<1x96x256xf32> to vector<96x256xf32>
    %c3_65 = arith.constant 3 : index
    %c0_66 = arith.constant 0 : index
    %c0_67 = arith.constant 0 : index
    %158 = vector.load %arg4[%c3_65, %c0_66, %c0_67] : memref<4x96x256xf32, #tpu.memory_space<vmem>>, vector<1x96x256xf32>
    %159 = vector.shape_cast %158 : vector<1x96x256xf32> to vector<96x256xf32>
    %160 = arith.mulf %157, %159 : vector<96x256xf32>
    %c4 = arith.constant 4 : index
    %c0_68 = arith.constant 0 : index
    %161 = vector.load %arg5[%c4, %c0_68] : memref<25x256xf32, #tpu.memory_space<vmem>>, vector<1x256xf32>
    %162 = vector.extract_strided_slice %160 {offsets = [0, 0], sizes = [64, 256], strides = [1, 1]} : vector<96x256xf32> to vector<64x256xf32>
    %163 = vector.broadcast %161 : vector<1x256xf32> to vector<64x256xf32>
    %164 = arith.mulf %162, %163 : vector<64x256xf32>
    %165 = arith.addf %155, %164 : vector<64x256xf32>
    %c9_69 = arith.constant 9 : index
    %c0_70 = arith.constant 0 : index
    %166 = vector.load %arg5[%c9_69, %c0_70] : memref<25x256xf32, #tpu.memory_space<vmem>>, vector<1x256xf32>
    %167 = vector.extract_strided_slice %160 {offsets = [8, 0], sizes = [64, 256], strides = [1, 1]} : vector<96x256xf32> to vector<64x256xf32>
    %168 = vector.broadcast %166 : vector<1x256xf32> to vector<64x256xf32>
    %169 = arith.mulf %167, %168 : vector<64x256xf32>
    %170 = arith.addf %165, %169 : vector<64x256xf32>
    %c14 = arith.constant 14 : index
    %c0_71 = arith.constant 0 : index
    %171 = vector.load %arg5[%c14, %c0_71] : memref<25x256xf32, #tpu.memory_space<vmem>>, vector<1x256xf32>
    %172 = vector.extract_strided_slice %160 {offsets = [16, 0], sizes = [64, 256], strides = [1, 1]} : vector<96x256xf32> to vector<64x256xf32>
    %173 = vector.broadcast %171 : vector<1x256xf32> to vector<64x256xf32>
    %174 = arith.mulf %172, %173 : vector<64x256xf32>
    %175 = arith.addf %170, %174 : vector<64x256xf32>
    %c19 = arith.constant 19 : index
    %c0_72 = arith.constant 0 : index
    %176 = vector.load %arg5[%c19, %c0_72] : memref<25x256xf32, #tpu.memory_space<vmem>>, vector<1x256xf32>
    %177 = vector.extract_strided_slice %160 {offsets = [24, 0], sizes = [64, 256], strides = [1, 1]} : vector<96x256xf32> to vector<64x256xf32>
    %178 = vector.broadcast %176 : vector<1x256xf32> to vector<64x256xf32>
    %179 = arith.mulf %177, %178 : vector<64x256xf32>
    %180 = arith.addf %175, %179 : vector<64x256xf32>
    %c24_73 = arith.constant 24 : index
    %c0_74 = arith.constant 0 : index
    %181 = vector.load %arg5[%c24_73, %c0_74] : memref<25x256xf32, #tpu.memory_space<vmem>>, vector<1x256xf32>
    %182 = vector.extract_strided_slice %160 {offsets = [32, 0], sizes = [64, 256], strides = [1, 1]} : vector<96x256xf32> to vector<64x256xf32>
    %183 = vector.broadcast %181 : vector<1x256xf32> to vector<64x256xf32>
    %184 = arith.mulf %182, %183 : vector<64x256xf32>
    %185 = arith.addf %180, %184 : vector<64x256xf32>
    %186 = vector.extract_strided_slice %37 {offsets = [0, 0], sizes = [1, 256], strides = [1, 1]} : vector<8x256xf32> to vector<1x256xf32>
    %187 = vector.broadcast %186 : vector<1x256xf32> to vector<64x256xf32>
    %188 = arith.addf %185, %187 : vector<64x256xf32>
    %cst_75 = arith.constant 5.000000e-01 : f32
    %189 = vector.broadcast %cst_75 : f32 to vector<64x256xf32>
    %190 = arith.mulf %189, %188 : vector<64x256xf32>
    %191 = arith.mulf %188, %188 : vector<64x256xf32>
    %192 = arith.mulf %191, %188 : vector<64x256xf32>
    %cst_76 = arith.constant 4.471500e-02 : f32
    %193 = vector.broadcast %cst_76 : f32 to vector<64x256xf32>
    %194 = arith.mulf %193, %192 : vector<64x256xf32>
    %195 = arith.addf %188, %194 : vector<64x256xf32>
    %cst_77 = arith.constant 0.797884583 : f32
    %196 = vector.broadcast %cst_77 : f32 to vector<64x256xf32>
    %197 = arith.mulf %196, %195 : vector<64x256xf32>
    %198 = math.tanh %197 : vector<64x256xf32>
    %cst_78 = arith.constant 1.000000e+00 : f32
    %199 = vector.broadcast %cst_78 : f32 to vector<64x256xf32>
    %200 = arith.addf %199, %198 : vector<64x256xf32>
    %201 = arith.mulf %190, %200 : vector<64x256xf32>
    %202 = vector.extract_strided_slice %37 {offsets = [1, 0], sizes = [1, 256], strides = [1, 1]} : vector<8x256xf32> to vector<1x256xf32>
    %203 = vector.broadcast %202 : vector<1x256xf32> to vector<64x256xf32>
    %204 = arith.mulf %201, %203 : vector<64x256xf32>
    %205 = vector.extract_strided_slice %37 {offsets = [2, 0], sizes = [1, 256], strides = [1, 1]} : vector<8x256xf32> to vector<1x256xf32>
    %206 = vector.broadcast %205 : vector<1x256xf32> to vector<64x256xf32>
    %207 = arith.addf %204, %206 : vector<64x256xf32>
    %c0_79 = arith.constant 0 : index
    %c24_80 = arith.constant 24 : index
    %c0_81 = arith.constant 0 : index
    %208 = vector.load %arg16[%c0_79, %c24_80, %c0_81] : memref<1x112x256xf32, #tpu.memory_space<vmem>>, vector<1x64x256xf32>
    %209 = vector.shape_cast %208 : vector<1x64x256xf32> to vector<64x256xf32>
    %210 = arith.addf %207, %209 : vector<64x256xf32>
    %211 = arith.truncf %210 : vector<64x256xf32> to vector<64x256xbf16>
    %c0_82 = arith.constant 0 : index
    %c0_83 = arith.constant 0 : index
    %212 = vector.load %arg17[%c0_82, %c0_83] : memref<64x256xbf16, #tpu.memory_space<vmem>>, vector<64x256xbf16>
    tpu.vector_store %arg17[%c0_82, %c0_83], %211 {strides = array<i32>} : memref<64x256xbf16, #tpu.memory_space<vmem>>, vector<64x256xbf16>,
    %c0_84 = arith.constant 0 : index
    %c0_85 = arith.constant 0 : index
    %213 = vector.load %arg8[%c0_84, %c0_85] : memref<8x256xf32, #tpu.memory_space<vmem>>, vector<8x256xf32>
    %c0_86 = arith.constant 0 : index
    %c0_87 = arith.constant 0 : index
    %214 = vector.load %arg17[%c0_86, %c0_87] : memref<64x256xbf16, #tpu.memory_space<vmem>>, vector<64x256xbf16>
    %c0_88 = arith.constant 0 : index
    %c0_89 = arith.constant 0 : index
    %215 = vector.load %arg7[%c0_88, %c0_89] : memref<256x256xbf16, #tpu.memory_space<vmem>>, vector<256x256xbf16>
    %cst_90 = arith.constant dense<0.000000e+00> : vector<64x256xf32>
    %216 = tpu.matmul %214, %215, %cst_90 {dimension_numbers = #tpu.dot_dimension_numbers<[1], [0], [0], [1], [0, 0, 1, 1], [], []>} : vector<64x256xbf16>, vector<256x256xbf16>, vector<64x256xf32> -> vector<64x256xf32>
    %217 = vector.extract_strided_slice %213 {offsets = [0, 0], sizes = [1, 256], strides = [1, 1]} : vector<8x256xf32> to vector<1x256xf32>
    %218 = vector.broadcast %217 : vector<1x256xf32> to vector<64x256xf32>
    %219 = arith.addf %216, %218 : vector<64x256xf32>
    %cst_91 = arith.constant 5.000000e-01 : f32
    %220 = vector.broadcast %cst_91 : f32 to vector<64x256xf32>
    %221 = arith.mulf %220, %219 : vector<64x256xf32>
    %222 = arith.mulf %219, %219 : vector<64x256xf32>
    %223 = arith.mulf %222, %219 : vector<64x256xf32>
    %cst_92 = arith.constant 4.471500e-02 : f32
    %224 = vector.broadcast %cst_92 : f32 to vector<64x256xf32>
    %225 = arith.mulf %224, %223 : vector<64x256xf32>
    %226 = arith.addf %219, %225 : vector<64x256xf32>
    %cst_93 = arith.constant 0.797884583 : f32
    %227 = vector.broadcast %cst_93 : f32 to vector<64x256xf32>
    %228 = arith.mulf %227, %226 : vector<64x256xf32>
    %229 = math.tanh %228 : vector<64x256xf32>
    %cst_94 = arith.constant 1.000000e+00 : f32
    %230 = vector.broadcast %cst_94 : f32 to vector<64x256xf32>
    %231 = arith.addf %230, %229 : vector<64x256xf32>
    %232 = arith.mulf %221, %231 : vector<64x256xf32>
    %233 = vector.extract_strided_slice %213 {offsets = [1, 0], sizes = [1, 256], strides = [1, 1]} : vector<8x256xf32> to vector<1x256xf32>
    %234 = vector.broadcast %233 : vector<1x256xf32> to vector<64x256xf32>
    %235 = arith.mulf %232, %234 : vector<64x256xf32>
    %236 = vector.extract_strided_slice %213 {offsets = [2, 0], sizes = [1, 256], strides = [1, 1]} : vector<8x256xf32> to vector<1x256xf32>
    %237 = vector.broadcast %236 : vector<1x256xf32> to vector<64x256xf32>
    %238 = arith.addf %235, %237 : vector<64x256xf32>
    %c0_95 = arith.constant 0 : index
    %c24_96 = arith.constant 24 : index
    %c0_97 = arith.constant 0 : index
    %239 = vector.load %arg16[%c0_95, %c24_96, %c0_97] : memref<1x112x256xf32, #tpu.memory_space<vmem>>, vector<1x64x256xf32>
    %240 = vector.shape_cast %239 : vector<1x64x256xf32> to vector<64x256xf32>
    %241 = vector.shape_cast %238 : vector<64x256xf32> to vector<1x64x256xf32>
    tpu.vector_store %arg16[%c0_95, %c24_96, %c0_97], %241 {strides = array<i32>} : memref<1x112x256xf32, #tpu.memory_space<vmem>>, vector<1x64x256xf32>,
    %c0_98 = arith.constant 0 : index
    %c0_99 = arith.constant 0 : index
    %242 = vector.load %arg10[%c0_98, %c0_99] : memref<8x256xf32, #tpu.memory_space<vmem>>, vector<8x256xf32>
    %cst_100 = arith.constant 0.000000e+00 : f32
    %243 = vector.broadcast %cst_100 : f32 to vector<64x256xf32>
    %c0_101 = arith.constant 0 : index
    %c6_102 = arith.constant 6 : index
    %c0_103 = arith.constant 0 : index
    %244 = vector.load %arg16[%c0_101, %c6_102, %c0_103] : memref<1x112x256xf32, #tpu.memory_space<vmem>>, vector<1x96x256xf32>
    %245 = vector.shape_cast %244 : vector<1x96x256xf32> to vector<96x256xf32>
    %c0_104 = arith.constant 0 : index
    %c0_105 = arith.constant 0 : index
    %c0_106 = arith.constant 0 : index
    %246 = vector.load %arg4[%c0_104, %c0_105, %c0_106] : memref<4x96x256xf32, #tpu.memory_space<vmem>>, vector<1x96x256xf32>
    %247 = vector.shape_cast %246 : vector<1x96x256xf32> to vector<96x256xf32>
    %248 = arith.mulf %245, %247 : vector<96x256xf32>
    %c0_107 = arith.constant 0 : index
    %c0_108 = arith.constant 0 : index
    %249 = vector.load %arg9[%c0_107, %c0_108] : memref<25x256xf32, #tpu.memory_space<vmem>>, vector<1x256xf32>
    %250 = vector.extract_strided_slice %248 {offsets = [0, 0], sizes = [64, 256], strides = [1, 1]} : vector<96x256xf32> to vector<64x256xf32>
    %251 = vector.broadcast %249 : vector<1x256xf32> to vector<64x256xf32>
    %252 = arith.mulf %250, %251 : vector<64x256xf32>
    %253 = arith.addf %243, %252 : vector<64x256xf32>
    %c5_109 = arith.constant 5 : index
    %c0_110 = arith.constant 0 : index
    %254 = vector.load %arg9[%c5_109, %c0_110] : memref<25x256xf32, #tpu.memory_space<vmem>>, vector<1x256xf32>
    %255 = vector.extract_strided_slice %248 {offsets = [8, 0], sizes = [64, 256], strides = [1, 1]} : vector<96x256xf32> to vector<64x256xf32>
    %256 = vector.broadcast %254 : vector<1x256xf32> to vector<64x256xf32>
    %257 = arith.mulf %255, %256 : vector<64x256xf32>
    %258 = arith.addf %253, %257 : vector<64x256xf32>
    %c10_111 = arith.constant 10 : index
    %c0_112 = arith.constant 0 : index
    %259 = vector.load %arg9[%c10_111, %c0_112] : memref<25x256xf32, #tpu.memory_space<vmem>>, vector<1x256xf32>
    %260 = vector.extract_strided_slice %248 {offsets = [16, 0], sizes = [64, 256], strides = [1, 1]} : vector<96x256xf32> to vector<64x256xf32>
    %261 = vector.broadcast %259 : vector<1x256xf32> to vector<64x256xf32>
    %262 = arith.mulf %260, %261 : vector<64x256xf32>
    %263 = arith.addf %258, %262 : vector<64x256xf32>
    %c15_113 = arith.constant 15 : index
    %c0_114 = arith.constant 0 : index
    %264 = vector.load %arg9[%c15_113, %c0_114] : memref<25x256xf32, #tpu.memory_space<vmem>>, vector<1x256xf32>
    %265 = vector.extract_strided_slice %248 {offsets = [24, 0], sizes = [64, 256], strides = [1, 1]} : vector<96x256xf32> to vector<64x256xf32>
    %266 = vector.broadcast %264 : vector<1x256xf32> to vector<64x256xf32>
    %267 = arith.mulf %265, %266 : vector<64x256xf32>
    %268 = arith.addf %263, %267 : vector<64x256xf32>
    %c20_115 = arith.constant 20 : index
    %c0_116 = arith.constant 0 : index
    %269 = vector.load %arg9[%c20_115, %c0_116] : memref<25x256xf32, #tpu.memory_space<vmem>>, vector<1x256xf32>
    %270 = vector.extract_strided_slice %248 {offsets = [32, 0], sizes = [64, 256], strides = [1, 1]} : vector<96x256xf32> to vector<64x256xf32>
    %271 = vector.broadcast %269 : vector<1x256xf32> to vector<64x256xf32>
    %272 = arith.mulf %270, %271 : vector<64x256xf32>
    %273 = arith.addf %268, %272 : vector<64x256xf32>
    %c0_117 = arith.constant 0 : index
    %c7_118 = arith.constant 7 : index
    %c0_119 = arith.constant 0 : index
    %274 = vector.load %arg16[%c0_117, %c7_118, %c0_119] : memref<1x112x256xf32, #tpu.memory_space<vmem>>, vector<1x96x256xf32>
    %275 = vector.shape_cast %274 : vector<1x96x256xf32> to vector<96x256xf32>
    %c1_120 = arith.constant 1 : index
    %c0_121 = arith.constant 0 : index
    %c0_122 = arith.constant 0 : index
    %276 = vector.load %arg4[%c1_120, %c0_121, %c0_122] : memref<4x96x256xf32, #tpu.memory_space<vmem>>, vector<1x96x256xf32>
    %277 = vector.shape_cast %276 : vector<1x96x256xf32> to vector<96x256xf32>
    %278 = arith.mulf %275, %277 : vector<96x256xf32>
    %c1_123 = arith.constant 1 : index
    %c0_124 = arith.constant 0 : index
    %279 = vector.load %arg9[%c1_123, %c0_124] : memref<25x256xf32, #tpu.memory_space<vmem>>, vector<1x256xf32>
    %280 = vector.extract_strided_slice %278 {offsets = [0, 0], sizes = [64, 256], strides = [1, 1]} : vector<96x256xf32> to vector<64x256xf32>
    %281 = vector.broadcast %279 : vector<1x256xf32> to vector<64x256xf32>
    %282 = arith.mulf %280, %281 : vector<64x256xf32>
    %283 = arith.addf %273, %282 : vector<64x256xf32>
    %c6_125 = arith.constant 6 : index
    %c0_126 = arith.constant 0 : index
    %284 = vector.load %arg9[%c6_125, %c0_126] : memref<25x256xf32, #tpu.memory_space<vmem>>, vector<1x256xf32>
    %285 = vector.extract_strided_slice %278 {offsets = [8, 0], sizes = [64, 256], strides = [1, 1]} : vector<96x256xf32> to vector<64x256xf32>
    %286 = vector.broadcast %284 : vector<1x256xf32> to vector<64x256xf32>
    %287 = arith.mulf %285, %286 : vector<64x256xf32>
    %288 = arith.addf %283, %287 : vector<64x256xf32>
    %c11_127 = arith.constant 11 : index
    %c0_128 = arith.constant 0 : index
    %289 = vector.load %arg9[%c11_127, %c0_128] : memref<25x256xf32, #tpu.memory_space<vmem>>, vector<1x256xf32>
    %290 = vector.extract_strided_slice %278 {offsets = [16, 0], sizes = [64, 256], strides = [1, 1]} : vector<96x256xf32> to vector<64x256xf32>
    %291 = vector.broadcast %289 : vector<1x256xf32> to vector<64x256xf32>
    %292 = arith.mulf %290, %291 : vector<64x256xf32>
    %293 = arith.addf %288, %292 : vector<64x256xf32>
    %c16_129 = arith.constant 16 : index
    %c0_130 = arith.constant 0 : index
    %294 = vector.load %arg9[%c16_129, %c0_130] : memref<25x256xf32, #tpu.memory_space<vmem>>, vector<1x256xf32>
    %295 = vector.extract_strided_slice %278 {offsets = [24, 0], sizes = [64, 256], strides = [1, 1]} : vector<96x256xf32> to vector<64x256xf32>
    %296 = vector.broadcast %294 : vector<1x256xf32> to vector<64x256xf32>
    %297 = arith.mulf %295, %296 : vector<64x256xf32>
    %298 = arith.addf %293, %297 : vector<64x256xf32>
    %c21_131 = arith.constant 21 : index
    %c0_132 = arith.constant 0 : index
    %299 = vector.load %arg9[%c21_131, %c0_132] : memref<25x256xf32, #tpu.memory_space<vmem>>, vector<1x256xf32>
    %300 = vector.extract_strided_slice %278 {offsets = [32, 0], sizes = [64, 256], strides = [1, 1]} : vector<96x256xf32> to vector<64x256xf32>
    %301 = vector.broadcast %299 : vector<1x256xf32> to vector<64x256xf32>
    %302 = arith.mulf %300, %301 : vector<64x256xf32>
    %303 = arith.addf %298, %302 : vector<64x256xf32>
    %c0_133 = arith.constant 0 : index
    %c8_134 = arith.constant 8 : index
    %c0_135 = arith.constant 0 : index
    %304 = vector.load %arg16[%c0_133, %c8_134, %c0_135] : memref<1x112x256xf32, #tpu.memory_space<vmem>>, vector<1x96x256xf32>
    %305 = vector.shape_cast %304 : vector<1x96x256xf32> to vector<96x256xf32>
    %c2_136 = arith.constant 2 : index
    %c0_137 = arith.constant 0 : index
    %306 = vector.load %arg9[%c2_136, %c0_137] : memref<25x256xf32, #tpu.memory_space<vmem>>, vector<1x256xf32>
    %307 = vector.extract_strided_slice %305 {offsets = [0, 0], sizes = [64, 256], strides = [1, 1]} : vector<96x256xf32> to vector<64x256xf32>
    %308 = vector.broadcast %306 : vector<1x256xf32> to vector<64x256xf32>
    %309 = arith.mulf %307, %308 : vector<64x256xf32>
    %310 = arith.addf %303, %309 : vector<64x256xf32>
    %c7_138 = arith.constant 7 : index
    %c0_139 = arith.constant 0 : index
    %311 = vector.load %arg9[%c7_138, %c0_139] : memref<25x256xf32, #tpu.memory_space<vmem>>, vector<1x256xf32>
    %312 = vector.extract_strided_slice %305 {offsets = [8, 0], sizes = [64, 256], strides = [1, 1]} : vector<96x256xf32> to vector<64x256xf32>
    %313 = vector.broadcast %311 : vector<1x256xf32> to vector<64x256xf32>
    %314 = arith.mulf %312, %313 : vector<64x256xf32>
    %315 = arith.addf %310, %314 : vector<64x256xf32>
    %c12_140 = arith.constant 12 : index
    %c0_141 = arith.constant 0 : index
    %316 = vector.load %arg9[%c12_140, %c0_141] : memref<25x256xf32, #tpu.memory_space<vmem>>, vector<1x256xf32>
    %317 = vector.extract_strided_slice %305 {offsets = [16, 0], sizes = [64, 256], strides = [1, 1]} : vector<96x256xf32> to vector<64x256xf32>
    %318 = vector.broadcast %316 : vector<1x256xf32> to vector<64x256xf32>
    %319 = arith.mulf %317, %318 : vector<64x256xf32>
    %320 = arith.addf %315, %319 : vector<64x256xf32>
    %c17_142 = arith.constant 17 : index
    %c0_143 = arith.constant 0 : index
    %321 = vector.load %arg9[%c17_142, %c0_143] : memref<25x256xf32, #tpu.memory_space<vmem>>, vector<1x256xf32>
    %322 = vector.extract_strided_slice %305 {offsets = [24, 0], sizes = [64, 256], strides = [1, 1]} : vector<96x256xf32> to vector<64x256xf32>
    %323 = vector.broadcast %321 : vector<1x256xf32> to vector<64x256xf32>
    %324 = arith.mulf %322, %323 : vector<64x256xf32>
    %325 = arith.addf %320, %324 : vector<64x256xf32>
    %c22_144 = arith.constant 22 : index
    %c0_145 = arith.constant 0 : index
    %326 = vector.load %arg9[%c22_144, %c0_145] : memref<25x256xf32, #tpu.memory_space<vmem>>, vector<1x256xf32>
    %327 = vector.extract_strided_slice %305 {offsets = [32, 0], sizes = [64, 256], strides = [1, 1]} : vector<96x256xf32> to vector<64x256xf32>
    %328 = vector.broadcast %326 : vector<1x256xf32> to vector<64x256xf32>
    %329 = arith.mulf %327, %328 : vector<64x256xf32>
    %330 = arith.addf %325, %329 : vector<64x256xf32>
    %c0_146 = arith.constant 0 : index
    %c9_147 = arith.constant 9 : index
    %c0_148 = arith.constant 0 : index
    %331 = vector.load %arg16[%c0_146, %c9_147, %c0_148] : memref<1x112x256xf32, #tpu.memory_space<vmem>>, vector<1x96x256xf32>
    %332 = vector.shape_cast %331 : vector<1x96x256xf32> to vector<96x256xf32>
    %c2_149 = arith.constant 2 : index
    %c0_150 = arith.constant 0 : index
    %c0_151 = arith.constant 0 : index
    %333 = vector.load %arg4[%c2_149, %c0_150, %c0_151] : memref<4x96x256xf32, #tpu.memory_space<vmem>>, vector<1x96x256xf32>
    %334 = vector.shape_cast %333 : vector<1x96x256xf32> to vector<96x256xf32>
    %335 = arith.mulf %332, %334 : vector<96x256xf32>
    %c3_152 = arith.constant 3 : index
    %c0_153 = arith.constant 0 : index
    %336 = vector.load %arg9[%c3_152, %c0_153] : memref<25x256xf32, #tpu.memory_space<vmem>>, vector<1x256xf32>
    %337 = vector.extract_strided_slice %335 {offsets = [0, 0], sizes = [64, 256], strides = [1, 1]} : vector<96x256xf32> to vector<64x256xf32>
    %338 = vector.broadcast %336 : vector<1x256xf32> to vector<64x256xf32>
    %339 = arith.mulf %337, %338 : vector<64x256xf32>
    %340 = arith.addf %330, %339 : vector<64x256xf32>
    %c8_154 = arith.constant 8 : index
    %c0_155 = arith.constant 0 : index
    %341 = vector.load %arg9[%c8_154, %c0_155] : memref<25x256xf32, #tpu.memory_space<vmem>>, vector<1x256xf32>
    %342 = vector.extract_strided_slice %335 {offsets = [8, 0], sizes = [64, 256], strides = [1, 1]} : vector<96x256xf32> to vector<64x256xf32>
    %343 = vector.broadcast %341 : vector<1x256xf32> to vector<64x256xf32>
    %344 = arith.mulf %342, %343 : vector<64x256xf32>
    %345 = arith.addf %340, %344 : vector<64x256xf32>
    %c13_156 = arith.constant 13 : index
    %c0_157 = arith.constant 0 : index
    %346 = vector.load %arg9[%c13_156, %c0_157] : memref<25x256xf32, #tpu.memory_space<vmem>>, vector<1x256xf32>
    %347 = vector.extract_strided_slice %335 {offsets = [16, 0], sizes = [64, 256], strides = [1, 1]} : vector<96x256xf32> to vector<64x256xf32>
    %348 = vector.broadcast %346 : vector<1x256xf32> to vector<64x256xf32>
    %349 = arith.mulf %347, %348 : vector<64x256xf32>
    %350 = arith.addf %345, %349 : vector<64x256xf32>
    %c18_158 = arith.constant 18 : index
    %c0_159 = arith.constant 0 : index
    %351 = vector.load %arg9[%c18_158, %c0_159] : memref<25x256xf32, #tpu.memory_space<vmem>>, vector<1x256xf32>
    %352 = vector.extract_strided_slice %335 {offsets = [24, 0], sizes = [64, 256], strides = [1, 1]} : vector<96x256xf32> to vector<64x256xf32>
    %353 = vector.broadcast %351 : vector<1x256xf32> to vector<64x256xf32>
    %354 = arith.mulf %352, %353 : vector<64x256xf32>
    %355 = arith.addf %350, %354 : vector<64x256xf32>
    %c23_160 = arith.constant 23 : index
    %c0_161 = arith.constant 0 : index
    %356 = vector.load %arg9[%c23_160, %c0_161] : memref<25x256xf32, #tpu.memory_space<vmem>>, vector<1x256xf32>
    %357 = vector.extract_strided_slice %335 {offsets = [32, 0], sizes = [64, 256], strides = [1, 1]} : vector<96x256xf32> to vector<64x256xf32>
    %358 = vector.broadcast %356 : vector<1x256xf32> to vector<64x256xf32>
    %359 = arith.mulf %357, %358 : vector<64x256xf32>
    %360 = arith.addf %355, %359 : vector<64x256xf32>
    %c0_162 = arith.constant 0 : index
    %c10_163 = arith.constant 10 : index
    %c0_164 = arith.constant 0 : index
    %361 = vector.load %arg16[%c0_162, %c10_163, %c0_164] : memref<1x112x256xf32, #tpu.memory_space<vmem>>, vector<1x96x256xf32>
    %362 = vector.shape_cast %361 : vector<1x96x256xf32> to vector<96x256xf32>
    %c3_165 = arith.constant 3 : index
    %c0_166 = arith.constant 0 : index
    %c0_167 = arith.constant 0 : index
    %363 = vector.load %arg4[%c3_165, %c0_166, %c0_167] : memref<4x96x256xf32, #tpu.memory_space<vmem>>, vector<1x96x256xf32>
    %364 = vector.shape_cast %363 : vector<1x96x256xf32> to vector<96x256xf32>
    %365 = arith.mulf %362, %364 : vector<96x256xf32>
    %c4_168 = arith.constant 4 : index
    %c0_169 = arith.constant 0 : index
    %366 = vector.load %arg9[%c4_168, %c0_169] : memref<25x256xf32, #tpu.memory_space<vmem>>, vector<1x256xf32>
    %367 = vector.extract_strided_slice %365 {offsets = [0, 0], sizes = [64, 256], strides = [1, 1]} : vector<96x256xf32> to vector<64x256xf32>
    %368 = vector.broadcast %366 : vector<1x256xf32> to vector<64x256xf32>
    %369 = arith.mulf %367, %368 : vector<64x256xf32>
    %370 = arith.addf %360, %369 : vector<64x256xf32>
    %c9_170 = arith.constant 9 : index
    %c0_171 = arith.constant 0 : index
    %371 = vector.load %arg9[%c9_170, %c0_171] : memref<25x256xf32, #tpu.memory_space<vmem>>, vector<1x256xf32>
    %372 = vector.extract_strided_slice %365 {offsets = [8, 0], sizes = [64, 256], strides = [1, 1]} : vector<96x256xf32> to vector<64x256xf32>
    %373 = vector.broadcast %371 : vector<1x256xf32> to vector<64x256xf32>
    %374 = arith.mulf %372, %373 : vector<64x256xf32>
    %375 = arith.addf %370, %374 : vector<64x256xf32>
    %c14_172 = arith.constant 14 : index
    %c0_173 = arith.constant 0 : index
    %376 = vector.load %arg9[%c14_172, %c0_173] : memref<25x256xf32, #tpu.memory_space<vmem>>, vector<1x256xf32>
    %377 = vector.extract_strided_slice %365 {offsets = [16, 0], sizes = [64, 256], strides = [1, 1]} : vector<96x256xf32> to vector<64x256xf32>
    %378 = vector.broadcast %376 : vector<1x256xf32> to vector<64x256xf32>
    %379 = arith.mulf %377, %378 : vector<64x256xf32>
    %380 = arith.addf %375, %379 : vector<64x256xf32>
    %c19_174 = arith.constant 19 : index
    %c0_175 = arith.constant 0 : index
    %381 = vector.load %arg9[%c19_174, %c0_175] : memref<25x256xf32, #tpu.memory_space<vmem>>, vector<1x256xf32>
    %382 = vector.extract_strided_slice %365 {offsets = [24, 0], sizes = [64, 256], strides = [1, 1]} : vector<96x256xf32> to vector<64x256xf32>
    %383 = vector.broadcast %381 : vector<1x256xf32> to vector<64x256xf32>
    %384 = arith.mulf %382, %383 : vector<64x256xf32>
    %385 = arith.addf %380, %384 : vector<64x256xf32>
    %c24_176 = arith.constant 24 : index
    %c0_177 = arith.constant 0 : index
    %386 = vector.load %arg9[%c24_176, %c0_177] : memref<25x256xf32, #tpu.memory_space<vmem>>, vector<1x256xf32>
    %387 = vector.extract_strided_slice %365 {offsets = [32, 0], sizes = [64, 256], strides = [1, 1]} : vector<96x256xf32> to vector<64x256xf32>
    %388 = vector.broadcast %386 : vector<1x256xf32> to vector<64x256xf32>
    %389 = arith.mulf %387, %388 : vector<64x256xf32>
    %390 = arith.addf %385, %389 : vector<64x256xf32>
    %391 = vector.extract_strided_slice %242 {offsets = [0, 0], sizes = [1, 256], strides = [1, 1]} : vector<8x256xf32> to vector<1x256xf32>
    %392 = vector.broadcast %391 : vector<1x256xf32> to vector<64x256xf32>
    %393 = arith.addf %390, %392 : vector<64x256xf32>
    %cst_178 = arith.constant 5.000000e-01 : f32
    %394 = vector.broadcast %cst_178 : f32 to vector<64x256xf32>
    %395 = arith.mulf %394, %393 : vector<64x256xf32>
    %396 = arith.mulf %393, %393 : vector<64x256xf32>
    %397 = arith.mulf %396, %393 : vector<64x256xf32>
    %cst_179 = arith.constant 4.471500e-02 : f32
    %398 = vector.broadcast %cst_179 : f32 to vector<64x256xf32>
    %399 = arith.mulf %398, %397 : vector<64x256xf32>
    %400 = arith.addf %393, %399 : vector<64x256xf32>
    %cst_180 = arith.constant 0.797884583 : f32
    %401 = vector.broadcast %cst_180 : f32 to vector<64x256xf32>
    %402 = arith.mulf %401, %400 : vector<64x256xf32>
    %403 = math.tanh %402 : vector<64x256xf32>
    %cst_181 = arith.constant 1.000000e+00 : f32
    %404 = vector.broadcast %cst_181 : f32 to vector<64x256xf32>
    %405 = arith.addf %404, %403 : vector<64x256xf32>
    %406 = arith.mulf %395, %405 : vector<64x256xf32>
    %407 = vector.extract_strided_slice %242 {offsets = [1, 0], sizes = [1, 256], strides = [1, 1]} : vector<8x256xf32> to vector<1x256xf32>
    %408 = vector.broadcast %407 : vector<1x256xf32> to vector<64x256xf32>
    %409 = arith.mulf %406, %408 : vector<64x256xf32>
    %410 = vector.extract_strided_slice %242 {offsets = [2, 0], sizes = [1, 256], strides = [1, 1]} : vector<8x256xf32> to vector<1x256xf32>
    %411 = vector.broadcast %410 : vector<1x256xf32> to vector<64x256xf32>
    %412 = arith.addf %409, %411 : vector<64x256xf32>
    %c0_182 = arith.constant 0 : index
    %c24_183 = arith.constant 24 : index
    %c0_184 = arith.constant 0 : index
    %413 = vector.load %arg16[%c0_182, %c24_183, %c0_184] : memref<1x112x256xf32, #tpu.memory_space<vmem>>, vector<1x64x256xf32>
    %414 = vector.shape_cast %413 : vector<1x64x256xf32> to vector<64x256xf32>
    %415 = arith.addf %412, %414 : vector<64x256xf32>
    %416 = arith.truncf %415 : vector<64x256xf32> to vector<64x256xbf16>
    %c0_185 = arith.constant 0 : index
    %c0_186 = arith.constant 0 : index
    %417 = vector.load %arg17[%c0_185, %c0_186] : memref<64x256xbf16, #tpu.memory_space<vmem>>, vector<64x256xbf16>
    tpu.vector_store %arg17[%c0_185, %c0_186], %416 {strides = array<i32>} : memref<64x256xbf16, #tpu.memory_space<vmem>>, vector<64x256xbf16>,
    %c0_187 = arith.constant 0 : index
    %c0_188 = arith.constant 0 : index
    %418 = vector.load %arg12[%c0_187, %c0_188] : memref<8x256xf32, #tpu.memory_space<vmem>>, vector<8x256xf32>
    %c0_189 = arith.constant 0 : index
    %c0_190 = arith.constant 0 : index
    %419 = vector.load %arg17[%c0_189, %c0_190] : memref<64x256xbf16, #tpu.memory_space<vmem>>, vector<64x256xbf16>
    %c0_191 = arith.constant 0 : index
    %c0_192 = arith.constant 0 : index
    %420 = vector.load %arg11[%c0_191, %c0_192] : memref<256x256xbf16, #tpu.memory_space<vmem>>, vector<256x256xbf16>
    %cst_193 = arith.constant dense<0.000000e+00> : vector<64x256xf32>
    %421 = tpu.matmul %419, %420, %cst_193 {dimension_numbers = #tpu.dot_dimension_numbers<[1], [0], [0], [1], [0, 0, 1, 1], [], []>} : vector<64x256xbf16>, vector<256x256xbf16>, vector<64x256xf32> -> vector<64x256xf32>
    %422 = vector.extract_strided_slice %418 {offsets = [0, 0], sizes = [1, 256], strides = [1, 1]} : vector<8x256xf32> to vector<1x256xf32>
    %423 = vector.broadcast %422 : vector<1x256xf32> to vector<64x256xf32>
    %424 = arith.addf %421, %423 : vector<64x256xf32>
    %cst_194 = arith.constant 5.000000e-01 : f32
    %425 = vector.broadcast %cst_194 : f32 to vector<64x256xf32>
    %426 = arith.mulf %425, %424 : vector<64x256xf32>
    %427 = arith.mulf %424, %424 : vector<64x256xf32>
    %428 = arith.mulf %427, %424 : vector<64x256xf32>
    %cst_195 = arith.constant 4.471500e-02 : f32
    %429 = vector.broadcast %cst_195 : f32 to vector<64x256xf32>
    %430 = arith.mulf %429, %428 : vector<64x256xf32>
    %431 = arith.addf %424, %430 : vector<64x256xf32>
    %cst_196 = arith.constant 0.797884583 : f32
    %432 = vector.broadcast %cst_196 : f32 to vector<64x256xf32>
    %433 = arith.mulf %432, %431 : vector<64x256xf32>
    %434 = math.tanh %433 : vector<64x256xf32>
    %cst_197 = arith.constant 1.000000e+00 : f32
    %435 = vector.broadcast %cst_197 : f32 to vector<64x256xf32>
    %436 = arith.addf %435, %434 : vector<64x256xf32>
    %437 = arith.mulf %426, %436 : vector<64x256xf32>
    %cst_198 = arith.constant dense<0.000000e+00> : vector<256xf32>
    %438 = vector.multi_reduction <add>, %437, %cst_198 [0] : vector<64x256xf32> to vector<256xf32>
    %439 = vector.shape_cast %438 : vector<256xf32> to vector<1x256xf32>
    %cst_199 = arith.constant 6.400000e+01 : f32
    %440 = vector.broadcast %cst_199 : f32 to vector<1x256xf32>
    %441 = arith.divf %439, %440 : vector<1x256xf32>
    %c0_200 = arith.constant 0 : index
    %c0_201 = arith.constant 0 : index
    %442 = vector.load %arg13[%c0_200, %c0_201] : memref<256x128xf32, #tpu.memory_space<vmem>>, vector<256x128xf32>
    %cst_202 = arith.constant dense<0.000000e+00> : vector<1x128xf32>
    %443 = tpu.matmul %441, %442, %cst_202 {dimension_numbers = #tpu.dot_dimension_numbers<[1], [0], [0], [1], [0, 0, 1, 1], [], []>} : vector<1x256xf32>, vector<256x128xf32>, vector<1x128xf32> -> vector<1x128xf32>
    %c0_203 = arith.constant 0 : index
    %c0_204 = arith.constant 0 : index
    %444 = vector.load %arg14[%c0_203, %c0_204] : memref<1x128xf32, #tpu.memory_space<vmem>>, vector<1x128xf32>
    %445 = arith.addf %443, %444 : vector<1x128xf32>
    %c0_205 = arith.constant 0 : index
    %c0_206 = arith.constant 0 : index
    %c0_207 = arith.constant 0 : index
    %446 = vector.load %arg15[%c0_205, %c0_206, %c0_207] : memref<1x1x128xf32, #tpu.memory_space<vmem>>, vector<1x1x128xf32>
    %447 = vector.shape_cast %446 : vector<1x1x128xf32> to vector<1x128xf32>
    %448 = vector.shape_cast %445 : vector<1x128xf32> to vector<1x1x128xf32>
    tpu.vector_store %arg15[%c0_205, %c0_206, %c0_207], %448 {strides = array<i32>} : memref<1x1x128xf32, #tpu.memory_space<vmem>>, vector<1x1x128xf32>,
    return
  }
  func.func @transform_0(%arg0: i32) -> (i32, i32, i32) {
    %c0_i32 = arith.constant 0 : i32
    %c0_i32_0 = arith.constant 0 : i32
    %c0_i32_1 = arith.constant 0 : i32
    return %arg0, %c0_i32, %c0_i32_0 : i32, i32, i32
  }
  func.func @transform_1(%arg0: i32) -> (i32, i32) {
    %c0_i32 = arith.constant 0 : i32
    %c0_i32_0 = arith.constant 0 : i32
    %c0_i32_1 = arith.constant 0 : i32
    return %c0_i32, %c0_i32_0 : i32, i32
  }
  func.func @transform_2(%arg0: i32) -> (i32, i32) {
    %c0_i32 = arith.constant 0 : i32
    %c0_i32_0 = arith.constant 0 : i32
    %c0_i32_1 = arith.constant 0 : i32
    return %c0_i32, %c0_i32_0 : i32, i32
  }
  func.func @transform_3(%arg0: i32) -> (i32, i32, i32) {
    %c0_i32 = arith.constant 0 : i32
    %c0_i32_0 = arith.constant 0 : i32
    %c0_i32_1 = arith.constant 0 : i32
    %c0_i32_2 = arith.constant 0 : i32
    return %c0_i32, %c0_i32_0, %c0_i32_1 : i32, i32, i32
  }
  func.func @transform_4(%arg0: i32) -> (i32, i32) {
    %c0_i32 = arith.constant 0 : i32
    %c0_i32_0 = arith.constant 0 : i32
    %c0_i32_1 = arith.constant 0 : i32
    return %c0_i32, %c0_i32_0 : i32, i32
  }
  func.func @transform_5(%arg0: i32) -> (i32, i32) {
    %c0_i32 = arith.constant 0 : i32
    %c0_i32_0 = arith.constant 0 : i32
    %c0_i32_1 = arith.constant 0 : i32
    return %c0_i32, %c0_i32_0 : i32, i32
  }
  func.func @transform_6(%arg0: i32) -> (i32, i32) {
    %c0_i32 = arith.constant 0 : i32
    %c0_i32_0 = arith.constant 0 : i32
    %c0_i32_1 = arith.constant 0 : i32
    return %c0_i32, %c0_i32_0 : i32, i32
  }
  func.func @transform_7(%arg0: i32) -> (i32, i32) {
    %c0_i32 = arith.constant 0 : i32
    %c0_i32_0 = arith.constant 0 : i32
    %c0_i32_1 = arith.constant 0 : i32
    return %c0_i32, %c0_i32_0 : i32, i32
  }
  func.func @transform_8(%arg0: i32) -> (i32, i32) {
    %c0_i32 = arith.constant 0 : i32
    %c0_i32_0 = arith.constant 0 : i32
    %c0_i32_1 = arith.constant 0 : i32
    return %c0_i32, %c0_i32_0 : i32, i32
  }
  func.func @transform_9(%arg0: i32) -> (i32, i32) {
    %c0_i32 = arith.constant 0 : i32
    %c0_i32_0 = arith.constant 0 : i32
    %c0_i32_1 = arith.constant 0 : i32
    return %c0_i32, %c0_i32_0 : i32, i32
  }
  func.func @transform_10(%arg0: i32) -> (i32, i32) {
    %c0_i32 = arith.constant 0 : i32
    %c0_i32_0 = arith.constant 0 : i32
    %c0_i32_1 = arith.constant 0 : i32
    return %c0_i32, %c0_i32_0 : i32, i32
  }
  func.func @transform_11(%arg0: i32) -> (i32, i32) {
    %c0_i32 = arith.constant 0 : i32
    %c0_i32_0 = arith.constant 0 : i32
    %c0_i32_1 = arith.constant 0 : i32
    return %c0_i32, %c0_i32_0 : i32, i32
  }
  func.func @transform_12(%arg0: i32) -> (i32, i32) {
    %c0_i32 = arith.constant 0 : i32
    %c0_i32_0 = arith.constant 0 : i32
    %c0_i32_1 = arith.constant 0 : i32
    return %c0_i32, %c0_i32_0 : i32, i32
  }
  func.func @transform_13(%arg0: i32) -> (i32, i32) {
    %c0_i32 = arith.constant 0 : i32
    %c0_i32_0 = arith.constant 0 : i32
    %c0_i32_1 = arith.constant 0 : i32
    return %c0_i32, %c0_i32_0 : i32, i32
  }
  func.func @transform_14(%arg0: i32) -> (i32, i32, i32) {
    %c0_i32 = arith.constant 0 : i32
    %c0_i32_0 = arith.constant 0 : i32
    %c0_i32_1 = arith.constant 0 : i32
    return %arg0, %c0_i32, %c0_i32_0 : i32, i32, i32
  }
}

</mosaic_0001>

<llo_original>
// kernel: convmixer_forward.1
$region0: #{convmixer_forward.1}
  #allocation0 [shape = 'u32[]', space=smem, size = 0x4, offset = 0x4, fixed_abs, tag = 'smem constant byte address 0x4 - core index']
  #allocation1 [shape = 'u32[144,128]{1,0:T(1,128)}', space=vmem, size = 0x12000, scoped, tag = 'internal scratch']
  #allocation2 [shape = 'f32[1,112,256]{2,1,0:T(8,128)}', space=vmem, size = 0x1c000, scoped, tag = 'scratch operand']
  #allocation3 [shape = 'bf16[64,256]{1,0:T(16,128)(2,1)}', space=vmem, size = 0x8000, scoped, tag = 'scratch operand']
  %s0 = inlined_call_operand.vmem [shape: bf16[2,64,128], index: 0, kind: input, shape index: {}]
  %s1 = inlined_call_operand.vmem [shape: bf16[128,256], index: 1, kind: input, shape index: {}]
  %s2 = inlined_call_operand.vmem [shape: f32[8,256], index: 2, kind: input, shape index: {}]
  %s3 = inlined_call_operand.vmem [shape: f32[4,96,256], index: 3, kind: input, shape index: {}]
  %s4 = inlined_call_operand.vmem [shape: f32[25,256], index: 4, kind: input, shape index: {}]
  %s5 = inlined_call_operand.vmem [shape: f32[8,256], index: 5, kind: input, shape index: {}]
  %s6 = inlined_call_operand.vmem [shape: bf16[256,256], index: 6, kind: input, shape index: {}]
  %s7 = inlined_call_operand.vmem [shape: f32[8,256], index: 7, kind: input, shape index: {}]
  %s8 = inlined_call_operand.vmem [shape: f32[25,256], index: 8, kind: input, shape index: {}]
  %s9 = inlined_call_operand.vmem [shape: f32[8,256], index: 9, kind: input, shape index: {}]
  %s10 = inlined_call_operand.vmem [shape: bf16[256,256], index: 10, kind: input, shape index: {}]
  %s11 = inlined_call_operand.vmem [shape: f32[8,256], index: 11, kind: input, shape index: {}]
  %s12 = inlined_call_operand.vmem [shape: f32[256,128], index: 12, kind: input, shape index: {}]
  %s13 = inlined_call_operand.vmem [shape: f32[1,128], index: 13, kind: input, shape index: {}]
  %s14 = inlined_call_operand.hbm [shape: f32[2,1,128], index: 14, kind: output, shape index: {}]
  %s15 = sld [smem:[#allocation0]]
  $region89: #{convmixer_forward.1} parent=0
    _
  %s17 = ssub.s32 1, %s15
  %s18 = scalar_select 0, %s17, %s15
  $region1: #{convmixer_forward.1} parent=0
    #allocation4 [shape = 'u8[1024]{0}', space=vmem, size = 0x400, scoped, tag = 'output window, operand 0']
    #allocation5 [shape = 's32[2]{0}', space=sflag, size = 0x8, scoped, tag = 'scoped memory for convmixer_forward.1']
    %19 = vsyncpa [#allocation5], 0
    %s20 = scalar_lea.sflag [#allocation5], 1
    %21 = vsyncpa %s20, 0
    loop: start=0, step=1, limit=4
    $region2: #{convmixer_forward.1} parent=1 // loop_pre_header
      _
    $region3: #{convmixer_forward.1} parent=1 // loop_header
      %s23 = sphi 0, %s27
      %p24 = scmp.ge.s32.totalorder %s23, 4
      %s33 = sphi 0, %s35
      %s36 = sphi 0, %s33
      %s37 = sphi 0, %s36
      %s53 = sphi 0, %s37
      %s57 = sphi 0, %s57
      %s59 = sphi 0, %s57
      %s60 = sphi 0, %s59
      %s74 = sphi 0, %s60
      %s78 = sphi 0, %s78
      %s80 = sphi 0, %s78
      %s81 = sphi 0, %s80
      %s95 = sphi 0, %s81
      %s99 = sphi 0, %s99
      %s101 = sphi 0, %s99
      %s102 = sphi 0, %s101
      %s116 = sphi 0, %s102
      %s120 = sphi 0, %s120
      %s122 = sphi 0, %s120
      %s123 = sphi 0, %s122
      %s137 = sphi 0, %s123
      %s141 = sphi 0, %s141
      %s143 = sphi 0, %s141
      %s144 = sphi 0, %s143
      %s158 = sphi 0, %s144
      %s162 = sphi 0, %s162
      %s164 = sphi 0, %s162
      %s165 = sphi 0, %s164
      %s179 = sphi 0, %s165
      %s183 = sphi 0, %s183
      %s185 = sphi 0, %s183
      %s186 = sphi 0, %s185
      %s200 = sphi 0, %s186
      %s204 = sphi 0, %s204
      %s206 = sphi 0, %s204
      %s207 = sphi 0, %s206
      %s221 = sphi 0, %s207
      %s225 = sphi 0, %s225
      %s227 = sphi 0, %s225
      %s228 = sphi 0, %s227
      %s242 = sphi 0, %s228
      %s246 = sphi 0, %s246
      %s248 = sphi 0, %s246
      %s249 = sphi 0, %s248
      %s263 = sphi 0, %s249
      %s267 = sphi 0, %s267
      %s269 = sphi 0, %s267
      %s270 = sphi 0, %s269
      %s284 = sphi 0, %s270
      %s288 = sphi 0, %s288
      %s290 = sphi 0, %s288
      %s291 = sphi 0, %s290
      %s305 = sphi 0, %s291
      %s309 = sphi 0, %s309
      %s311 = sphi 0, %s309
      %s312 = sphi 0, %s311
      %s326 = sphi 0, %s312
      %s332 = sphi 0, %s334
      %s335 = sphi 0, %s332
      %s336 = sphi 0, %s335
      %s352 = sphi 0, %s336
    $region4: #{convmixer_forward.1} parent=1 // loop_header_branch
      %26 = sbr.rel (%p24) target = $region8
    $region5: #{convmixer_forward.1} parent=1 // loop_body
      %s28 = ssub.s32 %s23, 1
      %s29 = ssub.s32 %s23, 2
      %s30 = sadd.s32 %s23, 1
      %s31 = ssub.s32 %s23, %s30
      %p32 = scmp.eq.s32.totalorder %s31, 0
      %s34 = sadd.s32 %s33, 1
      %s35 = scalar_select %p32, %s33, %s34
      %p38 = pneg %p32
      %p39 = scmp.eq.s32.totalorder %s23, 1
      %p40 = por %p38, %p39
      %p41 = scmp.ne.s32.totalorder %s33, %s36
      %p42 = scmp.eq.s32.totalorder %s23, 0
      %p43 = por %p41, %p42
      %p44 = scmp.ne.s32.totalorder %s33, %s36
      %p45 = scmp.eq.s32.totalorder %s28, 1
      %p46 = por %p44, %p45
      %p47 = scmp.ne.s32.totalorder %s36, %s37
      %p48 = scmp.eq.s32.totalorder %s28, 0
      %p49 = por %p47, %p48
      %p50 = scmp.ne.s32.totalorder %s36, %s37
      %p51 = scmp.eq.s32.totalorder %s29, 1
      %p52 = por %p50, %p51
      %p54 = scmp.ne.s32.totalorder %s37, %s53
      %p55 = scmp.eq.s32.totalorder %s29, 0
      %p56 = por %p54, %p55
      %s58 = sadd.s32 %s57, 1
      %p61 = scmp.eq.s32.totalorder %s23, 1
      %p62 = scmp.ne.s32.totalorder %s57, %s59
      %p63 = scmp.eq.s32.totalorder %s23, 0
      %p64 = por %p62, %p63
      %p65 = scmp.ne.s32.totalorder %s57, %s59
      %p66 = scmp.eq.s32.totalorder %s28, 1
      %p67 = por %p65, %p66
      %p68 = scmp.ne.s32.totalorder %s59, %s60
      %p69 = scmp.eq.s32.totalorder %s28, 0
      %p70 = por %p68, %p69
      %p71 = scmp.ne.s32.totalorder %s59, %s60
      %p72 = scmp.eq.s32.totalorder %s29, 1
      %p73 = por %p71, %p72
      %p75 = scmp.ne.s32.totalorder %s60, %s74
      %p76 = scmp.eq.s32.totalorder %s29, 0
      %p77 = por %p75, %p76
      %s79 = sadd.s32 %s78, 1
      %p82 = scmp.eq.s32.totalorder %s23, 1
      %p83 = scmp.ne.s32.totalorder %s78, %s80
      %p84 = scmp.eq.s32.totalorder %s23, 0
      %p85 = por %p83, %p84
      %p86 = scmp.ne.s32.totalorder %s78, %s80
      %p87 = scmp.eq.s32.totalorder %s28, 1
      %p88 = por %p86, %p87
      %p89 = scmp.ne.s32.totalorder %s80, %s81
      %p90 = scmp.eq.s32.totalorder %s28, 0
      %p91 = por %p89, %p90
      %p92 = scmp.ne.s32.totalorder %s80, %s81
      %p93 = scmp.eq.s32.totalorder %s29, 1
      %p94 = por %p92, %p93
      %p96 = scmp.ne.s32.totalorder %s81, %s95
      %p97 = scmp.eq.s32.totalorder %s29, 0
      %p98 = por %p96, %p97
      %s100 = sadd.s32 %s99, 1
      %p103 = scmp.eq.s32.totalorder %s23, 1
      %p104 = scmp.ne.s32.totalorder %s99, %s101
      %p105 = scmp.eq.s32.totalorder %s23, 0
      %p106 = por %p104, %p105
      %p107 = scmp.ne.s32.totalorder %s99, %s101
      %p108 = scmp.eq.s32.totalorder %s28, 1
      %p109 = por %p107, %p108
      %p110 = scmp.ne.s32.totalorder %s101, %s102
      %p111 = scmp.eq.s32.totalorder %s28, 0
      %p112 = por %p110, %p111
      %p113 = scmp.ne.s32.totalorder %s101, %s102
      %p114 = scmp.eq.s32.totalorder %s29, 1
      %p115 = por %p113, %p114
      %p117 = scmp.ne.s32.totalorder %s102, %s116
      %p118 = scmp.eq.s32.totalorder %s29, 0
      %p119 = por %p117, %p118
      %s121 = sadd.s32 %s120, 1
      %p124 = scmp.eq.s32.totalorder %s23, 1
      %p125 = scmp.ne.s32.totalorder %s120, %s122
      %p126 = scmp.eq.s32.totalorder %s23, 0
      %p127 = por %p125, %p126
      %p128 = scmp.ne.s32.totalorder %s120, %s122
      %p129 = scmp.eq.s32.totalorder %s28, 1
      %p130 = por %p128, %p129
      %p131 = scmp.ne.s32.totalorder %s122, %s123
      %p132 = scmp.eq.s32.totalorder %s28, 0
      %p133 = por %p131, %p132
      %p134 = scmp.ne.s32.totalorder %s122, %s123
      %p135 = scmp.eq.s32.totalorder %s29, 1
      %p136 = por %p134, %p135
      %p138 = scmp.ne.s32.totalorder %s123, %s137
      %p139 = scmp.eq.s32.totalorder %s29, 0
      %p140 = por %p138, %p139
      %s142 = sadd.s32 %s141, 1
      %p145 = scmp.eq.s32.totalorder %s23, 1
      %p146 = scmp.ne.s32.totalorder %s141, %s143
      %p147 = scmp.eq.s32.totalorder %s23, 0
      %p148 = por %p146, %p147
      %p149 = scmp.ne.s32.totalorder %s141, %s143
      %p150 = scmp.eq.s32.totalorder %s28, 1
      %p151 = por %p149, %p150
      %p152 = scmp.ne.s32.totalorder %s143, %s144
      %p153 = scmp.eq.s32.totalorder %s28, 0
      %p154 = por %p152, %p153
      %p155 = scmp.ne.s32.totalorder %s143, %s144
      %p156 = scmp.eq.s32.totalorder %s29, 1
      %p157 = por %p155, %p156
      %p159 = scmp.ne.s32.totalorder %s144, %s158
      %p160 = scmp.eq.s32.totalorder %s29, 0
      %p161 = por %p159, %p160
      %s163 = sadd.s32 %s162, 1
      %p166 = scmp.eq.s32.totalorder %s23, 1
      %p167 = scmp.ne.s32.totalorder %s162, %s164
      %p168 = scmp.eq.s32.totalorder %s23, 0
      %p169 = por %p167, %p168
      %p170 = scmp.ne.s32.totalorder %s162, %s164
      %p171 = scmp.eq.s32.totalorder %s28, 1
      %p172 = por %p170, %p171
      %p173 = scmp.ne.s32.totalorder %s164, %s165
      %p174 = scmp.eq.s32.totalorder %s28, 0
      %p175 = por %p173, %p174
      %p176 = scmp.ne.s32.totalorder %s164, %s165
      %p177 = scmp.eq.s32.totalorder %s29, 1
      %p178 = por %p176, %p177
      %p180 = scmp.ne.s32.totalorder %s165, %s179
      %p181 = scmp.eq.s32.totalorder %s29, 0
      %p182 = por %p180, %p181
      %s184 = sadd.s32 %s183, 1
      %p187 = scmp.eq.s32.totalorder %s23, 1
      %p188 = scmp.ne.s32.totalorder %s183, %s185
      %p189 = scmp.eq.s32.totalorder %s23, 0
      %p190 = por %p188, %p189
      %p191 = scmp.ne.s32.totalorder %s183, %s185
      %p192 = scmp.eq.s32.totalorder %s28, 1
      %p193 = por %p191, %p192
      %p194 = scmp.ne.s32.totalorder %s185, %s186
      %p195 = scmp.eq.s32.totalorder %s28, 0
      %p196 = por %p194, %p195
      %p197 = scmp.ne.s32.totalorder %s185, %s186
      %p198 = scmp.eq.s32.totalorder %s29, 1
      %p199 = por %p197, %p198
      %p201 = scmp.ne.s32.totalorder %s186, %s200
      %p202 = scmp.eq.s32.totalorder %s29, 0
      %p203 = por %p201, %p202
      %s205 = sadd.s32 %s204, 1
      %p208 = scmp.eq.s32.totalorder %s23, 1
      %p209 = scmp.ne.s32.totalorder %s204, %s206
      %p210 = scmp.eq.s32.totalorder %s23, 0
      %p211 = por %p209, %p210
      %p212 = scmp.ne.s32.totalorder %s204, %s206
      %p213 = scmp.eq.s32.totalorder %s28, 1
      %p214 = por %p212, %p213
      %p215 = scmp.ne.s32.totalorder %s206, %s207
      %p216 = scmp.eq.s32.totalorder %s28, 0
      %p217 = por %p215, %p216
      %p218 = scmp.ne.s32.totalorder %s206, %s207
      %p219 = scmp.eq.s32.totalorder %s29, 1
      %p220 = por %p218, %p219
      %p222 = scmp.ne.s32.totalorder %s207, %s221
      %p223 = scmp.eq.s32.totalorder %s29, 0
      %p224 = por %p222, %p223
      %s226 = sadd.s32 %s225, 1
      %p229 = scmp.eq.s32.totalorder %s23, 1
      %p230 = scmp.ne.s32.totalorder %s225, %s227
      %p231 = scmp.eq.s32.totalorder %s23, 0
      %p232 = por %p230, %p231
      %p233 = scmp.ne.s32.totalorder %s225, %s227
      %p234 = scmp.eq.s32.totalorder %s28, 1
      %p235 = por %p233, %p234
      %p236 = scmp.ne.s32.totalorder %s227, %s228
      %p237 = scmp.eq.s32.totalorder %s28, 0
      %p238 = por %p236, %p237
      %p239 = scmp.ne.s32.totalorder %s227, %s228
      %p240 = scmp.eq.s32.totalorder %s29, 1
      %p241 = por %p239, %p240
      %p243 = scmp.ne.s32.totalorder %s228, %s242
      %p244 = scmp.eq.s32.totalorder %s29, 0
      %p245 = por %p243, %p244
      %s247 = sadd.s32 %s246, 1
      %p250 = scmp.eq.s32.totalorder %s23, 1
      %p251 = scmp.ne.s32.totalorder %s246, %s248
      %p252 = scmp.eq.s32.totalorder %s23, 0
      %p253 = por %p251, %p252
      %p254 = scmp.ne.s32.totalorder %s246, %s248
      %p255 = scmp.eq.s32.totalorder %s28, 1
      %p256 = por %p254, %p255
      %p257 = scmp.ne.s32.totalorder %s248, %s249
      %p258 = scmp.eq.s32.totalorder %s28, 0
      %p259 = por %p257, %p258
      %p260 = scmp.ne.s32.totalorder %s248, %s249
      %p261 = scmp.eq.s32.totalorder %s29, 1
      %p262 = por %p260, %p261
      %p264 = scmp.ne.s32.totalorder %s249, %s263
      %p265 = scmp.eq.s32.totalorder %s29, 0
      %p266 = por %p264, %p265
      %s268 = sadd.s32 %s267, 1
      %p271 = scmp.eq.s32.totalorder %s23, 1
      %p272 = scmp.ne.s32.totalorder %s267, %s269
      %p273 = scmp.eq.s32.totalorder %s23, 0
      %p274 = por %p272, %p273
      %p275 = scmp.ne.s32.totalorder %s267, %s269
      %p276 = scmp.eq.s32.totalorder %s28, 1
      %p277 = por %p275, %p276
      %p278 = scmp.ne.s32.totalorder %s269, %s270
      %p279 = scmp.eq.s32.totalorder %s28, 0
      %p280 = por %p278, %p279
      %p281 = scmp.ne.s32.totalorder %s269, %s270
      %p282 = scmp.eq.s32.totalorder %s29, 1
      %p283 = por %p281, %p282
      %p285 = scmp.ne.s32.totalorder %s270, %s284
      %p286 = scmp.eq.s32.totalorder %s29, 0
      %p287 = por %p285, %p286
      %s289 = sadd.s32 %s288, 1
      %p292 = scmp.eq.s32.totalorder %s23, 1
      %p293 = scmp.ne.s32.totalorder %s288, %s290
      %p294 = scmp.eq.s32.totalorder %s23, 0
      %p295 = por %p293, %p294
      %p296 = scmp.ne.s32.totalorder %s288, %s290
      %p297 = scmp.eq.s32.totalorder %s28, 1
      %p298 = por %p296, %p297
      %p299 = scmp.ne.s32.totalorder %s290, %s291
      %p300 = scmp.eq.s32.totalorder %s28, 0
      %p301 = por %p299, %p300
      %p302 = scmp.ne.s32.totalorder %s290, %s291
      %p303 = scmp.eq.s32.totalorder %s29, 1
      %p304 = por %p302, %p303
      %p306 = scmp.ne.s32.totalorder %s291, %s305
      %p307 = scmp.eq.s32.totalorder %s29, 0
      %p308 = por %p306, %p307
      %s310 = sadd.s32 %s309, 1
      %p313 = scmp.eq.s32.totalorder %s23, 1
      %p314 = scmp.ne.s32.totalorder %s309, %s311
      %p315 = scmp.eq.s32.totalorder %s23, 0
      %p316 = por %p314, %p315
      %p317 = scmp.ne.s32.totalorder %s309, %s311
      %p318 = scmp.eq.s32.totalorder %s28, 1
      %p319 = por %p317, %p318
      %p320 = scmp.ne.s32.totalorder %s311, %s312
      %p321 = scmp.eq.s32.totalorder %s28, 0
      %p322 = por %p320, %p321
      %p323 = scmp.ne.s32.totalorder %s311, %s312
      %p324 = scmp.eq.s32.totalorder %s29, 1
      %p325 = por %p323, %p324
      %p327 = scmp.ne.s32.totalorder %s312, %s326
      %p328 = scmp.eq.s32.totalorder %s29, 0
      %p329 = por %p327, %p328
      %s330 = ssub.s32 %s23, %s30
      %p331 = scmp.eq.s32.totalorder %s330, 0
      %s333 = sadd.s32 %s332, 1
      %s334 = scalar_select %p331, %s332, %s333
      %p337 = pneg %p331
      %p338 = scmp.eq.s32.totalorder %s23, 1
      %p339 = por %p337, %p338
      %p340 = scmp.ne.s32.totalorder %s332, %s335
      %p341 = scmp.eq.s32.totalorder %s23, 0
      %p342 = por %p340, %p341
      %p343 = scmp.ne.s32.totalorder %s332, %s335
      %p344 = scmp.eq.s32.totalorder %s28, 1
      %p345 = por %p343, %p344
      %p346 = scmp.ne.s32.totalorder %s335, %s336
      %p347 = scmp.eq.s32.totalorder %s28, 0
      %p348 = por %p346, %p347
      %p349 = scmp.ne.s32.totalorder %s335, %s336
      %p350 = scmp.eq.s32.totalorder %s29, 1
      %p351 = por %p349, %p350
      %p353 = scmp.ne.s32.totalorder %s336, %s352
      %p354 = scmp.eq.s32.totalorder %s29, 0
      %p355 = por %p353, %p354
      %p356 = scmp.le.s32.totalorder 1, %s23
      %p357 = scmp.lt.s32.totalorder %s23, 3
      %p358 = pnand %p356, %p357
      %p359 = pneg %p358
      // Predicated region
      $region9: #{convmixer_forward.1} parent=5 // pred_check
        _
      $region10: #{convmixer_forward.1} parent=5 // pred_check_branch
        %361 = sbr.rel (%p358) target = $region12
      $region11: #{convmixer_forward.1} parent=5 // pred_region
        %s362 = ssub.s32 %s23, 1
        // Predicated region
        $region13: #{convmixer_forward.1} parent=11 // pred_check
          %p363 = pneg %p70
        $region14: #{convmixer_forward.1} parent=11 // pred_check_branch
          %365 = sbr.rel (%p363) target = $region16
        $region15: #{convmixer_forward.1} parent=11 // pred_region
          _
        $region16: #{convmixer_forward.1} parent=11 // pred_fallthru
          _
        // Predicated region
        $region17: #{convmixer_forward.1} parent=11 // pred_check
          %p366 = pneg %p91
        $region18: #{convmixer_forward.1} parent=11 // pred_check_branch
          %368 = sbr.rel (%p366) target = $region20
        $region19: #{convmixer_forward.1} parent=11 // pred_region
          _
        $region20: #{convmixer_forward.1} parent=11 // pred_fallthru
          _
        // Predicated region
        $region21: #{convmixer_forward.1} parent=11 // pred_check
          %p369 = pneg %p112
        $region22: #{convmixer_forward.1} parent=11 // pred_check_branch
          %371 = sbr.rel (%p369) target = $region24
        $region23: #{convmixer_forward.1} parent=11 // pred_region
          _
        $region24: #{convmixer_forward.1} parent=11 // pred_fallthru
          _
        // Predicated region
        $region25: #{convmixer_forward.1} parent=11 // pred_check
          %p372 = pneg %p133
        $region26: #{convmixer_forward.1} parent=11 // pred_check_branch
          %374 = sbr.rel (%p372) target = $region28
        $region27: #{convmixer_forward.1} parent=11 // pred_region
          _
        $region28: #{convmixer_forward.1} parent=11 // pred_fallthru
          _
        // Predicated region
        $region29: #{convmixer_forward.1} parent=11 // pred_check
          %p375 = pneg %p154
        $region30: #{convmixer_forward.1} parent=11 // pred_check_branch
          %377 = sbr.rel (%p375) target = $region32
        $region31: #{convmixer_forward.1} parent=11 // pred_region
          _
        $region32: #{convmixer_forward.1} parent=11 // pred_fallthru
          _
        // Predicated region
        $region33: #{convmixer_forward.1} parent=11 // pred_check
          %p378 = pneg %p175
        $region34: #{convmixer_forward.1} parent=11 // pred_check_branch
          %380 = sbr.rel (%p378) target = $region36
        $region35: #{convmixer_forward.1} parent=11 // pred_region
          _
        $region36: #{convmixer_forward.1} parent=11 // pred_fallthru
          _
        // Predicated region
        $region37: #{convmixer_forward.1} parent=11 // pred_check
          %p381 = pneg %p196
        $region38: #{convmixer_forward.1} parent=11 // pred_check_branch
          %383 = sbr.rel (%p381) target = $region40
        $region39: #{convmixer_forward.1} parent=11 // pred_region
          _
        $region40: #{convmixer_forward.1} parent=11 // pred_fallthru
          _
        // Predicated region
        $region41: #{convmixer_forward.1} parent=11 // pred_check
          %p384 = pneg %p217
        $region42: #{convmixer_forward.1} parent=11 // pred_check_branch
          %386 = sbr.rel (%p384) target = $region44
        $region43: #{convmixer_forward.1} parent=11 // pred_region
          _
        $region44: #{convmixer_forward.1} parent=11 // pred_fallthru
          _
        // Predicated region
        $region45: #{convmixer_forward.1} parent=11 // pred_check
          %p387 = pneg %p238
        $region46: #{convmixer_forward.1} parent=11 // pred_check_branch
          %389 = sbr.rel (%p387) target = $region48
        $region47: #{convmixer_forward.1} parent=11 // pred_region
          _
        $region48: #{convmixer_forward.1} parent=11 // pred_fallthru
          _
        // Predicated region
        $region49: #{convmixer_forward.1} parent=11 // pred_check
          %p390 = pneg %p259
        $region50: #{convmixer_forward.1} parent=11 // pred_check_branch
          %392 = sbr.rel (%p390) target = $region52
        $region51: #{convmixer_forward.1} parent=11 // pred_region
          _
        $region52: #{convmixer_forward.1} parent=11 // pred_fallthru
          _
        // Predicated region
        $region53: #{convmixer_forward.1} parent=11 // pred_check
          %p393 = pneg %p280
        $region54: #{convmixer_forward.1} parent=11 // pred_check_branch
          %395 = sbr.rel (%p393) target = $region56
        $region55: #{convmixer_forward.1} parent=11 // pred_region
          _
        $region56: #{convmixer_forward.1} parent=11 // pred_fallthru
          _
        // Predicated region
        $region57: #{convmixer_forward.1} parent=11 // pred_check
          %p396 = pneg %p301
        $region58: #{convmixer_forward.1} parent=11 // pred_check_branch
          %398 = sbr.rel (%p396) target = $region60
        $region59: #{convmixer_forward.1} parent=11 // pred_region
          _
        $region60: #{convmixer_forward.1} parent=11 // pred_fallthru
          _
        // Predicated region
        $region61: #{convmixer_forward.1} parent=11 // pred_check
          %p399 = pneg %p322
        $region62: #{convmixer_forward.1} parent=11 // pred_check_branch
          %401 = sbr.rel (%p399) target = $region64
        $region63: #{convmixer_forward.1} parent=11 // pred_region
          _
        $region64: #{convmixer_forward.1} parent=11 // pred_fallthru
          _
      $region12: #{convmixer_forward.1} parent=5 // pred_fallthru
        _
      %p402 = scmp.lt.s32.totalorder %s23, 2
      // Predicated region
      $region65: #{convmixer_forward.1} parent=5 // pred_check
        %p403 = pneg %p402
      $region66: #{convmixer_forward.1} parent=5 // pred_check_branch
        %405 = sbr.rel (%p403) target = $region68
      $region67: #{convmixer_forward.1} parent=5 // pred_region
        // Predicated region
        $region69: #{convmixer_forward.1} parent=67 // pred_check
          %p406 = pneg %p43
        $region70: #{convmixer_forward.1} parent=67 // pred_check_branch
          %408 = sbr.rel (%p406) target = $region72
        $region71: #{convmixer_forward.1} parent=67 // pred_region
          %p409 = scmp.lt.s32.totalorder %s23, 1
          %s410 = scalar_select %p409, %s23, 1
          %s411 = smul.addr %s410, 8
          %s412 = smul.addr %s411, 4
          %s413 = scalar_lea.vmem %s0, %s412
        $region72: #{convmixer_forward.1} parent=67 // pred_fallthru
          _
      $region68: #{convmixer_forward.1} parent=5 // pred_fallthru
        _
      %p414 = scmp.le.s32.totalorder 1, %s23
      %p415 = scmp.lt.s32.totalorder %s23, 3
      %p416 = pnand %p414, %p415
      %p417 = pneg %p416
      // Predicated region
      $region73: #{convmixer_forward.1} parent=5 // pred_check
        _
      $region74: #{convmixer_forward.1} parent=5 // pred_check_branch
        %419 = sbr.rel (%p416) target = $region76
      $region75: #{convmixer_forward.1} parent=5 // pred_region
        %s420 = ssub.s32 %s23, 1
        %p421 = scmp.lt.s32.totalorder %s28, 1
        %s422 = scalar_select %p421, %s28, 1
        %s423 = smul.addr %s422, 8
        %s424 = smul.addr %s423, 4
        %s425 = scalar_lea.vmem %s0, %s424
        %p426 = pneg %p49
        %p427 = pneg %p46
        %p428 = pneg %p70
        %p429 = pneg %p67
        %p430 = pneg %p91
        %p431 = pneg %p88
        %p432 = pneg %p112
        %p433 = pneg %p109
        %p434 = pneg %p133
        %p435 = pneg %p130
        %p436 = pneg %p154
        %p437 = pneg %p151
        %p438 = pneg %p175
        %p439 = pneg %p172
        %p440 = pneg %p196
        %p441 = pneg %p193
        %p442 = pneg %p217
        %p443 = pneg %p214
        %p444 = pneg %p238
        %p445 = pneg %p235
        %p446 = pneg %p259
        %p447 = pneg %p256
        %p448 = pneg %p280
        %p449 = pneg %p277
        %p450 = pneg %p301
        %p451 = pneg %p298
        %p452 = pneg %p322
        %p453 = pneg %p319
        %p454 = pneg %p348
        %p455 = pneg %p345
        %s456 = sand.u32 %s335, 1
        %s457 = scalar_lea.sflag [#allocation5], %s456
        %s458 = sand.u32 %s335, 1
        %s459 = scalar_lea.vmem [#allocation4], %s458
        %p460 = scmp.lt.s32.totalorder %s28, 1
        %s461 = scalar_select %p460, %s28, 1
        %s462 = smul.addr %s461, 8
        %s463 = smul.addr %s462, 4
        %s464 = scalar_lea.vmem %s0, %s463
        %466 = vst [vmem:[#allocation2] sm:$0xff] 0.0
        %467 = vst [vmem:[#allocation2 + $0x8] sm:$0xff] 0.0
        %468 = vst [vmem:[#allocation2 + $0x10] sm:$0xff] 0.0
        %469 = vst [vmem:[#allocation2 + $0x18] sm:$0xff] 0.0
        %470 = vst [vmem:[#allocation2 + $0x20] sm:$0xff] 0.0
        %471 = vst [vmem:[#allocation2 + $0x28] sm:$0xff] 0.0
        %472 = vst [vmem:[#allocation2 + $0xb0] sm:$0xff] 0.0
        %473 = vst [vmem:[#allocation2 + $0xb8] sm:$0xff] 0.0
        %474 = vst [vmem:[#allocation2 + $0xc0] sm:$0xff] 0.0
        %475 = vst [vmem:[#allocation2 + $0xc8] sm:$0xff] 0.0
        %476 = vst [vmem:[#allocation2 + $0xd0] sm:$0xff] 0.0
        %477 = vst [vmem:[#allocation2 + $0xd8] sm:$0xff] 0.0
        %v478 = vld [vmem:[%s2] sm:$0xff]
        %v479 = vld [vmem:[%s2 + $0x8] sm:$0xff]
        %v480 = vld [vmem:[%s464] sm:$0xf]
        %v481 = vld [vmem:[%s464 + $0x4] sm:$0xf]
        %v482 = vld [vmem:[%s464 + $0x8] sm:$0xf]
        %v483 = vld [vmem:[%s464 + $0xc] sm:$0xf]
        %v484 = vld [vmem:[%s464 + $0x10] sm:$0xf]
        %v485 = vld [vmem:[%s464 + $0x14] sm:$0xf]
        %v486 = vld [vmem:[%s464 + $0x18] sm:$0xf]
        %v487 = vld [vmem:[%s464 + $0x1c] sm:$0xf]
        %v488 = vld [vmem:[%s1] sm:$0xff]
        %v489 = vld [vmem:[%s1 + $0x8] sm:$0xff]
        %v490 = vld [vmem:[%s1 + $0x10] sm:$0xff]
        %v491 = vld [vmem:[%s1 + $0x18] sm:$0xff]
        %v492 = vld [vmem:[%s1 + $0x20] sm:$0xff]
        %v493 = vld [vmem:[%s1 + $0x28] sm:$0xff]
        %v494 = vld [vmem:[%s1 + $0x30] sm:$0xff]
        %v495 = vld [vmem:[%s1 + $0x38] sm:$0xff]
        %v496 = vld [vmem:[%s1 + $0x40] sm:$0xff]
        %v497 = vld [vmem:[%s1 + $0x48] sm:$0xff]
        %v498 = vld [vmem:[%s1 + $0x50] sm:$0xff]
        %v499 = vld [vmem:[%s1 + $0x58] sm:$0xff]
        %v500 = vld [vmem:[%s1 + $0x60] sm:$0xff]
        %v501 = vld [vmem:[%s1 + $0x68] sm:$0xff]
        %v502 = vld [vmem:[%s1 + $0x70] sm:$0xff]
        %v503 = vld [vmem:[%s1 + $0x78] sm:$0xff]
        %v504 = vlaneseq
        %v505 = vshrl.u32 %v504, 7
        %v506 = vsub.s32 0, %v505
        %v507 = vrot.slane %v478, %v506
        %v508 = vlaneseq
        %v509 = vshrl.u32 %v508, 7
        %v510 = vsub.s32 0, %v509
        %v511 = vrot.slane %v479, %v510
        %v520 = vunpack.c.l.b16 %v480
        %v521 = vunpack.c.l.b16 %v481
        %v522 = vunpack.c.l.b16 %v482
        %v523 = vunpack.c.l.b16 %v483
        %v524 = vunpack.c.l.b16 %v484
        %v525 = vunpack.c.l.b16 %v485
        %v526 = vunpack.c.l.b16 %v486
        %v527 = vunpack.c.l.b16 %v487
        %v528 = vpack.c.b16 %v521, %v520
        %v529 = vpack.c.b16 %v523, %v522
        %v530 = vpack.c.b16 %v525, %v524
        %v531 = vpack.c.b16 %v527, %v526
        %v552 = vunpack.c.l.b16 %v488
        %v553 = vunpack.c.h.b16 %v488
        %v554 = vunpack.c.l.b16 %v489
        %v555 = vunpack.c.h.b16 %v489
        %v556 = vunpack.c.l.b16 %v490
        %v557 = vunpack.c.h.b16 %v490
        %v558 = vunpack.c.l.b16 %v491
        %v559 = vunpack.c.h.b16 %v491
        %v560 = vunpack.c.l.b16 %v492
        %v561 = vunpack.c.h.b16 %v492
        %v562 = vunpack.c.l.b16 %v493
        %v563 = vunpack.c.h.b16 %v493
        %v564 = vunpack.c.l.b16 %v494
        %v565 = vunpack.c.h.b16 %v494
        %v566 = vunpack.c.l.b16 %v495
        %v567 = vunpack.c.h.b16 %v495
        %v568 = vunpack.c.l.b16 %v496
        %v569 = vunpack.c.h.b16 %v496
        %v570 = vunpack.c.l.b16 %v497
        %v571 = vunpack.c.h.b16 %v497
        %v572 = vunpack.c.l.b16 %v498
        %v573 = vunpack.c.h.b16 %v498
        %v574 = vunpack.c.l.b16 %v499
        %v575 = vunpack.c.h.b16 %v499
        %v576 = vunpack.c.l.b16 %v500
        %v577 = vunpack.c.h.b16 %v500
        %v578 = vunpack.c.l.b16 %v501
        %v579 = vunpack.c.h.b16 %v501
        %v580 = vunpack.c.l.b16 %v502
        %v581 = vunpack.c.h.b16 %v502
        %v582 = vunpack.c.l.b16 %v503
        %v583 = vunpack.c.h.b16 %v503
        %v584 = vpack.c.b16 %v554, %v552
        %v585 = vpack.c.b16 %v555, %v553
        %v586 = vpack.c.b16 %v558, %v556
        %v587 = vpack.c.b16 %v559, %v557
        %v588 = vpack.c.b16 %v562, %v560
        %v589 = vpack.c.b16 %v563, %v561
        %v590 = vpack.c.b16 %v566, %v564
        %v591 = vpack.c.b16 %v567, %v565
        %v592 = vpack.c.b16 %v570, %v568
        %v593 = vpack.c.b16 %v571, %v569
        %v594 = vpack.c.b16 %v574, %v572
        %v595 = vpack.c.b16 %v575, %v573
        %v596 = vpack.c.b16 %v578, %v576
        %v597 = vpack.c.b16 %v579, %v577
        %v598 = vpack.c.b16 %v582, %v580
        %v599 = vpack.c.b16 %v583, %v581
        %616 = vmatprep.subr.bf16.mxu0 %v585
        %617 = vmatpush1.bf16.msra.mxu0 %v584
        %618 = vmatprep.subr.bf16.mxu0 %v587
        %619 = vmatpush1.bf16.msra.mxu0 %v586
        %620 = vmatprep.subr.bf16.mxu0 %v589
        %621 = vmatpush1.bf16.msra.mxu0 %v588
        %622 = vmatprep.subr.bf16.mxu0 %v591
        %623 = vmatpush1.bf16.msra.mxu0 %v590
        %624 = vmatprep.subr.bf16.mxu0 %v593
        %625 = vmatpush1.bf16.msra.mxu0 %v592
        %626 = vmatprep.subr.bf16.mxu0 %v595
        %627 = vmatpush1.bf16.msra.mxu0 %v594
        %628 = vmatprep.subr.bf16.mxu0 %v597
        %629 = vmatpush1.bf16.msra.mxu0 %v596
        %630 = vmatprep.subr.bf16.mxu0 %v599
        %631 = vmatpush1.bf16.msra.mxu0 %v598
        %632 = vmatprep.subr.bf16.mxu0 0
        %633 = vmatpush1.bf16.msra.mxu0 0
        %634 = vmatprep.subr.bf16.mxu0 0
        %635 = vmatpush1.bf16.msra.mxu0 0
        %636 = vmatprep.subr.bf16.mxu0 0
        %637 = vmatpush1.bf16.msra.mxu0 0
        %638 = vmatprep.subr.bf16.mxu0 0
        %639 = vmatpush1.bf16.msra.mxu0 0
        %640 = vmatprep.subr.bf16.mxu0 0
        %641 = vmatpush1.bf16.msra.mxu0 0
        %642 = vmatprep.subr.bf16.mxu0 0
        %643 = vmatpush1.bf16.msra.mxu0 0
        %644 = vmatprep.subr.bf16.mxu0 0
        %645 = vmatpush1.bf16.msra.mxu0 0
        %646 = vmatprep.subr.bf16.mxu0 0
        %647 = vmatpush1.bf16.msra.mxu0 0
        %648 = vmatprep.mubr.bf16.mxu0 0
        %649 = vmatmul.mubr.bf16.gmra.mrb[0].mxu0 %v528
        %v650 = vpop.f32.mrb[0].mxu0
        %v651 = vadd.f32 %v507, %v650
        %v652 = vpop.f32.mrb[0].mxu0
        %v653 = vadd.f32 %v511, %v652
        %v654 = vpop.f32.mrb[0].mxu0
        %v655 = vadd.f32 %v507, %v654
        %v656 = vpop.f32.mrb[0].mxu0
        %v657 = vadd.f32 %v511, %v656
        %658 = vmatprep.mubr.bf16.mxu0 0
        %659 = vmatmul.mubr.bf16.gmra.mrb[0].mxu0 %v529
        %v660 = vpop.f32.mrb[0].mxu0
        %v661 = vadd.f32 %v507, %v660
        %v662 = vpop.f32.mrb[0].mxu0
        %v663 = vadd.f32 %v511, %v662
        %v664 = vpop.f32.mrb[0].mxu0
        %v665 = vadd.f32 %v507, %v664
        %v666 = vpop.f32.mrb[0].mxu0
        %v667 = vadd.f32 %v511, %v666
        %668 = vmatprep.mubr.bf16.mxu0 0
        %669 = vmatmul.mubr.bf16.gmra.mrb[0].mxu0 %v530
        %v670 = vpop.f32.mrb[0].mxu0
        %v671 = vadd.f32 %v507, %v670
        %v672 = vpop.f32.mrb[0].mxu0
        %v673 = vadd.f32 %v511, %v672
        %v674 = vpop.f32.mrb[0].mxu0
        %v675 = vadd.f32 %v507, %v674
        %v676 = vpop.f32.mrb[0].mxu0
        %v677 = vadd.f32 %v511, %v676
        %678 = vmatprep.mubr.bf16.mxu0 0
        %679 = vmatmul.mubr.bf16.gmra.mrb[0].mxu0 %v531
        %v680 = vpop.f32.mrb[0].mxu0
        %v681 = vadd.f32 %v507, %v680
        %v682 = vpop.f32.mrb[0].mxu0
        %v683 = vadd.f32 %v511, %v682
        %v684 = vpop.f32.mrb[0].mxu0
        %v685 = vadd.f32 %v507, %v684
        %v686 = vpop.f32.mrb[0].mxu0
        %v687 = vadd.f32 %v511, %v686
        %688 = vdwg.mxu0
        %v689 = vmul.f32 %v651, 0.5
        %v690 = vmul.f32 %v653, 0.5
        %v691 = vmul.f32 %v655, 0.5
        %v692 = vmul.f32 %v657, 0.5
        %v693 = vmul.f32 %v661, 0.5
        %v694 = vmul.f32 %v663, 0.5
        %v695 = vmul.f32 %v665, 0.5
        %v696 = vmul.f32 %v667, 0.5
        %v697 = vmul.f32 %v671, 0.5
        %v698 = vmul.f32 %v673, 0.5
        %v699 = vmul.f32 %v675, 0.5
        %v700 = vmul.f32 %v677, 0.5
        %v701 = vmul.f32 %v681, 0.5
        %v702 = vmul.f32 %v683, 0.5
        %v703 = vmul.f32 %v685, 0.5
        %v704 = vmul.f32 %v687, 0.5
        %v705 = vmul.f32 %v651, %v651
        %v706 = vmul.f32 %v653, %v653
        %v707 = vmul.f32 %v655, %v655
        %v708 = vmul.f32 %v657, %v657
        %v709 = vmul.f32 %v661, %v661
        %v710 = vmul.f32 %v663, %v663
        %v711 = vmul.f32 %v665, %v665
        %v712 = vmul.f32 %v667, %v667
        %v713 = vmul.f32 %v671, %v671
        %v714 = vmul.f32 %v673, %v673
        %v715 = vmul.f32 %v675, %v675
        %v716 = vmul.f32 %v677, %v677
        %v717 = vmul.f32 %v681, %v681
        %v718 = vmul.f32 %v683, %v683
        %v719 = vmul.f32 %v685, %v685
        %v720 = vmul.f32 %v687, %v687
        %v721 = vmul.f32 %v705, %v651
        %v722 = vmul.f32 %v706, %v653
        %v723 = vmul.f32 %v707, %v655
        %v724 = vmul.f32 %v708, %v657
        %v725 = vmul.f32 %v709, %v661
        %v726 = vmul.f32 %v710, %v663
        %v727 = vmul.f32 %v711, %v665
        %v728 = vmul.f32 %v712, %v667
        %v729 = vmul.f32 %v713, %v671
        %v730 = vmul.f32 %v714, %v673
        %v731 = vmul.f32 %v715, %v675
        %v732 = vmul.f32 %v716, %v677
        %v733 = vmul.f32 %v717, %v681
        %v734 = vmul.f32 %v718, %v683
        %v735 = vmul.f32 %v719, %v685
        %v736 = vmul.f32 %v720, %v687
        %v737 = vmul.f32 %v721, 0.044715
        %v738 = vmul.f32 %v722, 0.044715
        %v739 = vmul.f32 %v723, 0.044715
        %v740 = vmul.f32 %v724, 0.044715
        %v741 = vmul.f32 %v725, 0.044715
        %v742 = vmul.f32 %v726, 0.044715
        %v743 = vmul.f32 %v727, 0.044715
        %v744 = vmul.f32 %v728, 0.044715
        %v745 = vmul.f32 %v729, 0.044715
        %v746 = vmul.f32 %v730, 0.044715
        %v747 = vmul.f32 %v731, 0.044715
        %v748 = vmul.f32 %v732, 0.044715
        %v749 = vmul.f32 %v733, 0.044715
        %v750 = vmul.f32 %v734, 0.044715
        %v751 = vmul.f32 %v735, 0.044715
        %v752 = vmul.f32 %v736, 0.044715
        %v753 = vadd.f32 %v651, %v737
        %v754 = vadd.f32 %v653, %v738
        %v755 = vadd.f32 %v655, %v739
        %v756 = vadd.f32 %v657, %v740
        %v757 = vadd.f32 %v661, %v741
        %v758 = vadd.f32 %v663, %v742
        %v759 = vadd.f32 %v665, %v743
        %v760 = vadd.f32 %v667, %v744
        %v761 = vadd.f32 %v671, %v745
        %v762 = vadd.f32 %v673, %v746
        %v763 = vadd.f32 %v675, %v747
        %v764 = vadd.f32 %v677, %v748
        %v765 = vadd.f32 %v681, %v749
        %v766 = vadd.f32 %v683, %v750
        %v767 = vadd.f32 %v685, %v751
        %v768 = vadd.f32 %v687, %v752
        %v769 = vmul.f32 %v753, 0.7978846
        %v770 = vmul.f32 %v754, 0.7978846
        %v771 = vmul.f32 %v755, 0.7978846
        %v772 = vmul.f32 %v756, 0.7978846
        %v773 = vmul.f32 %v757, 0.7978846
        %v774 = vmul.f32 %v758, 0.7978846
        %v775 = vmul.f32 %v759, 0.7978846
        %v776 = vmul.f32 %v760, 0.7978846
        %v777 = vmul.f32 %v761, 0.7978846
        %v778 = vmul.f32 %v762, 0.7978846
        %v779 = vmul.f32 %v763, 0.7978846
        %v780 = vmul.f32 %v764, 0.7978846
        %v781 = vmul.f32 %v765, 0.7978846
        %v782 = vmul.f32 %v766, 0.7978846
        %v783 = vmul.f32 %v767, 0.7978846
        %v784 = vmul.f32 %v768, 0.7978846
        %v785 = vtanh.pop %v769
        %v786 = vtanh.pop %v770
        %v787 = vtanh.pop %v771
        %v788 = vtanh.pop %v772
        %v789 = vtanh.pop %v773
        %v790 = vtanh.pop %v774
        %v791 = vtanh.pop %v775
        %v792 = vtanh.pop %v776
        %v793 = vtanh.pop %v777
        %v794 = vtanh.pop %v778
        %v795 = vtanh.pop %v779
        %v796 = vtanh.pop %v780
        %v797 = vtanh.pop %v781
        %v798 = vtanh.pop %v782
        %v799 = vtanh.pop %v783
        %v800 = vtanh.pop %v784
        %v801 = vadd.f32 %v785, 1.0
        %v802 = vadd.f32 %v786, 1.0
        %v803 = vadd.f32 %v787, 1.0
        %v804 = vadd.f32 %v788, 1.0
        %v805 = vadd.f32 %v789, 1.0
        %v806 = vadd.f32 %v790, 1.0
        %v807 = vadd.f32 %v791, 1.0
        %v808 = vadd.f32 %v792, 1.0
        %v809 = vadd.f32 %v793, 1.0
        %v810 = vadd.f32 %v794, 1.0
        %v811 = vadd.f32 %v795, 1.0
        %v812 = vadd.f32 %v796, 1.0
        %v813 = vadd.f32 %v797, 1.0
        %v814 = vadd.f32 %v798, 1.0
        %v815 = vadd.f32 %v799, 1.0
        %v816 = vadd.f32 %v800, 1.0
        %v817 = vmul.f32 %v689, %v801
        %v818 = vmul.f32 %v690, %v802
        %v819 = vmul.f32 %v691, %v803
        %v820 = vmul.f32 %v692, %v804
        %v821 = vmul.f32 %v693, %v805
        %v822 = vmul.f32 %v694, %v806
        %v823 = vmul.f32 %v695, %v807
        %v824 = vmul.f32 %v696, %v808
        %v825 = vmul.f32 %v697, %v809
        %v826 = vmul.f32 %v698, %v810
        %v827 = vmul.f32 %v699, %v811
        %v828 = vmul.f32 %v700, %v812
        %v829 = vmul.f32 %v701, %v813
        %v830 = vmul.f32 %v702, %v814
        %v831 = vmul.f32 %v703, %v815
        %v832 = vmul.f32 %v704, %v816
        %v833 = vlaneseq
        %v834 = vshrl.u32 %v833, 7
        %v835 = vsub.s32 1, %v834
        %v836 = vrot.slane %v478, %v835
        %v837 = vlaneseq
        %v838 = vshrl.u32 %v837, 7
        %v839 = vsub.s32 1, %v838
        %v840 = vrot.slane %v479, %v839
        %v841 = vmul.f32 %v817, %v836
        %v842 = vmul.f32 %v818, %v840
        %v843 = vmul.f32 %v819, %v836
        %v844 = vmul.f32 %v820, %v840
        %v845 = vmul.f32 %v821, %v836
        %v846 = vmul.f32 %v822, %v840
        %v847 = vmul.f32 %v823, %v836
        %v848 = vmul.f32 %v824, %v840
        %v849 = vmul.f32 %v825, %v836
        %v850 = vmul.f32 %v826, %v840
        %v851 = vmul.f32 %v827, %v836
        %v852 = vmul.f32 %v828, %v840
        %v853 = vmul.f32 %v829, %v836
        %v854 = vmul.f32 %v830, %v840
        %v855 = vmul.f32 %v831, %v836
        %v856 = vmul.f32 %v832, %v840
        %v857 = vlaneseq
        %v858 = vshrl.u32 %v857, 7
        %v859 = vsub.s32 2, %v858
        %v860 = vrot.slane %v478, %v859
        %v861 = vlaneseq
        %v862 = vshrl.u32 %v861, 7
        %v863 = vsub.s32 2, %v862
        %v864 = vrot.slane %v479, %v863
        %v865 = vadd.f32 %v841, %v860
        %v866 = vadd.f32 %v842, %v864
        %v867 = vadd.f32 %v843, %v860
        %v868 = vadd.f32 %v844, %v864
        %v869 = vadd.f32 %v845, %v860
        %v870 = vadd.f32 %v846, %v864
        %v871 = vadd.f32 %v847, %v860
        %v872 = vadd.f32 %v848, %v864
        %v873 = vadd.f32 %v849, %v860
        %v874 = vadd.f32 %v850, %v864
        %v875 = vadd.f32 %v851, %v860
        %v876 = vadd.f32 %v852, %v864
        %v877 = vadd.f32 %v853, %v860
        %v878 = vadd.f32 %v854, %v864
        %v879 = vadd.f32 %v855, %v860
        %v880 = vadd.f32 %v856, %v864
        %881 = vst [vmem:[#allocation2 + $0x30] sm:$0xff] %v865
        %882 = vst [vmem:[#allocation2 + $0x38] sm:$0xff] %v866
        %883 = vst [vmem:[#allocation2 + $0x40] sm:$0xff] %v867
        %884 = vst [vmem:[#allocation2 + $0x48] sm:$0xff] %v868
        %885 = vst [vmem:[#allocation2 + $0x50] sm:$0xff] %v869
        %886 = vst [vmem:[#allocation2 + $0x58] sm:$0xff] %v870
        %887 = vst [vmem:[#allocation2 + $0x60] sm:$0xff] %v871
        %888 = vst [vmem:[#allocation2 + $0x68] sm:$0xff] %v872
        %889 = vst [vmem:[#allocation2 + $0x70] sm:$0xff] %v873
        %890 = vst [vmem:[#allocation2 + $0x78] sm:$0xff] %v874
        %891 = vst [vmem:[#allocation2 + $0x80] sm:$0xff] %v875
        %892 = vst [vmem:[#allocation2 + $0x88] sm:$0xff] %v876
        %893 = vst [vmem:[#allocation2 + $0x90] sm:$0xff] %v877
        %894 = vst [vmem:[#allocation2 + $0x98] sm:$0xff] %v878
        %895 = vst [vmem:[#allocation2 + $0xa0] sm:$0xff] %v879
        %896 = vst [vmem:[#allocation2 + $0xa8] sm:$0xff] %v880
        %v897 = vld [vmem:[%s5] sm:$0xff]
        %v898 = vld [vmem:[%s5 + $0x8] sm:$0xff]
        %v899 = vld [vmem:[#allocation2] sm:$0xc0]
        %v900 = vld [vmem:[#allocation2 + $0x8] sm:$0xc0]
        %v901 = vld [vmem:[#allocation2 + $0x10] sm:$0xff]
        %v902 = vld [vmem:[#allocation2 + $0x18] sm:$0xff]
        %v903 = vld [vmem:[#allocation2 + $0x20] sm:$0xff]
        %v904 = vld [vmem:[#allocation2 + $0x28] sm:$0xff]
        %v905 = vld [vmem:[#allocation2 + $0x30] sm:$0xff]
        %v906 = vld [vmem:[#allocation2 + $0x38] sm:$0xff]
        %v907 = vld [vmem:[#allocation2 + $0x40] sm:$0xff]
        %v908 = vld [vmem:[#allocation2 + $0x48] sm:$0xff]
        %v909 = vld [vmem:[#allocation2 + $0x50] sm:$0xff]
        %v910 = vld [vmem:[#allocation2 + $0x58] sm:$0xff]
        %v911 = vld [vmem:[#allocation2 + $0x60] sm:$0xff]
        %v912 = vld [vmem:[#allocation2 + $0x68] sm:$0xff]
        %v913 = vld [vmem:[#allocation2 + $0x70] sm:$0xff]
        %v914 = vld [vmem:[#allocation2 + $0x78] sm:$0xff]
        %v915 = vld [vmem:[#allocation2 + $0x80] sm:$0xff]
        %v916 = vld [vmem:[#allocation2 + $0x88] sm:$0xff]
        %v917 = vld [vmem:[#allocation2 + $0x90] sm:$0xff]
        %v918 = vld [vmem:[#allocation2 + $0x98] sm:$0xff]
        %v919 = vld [vmem:[#allocation2 + $0xa0] sm:$0xff]
        %v920 = vld [vmem:[#allocation2 + $0xa8] sm:$0xff]
        %v921 = vld [vmem:[#allocation2 + $0xb0] sm:$0xff]
        %v922 = vld [vmem:[#allocation2 + $0xb8] sm:$0xff]
        %v923 = vld [vmem:[#allocation2 + $0xc0] sm:$0x3f]
        %v924 = vld [vmem:[#allocation2 + $0xc8] sm:$0x3f]
        %v925 = vld [vmem:[%s3] sm:$0xff]
        %v926 = vld [vmem:[%s3 + $0x8] sm:$0xff]
        %v927 = vld [vmem:[%s3 + $0x10] sm:$0xff]
        %v928 = vld [vmem:[%s3 + $0x18] sm:$0xff]
        %v929 = vld [vmem:[%s3 + $0x20] sm:$0xff]
        %v930 = vld [vmem:[%s3 + $0x28] sm:$0xff]
        %v931 = vld [vmem:[%s3 + $0x30] sm:$0xff]
        %v932 = vld [vmem:[%s3 + $0x38] sm:$0xff]
        %v933 = vld [vmem:[%s3 + $0x40] sm:$0xff]
        %v934 = vld [vmem:[%s3 + $0x48] sm:$0xff]
        %v935 = vld [vmem:[%s3 + $0x50] sm:$0xff]
        %v936 = vld [vmem:[%s3 + $0x58] sm:$0xff]
        %v937 = vld [vmem:[%s3 + $0x60] sm:$0xff]
        %v938 = vld [vmem:[%s3 + $0x68] sm:$0xff]
        %v939 = vld [vmem:[%s3 + $0x70] sm:$0xff]
        %v940 = vld [vmem:[%s3 + $0x78] sm:$0xff]
        %v941 = vld [vmem:[%s3 + $0x80] sm:$0xff]
        %v942 = vld [vmem:[%s3 + $0x88] sm:$0xff]
        %v943 = vld [vmem:[%s3 + $0x90] sm:$0xff]
        %v944 = vld [vmem:[%s3 + $0x98] sm:$0xff]
        %v945 = vld [vmem:[%s3 + $0xa0] sm:$0xff]
        %v946 = vld [vmem:[%s3 + $0xa8] sm:$0xff]
        %v947 = vld [vmem:[%s3 + $0xb0] sm:$0xff]
        %v948 = vld [vmem:[%s3 + $0xb8] sm:$0xff]
        %vm973 = vcmask 1045504
        %v974 = vrot.slane %v925, 2
        %v975 = vrot.slane %v926, 2
        %v976 = vrot.slane %v927, 2
        %v977 = vsel %vm973, %v974, %v976
        %v978 = vrot.slane %v928, 2
        %v979 = vsel %vm973, %v975, %v978
        %v980 = vrot.slane %v929, 2
        %v981 = vsel %vm973, %v976, %v980
        %v982 = vrot.slane %v930, 2
        %v983 = vsel %vm973, %v978, %v982
        %v984 = vrot.slane %v931, 2
        %v985 = vsel %vm973, %v980, %v984
        %v986 = vrot.slane %v932, 2
        %v987 = vsel %vm973, %v982, %v986
        %v988 = vrot.slane %v933, 2
        %v989 = vsel %vm973, %v984, %v988
        %v990 = vrot.slane %v934, 2
        %v991 = vsel %vm973, %v986, %v990
        %v992 = vrot.slane %v935, 2
        %v993 = vsel %vm973, %v988, %v992
        %v994 = vrot.slane %v936, 2
        %v995 = vsel %vm973, %v990, %v994
        %v996 = vrot.slane %v937, 2
        %v997 = vsel %vm973, %v992, %v996
        %v998 = vrot.slane %v938, 2
        %v999 = vsel %vm973, %v994, %v998
        %v1000 = vrot.slane %v939, 2
        %v1001 = vsel %vm973, %v996, %v1000
        %v1002 = vrot.slane %v940, 2
        %v1003 = vsel %vm973, %v998, %v1002
        %v1004 = vrot.slane %v941, 2
        %v1005 = vsel %vm973, %v1000, %v1004
        %v1006 = vrot.slane %v942, 2
        %v1007 = vsel %vm973, %v1002, %v1006
        %v1008 = vrot.slane %v943, 2
        %v1009 = vsel %vm973, %v1004, %v1008
        %v1010 = vrot.slane %v944, 2
        %v1011 = vsel %vm973, %v1006, %v1010
        %v1012 = vrot.slane %v945, 2
        %v1013 = vsel %vm973, %v1008, %v1012
        %v1014 = vrot.slane %v946, 2
        %v1015 = vsel %vm973, %v1010, %v1014
        %v1016 = vrot.slane %v947, 2
        %v1017 = vsel %vm973, %v1012, %v1016
        %v1018 = vrot.slane %v948, 2
        %v1019 = vsel %vm973, %v1014, %v1018
        %v1046 = vmul.f32 %v899, %v974
        %v1047 = vmul.f32 %v900, %v975
        %v1048 = vmul.f32 %v901, %v977
        %v1049 = vmul.f32 %v902, %v979
        %v1050 = vmul.f32 %v903, %v981
        %v1051 = vmul.f32 %v904, %v983
        %v1052 = vmul.f32 %v905, %v985
        %v1053 = vmul.f32 %v906, %v987
        %v1054 = vmul.f32 %v907, %v989
        %v1055 = vmul.f32 %v908, %v991
        %v1056 = vmul.f32 %v909, %v993
        %v1057 = vmul.f32 %v910, %v995
        %v1058 = vmul.f32 %v911, %v997
        %v1059 = vmul.f32 %v912, %v999
        %v1060 = vmul.f32 %v913, %v1001
        %v1061 = vmul.f32 %v914, %v1003
        %v1062 = vmul.f32 %v915, %v1005
        %v1063 = vmul.f32 %v916, %v1007
        %v1064 = vmul.f32 %v917, %v1009
        %v1065 = vmul.f32 %v918, %v1011
        %v1066 = vmul.f32 %v919, %v1013
        %v1067 = vmul.f32 %v920, %v1015
        %v1068 = vmul.f32 %v921, %v1017
        %v1069 = vmul.f32 %v922, %v1019
        %v1070 = vmul.f32 %v923, %v1016
        %v1071 = vmul.f32 %v924, %v1018
        %v1072 = vld [vmem:[%s4] ss:$8 sm:$0x3]
        %v1074 = vlaneseq
        %v1075 = vshrl.u32 %v1074, 7
        %v1076 = vsub.s32 0, %v1075
        %v1077 = vrot.slane %v1072, %v1076
        %v1078 = vlaneseq
        %v1079 = vshrl.u32 %v1078, 7
        %v1080 = vsub.s32 1, %v1079
        %v1081 = vrot.slane %v1072, %v1080
        %v1084 = vmul.f32 %v1046, %v1077
        %v1085 = vmul.f32 %v1047, %v1081
        %v1086 = vmul.f32 %v1048, %v1077
        %v1087 = vmul.f32 %v1049, %v1081
        %v1088 = vmul.f32 %v1050, %v1077
        %v1089 = vmul.f32 %v1051, %v1081
        %v1090 = vmul.f32 %v1052, %v1077
        %v1091 = vmul.f32 %v1053, %v1081
        %v1092 = vmul.f32 %v1054, %v1077
        %v1093 = vmul.f32 %v1055, %v1081
        %v1094 = vmul.f32 %v1056, %v1077
        %v1095 = vmul.f32 %v1057, %v1081
        %v1096 = vmul.f32 %v1058, %v1077
        %v1097 = vmul.f32 %v1059, %v1081
        %v1098 = vmul.f32 %v1060, %v1077
        %v1099 = vmul.f32 %v1061, %v1081
        %v1100 = vmul.f32 %v1062, %v1077
        %v1101 = vmul.f32 %v1063, %v1081
        %v1102 = vadd.f32 %v1084, 0.0
        %v1103 = vadd.f32 %v1085, 0.0
        %v1104 = vadd.f32 %v1086, 0.0
        %v1105 = vadd.f32 %v1087, 0.0
        %v1106 = vadd.f32 %v1088, 0.0
        %v1107 = vadd.f32 %v1089, 0.0
        %v1108 = vadd.f32 %v1090, 0.0
        %v1109 = vadd.f32 %v1091, 0.0
        %v1110 = vadd.f32 %v1092, 0.0
        %v1111 = vadd.f32 %v1093, 0.0
        %v1112 = vadd.f32 %v1094, 0.0
        %v1113 = vadd.f32 %v1095, 0.0
        %v1114 = vadd.f32 %v1096, 0.0
        %v1115 = vadd.f32 %v1097, 0.0
        %v1116 = vadd.f32 %v1098, 0.0
        %v1117 = vadd.f32 %v1099, 0.0
        %v1118 = vadd.f32 %v1100, 0.0
        %v1119 = vadd.f32 %v1101, 0.0
        %s1120 = scalar_lea.vmem %s4, 5
        %v1121 = vld [vmem:[%s1120] ss:$8 sm:$0x3]
        %v1123 = vlaneseq
        %v1124 = vshrl.u32 %v1123, 7
        %v1125 = vsub.s32 0, %v1124
        %v1126 = vrot.slane %v1121, %v1125
        %v1127 = vlaneseq
        %v1128 = vshrl.u32 %v1127, 7
        %v1129 = vsub.s32 1, %v1128
        %v1130 = vrot.slane %v1121, %v1129
        %v1133 = vmul.f32 %v1048, %v1126
        %v1134 = vmul.f32 %v1049, %v1130
        %v1135 = vmul.f32 %v1050, %v1126
        %v1136 = vmul.f32 %v1051, %v1130
        %v1137 = vmul.f32 %v1052, %v1126
        %v1138 = vmul.f32 %v1053, %v1130
        %v1139 = vmul.f32 %v1054, %v1126
        %v1140 = vmul.f32 %v1055, %v1130
        %v1141 = vmul.f32 %v1056, %v1126
        %v1142 = vmul.f32 %v1057, %v1130
        %v1143 = vmul.f32 %v1058, %v1126
        %v1144 = vmul.f32 %v1059, %v1130
        %v1145 = vmul.f32 %v1060, %v1126
        %v1146 = vmul.f32 %v1061, %v1130
        %v1147 = vmul.f32 %v1062, %v1126
        %v1148 = vmul.f32 %v1063, %v1130
        %v1149 = vmul.f32 %v1064, %v1126
        %v1150 = vmul.f32 %v1065, %v1130
        %v1151 = vadd.f32 %v1102, %v1133
        %v1152 = vadd.f32 %v1103, %v1134
        %v1153 = vadd.f32 %v1104, %v1135
        %v1154 = vadd.f32 %v1105, %v1136
        %v1155 = vadd.f32 %v1106, %v1137
        %v1156 = vadd.f32 %v1107, %v1138
        %v1157 = vadd.f32 %v1108, %v1139
        %v1158 = vadd.f32 %v1109, %v1140
        %v1159 = vadd.f32 %v1110, %v1141
        %v1160 = vadd.f32 %v1111, %v1142
        %v1161 = vadd.f32 %v1112, %v1143
        %v1162 = vadd.f32 %v1113, %v1144
        %v1163 = vadd.f32 %v1114, %v1145
        %v1164 = vadd.f32 %v1115, %v1146
        %v1165 = vadd.f32 %v1116, %v1147
        %v1166 = vadd.f32 %v1117, %v1148
        %v1167 = vadd.f32 %v1118, %v1149
        %v1168 = vadd.f32 %v1119, %v1150
        %s1169 = scalar_lea.vmem %s4, 18
        %v1170 = vld [vmem:[%s1169] ss:$8 sm:$0x3]
        %v1172 = vlaneseq
        %v1173 = vshrl.u32 %v1172, 7
        %v1174 = vsub.s32 0, %v1173
        %v1175 = vrot.slane %v1170, %v1174
        %v1176 = vlaneseq
        %v1177 = vshrl.u32 %v1176, 7
        %v1178 = vsub.s32 1, %v1177
        %v1179 = vrot.slane %v1170, %v1178
        %v1182 = vmul.f32 %v1050, %v1175
        %v1183 = vmul.f32 %v1051, %v1179
        %v1184 = vmul.f32 %v1052, %v1175
        %v1185 = vmul.f32 %v1053, %v1179
        %v1186 = vmul.f32 %v1054, %v1175
        %v1187 = vmul.f32 %v1055, %v1179
        %v1188 = vmul.f32 %v1056, %v1175
        %v1189 = vmul.f32 %v1057, %v1179
        %v1190 = vmul.f32 %v1058, %v1175
        %v1191 = vmul.f32 %v1059, %v1179
        %v1192 = vmul.f32 %v1060, %v1175
        %v1193 = vmul.f32 %v1061, %v1179
        %v1194 = vmul.f32 %v1062, %v1175
        %v1195 = vmul.f32 %v1063, %v1179
        %v1196 = vmul.f32 %v1064, %v1175
        %v1197 = vmul.f32 %v1065, %v1179
        %v1198 = vmul.f32 %v1066, %v1175
        %v1199 = vmul.f32 %v1067, %v1179
        %v1200 = vadd.f32 %v1151, %v1182
        %v1201 = vadd.f32 %v1152, %v1183
        %v1202 = vadd.f32 %v1153, %v1184
        %v1203 = vadd.f32 %v1154, %v1185
        %v1204 = vadd.f32 %v1155, %v1186
        %v1205 = vadd.f32 %v1156, %v1187
        %v1206 = vadd.f32 %v1157, %v1188
        %v1207 = vadd.f32 %v1158, %v1189
        %v1208 = vadd.f32 %v1159, %v1190
        %v1209 = vadd.f32 %v1160, %v1191
        %v1210 = vadd.f32 %v1161, %v1192
        %v1211 = vadd.f32 %v1162, %v1193
        %v1212 = vadd.f32 %v1163, %v1194
        %v1213 = vadd.f32 %v1164, %v1195
        %v1214 = vadd.f32 %v1165, %v1196
        %v1215 = vadd.f32 %v1166, %v1197
        %v1216 = vadd.f32 %v1167, %v1198
        %v1217 = vadd.f32 %v1168, %v1199
        %s1218 = scalar_lea.vmem %s4, 23
        %v1219 = vld [vmem:[%s1218] ss:$8 sm:$0x3]
        %v1221 = vlaneseq
        %v1222 = vshrl.u32 %v1221, 7
        %v1223 = vsub.s32 0, %v1222
        %v1224 = vrot.slane %v1219, %v1223
        %v1225 = vlaneseq
        %v1226 = vshrl.u32 %v1225, 7
        %v1227 = vsub.s32 1, %v1226
        %v1228 = vrot.slane %v1219, %v1227
        %v1231 = vmul.f32 %v1052, %v1224
        %v1232 = vmul.f32 %v1053, %v1228
        %v1233 = vmul.f32 %v1054, %v1224
        %v1234 = vmul.f32 %v1055, %v1228
        %v1235 = vmul.f32 %v1056, %v1224
        %v1236 = vmul.f32 %v1057, %v1228
        %v1237 = vmul.f32 %v1058, %v1224
        %v1238 = vmul.f32 %v1059, %v1228
        %v1239 = vmul.f32 %v1060, %v1224
        %v1240 = vmul.f32 %v1061, %v1228
        %v1241 = vmul.f32 %v1062, %v1224
        %v1242 = vmul.f32 %v1063, %v1228
        %v1243 = vmul.f32 %v1064, %v1224
        %v1244 = vmul.f32 %v1065, %v1228
        %v1245 = vmul.f32 %v1066, %v1224
        %v1246 = vmul.f32 %v1067, %v1228
        %v1247 = vmul.f32 %v1068, %v1224
        %v1248 = vmul.f32 %v1069, %v1228
        %v1249 = vadd.f32 %v1200, %v1231
        %v1250 = vadd.f32 %v1201, %v1232
        %v1251 = vadd.f32 %v1202, %v1233
        %v1252 = vadd.f32 %v1203, %v1234
        %v1253 = vadd.f32 %v1204, %v1235
        %v1254 = vadd.f32 %v1205, %v1236
        %v1255 = vadd.f32 %v1206, %v1237
        %v1256 = vadd.f32 %v1207, %v1238
        %v1257 = vadd.f32 %v1208, %v1239
        %v1258 = vadd.f32 %v1209, %v1240
        %v1259 = vadd.f32 %v1210, %v1241
        %v1260 = vadd.f32 %v1211, %v1242
        %v1261 = vadd.f32 %v1212, %v1243
        %v1262 = vadd.f32 %v1213, %v1244
        %v1263 = vadd.f32 %v1214, %v1245
        %v1264 = vadd.f32 %v1215, %v1246
        %v1265 = vadd.f32 %v1216, %v1247
        %v1266 = vadd.f32 %v1217, %v1248
        %s1267 = scalar_lea.vmem %s4, 36
        %v1268 = vld [vmem:[%s1267] ss:$8 sm:$0x3]
        %v1270 = vlaneseq
        %v1271 = vshrl.u32 %v1270, 7
        %v1272 = vsub.s32 0, %v1271
        %v1273 = vrot.slane %v1268, %v1272
        %v1274 = vlaneseq
        %v1275 = vshrl.u32 %v1274, 7
        %v1276 = vsub.s32 1, %v1275
        %v1277 = vrot.slane %v1268, %v1276
        %v1280 = vmul.f32 %v1054, %v1273
        %v1281 = vmul.f32 %v1055, %v1277
        %v1282 = vmul.f32 %v1056, %v1273
        %v1283 = vmul.f32 %v1057, %v1277
        %v1284 = vmul.f32 %v1058, %v1273
        %v1285 = vmul.f32 %v1059, %v1277
        %v1286 = vmul.f32 %v1060, %v1273
        %v1287 = vmul.f32 %v1061, %v1277
        %v1288 = vmul.f32 %v1062, %v1273
        %v1289 = vmul.f32 %v1063, %v1277
        %v1290 = vmul.f32 %v1064, %v1273
        %v1291 = vmul.f32 %v1065, %v1277
        %v1292 = vmul.f32 %v1066, %v1273
        %v1293 = vmul.f32 %v1067, %v1277
        %v1294 = vmul.f32 %v1068, %v1273
        %v1295 = vmul.f32 %v1069, %v1277
        %v1296 = vmul.f32 %v1070, %v1273
        %v1297 = vmul.f32 %v1071, %v1277
        %v1298 = vadd.f32 %v1249, %v1280
        %v1299 = vadd.f32 %v1250, %v1281
        %v1300 = vadd.f32 %v1251, %v1282
        %v1301 = vadd.f32 %v1252, %v1283
        %v1302 = vadd.f32 %v1253, %v1284
        %v1303 = vadd.f32 %v1254, %v1285
        %v1304 = vadd.f32 %v1255, %v1286
        %v1305 = vadd.f32 %v1256, %v1287
        %v1306 = vadd.f32 %v1257, %v1288
        %v1307 = vadd.f32 %v1258, %v1289
        %v1308 = vadd.f32 %v1259, %v1290
        %v1309 = vadd.f32 %v1260, %v1291
        %v1310 = vadd.f32 %v1261, %v1292
        %v1311 = vadd.f32 %v1262, %v1293
        %v1312 = vadd.f32 %v1263, %v1294
        %v1313 = vadd.f32 %v1264, %v1295
        %v1314 = vadd.f32 %v1265, %v1296
        %v1315 = vadd.f32 %v1266, %v1297
        %v1316 = vld [vmem:[#allocation2] sm:$0x80]
        %v1317 = vld [vmem:[#allocation2 + $0x8] sm:$0x80]
        %v1318 = vld [vmem:[#allocation2 + $0xc0] sm:$0x7f]
        %v1319 = vld [vmem:[#allocation2 + $0xc8] sm:$0x7f]
        %s1320 = scalar_lea.vmem %s3, 192
        %v1321 = vld [vmem:[%s1320] sm:$0xff]
        %v1322 = vld [vmem:[%s1320 + $0x8] sm:$0xff]
        %v1323 = vld [vmem:[%s1320 + $0x10] sm:$0xff]
        %v1324 = vld [vmem:[%s1320 + $0x18] sm:$0xff]
        %v1325 = vld [vmem:[%s1320 + $0x20] sm:$0xff]
        %v1326 = vld [vmem:[%s1320 + $0x28] sm:$0xff]
        %v1327 = vld [vmem:[%s1320 + $0x30] sm:$0xff]
        %v1328 = vld [vmem:[%s1320 + $0x38] sm:$0xff]
        %v1329 = vld [vmem:[%s1320 + $0x40] sm:$0xff]
        %v1330 = vld [vmem:[%s1320 + $0x48] sm:$0xff]
        %v1331 = vld [vmem:[%s1320 + $0x50] sm:$0xff]
        %v1332 = vld [vmem:[%s1320 + $0x58] sm:$0xff]
        %v1333 = vld [vmem:[%s1320 + $0x60] sm:$0xff]
        %v1334 = vld [vmem:[%s1320 + $0x68] sm:$0xff]
        %v1335 = vld [vmem:[%s1320 + $0x70] sm:$0xff]
        %v1336 = vld [vmem:[%s1320 + $0x78] sm:$0xff]
        %v1337 = vld [vmem:[%s1320 + $0x80] sm:$0xff]
        %v1338 = vld [vmem:[%s1320 + $0x88] sm:$0xff]
        %v1339 = vld [vmem:[%s1320 + $0x90] sm:$0xff]
        %v1340 = vld [vmem:[%s1320 + $0x98] sm:$0xff]
        %v1341 = vld [vmem:[%s1320 + $0xa0] sm:$0xff]
        %v1342 = vld [vmem:[%s1320 + $0xa8] sm:$0xff]
        %v1343 = vld [vmem:[%s1320 + $0xb0] sm:$0xff]
        %v1344 = vld [vmem:[%s1320 + $0xb8] sm:$0xff]
        %vm1369 = vcmask 1046528
        %v1370 = vrot.slane %v1321, 1
        %v1371 = vrot.slane %v1322, 1
        %v1372 = vrot.slane %v1323, 1
        %v1373 = vsel %vm1369, %v1370, %v1372
        %v1374 = vrot.slane %v1324, 1
        %v1375 = vsel %vm1369, %v1371, %v1374
        %v1376 = vrot.slane %v1325, 1
        %v1377 = vsel %vm1369, %v1372, %v1376
        %v1378 = vrot.slane %v1326, 1
        %v1379 = vsel %vm1369, %v1374, %v1378
        %v1380 = vrot.slane %v1327, 1
        %v1381 = vsel %vm1369, %v1376, %v1380
        %v1382 = vrot.slane %v1328, 1
        %v1383 = vsel %vm1369, %v1378, %v1382
        %v1384 = vrot.slane %v1329, 1
        %v1385 = vsel %vm1369, %v1380, %v1384
        %v1386 = vrot.slane %v1330, 1
        %v1387 = vsel %vm1369, %v1382, %v1386
        %v1388 = vrot.slane %v1331, 1
        %v1389 = vsel %vm1369, %v1384, %v1388
        %v1390 = vrot.slane %v1332, 1
        %v1391 = vsel %vm1369, %v1386, %v1390
        %v1392 = vrot.slane %v1333, 1
        %v1393 = vsel %vm1369, %v1388, %v1392
        %v1394 = vrot.slane %v1334, 1
        %v1395 = vsel %vm1369, %v1390, %v1394
        %v1396 = vrot.slane %v1335, 1
        %v1397 = vsel %vm1369, %v1392, %v1396
        %v1398 = vrot.slane %v1336, 1
        %v1399 = vsel %vm1369, %v1394, %v1398
        %v1400 = vrot.slane %v1337, 1
        %v1401 = vsel %vm1369, %v1396, %v1400
        %v1402 = vrot.slane %v1338, 1
        %v1403 = vsel %vm1369, %v1398, %v1402
        %v1404 = vrot.slane %v1339, 1
        %v1405 = vsel %vm1369, %v1400, %v1404
        %v1406 = vrot.slane %v1340, 1
        %v1407 = vsel %vm1369, %v1402, %v1406
        %v1408 = vrot.slane %v1341, 1
        %v1409 = vsel %vm1369, %v1404, %v1408
        %v1410 = vrot.slane %v1342, 1
        %v1411 = vsel %vm1369, %v1406, %v1410
        %v1412 = vrot.slane %v1343, 1
        %v1413 = vsel %vm1369, %v1408, %v1412
        %v1414 = vrot.slane %v1344, 1
        %v1415 = vsel %vm1369, %v1410, %v1414
        %v1442 = vmul.f32 %v1316, %v1370
        %v1443 = vmul.f32 %v1317, %v1371
        %v1444 = vmul.f32 %v901, %v1373
        %v1445 = vmul.f32 %v902, %v1375
        %v1446 = vmul.f32 %v903, %v1377
        %v1447 = vmul.f32 %v904, %v1379
        %v1448 = vmul.f32 %v905, %v1381
        %v1449 = vmul.f32 %v906, %v1383
        %v1450 = vmul.f32 %v907, %v1385
        %v1451 = vmul.f32 %v908, %v1387
        %v1452 = vmul.f32 %v909, %v1389
        %v1453 = vmul.f32 %v910, %v1391
        %v1454 = vmul.f32 %v911, %v1393
        %v1455 = vmul.f32 %v912, %v1395
        %v1456 = vmul.f32 %v913, %v1397
        %v1457 = vmul.f32 %v914, %v1399
        %v1458 = vmul.f32 %v915, %v1401
        %v1459 = vmul.f32 %v916, %v1403
        %v1460 = vmul.f32 %v917, %v1405
        %v1461 = vmul.f32 %v918, %v1407
        %v1462 = vmul.f32 %v919, %v1409
        %v1463 = vmul.f32 %v920, %v1411
        %v1464 = vmul.f32 %v921, %v1413
        %v1465 = vmul.f32 %v922, %v1415
        %v1466 = vmul.f32 %v1318, %v1412
        %v1467 = vmul.f32 %v1319, %v1414
        %s1468 = scalar_lea.vmem %s4, 1
        %v1469 = vld [vmem:[%s1468] ss:$8 sm:$0x3]
        %v1471 = vlaneseq
        %v1472 = vshrl.u32 %v1471, 7
        %v1473 = vsub.s32 0, %v1472
        %v1474 = vrot.slane %v1469, %v1473
        %v1475 = vlaneseq
        %v1476 = vshrl.u32 %v1475, 7
        %v1477 = vsub.s32 1, %v1476
        %v1478 = vrot.slane %v1469, %v1477
        %v1481 = vmul.f32 %v1442, %v1474
        %v1482 = vmul.f32 %v1443, %v1478
        %v1483 = vmul.f32 %v1444, %v1474
        %v1484 = vmul.f32 %v1445, %v1478
        %v1485 = vmul.f32 %v1446, %v1474
        %v1486 = vmul.f32 %v1447, %v1478
        %v1487 = vmul.f32 %v1448, %v1474
        %v1488 = vmul.f32 %v1449, %v1478
        %v1489 = vmul.f32 %v1450, %v1474
        %v1490 = vmul.f32 %v1451, %v1478
        %v1491 = vmul.f32 %v1452, %v1474
        %v1492 = vmul.f32 %v1453, %v1478
        %v1493 = vmul.f32 %v1454, %v1474
        %v1494 = vmul.f32 %v1455, %v1478
        %v1495 = vmul.f32 %v1456, %v1474
        %v1496 = vmul.f32 %v1457, %v1478
        %v1497 = vmul.f32 %v1458, %v1474
        %v1498 = vmul.f32 %v1459, %v1478
        %v1517 = vrot.slane %v1481, 1
        %v1518 = vrot.slane %v1483, 1
        %v1519 = vsel %vm1369, %v1517, %v1518
        %v1520 = vrot.slane %v1482, 1
        %v1521 = vrot.slane %v1484, 1
        %v1522 = vsel %vm1369, %v1520, %v1521
        %v1523 = vrot.slane %v1485, 1
        %v1524 = vsel %vm1369, %v1518, %v1523
        %v1525 = vrot.slane %v1486, 1
        %v1526 = vsel %vm1369, %v1521, %v1525
        %v1527 = vrot.slane %v1487, 1
        %v1528 = vsel %vm1369, %v1523, %v1527
        %v1529 = vrot.slane %v1488, 1
        %v1530 = vsel %vm1369, %v1525, %v1529
        %v1531 = vrot.slane %v1489, 1
        %v1532 = vsel %vm1369, %v1527, %v1531
        %v1533 = vrot.slane %v1490, 1
        %v1534 = vsel %vm1369, %v1529, %v1533
        %v1535 = vrot.slane %v1491, 1
        %v1536 = vsel %vm1369, %v1531, %v1535
        %v1537 = vrot.slane %v1492, 1
        %v1538 = vsel %vm1369, %v1533, %v1537
        %v1539 = vrot.slane %v1493, 1
        %v1540 = vsel %vm1369, %v1535, %v1539
        %v1541 = vrot.slane %v1494, 1
        %v1542 = vsel %vm1369, %v1537, %v1541
        %v1543 = vrot.slane %v1495, 1
        %v1544 = vsel %vm1369, %v1539, %v1543
        %v1545 = vrot.slane %v1496, 1
        %v1546 = vsel %vm1369, %v1541, %v1545
        %v1547 = vrot.slane %v1497, 1
        %v1548 = vsel %vm1369, %v1543, %v1547
        %v1549 = vrot.slane %v1498, 1
        %v1550 = vsel %vm1369, %v1545, %v1549
        %v1569 = vadd.f32 %v1298, %v1519
        %v1570 = vadd.f32 %v1299, %v1522
        %v1571 = vadd.f32 %v1300, %v1524
        %v1572 = vadd.f32 %v1301, %v1526
        %v1573 = vadd.f32 %v1302, %v1528
        %v1574 = vadd.f32 %v1303, %v1530
        %v1575 = vadd.f32 %v1304, %v1532
        %v1576 = vadd.f32 %v1305, %v1534
        %v1577 = vadd.f32 %v1306, %v1536
        %v1578 = vadd.f32 %v1307, %v1538
        %v1579 = vadd.f32 %v1308, %v1540
        %v1580 = vadd.f32 %v1309, %v1542
        %v1581 = vadd.f32 %v1310, %v1544
        %v1582 = vadd.f32 %v1311, %v1546
        %v1583 = vadd.f32 %v1312, %v1548
        %v1584 = vadd.f32 %v1313, %v1550
        %v1585 = vadd.f32 %v1314, %v1547
        %v1586 = vadd.f32 %v1315, %v1549
        %s1587 = scalar_lea.vmem %s4, 6
        %v1588 = vld [vmem:[%s1587] ss:$8 sm:$0x3]
        %v1590 = vlaneseq
        %v1591 = vshrl.u32 %v1590, 7
        %v1592 = vsub.s32 0, %v1591
        %v1593 = vrot.slane %v1588, %v1592
        %v1594 = vlaneseq
        %v1595 = vshrl.u32 %v1594, 7
        %v1596 = vsub.s32 1, %v1595
        %v1597 = vrot.slane %v1588, %v1596
        %v1600 = vmul.f32 %v1444, %v1593
        %v1601 = vmul.f32 %v1445, %v1597
        %v1602 = vmul.f32 %v1446, %v1593
        %v1603 = vmul.f32 %v1447, %v1597
        %v1604 = vmul.f32 %v1448, %v1593
        %v1605 = vmul.f32 %v1449, %v1597
        %v1606 = vmul.f32 %v1450, %v1593
        %v1607 = vmul.f32 %v1451, %v1597
        %v1608 = vmul.f32 %v1452, %v1593
        %v1609 = vmul.f32 %v1453, %v1597
        %v1610 = vmul.f32 %v1454, %v1593
        %v1611 = vmul.f32 %v1455, %v1597
        %v1612 = vmul.f32 %v1456, %v1593
        %v1613 = vmul.f32 %v1457, %v1597
        %v1614 = vmul.f32 %v1458, %v1593
        %v1615 = vmul.f32 %v1459, %v1597
        %v1616 = vmul.f32 %v1460, %v1593
        %v1617 = vmul.f32 %v1461, %v1597
        %v1636 = vrot.slane %v1600, 1
        %v1637 = vrot.slane %v1602, 1
        %v1638 = vsel %vm1369, %v1636, %v1637
        %v1639 = vrot.slane %v1601, 1
        %v1640 = vrot.slane %v1603, 1
        %v1641 = vsel %vm1369, %v1639, %v1640
        %v1642 = vrot.slane %v1604, 1
        %v1643 = vsel %vm1369, %v1637, %v1642
        %v1644 = vrot.slane %v1605, 1
        %v1645 = vsel %vm1369, %v1640, %v1644
        %v1646 = vrot.slane %v1606, 1
        %v1647 = vsel %vm1369, %v1642, %v1646
        %v1648 = vrot.slane %v1607, 1
        %v1649 = vsel %vm1369, %v1644, %v1648
        %v1650 = vrot.slane %v1608, 1
        %v1651 = vsel %vm1369, %v1646, %v1650
        %v1652 = vrot.slane %v1609, 1
        %v1653 = vsel %vm1369, %v1648, %v1652
        %v1654 = vrot.slane %v1610, 1
        %v1655 = vsel %vm1369, %v1650, %v1654
        %v1656 = vrot.slane %v1611, 1
        %v1657 = vsel %vm1369, %v1652, %v1656
        %v1658 = vrot.slane %v1612, 1
        %v1659 = vsel %vm1369, %v1654, %v1658
        %v1660 = vrot.slane %v1613, 1
        %v1661 = vsel %vm1369, %v1656, %v1660
        %v1662 = vrot.slane %v1614, 1
        %v1663 = vsel %vm1369, %v1658, %v1662
        %v1664 = vrot.slane %v1615, 1
        %v1665 = vsel %vm1369, %v1660, %v1664
        %v1666 = vrot.slane %v1616, 1
        %v1667 = vsel %vm1369, %v1662, %v1666
        %v1668 = vrot.slane %v1617, 1
        %v1669 = vsel %vm1369, %v1664, %v1668
        %v1688 = vadd.f32 %v1569, %v1638
        %v1689 = vadd.f32 %v1570, %v1641
        %v1690 = vadd.f32 %v1571, %v1643
        %v1691 = vadd.f32 %v1572, %v1645
        %v1692 = vadd.f32 %v1573, %v1647
        %v1693 = vadd.f32 %v1574, %v1649
        %v1694 = vadd.f32 %v1575, %v1651
        %v1695 = vadd.f32 %v1576, %v1653
        %v1696 = vadd.f32 %v1577, %v1655
        %v1697 = vadd.f32 %v1578, %v1657
        %v1698 = vadd.f32 %v1579, %v1659
        %v1699 = vadd.f32 %v1580, %v1661
        %v1700 = vadd.f32 %v1581, %v1663
        %v1701 = vadd.f32 %v1582, %v1665
        %v1702 = vadd.f32 %v1583, %v1667
        %v1703 = vadd.f32 %v1584, %v1669
        %v1704 = vadd.f32 %v1585, %v1666
        %v1705 = vadd.f32 %v1586, %v1668
        %s1706 = scalar_lea.vmem %s4, 19
        %v1707 = vld [vmem:[%s1706] ss:$8 sm:$0x3]
        %v1709 = vlaneseq
        %v1710 = vshrl.u32 %v1709, 7
        %v1711 = vsub.s32 0, %v1710
        %v1712 = vrot.slane %v1707, %v1711
        %v1713 = vlaneseq
        %v1714 = vshrl.u32 %v1713, 7
        %v1715 = vsub.s32 1, %v1714
        %v1716 = vrot.slane %v1707, %v1715
        %v1719 = vmul.f32 %v1446, %v1712
        %v1720 = vmul.f32 %v1447, %v1716
        %v1721 = vmul.f32 %v1448, %v1712
        %v1722 = vmul.f32 %v1449, %v1716
        %v1723 = vmul.f32 %v1450, %v1712
        %v1724 = vmul.f32 %v1451, %v1716
        %v1725 = vmul.f32 %v1452, %v1712
        %v1726 = vmul.f32 %v1453, %v1716
        %v1727 = vmul.f32 %v1454, %v1712
        %v1728 = vmul.f32 %v1455, %v1716
        %v1729 = vmul.f32 %v1456, %v1712
        %v1730 = vmul.f32 %v1457, %v1716
        %v1731 = vmul.f32 %v1458, %v1712
        %v1732 = vmul.f32 %v1459, %v1716
        %v1733 = vmul.f32 %v1460, %v1712
        %v1734 = vmul.f32 %v1461, %v1716
        %v1735 = vmul.f32 %v1462, %v1712
        %v1736 = vmul.f32 %v1463, %v1716
        %v1755 = vrot.slane %v1719, 1
        %v1756 = vrot.slane %v1721, 1
        %v1757 = vsel %vm1369, %v1755, %v1756
        %v1758 = vrot.slane %v1720, 1
        %v1759 = vrot.slane %v1722, 1
        %v1760 = vsel %vm1369, %v1758, %v1759
        %v1761 = vrot.slane %v1723, 1
        %v1762 = vsel %vm1369, %v1756, %v1761
        %v1763 = vrot.slane %v1724, 1
        %v1764 = vsel %vm1369, %v1759, %v1763
        %v1765 = vrot.slane %v1725, 1
        %v1766 = vsel %vm1369, %v1761, %v1765
        %v1767 = vrot.slane %v1726, 1
        %v1768 = vsel %vm1369, %v1763, %v1767
        %v1769 = vrot.slane %v1727, 1
        %v1770 = vsel %vm1369, %v1765, %v1769
        %v1771 = vrot.slane %v1728, 1
        %v1772 = vsel %vm1369, %v1767, %v1771
        %v1773 = vrot.slane %v1729, 1
        %v1774 = vsel %vm1369, %v1769, %v1773
        %v1775 = vrot.slane %v1730, 1
        %v1776 = vsel %vm1369, %v1771, %v1775
        %v1777 = vrot.slane %v1731, 1
        %v1778 = vsel %vm1369, %v1773, %v1777
        %v1779 = vrot.slane %v1732, 1
        %v1780 = vsel %vm1369, %v1775, %v1779
        %v1781 = vrot.slane %v1733, 1
        %v1782 = vsel %vm1369, %v1777, %v1781
        %v1783 = vrot.slane %v1734, 1
        %v1784 = vsel %vm1369, %v1779, %v1783
        %v1785 = vrot.slane %v1735, 1
        %v1786 = vsel %vm1369, %v1781, %v1785
        %v1787 = vrot.slane %v1736, 1
        %v1788 = vsel %vm1369, %v1783, %v1787
        %v1807 = vadd.f32 %v1688, %v1757
        %v1808 = vadd.f32 %v1689, %v1760
        %v1809 = vadd.f32 %v1690, %v1762
        %v1810 = vadd.f32 %v1691, %v1764
        %v1811 = vadd.f32 %v1692, %v1766
        %v1812 = vadd.f32 %v1693, %v1768
        %v1813 = vadd.f32 %v1694, %v1770
        %v1814 = vadd.f32 %v1695, %v1772
        %v1815 = vadd.f32 %v1696, %v1774
        %v1816 = vadd.f32 %v1697, %v1776
        %v1817 = vadd.f32 %v1698, %v1778
        %v1818 = vadd.f32 %v1699, %v1780
        %v1819 = vadd.f32 %v1700, %v1782
        %v1820 = vadd.f32 %v1701, %v1784
        %v1821 = vadd.f32 %v1702, %v1786
        %v1822 = vadd.f32 %v1703, %v1788
        %v1823 = vadd.f32 %v1704, %v1785
        %v1824 = vadd.f32 %v1705, %v1787
        %s1825 = scalar_lea.vmem %s4, 32
        %v1826 = vld [vmem:[%s1825] ss:$8 sm:$0x3]
        %v1828 = vlaneseq
        %v1829 = vshrl.u32 %v1828, 7
        %v1830 = vsub.s32 0, %v1829
        %v1831 = vrot.slane %v1826, %v1830
        %v1832 = vlaneseq
        %v1833 = vshrl.u32 %v1832, 7
        %v1834 = vsub.s32 1, %v1833
        %v1835 = vrot.slane %v1826, %v1834
        %v1838 = vmul.f32 %v1448, %v1831
        %v1839 = vmul.f32 %v1449, %v1835
        %v1840 = vmul.f32 %v1450, %v1831
        %v1841 = vmul.f32 %v1451, %v1835
        %v1842 = vmul.f32 %v1452, %v1831
        %v1843 = vmul.f32 %v1453, %v1835
        %v1844 = vmul.f32 %v1454, %v1831
        %v1845 = vmul.f32 %v1455, %v1835
        %v1846 = vmul.f32 %v1456, %v1831
        %v1847 = vmul.f32 %v1457, %v1835
        %v1848 = vmul.f32 %v1458, %v1831
        %v1849 = vmul.f32 %v1459, %v1835
        %v1850 = vmul.f32 %v1460, %v1831
        %v1851 = vmul.f32 %v1461, %v1835
        %v1852 = vmul.f32 %v1462, %v1831
        %v1853 = vmul.f32 %v1463, %v1835
        %v1854 = vmul.f32 %v1464, %v1831
        %v1855 = vmul.f32 %v1465, %v1835
        %v1874 = vrot.slane %v1838, 1
        %v1875 = vrot.slane %v1840, 1
        %v1876 = vsel %vm1369, %v1874, %v1875
        %v1877 = vrot.slane %v1839, 1
        %v1878 = vrot.slane %v1841, 1
        %v1879 = vsel %vm1369, %v1877, %v1878
        %v1880 = vrot.slane %v1842, 1
        %v1881 = vsel %vm1369, %v1875, %v1880
        %v1882 = vrot.slane %v1843, 1
        %v1883 = vsel %vm1369, %v1878, %v1882
        %v1884 = vrot.slane %v1844, 1
        %v1885 = vsel %vm1369, %v1880, %v1884
        %v1886 = vrot.slane %v1845, 1
        %v1887 = vsel %vm1369, %v1882, %v1886
        %v1888 = vrot.slane %v1846, 1
        %v1889 = vsel %vm1369, %v1884, %v1888
        %v1890 = vrot.slane %v1847, 1
        %v1891 = vsel %vm1369, %v1886, %v1890
        %v1892 = vrot.slane %v1848, 1
        %v1893 = vsel %vm1369, %v1888, %v1892
        %v1894 = vrot.slane %v1849, 1
        %v1895 = vsel %vm1369, %v1890, %v1894
        %v1896 = vrot.slane %v1850, 1
        %v1897 = vsel %vm1369, %v1892, %v1896
        %v1898 = vrot.slane %v1851, 1
        %v1899 = vsel %vm1369, %v1894, %v1898
        %v1900 = vrot.slane %v1852, 1
        %v1901 = vsel %vm1369, %v1896, %v1900
        %v1902 = vrot.slane %v1853, 1
        %v1903 = vsel %vm1369, %v1898, %v1902
        %v1904 = vrot.slane %v1854, 1
        %v1905 = vsel %vm1369, %v1900, %v1904
        %v1906 = vrot.slane %v1855, 1
        %v1907 = vsel %vm1369, %v1902, %v1906
        %v1926 = vadd.f32 %v1807, %v1876
        %v1927 = vadd.f32 %v1808, %v1879
        %v1928 = vadd.f32 %v1809, %v1881
        %v1929 = vadd.f32 %v1810, %v1883
        %v1930 = vadd.f32 %v1811, %v1885
        %v1931 = vadd.f32 %v1812, %v1887
        %v1932 = vadd.f32 %v1813, %v1889
        %v1933 = vadd.f32 %v1814, %v1891
        %v1934 = vadd.f32 %v1815, %v1893
        %v1935 = vadd.f32 %v1816, %v1895
        %v1936 = vadd.f32 %v1817, %v1897
        %v1937 = vadd.f32 %v1818, %v1899
        %v1938 = vadd.f32 %v1819, %v1901
        %v1939 = vadd.f32 %v1820, %v1903
        %v1940 = vadd.f32 %v1821, %v1905
        %v1941 = vadd.f32 %v1822, %v1907
        %v1942 = vadd.f32 %v1823, %v1904
        %v1943 = vadd.f32 %v1824, %v1906
        %s1944 = scalar_lea.vmem %s4, 37
        %v1945 = vld [vmem:[%s1944] ss:$8 sm:$0x3]
        %v1947 = vlaneseq
        %v1948 = vshrl.u32 %v1947, 7
        %v1949 = vsub.s32 0, %v1948
        %v1950 = vrot.slane %v1945, %v1949
        %v1951 = vlaneseq
        %v1952 = vshrl.u32 %v1951, 7
        %v1953 = vsub.s32 1, %v1952
        %v1954 = vrot.slane %v1945, %v1953
        %v1957 = vmul.f32 %v1450, %v1950
        %v1958 = vmul.f32 %v1451, %v1954
        %v1959 = vmul.f32 %v1452, %v1950
        %v1960 = vmul.f32 %v1453, %v1954
        %v1961 = vmul.f32 %v1454, %v1950
        %v1962 = vmul.f32 %v1455, %v1954
        %v1963 = vmul.f32 %v1456, %v1950
        %v1964 = vmul.f32 %v1457, %v1954
        %v1965 = vmul.f32 %v1458, %v1950
        %v1966 = vmul.f32 %v1459, %v1954
        %v1967 = vmul.f32 %v1460, %v1950
        %v1968 = vmul.f32 %v1461, %v1954
        %v1969 = vmul.f32 %v1462, %v1950
        %v1970 = vmul.f32 %v1463, %v1954
        %v1971 = vmul.f32 %v1464, %v1950
        %v1972 = vmul.f32 %v1465, %v1954
        %v1973 = vmul.f32 %v1466, %v1950
        %v1974 = vmul.f32 %v1467, %v1954
        %v1993 = vrot.slane %v1957, 1
        %v1994 = vrot.slane %v1959, 1
        %v1995 = vsel %vm1369, %v1993, %v1994
        %v1996 = vrot.slane %v1958, 1
        %v1997 = vrot.slane %v1960, 1
        %v1998 = vsel %vm1369, %v1996, %v1997
        %v1999 = vrot.slane %v1961, 1
        %v2000 = vsel %vm1369, %v1994, %v1999
        %v2001 = vrot.slane %v1962, 1
        %v2002 = vsel %vm1369, %v1997, %v2001
        %v2003 = vrot.slane %v1963, 1
        %v2004 = vsel %vm1369, %v1999, %v2003
        %v2005 = vrot.slane %v1964, 1
        %v2006 = vsel %vm1369, %v2001, %v2005
        %v2007 = vrot.slane %v1965, 1
        %v2008 = vsel %vm1369, %v2003, %v2007
        %v2009 = vrot.slane %v1966, 1
        %v2010 = vsel %vm1369, %v2005, %v2009
        %v2011 = vrot.slane %v1967, 1
        %v2012 = vsel %vm1369, %v2007, %v2011
        %v2013 = vrot.slane %v1968, 1
        %v2014 = vsel %vm1369, %v2009, %v2013
        %v2015 = vrot.slane %v1969, 1
        %v2016 = vsel %vm1369, %v2011, %v2015
        %v2017 = vrot.slane %v1970, 1
        %v2018 = vsel %vm1369, %v2013, %v2017
        %v2019 = vrot.slane %v1971, 1
        %v2020 = vsel %vm1369, %v2015, %v2019
        %v2021 = vrot.slane %v1972, 1
        %v2022 = vsel %vm1369, %v2017, %v2021
        %v2023 = vrot.slane %v1973, 1
        %v2024 = vsel %vm1369, %v2019, %v2023
        %v2025 = vrot.slane %v1974, 1
        %v2026 = vsel %vm1369, %v2021, %v2025
        %v2045 = vadd.f32 %v1926, %v1995
        %v2046 = vadd.f32 %v1927, %v1998
        %v2047 = vadd.f32 %v1928, %v2000
        %v2048 = vadd.f32 %v1929, %v2002
        %v2049 = vadd.f32 %v1930, %v2004
        %v2050 = vadd.f32 %v1931, %v2006
        %v2051 = vadd.f32 %v1932, %v2008
        %v2052 = vadd.f32 %v1933, %v2010
        %v2053 = vadd.f32 %v1934, %v2012
        %v2054 = vadd.f32 %v1935, %v2014
        %v2055 = vadd.f32 %v1936, %v2016
        %v2056 = vadd.f32 %v1937, %v2018
        %v2057 = vadd.f32 %v1938, %v2020
        %v2058 = vadd.f32 %v1939, %v2022
        %v2059 = vadd.f32 %v1940, %v2024
        %v2060 = vadd.f32 %v1941, %v2026
        %v2061 = vadd.f32 %v1942, %v2023
        %v2062 = vadd.f32 %v1943, %v2025
        %v2063 = vld [vmem:[#allocation2 + $0xc0] sm:$0xff]
        %v2064 = vld [vmem:[#allocation2 + $0xc8] sm:$0xff]
        %s2065 = scalar_lea.vmem %s4, 2
        %v2066 = vld [vmem:[%s2065] ss:$8 sm:$0x3]
        %v2068 = vlaneseq
        %v2069 = vshrl.u32 %v2068, 7
        %v2070 = vsub.s32 0, %v2069
        %v2071 = vrot.slane %v2066, %v2070
        %v2072 = vlaneseq
        %v2073 = vshrl.u32 %v2072, 7
        %v2074 = vsub.s32 1, %v2073
        %v2075 = vrot.slane %v2066, %v2074
        %v2078 = vmul.f32 %v901, %v2071
        %v2079 = vmul.f32 %v902, %v2075
        %v2080 = vmul.f32 %v903, %v2071
        %v2081 = vmul.f32 %v904, %v2075
        %v2082 = vmul.f32 %v905, %v2071
        %v2083 = vmul.f32 %v906, %v2075
        %v2084 = vmul.f32 %v907, %v2071
        %v2085 = vmul.f32 %v908, %v2075
        %v2086 = vmul.f32 %v909, %v2071
        %v2087 = vmul.f32 %v910, %v2075
        %v2088 = vmul.f32 %v911, %v2071
        %v2089 = vmul.f32 %v912, %v2075
        %v2090 = vmul.f32 %v913, %v2071
        %v2091 = vmul.f32 %v914, %v2075
        %v2092 = vmul.f32 %v915, %v2071
        %v2093 = vmul.f32 %v916, %v2075
        %v2110 = vrot.slane %v2078, 2
        %v2111 = vrot.slane %v2079, 2
        %v2112 = vrot.slane %v2080, 2
        %v2113 = vsel %vm973, %v2110, %v2112
        %v2114 = vrot.slane %v2081, 2
        %v2115 = vsel %vm973, %v2111, %v2114
        %v2116 = vrot.slane %v2082, 2
        %v2117 = vsel %vm973, %v2112, %v2116
        %v2118 = vrot.slane %v2083, 2
        %v2119 = vsel %vm973, %v2114, %v2118
        %v2120 = vrot.slane %v2084, 2
        %v2121 = vsel %vm973, %v2116, %v2120
        %v2122 = vrot.slane %v2085, 2
        %v2123 = vsel %vm973, %v2118, %v2122
        %v2124 = vrot.slane %v2086, 2
        %v2125 = vsel %vm973, %v2120, %v2124
        %v2126 = vrot.slane %v2087, 2
        %v2127 = vsel %vm973, %v2122, %v2126
        %v2128 = vrot.slane %v2088, 2
        %v2129 = vsel %vm973, %v2124, %v2128
        %v2130 = vrot.slane %v2089, 2
        %v2131 = vsel %vm973, %v2126, %v2130
        %v2132 = vrot.slane %v2090, 2
        %v2133 = vsel %vm973, %v2128, %v2132
        %v2134 = vrot.slane %v2091, 2
        %v2135 = vsel %vm973, %v2130, %v2134
        %v2136 = vrot.slane %v2092, 2
        %v2137 = vsel %vm973, %v2132, %v2136
        %v2138 = vrot.slane %v2093, 2
        %v2139 = vsel %vm973, %v2134, %v2138
        %v2158 = vadd.f32 %v2045, %v2110
        %v2159 = vadd.f32 %v2046, %v2111
        %v2160 = vadd.f32 %v2047, %v2113
        %v2161 = vadd.f32 %v2048, %v2115
        %v2162 = vadd.f32 %v2049, %v2117
        %v2163 = vadd.f32 %v2050, %v2119
        %v2164 = vadd.f32 %v2051, %v2121
        %v2165 = vadd.f32 %v2052, %v2123
        %v2166 = vadd.f32 %v2053, %v2125
        %v2167 = vadd.f32 %v2054, %v2127
        %v2168 = vadd.f32 %v2055, %v2129
        %v2169 = vadd.f32 %v2056, %v2131
        %v2170 = vadd.f32 %v2057, %v2133
        %v2171 = vadd.f32 %v2058, %v2135
        %v2172 = vadd.f32 %v2059, %v2137
        %v2173 = vadd.f32 %v2060, %v2139
        %v2174 = vadd.f32 %v2061, %v2136
        %v2175 = vadd.f32 %v2062, %v2138
        %s2176 = scalar_lea.vmem %s4, 7
        %v2177 = vld [vmem:[%s2176] ss:$8 sm:$0x3]
        %v2179 = vlaneseq
        %v2180 = vshrl.u32 %v2179, 7
        %v2181 = vsub.s32 0, %v2180
        %v2182 = vrot.slane %v2177, %v2181
        %v2183 = vlaneseq
        %v2184 = vshrl.u32 %v2183, 7
        %v2185 = vsub.s32 1, %v2184
        %v2186 = vrot.slane %v2177, %v2185
        %v2189 = vmul.f32 %v903, %v2182
        %v2190 = vmul.f32 %v904, %v2186
        %v2191 = vmul.f32 %v905, %v2182
        %v2192 = vmul.f32 %v906, %v2186
        %v2193 = vmul.f32 %v907, %v2182
        %v2194 = vmul.f32 %v908, %v2186
        %v2195 = vmul.f32 %v909, %v2182
        %v2196 = vmul.f32 %v910, %v2186
        %v2197 = vmul.f32 %v911, %v2182
        %v2198 = vmul.f32 %v912, %v2186
        %v2199 = vmul.f32 %v913, %v2182
        %v2200 = vmul.f32 %v914, %v2186
        %v2201 = vmul.f32 %v915, %v2182
        %v2202 = vmul.f32 %v916, %v2186
        %v2203 = vmul.f32 %v917, %v2182
        %v2204 = vmul.f32 %v918, %v2186
        %v2221 = vrot.slane %v2189, 2
        %v2222 = vrot.slane %v2190, 2
        %v2223 = vrot.slane %v2191, 2
        %v2224 = vsel %vm973, %v2221, %v2223
        %v2225 = vrot.slane %v2192, 2
        %v2226 = vsel %vm973, %v2222, %v2225
        %v2227 = vrot.slane %v2193, 2
        %v2228 = vsel %vm973, %v2223, %v2227
        %v2229 = vrot.slane %v2194, 2
        %v2230 = vsel %vm973, %v2225, %v2229
        %v2231 = vrot.slane %v2195, 2
        %v2232 = vsel %vm973, %v2227, %v2231
        %v2233 = vrot.slane %v2196, 2
        %v2234 = vsel %vm973, %v2229, %v2233
        %v2235 = vrot.slane %v2197, 2
        %v2236 = vsel %vm973, %v2231, %v2235
        %v2237 = vrot.slane %v2198, 2
        %v2238 = vsel %vm973, %v2233, %v2237
        %v2239 = vrot.slane %v2199, 2
        %v2240 = vsel %vm973, %v2235, %v2239
        %v2241 = vrot.slane %v2200, 2
        %v2242 = vsel %vm973, %v2237, %v2241
        %v2243 = vrot.slane %v2201, 2
        %v2244 = vsel %vm973, %v2239, %v2243
        %v2245 = vrot.slane %v2202, 2
        %v2246 = vsel %vm973, %v2241, %v2245
        %v2247 = vrot.slane %v2203, 2
        %v2248 = vsel %vm973, %v2243, %v2247
        %v2249 = vrot.slane %v2204, 2
        %v2250 = vsel %vm973, %v2245, %v2249
        %v2269 = vadd.f32 %v2158, %v2221
        %v2270 = vadd.f32 %v2159, %v2222
        %v2271 = vadd.f32 %v2160, %v2224
        %v2272 = vadd.f32 %v2161, %v2226
        %v2273 = vadd.f32 %v2162, %v2228
        %v2274 = vadd.f32 %v2163, %v2230
        %v2275 = vadd.f32 %v2164, %v2232
        %v2276 = vadd.f32 %v2165, %v2234
        %v2277 = vadd.f32 %v2166, %v2236
        %v2278 = vadd.f32 %v2167, %v2238
        %v2279 = vadd.f32 %v2168, %v2240
        %v2280 = vadd.f32 %v2169, %v2242
        %v2281 = vadd.f32 %v2170, %v2244
        %v2282 = vadd.f32 %v2171, %v2246
        %v2283 = vadd.f32 %v2172, %v2248
        %v2284 = vadd.f32 %v2173, %v2250
        %v2285 = vadd.f32 %v2174, %v2247
        %v2286 = vadd.f32 %v2175, %v2249
        %s2287 = scalar_lea.vmem %s4, 20
        %v2288 = vld [vmem:[%s2287] ss:$8 sm:$0x3]
        %v2290 = vlaneseq
        %v2291 = vshrl.u32 %v2290, 7
        %v2292 = vsub.s32 0, %v2291
        %v2293 = vrot.slane %v2288, %v2292
        %v2294 = vlaneseq
        %v2295 = vshrl.u32 %v2294, 7
        %v2296 = vsub.s32 1, %v2295
        %v2297 = vrot.slane %v2288, %v2296
        %v2300 = vmul.f32 %v905, %v2293
        %v2301 = vmul.f32 %v906, %v2297
        %v2302 = vmul.f32 %v907, %v2293
        %v2303 = vmul.f32 %v908, %v2297
        %v2304 = vmul.f32 %v909, %v2293
        %v2305 = vmul.f32 %v910, %v2297
        %v2306 = vmul.f32 %v911, %v2293
        %v2307 = vmul.f32 %v912, %v2297
        %v2308 = vmul.f32 %v913, %v2293
        %v2309 = vmul.f32 %v914, %v2297
        %v2310 = vmul.f32 %v915, %v2293
        %v2311 = vmul.f32 %v916, %v2297
        %v2312 = vmul.f32 %v917, %v2293
        %v2313 = vmul.f32 %v918, %v2297
        %v2314 = vmul.f32 %v919, %v2293
        %v2315 = vmul.f32 %v920, %v2297
        %v2332 = vrot.slane %v2300, 2
        %v2333 = vrot.slane %v2301, 2
        %v2334 = vrot.slane %v2302, 2
        %v2335 = vsel %vm973, %v2332, %v2334
        %v2336 = vrot.slane %v2303, 2
        %v2337 = vsel %vm973, %v2333, %v2336
        %v2338 = vrot.slane %v2304, 2
        %v2339 = vsel %vm973, %v2334, %v2338
        %v2340 = vrot.slane %v2305, 2
        %v2341 = vsel %vm973, %v2336, %v2340
        %v2342 = vrot.slane %v2306, 2
        %v2343 = vsel %vm973, %v2338, %v2342
        %v2344 = vrot.slane %v2307, 2
        %v2345 = vsel %vm973, %v2340, %v2344
        %v2346 = vrot.slane %v2308, 2
        %v2347 = vsel %vm973, %v2342, %v2346
        %v2348 = vrot.slane %v2309, 2
        %v2349 = vsel %vm973, %v2344, %v2348
        %v2350 = vrot.slane %v2310, 2
        %v2351 = vsel %vm973, %v2346, %v2350
        %v2352 = vrot.slane %v2311, 2
        %v2353 = vsel %vm973, %v2348, %v2352
        %v2354 = vrot.slane %v2312, 2
        %v2355 = vsel %vm973, %v2350, %v2354
        %v2356 = vrot.slane %v2313, 2
        %v2357 = vsel %vm973, %v2352, %v2356
        %v2358 = vrot.slane %v2314, 2
        %v2359 = vsel %vm973, %v2354, %v2358
        %v2360 = vrot.slane %v2315, 2
        %v2361 = vsel %vm973, %v2356, %v2360
        %v2380 = vadd.f32 %v2269, %v2332
        %v2381 = vadd.f32 %v2270, %v2333
        %v2382 = vadd.f32 %v2271, %v2335
        %v2383 = vadd.f32 %v2272, %v2337
        %v2384 = vadd.f32 %v2273, %v2339
        %v2385 = vadd.f32 %v2274, %v2341
        %v2386 = vadd.f32 %v2275, %v2343
        %v2387 = vadd.f32 %v2276, %v2345
        %v2388 = vadd.f32 %v2277, %v2347
        %v2389 = vadd.f32 %v2278, %v2349
        %v2390 = vadd.f32 %v2279, %v2351
        %v2391 = vadd.f32 %v2280, %v2353
        %v2392 = vadd.f32 %v2281, %v2355
        %v2393 = vadd.f32 %v2282, %v2357
        %v2394 = vadd.f32 %v2283, %v2359
        %v2395 = vadd.f32 %v2284, %v2361
        %v2396 = vadd.f32 %v2285, %v2358
        %v2397 = vadd.f32 %v2286, %v2360
        %s2398 = scalar_lea.vmem %s4, 33
        %v2399 = vld [vmem:[%s2398] ss:$8 sm:$0x3]
        %v2401 = vlaneseq
        %v2402 = vshrl.u32 %v2401, 7
        %v2403 = vsub.s32 0, %v2402
        %v2404 = vrot.slane %v2399, %v2403
        %v2405 = vlaneseq
        %v2406 = vshrl.u32 %v2405, 7
        %v2407 = vsub.s32 1, %v2406
        %v2408 = vrot.slane %v2399, %v2407
        %v2411 = vmul.f32 %v907, %v2404
        %v2412 = vmul.f32 %v908, %v2408
        %v2413 = vmul.f32 %v909, %v2404
        %v2414 = vmul.f32 %v910, %v2408
        %v2415 = vmul.f32 %v911, %v2404
        %v2416 = vmul.f32 %v912, %v2408
        %v2417 = vmul.f32 %v913, %v2404
        %v2418 = vmul.f32 %v914, %v2408
        %v2419 = vmul.f32 %v915, %v2404
        %v2420 = vmul.f32 %v916, %v2408
        %v2421 = vmul.f32 %v917, %v2404
        %v2422 = vmul.f32 %v918, %v2408
        %v2423 = vmul.f32 %v919, %v2404
        %v2424 = vmul.f32 %v920, %v2408
        %v2425 = vmul.f32 %v921, %v2404
        %v2426 = vmul.f32 %v922, %v2408
        %v2443 = vrot.slane %v2411, 2
        %v2444 = vrot.slane %v2412, 2
        %v2445 = vrot.slane %v2413, 2
        %v2446 = vsel %vm973, %v2443, %v2445
        %v2447 = vrot.slane %v2414, 2
        %v2448 = vsel %vm973, %v2444, %v2447
        %v2449 = vrot.slane %v2415, 2
        %v2450 = vsel %vm973, %v2445, %v2449
        %v2451 = vrot.slane %v2416, 2
        %v2452 = vsel %vm973, %v2447, %v2451
        %v2453 = vrot.slane %v2417, 2
        %v2454 = vsel %vm973, %v2449, %v2453
        %v2455 = vrot.slane %v2418, 2
        %v2456 = vsel %vm973, %v2451, %v2455
        %v2457 = vrot.slane %v2419, 2
        %v2458 = vsel %vm973, %v2453, %v2457
        %v2459 = vrot.slane %v2420, 2
        %v2460 = vsel %vm973, %v2455, %v2459
        %v2461 = vrot.slane %v2421, 2
        %v2462 = vsel %vm973, %v2457, %v2461
        %v2463 = vrot.slane %v2422, 2
        %v2464 = vsel %vm973, %v2459, %v2463
        %v2465 = vrot.slane %v2423, 2
        %v2466 = vsel %vm973, %v2461, %v2465
        %v2467 = vrot.slane %v2424, 2
        %v2468 = vsel %vm973, %v2463, %v2467
        %v2469 = vrot.slane %v2425, 2
        %v2470 = vsel %vm973, %v2465, %v2469
        %v2471 = vrot.slane %v2426, 2
        %v2472 = vsel %vm973, %v2467, %v2471
        %v2491 = vadd.f32 %v2380, %v2443
        %v2492 = vadd.f32 %v2381, %v2444
        %v2493 = vadd.f32 %v2382, %v2446
        %v2494 = vadd.f32 %v2383, %v2448
        %v2495 = vadd.f32 %v2384, %v2450
        %v2496 = vadd.f32 %v2385, %v2452
        %v2497 = vadd.f32 %v2386, %v2454
        %v2498 = vadd.f32 %v2387, %v2456
        %v2499 = vadd.f32 %v2388, %v2458
        %v2500 = vadd.f32 %v2389, %v2460
        %v2501 = vadd.f32 %v2390, %v2462
        %v2502 = vadd.f32 %v2391, %v2464
        %v2503 = vadd.f32 %v2392, %v2466
        %v2504 = vadd.f32 %v2393, %v2468
        %v2505 = vadd.f32 %v2394, %v2470
        %v2506 = vadd.f32 %v2395, %v2472
        %v2507 = vadd.f32 %v2396, %v2469
        %v2508 = vadd.f32 %v2397, %v2471
        %s2509 = scalar_lea.vmem %s4, 38
        %v2510 = vld [vmem:[%s2509] ss:$8 sm:$0x3]
        %v2512 = vlaneseq
        %v2513 = vshrl.u32 %v2512, 7
        %v2514 = vsub.s32 0, %v2513
        %v2515 = vrot.slane %v2510, %v2514
        %v2516 = vlaneseq
        %v2517 = vshrl.u32 %v2516, 7
        %v2518 = vsub.s32 1, %v2517
        %v2519 = vrot.slane %v2510, %v2518
        %v2522 = vmul.f32 %v909, %v2515
        %v2523 = vmul.f32 %v910, %v2519
        %v2524 = vmul.f32 %v911, %v2515
        %v2525 = vmul.f32 %v912, %v2519
        %v2526 = vmul.f32 %v913, %v2515
        %v2527 = vmul.f32 %v914, %v2519
        %v2528 = vmul.f32 %v915, %v2515
        %v2529 = vmul.f32 %v916, %v2519
        %v2530 = vmul.f32 %v917, %v2515
        %v2531 = vmul.f32 %v918, %v2519
        %v2532 = vmul.f32 %v919, %v2515
        %v2533 = vmul.f32 %v920, %v2519
        %v2534 = vmul.f32 %v921, %v2515
        %v2535 = vmul.f32 %v922, %v2519
        %v2536 = vmul.f32 %v2063, %v2515
        %v2537 = vmul.f32 %v2064, %v2519
        %v2554 = vrot.slane %v2522, 2
        %v2555 = vrot.slane %v2523, 2
        %v2556 = vrot.slane %v2524, 2
        %v2557 = vsel %vm973, %v2554, %v2556
        %v2558 = vrot.slane %v2525, 2
        %v2559 = vsel %vm973, %v2555, %v2558
        %v2560 = vrot.slane %v2526, 2
        %v2561 = vsel %vm973, %v2556, %v2560
        %v2562 = vrot.slane %v2527, 2
        %v2563 = vsel %vm973, %v2558, %v2562
        %v2564 = vrot.slane %v2528, 2
        %v2565 = vsel %vm973, %v2560, %v2564
        %v2566 = vrot.slane %v2529, 2
        %v2567 = vsel %vm973, %v2562, %v2566
        %v2568 = vrot.slane %v2530, 2
        %v2569 = vsel %vm973, %v2564, %v2568
        %v2570 = vrot.slane %v2531, 2
        %v2571 = vsel %vm973, %v2566, %v2570
        %v2572 = vrot.slane %v2532, 2
        %v2573 = vsel %vm973, %v2568, %v2572
        %v2574 = vrot.slane %v2533, 2
        %v2575 = vsel %vm973, %v2570, %v2574
        %v2576 = vrot.slane %v2534, 2
        %v2577 = vsel %vm973, %v2572, %v2576
        %v2578 = vrot.slane %v2535, 2
        %v2579 = vsel %vm973, %v2574, %v2578
        %v2580 = vrot.slane %v2536, 2
        %v2581 = vsel %vm973, %v2576, %v2580
        %v2582 = vrot.slane %v2537, 2
        %v2583 = vsel %vm973, %v2578, %v2582
        %v2602 = vadd.f32 %v2491, %v2554
        %v2603 = vadd.f32 %v2492, %v2555
        %v2604 = vadd.f32 %v2493, %v2557
        %v2605 = vadd.f32 %v2494, %v2559
        %v2606 = vadd.f32 %v2495, %v2561
        %v2607 = vadd.f32 %v2496, %v2563
        %v2608 = vadd.f32 %v2497, %v2565
        %v2609 = vadd.f32 %v2498, %v2567
        %v2610 = vadd.f32 %v2499, %v2569
        %v2611 = vadd.f32 %v2500, %v2571
        %v2612 = vadd.f32 %v2501, %v2573
        %v2613 = vadd.f32 %v2502, %v2575
        %v2614 = vadd.f32 %v2503, %v2577
        %v2615 = vadd.f32 %v2504, %v2579
        %v2616 = vadd.f32 %v2505, %v2581
        %v2617 = vadd.f32 %v2506, %v2583
        %v2618 = vadd.f32 %v2507, %v2580
        %v2619 = vadd.f32 %v2508, %v2582
        %v2620 = vld [vmem:[#allocation2 + $0x10] sm:$0xfe]
        %v2621 = vld [vmem:[#allocation2 + $0x18] sm:$0xfe]
        %v2622 = vld [vmem:[#allocation2 + $0x20] sm:$0xff]
        %v2623 = vld [vmem:[#allocation2 + $0x28] sm:$0xff]
        %v2624 = vld [vmem:[#allocation2 + $0x30] sm:$0xff]
        %v2625 = vld [vmem:[#allocation2 + $0x38] sm:$0xff]
        %v2626 = vld [vmem:[#allocation2 + $0x40] sm:$0xff]
        %v2627 = vld [vmem:[#allocation2 + $0x48] sm:$0xff]
        %v2628 = vld [vmem:[#allocation2 + $0x50] sm:$0xff]
        %v2629 = vld [vmem:[#allocation2 + $0x58] sm:$0xff]
        %v2630 = vld [vmem:[#allocation2 + $0x60] sm:$0xff]
        %v2631 = vld [vmem:[#allocation2 + $0x68] sm:$0xff]
        %v2632 = vld [vmem:[#allocation2 + $0x70] sm:$0xff]
        %v2633 = vld [vmem:[#allocation2 + $0x78] sm:$0xff]
        %v2634 = vld [vmem:[#allocation2 + $0x80] sm:$0xff]
        %v2635 = vld [vmem:[#allocation2 + $0x88] sm:$0xff]
        %v2636 = vld [vmem:[#allocation2 + $0x90] sm:$0xff]
        %v2637 = vld [vmem:[#allocation2 + $0x98] sm:$0xff]
        %v2638 = vld [vmem:[#allocation2 + $0xa0] sm:$0xff]
        %v2639 = vld [vmem:[#allocation2 + $0xa8] sm:$0xff]
        %v2640 = vld [vmem:[#allocation2 + $0xb0] sm:$0xff]
        %v2641 = vld [vmem:[#allocation2 + $0xb8] sm:$0xff]
        %v2642 = vld [vmem:[#allocation2 + $0xc0] sm:$0xff]
        %v2643 = vld [vmem:[#allocation2 + $0xc8] sm:$0xff]
        %v2644 = vld [vmem:[#allocation2 + $0xd0] sm:$0x1]
        %v2645 = vld [vmem:[#allocation2 + $0xd8] sm:$0x1]
        %s2646 = scalar_lea.vmem %s3, 384
        %v2647 = vld [vmem:[%s2646] sm:$0xff]
        %v2648 = vld [vmem:[%s2646 + $0x8] sm:$0xff]
        %v2649 = vld [vmem:[%s2646 + $0x10] sm:$0xff]
        %v2650 = vld [vmem:[%s2646 + $0x18] sm:$0xff]
        %v2651 = vld [vmem:[%s2646 + $0x20] sm:$0xff]
        %v2652 = vld [vmem:[%s2646 + $0x28] sm:$0xff]
        %v2653 = vld [vmem:[%s2646 + $0x30] sm:$0xff]
        %v2654 = vld [vmem:[%s2646 + $0x38] sm:$0xff]
        %v2655 = vld [vmem:[%s2646 + $0x40] sm:$0xff]
        %v2656 = vld [vmem:[%s2646 + $0x48] sm:$0xff]
        %v2657 = vld [vmem:[%s2646 + $0x50] sm:$0xff]
        %v2658 = vld [vmem:[%s2646 + $0x58] sm:$0xff]
        %v2659 = vld [vmem:[%s2646 + $0x60] sm:$0xff]
        %v2660 = vld [vmem:[%s2646 + $0x68] sm:$0xff]
        %v2661 = vld [vmem:[%s2646 + $0x70] sm:$0xff]
        %v2662 = vld [vmem:[%s2646 + $0x78] sm:$0xff]
        %v2663 = vld [vmem:[%s2646 + $0x80] sm:$0xff]
        %v2664 = vld [vmem:[%s2646 + $0x88] sm:$0xff]
        %v2665 = vld [vmem:[%s2646 + $0x90] sm:$0xff]
        %v2666 = vld [vmem:[%s2646 + $0x98] sm:$0xff]
        %v2667 = vld [vmem:[%s2646 + $0xa0] sm:$0xff]
        %v2668 = vld [vmem:[%s2646 + $0xa8] sm:$0xff]
        %v2669 = vld [vmem:[%s2646 + $0xb0] sm:$0xff]
        %v2670 = vld [vmem:[%s2646 + $0xb8] sm:$0xff]
        %vm2695 = vcmask 1040384
        %v2696 = vrot.slane %v2647, 7
        %v2697 = vrot.slane %v2648, 7
        %v2698 = vrot.slane %v2649, 7
        %v2699 = vsel %vm2695, %v2696, %v2698
        %v2700 = vrot.slane %v2650, 7
        %v2701 = vsel %vm2695, %v2697, %v2700
        %v2702 = vrot.slane %v2651, 7
        %v2703 = vsel %vm2695, %v2698, %v2702
        %v2704 = vrot.slane %v2652, 7
        %v2705 = vsel %vm2695, %v2700, %v2704
        %v2706 = vrot.slane %v2653, 7
        %v2707 = vsel %vm2695, %v2702, %v2706
        %v2708 = vrot.slane %v2654, 7
        %v2709 = vsel %vm2695, %v2704, %v2708
        %v2710 = vrot.slane %v2655, 7
        %v2711 = vsel %vm2695, %v2706, %v2710
        %v2712 = vrot.slane %v2656, 7
        %v2713 = vsel %vm2695, %v2708, %v2712
        %v2714 = vrot.slane %v2657, 7
        %v2715 = vsel %vm2695, %v2710, %v2714
        %v2716 = vrot.slane %v2658, 7
        %v2717 = vsel %vm2695, %v2712, %v2716
        %v2718 = vrot.slane %v2659, 7
        %v2719 = vsel %vm2695, %v2714, %v2718
        %v2720 = vrot.slane %v2660, 7
        %v2721 = vsel %vm2695, %v2716, %v2720
        %v2722 = vrot.slane %v2661, 7
        %v2723 = vsel %vm2695, %v2718, %v2722
        %v2724 = vrot.slane %v2662, 7
        %v2725 = vsel %vm2695, %v2720, %v2724
        %v2726 = vrot.slane %v2663, 7
        %v2727 = vsel %vm2695, %v2722, %v2726
        %v2728 = vrot.slane %v2664, 7
        %v2729 = vsel %vm2695, %v2724, %v2728
        %v2730 = vrot.slane %v2665, 7
        %v2731 = vsel %vm2695, %v2726, %v2730
        %v2732 = vrot.slane %v2666, 7
        %v2733 = vsel %vm2695, %v2728, %v2732
        %v2734 = vrot.slane %v2667, 7
        %v2735 = vsel %vm2695, %v2730, %v2734
        %v2736 = vrot.slane %v2668, 7
        %v2737 = vsel %vm2695, %v2732, %v2736
        %v2738 = vrot.slane %v2669, 7
        %v2739 = vsel %vm2695, %v2734, %v2738
        %v2740 = vrot.slane %v2670, 7
        %v2741 = vsel %vm2695, %v2736, %v2740
        %v2768 = vmul.f32 %v2620, %v2696
        %v2769 = vmul.f32 %v2621, %v2697
        %v2770 = vmul.f32 %v2622, %v2699
        %v2771 = vmul.f32 %v2623, %v2701
        %v2772 = vmul.f32 %v2624, %v2703
        %v2773 = vmul.f32 %v2625, %v2705
        %v2774 = vmul.f32 %v2626, %v2707
        %v2775 = vmul.f32 %v2627, %v2709
        %v2776 = vmul.f32 %v2628, %v2711
        %v2777 = vmul.f32 %v2629, %v2713
        %v2778 = vmul.f32 %v2630, %v2715
        %v2779 = vmul.f32 %v2631, %v2717
        %v2780 = vmul.f32 %v2632, %v2719
        %v2781 = vmul.f32 %v2633, %v2721
        %v2782 = vmul.f32 %v2634, %v2723
        %v2783 = vmul.f32 %v2635, %v2725
        %v2784 = vmul.f32 %v2636, %v2727
        %v2785 = vmul.f32 %v2637, %v2729
        %v2786 = vmul.f32 %v2638, %v2731
        %v2787 = vmul.f32 %v2639, %v2733
        %v2788 = vmul.f32 %v2640, %v2735
        %v2789 = vmul.f32 %v2641, %v2737
        %v2790 = vmul.f32 %v2642, %v2739
        %v2791 = vmul.f32 %v2643, %v2741
        %v2792 = vmul.f32 %v2644, %v2738
        %v2793 = vmul.f32 %v2645, %v2740
        %s2794 = scalar_lea.vmem %s4, 3
        %v2795 = vld [vmem:[%s2794] ss:$8 sm:$0x3]
        %v2797 = vlaneseq
        %v2798 = vshrl.u32 %v2797, 7
        %v2799 = vsub.s32 0, %v2798
        %v2800 = vrot.slane %v2795, %v2799
        %v2801 = vlaneseq
        %v2802 = vshrl.u32 %v2801, 7
        %v2803 = vsub.s32 1, %v2802
        %v2804 = vrot.slane %v2795, %v2803
        %v2807 = vmul.f32 %v2768, %v2800
        %v2808 = vmul.f32 %v2769, %v2804
        %v2809 = vmul.f32 %v2770, %v2800
        %v2810 = vmul.f32 %v2771, %v2804
        %v2811 = vmul.f32 %v2772, %v2800
        %v2812 = vmul.f32 %v2773, %v2804
        %v2813 = vmul.f32 %v2774, %v2800
        %v2814 = vmul.f32 %v2775, %v2804
        %v2815 = vmul.f32 %v2776, %v2800
        %v2816 = vmul.f32 %v2777, %v2804
        %v2817 = vmul.f32 %v2778, %v2800
        %v2818 = vmul.f32 %v2779, %v2804
        %v2819 = vmul.f32 %v2780, %v2800
        %v2820 = vmul.f32 %v2781, %v2804
        %v2821 = vmul.f32 %v2782, %v2800
        %v2822 = vmul.f32 %v2783, %v2804
        %v2823 = vmul.f32 %v2784, %v2800
        %v2824 = vmul.f32 %v2785, %v2804
        %vm2843 = vcmask 1044480
        %v2844 = vrot.slane %v2807, 3
        %v2845 = vrot.slane %v2808, 3
        %v2846 = vrot.slane %v2809, 3
        %v2847 = vsel %vm2843, %v2844, %v2846
        %v2848 = vrot.slane %v2810, 3
        %v2849 = vsel %vm2843, %v2845, %v2848
        %v2850 = vrot.slane %v2811, 3
        %v2851 = vsel %vm2843, %v2846, %v2850
        %v2852 = vrot.slane %v2812, 3
        %v2853 = vsel %vm2843, %v2848, %v2852
        %v2854 = vrot.slane %v2813, 3
        %v2855 = vsel %vm2843, %v2850, %v2854
        %v2856 = vrot.slane %v2814, 3
        %v2857 = vsel %vm2843, %v2852, %v2856
        %v2858 = vrot.slane %v2815, 3
        %v2859 = vsel %vm2843, %v2854, %v2858
        %v2860 = vrot.slane %v2816, 3
        %v2861 = vsel %vm2843, %v2856, %v2860
        %v2862 = vrot.slane %v2817, 3
        %v2863 = vsel %vm2843, %v2858, %v2862
        %v2864 = vrot.slane %v2818, 3
        %v2865 = vsel %vm2843, %v2860, %v2864
        %v2866 = vrot.slane %v2819, 3
        %v2867 = vsel %vm2843, %v2862, %v2866
        %v2868 = vrot.slane %v2820, 3
        %v2869 = vsel %vm2843, %v2864, %v2868
        %v2870 = vrot.slane %v2821, 3
        %v2871 = vsel %vm2843, %v2866, %v2870
        %v2872 = vrot.slane %v2822, 3
        %v2873 = vsel %vm2843, %v2868, %v2872
        %v2874 = vrot.slane %v2823, 3
        %v2875 = vsel %vm2843, %v2870, %v2874
        %v2876 = vrot.slane %v2824, 3
        %v2877 = vsel %vm2843, %v2872, %v2876
        %v2896 = vadd.f32 %v2602, %v2844
        %v2897 = vadd.f32 %v2603, %v2845
        %v2898 = vadd.f32 %v2604, %v2847
        %v2899 = vadd.f32 %v2605, %v2849
        %v2900 = vadd.f32 %v2606, %v2851
        %v2901 = vadd.f32 %v2607, %v2853
        %v2902 = vadd.f32 %v2608, %v2855
        %v2903 = vadd.f32 %v2609, %v2857
        %v2904 = vadd.f32 %v2610, %v2859
        %v2905 = vadd.f32 %v2611, %v2861
        %v2906 = vadd.f32 %v2612, %v2863
        %v2907 = vadd.f32 %v2613, %v2865
        %v2908 = vadd.f32 %v2614, %v2867
        %v2909 = vadd.f32 %v2615, %v2869
        %v2910 = vadd.f32 %v2616, %v2871
        %v2911 = vadd.f32 %v2617, %v2873
        %v2912 = vadd.f32 %v2618, %v2875
        %v2913 = vadd.f32 %v2619, %v2877
        %s2914 = scalar_lea.vmem %s4, 16
        %v2915 = vld [vmem:[%s2914] ss:$8 sm:$0x3]
        %v2917 = vlaneseq
        %v2918 = vshrl.u32 %v2917, 7
        %v2919 = vsub.s32 0, %v2918
        %v2920 = vrot.slane %v2915, %v2919
        %v2921 = vlaneseq
        %v2922 = vshrl.u32 %v2921, 7
        %v2923 = vsub.s32 1, %v2922
        %v2924 = vrot.slane %v2915, %v2923
        %v2927 = vmul.f32 %v2770, %v2920
        %v2928 = vmul.f32 %v2771, %v2924
        %v2929 = vmul.f32 %v2772, %v2920
        %v2930 = vmul.f32 %v2773, %v2924
        %v2931 = vmul.f32 %v2774, %v2920
        %v2932 = vmul.f32 %v2775, %v2924
        %v2933 = vmul.f32 %v2776, %v2920
        %v2934 = vmul.f32 %v2777, %v2924
        %v2935 = vmul.f32 %v2778, %v2920
        %v2936 = vmul.f32 %v2779, %v2924
        %v2937 = vmul.f32 %v2780, %v2920
        %v2938 = vmul.f32 %v2781, %v2924
        %v2939 = vmul.f32 %v2782, %v2920
        %v2940 = vmul.f32 %v2783, %v2924
        %v2941 = vmul.f32 %v2784, %v2920
        %v2942 = vmul.f32 %v2785, %v2924
        %v2943 = vmul.f32 %v2786, %v2920
        %v2944 = vmul.f32 %v2787, %v2924
        %v2963 = vrot.slane %v2927, 3
        %v2964 = vrot.slane %v2928, 3
        %v2965 = vrot.slane %v2929, 3
        %v2966 = vsel %vm2843, %v2963, %v2965
        %v2967 = vrot.slane %v2930, 3
        %v2968 = vsel %vm2843, %v2964, %v2967
        %v2969 = vrot.slane %v2931, 3
        %v2970 = vsel %vm2843, %v2965, %v2969
        %v2971 = vrot.slane %v2932, 3
        %v2972 = vsel %vm2843, %v2967, %v2971
        %v2973 = vrot.slane %v2933, 3
        %v2974 = vsel %vm2843, %v2969, %v2973
        %v2975 = vrot.slane %v2934, 3
        %v2976 = vsel %vm2843, %v2971, %v2975
        %v2977 = vrot.slane %v2935, 3
        %v2978 = vsel %vm2843, %v2973, %v2977
        %v2979 = vrot.slane %v2936, 3
        %v2980 = vsel %vm2843, %v2975, %v2979
        %v2981 = vrot.slane %v2937, 3
        %v2982 = vsel %vm2843, %v2977, %v2981
        %v2983 = vrot.slane %v2938, 3
        %v2984 = vsel %vm2843, %v2979, %v2983
        %v2985 = vrot.slane %v2939, 3
        %v2986 = vsel %vm2843, %v2981, %v2985
        %v2987 = vrot.slane %v2940, 3
        %v2988 = vsel %vm2843, %v2983, %v2987
        %v2989 = vrot.slane %v2941, 3
        %v2990 = vsel %vm2843, %v2985, %v2989
        %v2991 = vrot.slane %v2942, 3
        %v2992 = vsel %vm2843, %v2987, %v2991
        %v2993 = vrot.slane %v2943, 3
        %v2994 = vsel %vm2843, %v2989, %v2993
        %v2995 = vrot.slane %v2944, 3
        %v2996 = vsel %vm2843, %v2991, %v2995
        %v3015 = vadd.f32 %v2896, %v2963
        %v3016 = vadd.f32 %v2897, %v2964
        %v3017 = vadd.f32 %v2898, %v2966
        %v3018 = vadd.f32 %v2899, %v2968
        %v3019 = vadd.f32 %v2900, %v2970
        %v3020 = vadd.f32 %v2901, %v2972
        %v3021 = vadd.f32 %v2902, %v2974
        %v3022 = vadd.f32 %v2903, %v2976
        %v3023 = vadd.f32 %v2904, %v2978
        %v3024 = vadd.f32 %v2905, %v2980
        %v3025 = vadd.f32 %v2906, %v2982
        %v3026 = vadd.f32 %v2907, %v2984
        %v3027 = vadd.f32 %v2908, %v2986
        %v3028 = vadd.f32 %v2909, %v2988
        %v3029 = vadd.f32 %v2910, %v2990
        %v3030 = vadd.f32 %v2911, %v2992
        %v3031 = vadd.f32 %v2912, %v2994
        %v3032 = vadd.f32 %v2913, %v2996
        %s3033 = scalar_lea.vmem %s4, 21
        %v3034 = vld [vmem:[%s3033] ss:$8 sm:$0x3]
        %v3036 = vlaneseq
        %v3037 = vshrl.u32 %v3036, 7
        %v3038 = vsub.s32 0, %v3037
        %v3039 = vrot.slane %v3034, %v3038
        %v3040 = vlaneseq
        %v3041 = vshrl.u32 %v3040, 7
        %v3042 = vsub.s32 1, %v3041
        %v3043 = vrot.slane %v3034, %v3042
        %v3046 = vmul.f32 %v2772, %v3039
        %v3047 = vmul.f32 %v2773, %v3043
        %v3048 = vmul.f32 %v2774, %v3039
        %v3049 = vmul.f32 %v2775, %v3043
        %v3050 = vmul.f32 %v2776, %v3039
        %v3051 = vmul.f32 %v2777, %v3043
        %v3052 = vmul.f32 %v2778, %v3039
        %v3053 = vmul.f32 %v2779, %v3043
        %v3054 = vmul.f32 %v2780, %v3039
        %v3055 = vmul.f32 %v2781, %v3043
        %v3056 = vmul.f32 %v2782, %v3039
        %v3057 = vmul.f32 %v2783, %v3043
        %v3058 = vmul.f32 %v2784, %v3039
        %v3059 = vmul.f32 %v2785, %v3043
        %v3060 = vmul.f32 %v2786, %v3039
        %v3061 = vmul.f32 %v2787, %v3043
        %v3062 = vmul.f32 %v2788, %v3039
        %v3063 = vmul.f32 %v2789, %v3043
        %v3082 = vrot.slane %v3046, 3
        %v3083 = vrot.slane %v3047, 3
        %v3084 = vrot.slane %v3048, 3
        %v3085 = vsel %vm2843, %v3082, %v3084
        %v3086 = vrot.slane %v3049, 3
        %v3087 = vsel %vm2843, %v3083, %v3086
        %v3088 = vrot.slane %v3050, 3
        %v3089 = vsel %vm2843, %v3084, %v3088
        %v3090 = vrot.slane %v3051, 3
        %v3091 = vsel %vm2843, %v3086, %v3090
        %v3092 = vrot.slane %v3052, 3
        %v3093 = vsel %vm2843, %v3088, %v3092
        %v3094 = vrot.slane %v3053, 3
        %v3095 = vsel %vm2843, %v3090, %v3094
        %v3096 = vrot.slane %v3054, 3
        %v3097 = vsel %vm2843, %v3092, %v3096
        %v3098 = vrot.slane %v3055, 3
        %v3099 = vsel %vm2843, %v3094, %v3098
        %v3100 = vrot.slane %v3056, 3
        %v3101 = vsel %vm2843, %v3096, %v3100
        %v3102 = vrot.slane %v3057, 3
        %v3103 = vsel %vm2843, %v3098, %v3102
        %v3104 = vrot.slane %v3058, 3
        %v3105 = vsel %vm2843, %v3100, %v3104
        %v3106 = vrot.slane %v3059, 3
        %v3107 = vsel %vm2843, %v3102, %v3106
        %v3108 = vrot.slane %v3060, 3
        %v3109 = vsel %vm2843, %v3104, %v3108
        %v3110 = vrot.slane %v3061, 3
        %v3111 = vsel %vm2843, %v3106, %v3110
        %v3112 = vrot.slane %v3062, 3
        %v3113 = vsel %vm2843, %v3108, %v3112
        %v3114 = vrot.slane %v3063, 3
        %v3115 = vsel %vm2843, %v3110, %v3114
        %v3134 = vadd.f32 %v3015, %v3082
        %v3135 = vadd.f32 %v3016, %v3083
        %v3136 = vadd.f32 %v3017, %v3085
        %v3137 = vadd.f32 %v3018, %v3087
        %v3138 = vadd.f32 %v3019, %v3089
        %v3139 = vadd.f32 %v3020, %v3091
        %v3140 = vadd.f32 %v3021, %v3093
        %v3141 = vadd.f32 %v3022, %v3095
        %v3142 = vadd.f32 %v3023, %v3097
        %v3143 = vadd.f32 %v3024, %v3099
        %v3144 = vadd.f32 %v3025, %v3101
        %v3145 = vadd.f32 %v3026, %v3103
        %v3146 = vadd.f32 %v3027, %v3105
        %v3147 = vadd.f32 %v3028, %v3107
        %v3148 = vadd.f32 %v3029, %v3109
        %v3149 = vadd.f32 %v3030, %v3111
        %v3150 = vadd.f32 %v3031, %v3113
        %v3151 = vadd.f32 %v3032, %v3115
        %s3152 = scalar_lea.vmem %s4, 34
        %v3153 = vld [vmem:[%s3152] ss:$8 sm:$0x3]
        %v3155 = vlaneseq
        %v3156 = vshrl.u32 %v3155, 7
        %v3157 = vsub.s32 0, %v3156
        %v3158 = vrot.slane %v3153, %v3157
        %v3159 = vlaneseq
        %v3160 = vshrl.u32 %v3159, 7
        %v3161 = vsub.s32 1, %v3160
        %v3162 = vrot.slane %v3153, %v3161
        %v3165 = vmul.f32 %v2774, %v3158
        %v3166 = vmul.f32 %v2775, %v3162
        %v3167 = vmul.f32 %v2776, %v3158
        %v3168 = vmul.f32 %v2777, %v3162
        %v3169 = vmul.f32 %v2778, %v3158
        %v3170 = vmul.f32 %v2779, %v3162
        %v3171 = vmul.f32 %v2780, %v3158
        %v3172 = vmul.f32 %v2781, %v3162
        %v3173 = vmul.f32 %v2782, %v3158
        %v3174 = vmul.f32 %v2783, %v3162
        %v3175 = vmul.f32 %v2784, %v3158
        %v3176 = vmul.f32 %v2785, %v3162
        %v3177 = vmul.f32 %v2786, %v3158
        %v3178 = vmul.f32 %v2787, %v3162
        %v3179 = vmul.f32 %v2788, %v3158
        %v3180 = vmul.f32 %v2789, %v3162
        %v3181 = vmul.f32 %v2790, %v3158
        %v3182 = vmul.f32 %v2791, %v3162
        %v3201 = vrot.slane %v3165, 3
        %v3202 = vrot.slane %v3166, 3
        %v3203 = vrot.slane %v3167, 3
        %v3204 = vsel %vm2843, %v3201, %v3203
        %v3205 = vrot.slane %v3168, 3
        %v3206 = vsel %vm2843, %v3202, %v3205
        %v3207 = vrot.slane %v3169, 3
        %v3208 = vsel %vm2843, %v3203, %v3207
        %v3209 = vrot.slane %v3170, 3
        %v3210 = vsel %vm2843, %v3205, %v3209
        %v3211 = vrot.slane %v3171, 3
        %v3212 = vsel %vm2843, %v3207, %v3211
        %v3213 = vrot.slane %v3172, 3
        %v3214 = vsel %vm2843, %v3209, %v3213
        %v3215 = vrot.slane %v3173, 3
        %v3216 = vsel %vm2843, %v3211, %v3215
        %v3217 = vrot.slane %v3174, 3
        %v3218 = vsel %vm2843, %v3213, %v3217
        %v3219 = vrot.slane %v3175, 3
        %v3220 = vsel %vm2843, %v3215, %v3219
        %v3221 = vrot.slane %v3176, 3
        %v3222 = vsel %vm2843, %v3217, %v3221
        %v3223 = vrot.slane %v3177, 3
        %v3224 = vsel %vm2843, %v3219, %v3223
        %v3225 = vrot.slane %v3178, 3
        %v3226 = vsel %vm2843, %v3221, %v3225
        %v3227 = vrot.slane %v3179, 3
        %v3228 = vsel %vm2843, %v3223, %v3227
        %v3229 = vrot.slane %v3180, 3
        %v3230 = vsel %vm2843, %v3225, %v3229
        %v3231 = vrot.slane %v3181, 3
        %v3232 = vsel %vm2843, %v3227, %v3231
        %v3233 = vrot.slane %v3182, 3
        %v3234 = vsel %vm2843, %v3229, %v3233
        %v3253 = vadd.f32 %v3134, %v3201
        %v3254 = vadd.f32 %v3135, %v3202
        %v3255 = vadd.f32 %v3136, %v3204
        %v3256 = vadd.f32 %v3137, %v3206
        %v3257 = vadd.f32 %v3138, %v3208
        %v3258 = vadd.f32 %v3139, %v3210
        %v3259 = vadd.f32 %v3140, %v3212
        %v3260 = vadd.f32 %v3141, %v3214
        %v3261 = vadd.f32 %v3142, %v3216
        %v3262 = vadd.f32 %v3143, %v3218
        %v3263 = vadd.f32 %v3144, %v3220
        %v3264 = vadd.f32 %v3145, %v3222
        %v3265 = vadd.f32 %v3146, %v3224
        %v3266 = vadd.f32 %v3147, %v3226
        %v3267 = vadd.f32 %v3148, %v3228
        %v3268 = vadd.f32 %v3149, %v3230
        %v3269 = vadd.f32 %v3150, %v3232
        %v3270 = vadd.f32 %v3151, %v3234
        %s3271 = scalar_lea.vmem %s4, 39
        %v3272 = vld [vmem:[%s3271] ss:$8 sm:$0x3]
        %v3274 = vlaneseq
        %v3275 = vshrl.u32 %v3274, 7
        %v3276 = vsub.s32 0, %v3275
        %v3277 = vrot.slane %v3272, %v3276
        %v3278 = vlaneseq
        %v3279 = vshrl.u32 %v3278, 7
        %v3280 = vsub.s32 1, %v3279
        %v3281 = vrot.slane %v3272, %v3280
        %v3284 = vmul.f32 %v2776, %v3277
        %v3285 = vmul.f32 %v2777, %v3281
        %v3286 = vmul.f32 %v2778, %v3277
        %v3287 = vmul.f32 %v2779, %v3281
        %v3288 = vmul.f32 %v2780, %v3277
        %v3289 = vmul.f32 %v2781, %v3281
        %v3290 = vmul.f32 %v2782, %v3277
        %v3291 = vmul.f32 %v2783, %v3281
        %v3292 = vmul.f32 %v2784, %v3277
        %v3293 = vmul.f32 %v2785, %v3281
        %v3294 = vmul.f32 %v2786, %v3277
        %v3295 = vmul.f32 %v2787, %v3281
        %v3296 = vmul.f32 %v2788, %v3277
        %v3297 = vmul.f32 %v2789, %v3281
        %v3298 = vmul.f32 %v2790, %v3277
        %v3299 = vmul.f32 %v2791, %v3281
        %v3300 = vmul.f32 %v2792, %v3277
        %v3301 = vmul.f32 %v2793, %v3281
        %v3320 = vrot.slane %v3284, 3
        %v3321 = vrot.slane %v3285, 3
        %v3322 = vrot.slane %v3286, 3
        %v3323 = vsel %vm2843, %v3320, %v3322
        %v3324 = vrot.slane %v3287, 3
        %v3325 = vsel %vm2843, %v3321, %v3324
        %v3326 = vrot.slane %v3288, 3
        %v3327 = vsel %vm2843, %v3322, %v3326
        %v3328 = vrot.slane %v3289, 3
        %v3329 = vsel %vm2843, %v3324, %v3328
        %v3330 = vrot.slane %v3290, 3
        %v3331 = vsel %vm2843, %v3326, %v3330
        %v3332 = vrot.slane %v3291, 3
        %v3333 = vsel %vm2843, %v3328, %v3332
        %v3334 = vrot.slane %v3292, 3
        %v3335 = vsel %vm2843, %v3330, %v3334
        %v3336 = vrot.slane %v3293, 3
        %v3337 = vsel %vm2843, %v3332, %v3336
        %v3338 = vrot.slane %v3294, 3
        %v3339 = vsel %vm2843, %v3334, %v3338
        %v3340 = vrot.slane %v3295, 3
        %v3341 = vsel %vm2843, %v3336, %v3340
        %v3342 = vrot.slane %v3296, 3
        %v3343 = vsel %vm2843, %v3338, %v3342
        %v3344 = vrot.slane %v3297, 3
        %v3345 = vsel %vm2843, %v3340, %v3344
        %v3346 = vrot.slane %v3298, 3
        %v3347 = vsel %vm2843, %v3342, %v3346
        %v3348 = vrot.slane %v3299, 3
        %v3349 = vsel %vm2843, %v3344, %v3348
        %v3350 = vrot.slane %v3300, 3
        %v3351 = vsel %vm2843, %v3346, %v3350
        %v3352 = vrot.slane %v3301, 3
        %v3353 = vsel %vm2843, %v3348, %v3352
        %v3372 = vadd.f32 %v3253, %v3320
        %v3373 = vadd.f32 %v3254, %v3321
        %v3374 = vadd.f32 %v3255, %v3323
        %v3375 = vadd.f32 %v3256, %v3325
        %v3376 = vadd.f32 %v3257, %v3327
        %v3377 = vadd.f32 %v3258, %v3329
        %v3378 = vadd.f32 %v3259, %v3331
        %v3379 = vadd.f32 %v3260, %v3333
        %v3380 = vadd.f32 %v3261, %v3335
        %v3381 = vadd.f32 %v3262, %v3337
        %v3382 = vadd.f32 %v3263, %v3339
        %v3383 = vadd.f32 %v3264, %v3341
        %v3384 = vadd.f32 %v3265, %v3343
        %v3385 = vadd.f32 %v3266, %v3345
        %v3386 = vadd.f32 %v3267, %v3347
        %v3387 = vadd.f32 %v3268, %v3349
        %v3388 = vadd.f32 %v3269, %v3351
        %v3389 = vadd.f32 %v3270, %v3353
        %v3390 = vld [vmem:[#allocation2 + $0x10] sm:$0xfc]
        %v3391 = vld [vmem:[#allocation2 + $0x18] sm:$0xfc]
        %v3392 = vld [vmem:[#allocation2 + $0xd0] sm:$0x3]
        %v3393 = vld [vmem:[#allocation2 + $0xd8] sm:$0x3]
        %s3394 = scalar_lea.vmem %s3, 576
        %v3395 = vld [vmem:[%s3394] sm:$0xff]
        %v3396 = vld [vmem:[%s3394 + $0x8] sm:$0xff]
        %v3397 = vld [vmem:[%s3394 + $0x10] sm:$0xff]
        %v3398 = vld [vmem:[%s3394 + $0x18] sm:$0xff]
        %v3399 = vld [vmem:[%s3394 + $0x20] sm:$0xff]
        %v3400 = vld [vmem:[%s3394 + $0x28] sm:$0xff]
        %v3401 = vld [vmem:[%s3394 + $0x30] sm:$0xff]
        %v3402 = vld [vmem:[%s3394 + $0x38] sm:$0xff]
        %v3403 = vld [vmem:[%s3394 + $0x40] sm:$0xff]
        %v3404 = vld [vmem:[%s3394 + $0x48] sm:$0xff]
        %v3405 = vld [vmem:[%s3394 + $0x50] sm:$0xff]
        %v3406 = vld [vmem:[%s3394 + $0x58] sm:$0xff]
        %v3407 = vld [vmem:[%s3394 + $0x60] sm:$0xff]
        %v3408 = vld [vmem:[%s3394 + $0x68] sm:$0xff]
        %v3409 = vld [vmem:[%s3394 + $0x70] sm:$0xff]
        %v3410 = vld [vmem:[%s3394 + $0x78] sm:$0xff]
        %v3411 = vld [vmem:[%s3394 + $0x80] sm:$0xff]
        %v3412 = vld [vmem:[%s3394 + $0x88] sm:$0xff]
        %v3413 = vld [vmem:[%s3394 + $0x90] sm:$0xff]
        %v3414 = vld [vmem:[%s3394 + $0x98] sm:$0xff]
        %v3415 = vld [vmem:[%s3394 + $0xa0] sm:$0xff]
        %v3416 = vld [vmem:[%s3394 + $0xa8] sm:$0xff]
        %v3417 = vld [vmem:[%s3394 + $0xb0] sm:$0xff]
        %v3418 = vld [vmem:[%s3394 + $0xb8] sm:$0xff]
        %vm3443 = vcmask 1041408
        %v3444 = vrot.slane %v3395, 6
        %v3445 = vrot.slane %v3396, 6
        %v3446 = vrot.slane %v3397, 6
        %v3447 = vsel %vm3443, %v3444, %v3446
        %v3448 = vrot.slane %v3398, 6
        %v3449 = vsel %vm3443, %v3445, %v3448
        %v3450 = vrot.slane %v3399, 6
        %v3451 = vsel %vm3443, %v3446, %v3450
        %v3452 = vrot.slane %v3400, 6
        %v3453 = vsel %vm3443, %v3448, %v3452
        %v3454 = vrot.slane %v3401, 6
        %v3455 = vsel %vm3443, %v3450, %v3454
        %v3456 = vrot.slane %v3402, 6
        %v3457 = vsel %vm3443, %v3452, %v3456
        %v3458 = vrot.slane %v3403, 6
        %v3459 = vsel %vm3443, %v3454, %v3458
        %v3460 = vrot.slane %v3404, 6
        %v3461 = vsel %vm3443, %v3456, %v3460
        %v3462 = vrot.slane %v3405, 6
        %v3463 = vsel %vm3443, %v3458, %v3462
        %v3464 = vrot.slane %v3406, 6
        %v3465 = vsel %vm3443, %v3460, %v3464
        %v3466 = vrot.slane %v3407, 6
        %v3467 = vsel %vm3443, %v3462, %v3466
        %v3468 = vrot.slane %v3408, 6
        %v3469 = vsel %vm3443, %v3464, %v3468
        %v3470 = vrot.slane %v3409, 6
        %v3471 = vsel %vm3443, %v3466, %v3470
        %v3472 = vrot.slane %v3410, 6
        %v3473 = vsel %vm3443, %v3468, %v3472
        %v3474 = vrot.slane %v3411, 6
        %v3475 = vsel %vm3443, %v3470, %v3474
        %v3476 = vrot.slane %v3412, 6
        %v3477 = vsel %vm3443, %v3472, %v3476
        %v3478 = vrot.slane %v3413, 6
        %v3479 = vsel %vm3443, %v3474, %v3478
        %v3480 = vrot.slane %v3414, 6
        %v3481 = vsel %vm3443, %v3476, %v3480
        %v3482 = vrot.slane %v3415, 6
        %v3483 = vsel %vm3443, %v3478, %v3482
        %v3484 = vrot.slane %v3416, 6
        %v3485 = vsel %vm3443, %v3480, %v3484
        %v3486 = vrot.slane %v3417, 6
        %v3487 = vsel %vm3443, %v3482, %v3486
        %v3488 = vrot.slane %v3418, 6
        %v3489 = vsel %vm3443, %v3484, %v3488
        %v3516 = vmul.f32 %v3390, %v3444
        %v3517 = vmul.f32 %v3391, %v3445
        %v3518 = vmul.f32 %v2622, %v3447
        %v3519 = vmul.f32 %v2623, %v3449
        %v3520 = vmul.f32 %v2624, %v3451
        %v3521 = vmul.f32 %v2625, %v3453
        %v3522 = vmul.f32 %v2626, %v3455
        %v3523 = vmul.f32 %v2627, %v3457
        %v3524 = vmul.f32 %v2628, %v3459
        %v3525 = vmul.f32 %v2629, %v3461
        %v3526 = vmul.f32 %v2630, %v3463
        %v3527 = vmul.f32 %v2631, %v3465
        %v3528 = vmul.f32 %v2632, %v3467
        %v3529 = vmul.f32 %v2633, %v3469
        %v3530 = vmul.f32 %v2634, %v3471
        %v3531 = vmul.f32 %v2635, %v3473
        %v3532 = vmul.f32 %v2636, %v3475
        %v3533 = vmul.f32 %v2637, %v3477
        %v3534 = vmul.f32 %v2638, %v3479
        %v3535 = vmul.f32 %v2639, %v3481
        %v3536 = vmul.f32 %v2640, %v3483
        %v3537 = vmul.f32 %v2641, %v3485
        %v3538 = vmul.f32 %v2642, %v3487
        %v3539 = vmul.f32 %v2643, %v3489
        %v3540 = vmul.f32 %v3392, %v3486
        %v3541 = vmul.f32 %v3393, %v3488
        %s3542 = scalar_lea.vmem %s4, 4
        %v3543 = vld [vmem:[%s3542] ss:$8 sm:$0x3]
        %v3545 = vlaneseq
        %v3546 = vshrl.u32 %v3545, 7
        %v3547 = vsub.s32 0, %v3546
        %v3548 = vrot.slane %v3543, %v3547
        %v3549 = vlaneseq
        %v3550 = vshrl.u32 %v3549, 7
        %v3551 = vsub.s32 1, %v3550
        %v3552 = vrot.slane %v3543, %v3551
        %v3555 = vmul.f32 %v3516, %v3548
        %v3556 = vmul.f32 %v3517, %v3552
        %v3557 = vmul.f32 %v3518, %v3548
        %v3558 = vmul.f32 %v3519, %v3552
        %v3559 = vmul.f32 %v3520, %v3548
        %v3560 = vmul.f32 %v3521, %v3552
        %v3561 = vmul.f32 %v3522, %v3548
        %v3562 = vmul.f32 %v3523, %v3552
        %v3563 = vmul.f32 %v3524, %v3548
        %v3564 = vmul.f32 %v3525, %v3552
        %v3565 = vmul.f32 %v3526, %v3548
        %v3566 = vmul.f32 %v3527, %v3552
        %v3567 = vmul.f32 %v3528, %v3548
        %v3568 = vmul.f32 %v3529, %v3552
        %v3569 = vmul.f32 %v3530, %v3548
        %v3570 = vmul.f32 %v3531, %v3552
        %v3571 = vmul.f32 %v3532, %v3548
        %v3572 = vmul.f32 %v3533, %v3552
        %vm3591 = vcmask 1043456
        %v3592 = vrot.slane %v3555, 4
        %v3593 = vrot.slane %v3556, 4
        %v3594 = vrot.slane %v3557, 4
        %v3595 = vsel %vm3591, %v3592, %v3594
        %v3596 = vrot.slane %v3558, 4
        %v3597 = vsel %vm3591, %v3593, %v3596
        %v3598 = vrot.slane %v3559, 4
        %v3599 = vsel %vm3591, %v3594, %v3598
        %v3600 = vrot.slane %v3560, 4
        %v3601 = vsel %vm3591, %v3596, %v3600
        %v3602 = vrot.slane %v3561, 4
        %v3603 = vsel %vm3591, %v3598, %v3602
        %v3604 = vrot.slane %v3562, 4
        %v3605 = vsel %vm3591, %v3600, %v3604
        %v3606 = vrot.slane %v3563, 4
        %v3607 = vsel %vm3591, %v3602, %v3606
        %v3608 = vrot.slane %v3564, 4
        %v3609 = vsel %vm3591, %v3604, %v3608
        %v3610 = vrot.slane %v3565, 4
        %v3611 = vsel %vm3591, %v3606, %v3610
        %v3612 = vrot.slane %v3566, 4
        %v3613 = vsel %vm3591, %v3608, %v3612
        %v3614 = vrot.slane %v3567, 4
        %v3615 = vsel %vm3591, %v3610, %v3614
        %v3616 = vrot.slane %v3568, 4
        %v3617 = vsel %vm3591, %v3612, %v3616
        %v3618 = vrot.slane %v3569, 4
        %v3619 = vsel %vm3591, %v3614, %v3618
        %v3620 = vrot.slane %v3570, 4
        %v3621 = vsel %vm3591, %v3616, %v3620
        %v3622 = vrot.slane %v3571, 4
        %v3623 = vsel %vm3591, %v3618, %v3622
        %v3624 = vrot.slane %v3572, 4
        %v3625 = vsel %vm3591, %v3620, %v3624
        %v3644 = vadd.f32 %v3372, %v3592
        %v3645 = vadd.f32 %v3373, %v3593
        %v3646 = vadd.f32 %v3374, %v3595
        %v3647 = vadd.f32 %v3375, %v3597
        %v3648 = vadd.f32 %v3376, %v3599
        %v3649 = vadd.f32 %v3377, %v3601
        %v3650 = vadd.f32 %v3378, %v3603
        %v3651 = vadd.f32 %v3379, %v3605
        %v3652 = vadd.f32 %v3380, %v3607
        %v3653 = vadd.f32 %v3381, %v3609
        %v3654 = vadd.f32 %v3382, %v3611
        %v3655 = vadd.f32 %v3383, %v3613
        %v3656 = vadd.f32 %v3384, %v3615
        %v3657 = vadd.f32 %v3385, %v3617
        %v3658 = vadd.f32 %v3386, %v3619
        %v3659 = vadd.f32 %v3387, %v3621
        %v3660 = vadd.f32 %v3388, %v3623
        %v3661 = vadd.f32 %v3389, %v3625
        %s3662 = scalar_lea.vmem %s4, 17
        %v3663 = vld [vmem:[%s3662] ss:$8 sm:$0x3]
        %v3665 = vlaneseq
        %v3666 = vshrl.u32 %v3665, 7
        %v3667 = vsub.s32 0, %v3666
        %v3668 = vrot.slane %v3663, %v3667
        %v3669 = vlaneseq
        %v3670 = vshrl.u32 %v3669, 7
        %v3671 = vsub.s32 1, %v3670
        %v3672 = vrot.slane %v3663, %v3671
        %v3675 = vmul.f32 %v3518, %v3668
        %v3676 = vmul.f32 %v3519, %v3672
        %v3677 = vmul.f32 %v3520, %v3668
        %v3678 = vmul.f32 %v3521, %v3672
        %v3679 = vmul.f32 %v3522, %v3668
        %v3680 = vmul.f32 %v3523, %v3672
        %v3681 = vmul.f32 %v3524, %v3668
        %v3682 = vmul.f32 %v3525, %v3672
        %v3683 = vmul.f32 %v3526, %v3668
        %v3684 = vmul.f32 %v3527, %v3672
        %v3685 = vmul.f32 %v3528, %v3668
        %v3686 = vmul.f32 %v3529, %v3672
        %v3687 = vmul.f32 %v3530, %v3668
        %v3688 = vmul.f32 %v3531, %v3672
        %v3689 = vmul.f32 %v3532, %v3668
        %v3690 = vmul.f32 %v3533, %v3672
        %v3691 = vmul.f32 %v3534, %v3668
        %v3692 = vmul.f32 %v3535, %v3672
        %v3711 = vrot.slane %v3675, 4
        %v3712 = vrot.slane %v3676, 4
        %v3713 = vrot.slane %v3677, 4
        %v3714 = vsel %vm3591, %v3711, %v3713
        %v3715 = vrot.slane %v3678, 4
        %v3716 = vsel %vm3591, %v3712, %v3715
        %v3717 = vrot.slane %v3679, 4
        %v3718 = vsel %vm3591, %v3713, %v3717
        %v3719 = vrot.slane %v3680, 4
        %v3720 = vsel %vm3591, %v3715, %v3719
        %v3721 = vrot.slane %v3681, 4
        %v3722 = vsel %vm3591, %v3717, %v3721
        %v3723 = vrot.slane %v3682, 4
        %v3724 = vsel %vm3591, %v3719, %v3723
        %v3725 = vrot.slane %v3683, 4
        %v3726 = vsel %vm3591, %v3721, %v3725
        %v3727 = vrot.slane %v3684, 4
        %v3728 = vsel %vm3591, %v3723, %v3727
        %v3729 = vrot.slane %v3685, 4
        %v3730 = vsel %vm3591, %v3725, %v3729
        %v3731 = vrot.slane %v3686, 4
        %v3732 = vsel %vm3591, %v3727, %v3731
        %v3733 = vrot.slane %v3687, 4
        %v3734 = vsel %vm3591, %v3729, %v3733
        %v3735 = vrot.slane %v3688, 4
        %v3736 = vsel %vm3591, %v3731, %v3735
        %v3737 = vrot.slane %v3689, 4
        %v3738 = vsel %vm3591, %v3733, %v3737
        %v3739 = vrot.slane %v3690, 4
        %v3740 = vsel %vm3591, %v3735, %v3739
        %v3741 = vrot.slane %v3691, 4
        %v3742 = vsel %vm3591, %v3737, %v3741
        %v3743 = vrot.slane %v3692, 4
        %v3744 = vsel %vm3591, %v3739, %v3743
        %v3763 = vadd.f32 %v3644, %v3711
        %v3764 = vadd.f32 %v3645, %v3712
        %v3765 = vadd.f32 %v3646, %v3714
        %v3766 = vadd.f32 %v3647, %v3716
        %v3767 = vadd.f32 %v3648, %v3718
        %v3768 = vadd.f32 %v3649, %v3720
        %v3769 = vadd.f32 %v3650, %v3722
        %v3770 = vadd.f32 %v3651, %v3724
        %v3771 = vadd.f32 %v3652, %v3726
        %v3772 = vadd.f32 %v3653, %v3728
        %v3773 = vadd.f32 %v3654, %v3730
        %v3774 = vadd.f32 %v3655, %v3732
        %v3775 = vadd.f32 %v3656, %v3734
        %v3776 = vadd.f32 %v3657, %v3736
        %v3777 = vadd.f32 %v3658, %v3738
        %v3778 = vadd.f32 %v3659, %v3740
        %v3779 = vadd.f32 %v3660, %v3742
        %v3780 = vadd.f32 %v3661, %v3744
        %s3781 = scalar_lea.vmem %s4, 22
        %v3782 = vld [vmem:[%s3781] ss:$8 sm:$0x3]
        %v3784 = vlaneseq
        %v3785 = vshrl.u32 %v3784, 7
        %v3786 = vsub.s32 0, %v3785
        %v3787 = vrot.slane %v3782, %v3786
        %v3788 = vlaneseq
        %v3789 = vshrl.u32 %v3788, 7
        %v3790 = vsub.s32 1, %v3789
        %v3791 = vrot.slane %v3782, %v3790
        %v3794 = vmul.f32 %v3520, %v3787
        %v3795 = vmul.f32 %v3521, %v3791
        %v3796 = vmul.f32 %v3522, %v3787
        %v3797 = vmul.f32 %v3523, %v3791
        %v3798 = vmul.f32 %v3524, %v3787
        %v3799 = vmul.f32 %v3525, %v3791
        %v3800 = vmul.f32 %v3526, %v3787
        %v3801 = vmul.f32 %v3527, %v3791
        %v3802 = vmul.f32 %v3528, %v3787
        %v3803 = vmul.f32 %v3529, %v3791
        %v3804 = vmul.f32 %v3530, %v3787
        %v3805 = vmul.f32 %v3531, %v3791
        %v3806 = vmul.f32 %v3532, %v3787
        %v3807 = vmul.f32 %v3533, %v3791
        %v3808 = vmul.f32 %v3534, %v3787
        %v3809 = vmul.f32 %v3535, %v3791
        %v3810 = vmul.f32 %v3536, %v3787
        %v3811 = vmul.f32 %v3537, %v3791
        %v3830 = vrot.slane %v3794, 4
        %v3831 = vrot.slane %v3795, 4
        %v3832 = vrot.slane %v3796, 4
        %v3833 = vsel %vm3591, %v3830, %v3832
        %v3834 = vrot.slane %v3797, 4
        %v3835 = vsel %vm3591, %v3831, %v3834
        %v3836 = vrot.slane %v3798, 4
        %v3837 = vsel %vm3591, %v3832, %v3836
        %v3838 = vrot.slane %v3799, 4
        %v3839 = vsel %vm3591, %v3834, %v3838
        %v3840 = vrot.slane %v3800, 4
        %v3841 = vsel %vm3591, %v3836, %v3840
        %v3842 = vrot.slane %v3801, 4
        %v3843 = vsel %vm3591, %v3838, %v3842
        %v3844 = vrot.slane %v3802, 4
        %v3845 = vsel %vm3591, %v3840, %v3844
        %v3846 = vrot.slane %v3803, 4
        %v3847 = vsel %vm3591, %v3842, %v3846
        %v3848 = vrot.slane %v3804, 4
        %v3849 = vsel %vm3591, %v3844, %v3848
        %v3850 = vrot.slane %v3805, 4
        %v3851 = vsel %vm3591, %v3846, %v3850
        %v3852 = vrot.slane %v3806, 4
        %v3853 = vsel %vm3591, %v3848, %v3852
        %v3854 = vrot.slane %v3807, 4
        %v3855 = vsel %vm3591, %v3850, %v3854
        %v3856 = vrot.slane %v3808, 4
        %v3857 = vsel %vm3591, %v3852, %v3856
        %v3858 = vrot.slane %v3809, 4
        %v3859 = vsel %vm3591, %v3854, %v3858
        %v3860 = vrot.slane %v3810, 4
        %v3861 = vsel %vm3591, %v3856, %v3860
        %v3862 = vrot.slane %v3811, 4
        %v3863 = vsel %vm3591, %v3858, %v3862
        %v3882 = vadd.f32 %v3763, %v3830
        %v3883 = vadd.f32 %v3764, %v3831
        %v3884 = vadd.f32 %v3765, %v3833
        %v3885 = vadd.f32 %v3766, %v3835
        %v3886 = vadd.f32 %v3767, %v3837
        %v3887 = vadd.f32 %v3768, %v3839
        %v3888 = vadd.f32 %v3769, %v3841
        %v3889 = vadd.f32 %v3770, %v3843
        %v3890 = vadd.f32 %v3771, %v3845
        %v3891 = vadd.f32 %v3772, %v3847
        %v3892 = vadd.f32 %v3773, %v3849
        %v3893 = vadd.f32 %v3774, %v3851
        %v3894 = vadd.f32 %v3775, %v3853
        %v3895 = vadd.f32 %v3776, %v3855
        %v3896 = vadd.f32 %v3777, %v3857
        %v3897 = vadd.f32 %v3778, %v3859
        %v3898 = vadd.f32 %v3779, %v3861
        %v3899 = vadd.f32 %v3780, %v3863
        %s3900 = scalar_lea.vmem %s4, 35
        %v3901 = vld [vmem:[%s3900] ss:$8 sm:$0x3]
        %v3903 = vlaneseq
        %v3904 = vshrl.u32 %v3903, 7
        %v3905 = vsub.s32 0, %v3904
        %v3906 = vrot.slane %v3901, %v3905
        %v3907 = vlaneseq
        %v3908 = vshrl.u32 %v3907, 7
        %v3909 = vsub.s32 1, %v3908
        %v3910 = vrot.slane %v3901, %v3909
        %v3913 = vmul.f32 %v3522, %v3906
        %v3914 = vmul.f32 %v3523, %v3910
        %v3915 = vmul.f32 %v3524, %v3906
        %v3916 = vmul.f32 %v3525, %v3910
        %v3917 = vmul.f32 %v3526, %v3906
        %v3918 = vmul.f32 %v3527, %v3910
        %v3919 = vmul.f32 %v3528, %v3906
        %v3920 = vmul.f32 %v3529, %v3910
        %v3921 = vmul.f32 %v3530, %v3906
        %v3922 = vmul.f32 %v3531, %v3910
        %v3923 = vmul.f32 %v3532, %v3906
        %v3924 = vmul.f32 %v3533, %v3910
        %v3925 = vmul.f32 %v3534, %v3906
        %v3926 = vmul.f32 %v3535, %v3910
        %v3927 = vmul.f32 %v3536, %v3906
        %v3928 = vmul.f32 %v3537, %v3910
        %v3929 = vmul.f32 %v3538, %v3906
        %v3930 = vmul.f32 %v3539, %v3910
        %v3949 = vrot.slane %v3913, 4
        %v3950 = vrot.slane %v3914, 4
        %v3951 = vrot.slane %v3915, 4
        %v3952 = vsel %vm3591, %v3949, %v3951
        %v3953 = vrot.slane %v3916, 4
        %v3954 = vsel %vm3591, %v3950, %v3953
        %v3955 = vrot.slane %v3917, 4
        %v3956 = vsel %vm3591, %v3951, %v3955
        %v3957 = vrot.slane %v3918, 4
        %v3958 = vsel %vm3591, %v3953, %v3957
        %v3959 = vrot.slane %v3919, 4
        %v3960 = vsel %vm3591, %v3955, %v3959
        %v3961 = vrot.slane %v3920, 4
        %v3962 = vsel %vm3591, %v3957, %v3961
        %v3963 = vrot.slane %v3921, 4
        %v3964 = vsel %vm3591, %v3959, %v3963
        %v3965 = vrot.slane %v3922, 4
        %v3966 = vsel %vm3591, %v3961, %v3965
        %v3967 = vrot.slane %v3923, 4
        %v3968 = vsel %vm3591, %v3963, %v3967
        %v3969 = vrot.slane %v3924, 4
        %v3970 = vsel %vm3591, %v3965, %v3969
        %v3971 = vrot.slane %v3925, 4
        %v3972 = vsel %vm3591, %v3967, %v3971
        %v3973 = vrot.slane %v3926, 4
        %v3974 = vsel %vm3591, %v3969, %v3973
        %v3975 = vrot.slane %v3927, 4
        %v3976 = vsel %vm3591, %v3971, %v3975
        %v3977 = vrot.slane %v3928, 4
        %v3978 = vsel %vm3591, %v3973, %v3977
        %v3979 = vrot.slane %v3929, 4
        %v3980 = vsel %vm3591, %v3975, %v3979
        %v3981 = vrot.slane %v3930, 4
        %v3982 = vsel %vm3591, %v3977, %v3981
        %v4001 = vadd.f32 %v3882, %v3949
        %v4002 = vadd.f32 %v3883, %v3950
        %v4003 = vadd.f32 %v3884, %v3952
        %v4004 = vadd.f32 %v3885, %v3954
        %v4005 = vadd.f32 %v3886, %v3956
        %v4006 = vadd.f32 %v3887, %v3958
        %v4007 = vadd.f32 %v3888, %v3960
        %v4008 = vadd.f32 %v3889, %v3962
        %v4009 = vadd.f32 %v3890, %v3964
        %v4010 = vadd.f32 %v3891, %v3966
        %v4011 = vadd.f32 %v3892, %v3968
        %v4012 = vadd.f32 %v3893, %v3970
        %v4013 = vadd.f32 %v3894, %v3972
        %v4014 = vadd.f32 %v3895, %v3974
        %v4015 = vadd.f32 %v3896, %v3976
        %v4016 = vadd.f32 %v3897, %v3978
        %v4017 = vadd.f32 %v3898, %v3980
        %v4018 = vadd.f32 %v3899, %v3982
        %s4019 = scalar_lea.vmem %s4, 48
        %v4020 = vld [vmem:[%s4019] ss:$8 sm:$0x3]
        %v4022 = vlaneseq
        %v4023 = vshrl.u32 %v4022, 7
        %v4024 = vsub.s32 0, %v4023
        %v4025 = vrot.slane %v4020, %v4024
        %v4026 = vlaneseq
        %v4027 = vshrl.u32 %v4026, 7
        %v4028 = vsub.s32 1, %v4027
        %v4029 = vrot.slane %v4020, %v4028
        %v4032 = vmul.f32 %v3524, %v4025
        %v4033 = vmul.f32 %v3525, %v4029
        %v4034 = vmul.f32 %v3526, %v4025
        %v4035 = vmul.f32 %v3527, %v4029
        %v4036 = vmul.f32 %v3528, %v4025
        %v4037 = vmul.f32 %v3529, %v4029
        %v4038 = vmul.f32 %v3530, %v4025
        %v4039 = vmul.f32 %v3531, %v4029
        %v4040 = vmul.f32 %v3532, %v4025
        %v4041 = vmul.f32 %v3533, %v4029
        %v4042 = vmul.f32 %v3534, %v4025
        %v4043 = vmul.f32 %v3535, %v4029
        %v4044 = vmul.f32 %v3536, %v4025
        %v4045 = vmul.f32 %v3537, %v4029
        %v4046 = vmul.f32 %v3538, %v4025
        %v4047 = vmul.f32 %v3539, %v4029
        %v4048 = vmul.f32 %v3540, %v4025
        %v4049 = vmul.f32 %v3541, %v4029
        %v4068 = vrot.slane %v4032, 4
        %v4069 = vrot.slane %v4033, 4
        %v4070 = vrot.slane %v4034, 4
        %v4071 = vsel %vm3591, %v4068, %v4070
        %v4072 = vrot.slane %v4035, 4
        %v4073 = vsel %vm3591, %v4069, %v4072
        %v4074 = vrot.slane %v4036, 4
        %v4075 = vsel %vm3591, %v4070, %v4074
        %v4076 = vrot.slane %v4037, 4
        %v4077 = vsel %vm3591, %v4072, %v4076
        %v4078 = vrot.slane %v4038, 4
        %v4079 = vsel %vm3591, %v4074, %v4078
        %v4080 = vrot.slane %v4039, 4
        %v4081 = vsel %vm3591, %v4076, %v4080
        %v4082 = vrot.slane %v4040, 4
        %v4083 = vsel %vm3591, %v4078, %v4082
        %v4084 = vrot.slane %v4041, 4
        %v4085 = vsel %vm3591, %v4080, %v4084
        %v4086 = vrot.slane %v4042, 4
        %v4087 = vsel %vm3591, %v4082, %v4086
        %v4088 = vrot.slane %v4043, 4
        %v4089 = vsel %vm3591, %v4084, %v4088
        %v4090 = vrot.slane %v4044, 4
        %v4091 = vsel %vm3591, %v4086, %v4090
        %v4092 = vrot.slane %v4045, 4
        %v4093 = vsel %vm3591, %v4088, %v4092
        %v4094 = vrot.slane %v4046, 4
        %v4095 = vsel %vm3591, %v4090, %v4094
        %v4096 = vrot.slane %v4047, 4
        %v4097 = vsel %vm3591, %v4092, %v4096
        %v4098 = vrot.slane %v4048, 4
        %v4099 = vsel %vm3591, %v4094, %v4098
        %v4100 = vrot.slane %v4049, 4
        %v4101 = vsel %vm3591, %v4096, %v4100
        %v4120 = vadd.f32 %v4001, %v4068
        %v4121 = vadd.f32 %v4002, %v4069
        %v4122 = vadd.f32 %v4003, %v4071
        %v4123 = vadd.f32 %v4004, %v4073
        %v4124 = vadd.f32 %v4005, %v4075
        %v4125 = vadd.f32 %v4006, %v4077
        %v4126 = vadd.f32 %v4007, %v4079
        %v4127 = vadd.f32 %v4008, %v4081
        %v4128 = vadd.f32 %v4009, %v4083
        %v4129 = vadd.f32 %v4010, %v4085
        %v4130 = vadd.f32 %v4011, %v4087
        %v4131 = vadd.f32 %v4012, %v4089
        %v4132 = vadd.f32 %v4013, %v4091
        %v4133 = vadd.f32 %v4014, %v4093
        %v4134 = vadd.f32 %v4015, %v4095
        %v4135 = vadd.f32 %v4016, %v4097
        %v4136 = vadd.f32 %v4017, %v4099
        %v4137 = vadd.f32 %v4018, %v4101
        %v4138 = vlaneseq
        %v4139 = vshrl.u32 %v4138, 7
        %v4140 = vsub.s32 0, %v4139
        %v4141 = vrot.slane %v897, %v4140
        %v4142 = vlaneseq
        %v4143 = vshrl.u32 %v4142, 7
        %v4144 = vsub.s32 0, %v4143
        %v4145 = vrot.slane %v898, %v4144
        %v4146 = vadd.f32 %v4120, %v4141
        %v4147 = vadd.f32 %v4121, %v4145
        %v4148 = vadd.f32 %v4122, %v4141
        %v4149 = vadd.f32 %v4123, %v4145
        %v4150 = vadd.f32 %v4124, %v4141
        %v4151 = vadd.f32 %v4125, %v4145
        %v4152 = vadd.f32 %v4126, %v4141
        %v4153 = vadd.f32 %v4127, %v4145
        %v4154 = vadd.f32 %v4128, %v4141
        %v4155 = vadd.f32 %v4129, %v4145
        %v4156 = vadd.f32 %v4130, %v4141
        %v4157 = vadd.f32 %v4131, %v4145
        %v4158 = vadd.f32 %v4132, %v4141
        %v4159 = vadd.f32 %v4133, %v4145
        %v4160 = vadd.f32 %v4134, %v4141
        %v4161 = vadd.f32 %v4135, %v4145
        %v4162 = vadd.f32 %v4136, %v4141
        %v4163 = vadd.f32 %v4137, %v4145
        %v4164 = vmul.f32 %v4146, 0.5
        %v4165 = vmul.f32 %v4147, 0.5
        %v4166 = vmul.f32 %v4148, 0.5
        %v4167 = vmul.f32 %v4149, 0.5
        %v4168 = vmul.f32 %v4150, 0.5
        %v4169 = vmul.f32 %v4151, 0.5
        %v4170 = vmul.f32 %v4152, 0.5
        %v4171 = vmul.f32 %v4153, 0.5
        %v4172 = vmul.f32 %v4154, 0.5
        %v4173 = vmul.f32 %v4155, 0.5
        %v4174 = vmul.f32 %v4156, 0.5
        %v4175 = vmul.f32 %v4157, 0.5
        %v4176 = vmul.f32 %v4158, 0.5
        %v4177 = vmul.f32 %v4159, 0.5
        %v4178 = vmul.f32 %v4160, 0.5
        %v4179 = vmul.f32 %v4161, 0.5
        %v4180 = vmul.f32 %v4162, 0.5
        %v4181 = vmul.f32 %v4163, 0.5
        %v4182 = vmul.f32 %v4146, %v4146
        %v4183 = vmul.f32 %v4147, %v4147
        %v4184 = vmul.f32 %v4148, %v4148
        %v4185 = vmul.f32 %v4149, %v4149
        %v4186 = vmul.f32 %v4150, %v4150
        %v4187 = vmul.f32 %v4151, %v4151
        %v4188 = vmul.f32 %v4152, %v4152
        %v4189 = vmul.f32 %v4153, %v4153
        %v4190 = vmul.f32 %v4154, %v4154
        %v4191 = vmul.f32 %v4155, %v4155
        %v4192 = vmul.f32 %v4156, %v4156
        %v4193 = vmul.f32 %v4157, %v4157
        %v4194 = vmul.f32 %v4158, %v4158
        %v4195 = vmul.f32 %v4159, %v4159
        %v4196 = vmul.f32 %v4160, %v4160
        %v4197 = vmul.f32 %v4161, %v4161
        %v4198 = vmul.f32 %v4162, %v4162
        %v4199 = vmul.f32 %v4163, %v4163
        %v4200 = vmul.f32 %v4182, %v4146
        %v4201 = vmul.f32 %v4183, %v4147
        %v4202 = vmul.f32 %v4184, %v4148
        %v4203 = vmul.f32 %v4185, %v4149
        %v4204 = vmul.f32 %v4186, %v4150
        %v4205 = vmul.f32 %v4187, %v4151
        %v4206 = vmul.f32 %v4188, %v4152
        %v4207 = vmul.f32 %v4189, %v4153
        %v4208 = vmul.f32 %v4190, %v4154
        %v4209 = vmul.f32 %v4191, %v4155
        %v4210 = vmul.f32 %v4192, %v4156
        %v4211 = vmul.f32 %v4193, %v4157
        %v4212 = vmul.f32 %v4194, %v4158
        %v4213 = vmul.f32 %v4195, %v4159
        %v4214 = vmul.f32 %v4196, %v4160
        %v4215 = vmul.f32 %v4197, %v4161
        %v4216 = vmul.f32 %v4198, %v4162
        %v4217 = vmul.f32 %v4199, %v4163
        %v4218 = vmul.f32 %v4200, 0.044715
        %v4219 = vmul.f32 %v4201, 0.044715
        %v4220 = vmul.f32 %v4202, 0.044715
        %v4221 = vmul.f32 %v4203, 0.044715
        %v4222 = vmul.f32 %v4204, 0.044715
        %v4223 = vmul.f32 %v4205, 0.044715
        %v4224 = vmul.f32 %v4206, 0.044715
        %v4225 = vmul.f32 %v4207, 0.044715
        %v4226 = vmul.f32 %v4208, 0.044715
        %v4227 = vmul.f32 %v4209, 0.044715
        %v4228 = vmul.f32 %v4210, 0.044715
        %v4229 = vmul.f32 %v4211, 0.044715
        %v4230 = vmul.f32 %v4212, 0.044715
        %v4231 = vmul.f32 %v4213, 0.044715
        %v4232 = vmul.f32 %v4214, 0.044715
        %v4233 = vmul.f32 %v4215, 0.044715
        %v4234 = vmul.f32 %v4216, 0.044715
        %v4235 = vmul.f32 %v4217, 0.044715
        %v4236 = vadd.f32 %v4146, %v4218
        %v4237 = vadd.f32 %v4147, %v4219
        %v4238 = vadd.f32 %v4148, %v4220
        %v4239 = vadd.f32 %v4149, %v4221
        %v4240 = vadd.f32 %v4150, %v4222
        %v4241 = vadd.f32 %v4151, %v4223
        %v4242 = vadd.f32 %v4152, %v4224
        %v4243 = vadd.f32 %v4153, %v4225
        %v4244 = vadd.f32 %v4154, %v4226
        %v4245 = vadd.f32 %v4155, %v4227
        %v4246 = vadd.f32 %v4156, %v4228
        %v4247 = vadd.f32 %v4157, %v4229
        %v4248 = vadd.f32 %v4158, %v4230
        %v4249 = vadd.f32 %v4159, %v4231
        %v4250 = vadd.f32 %v4160, %v4232
        %v4251 = vadd.f32 %v4161, %v4233
        %v4252 = vadd.f32 %v4162, %v4234
        %v4253 = vadd.f32 %v4163, %v4235
        %v4254 = vmul.f32 %v4236, 0.7978846
        %v4255 = vmul.f32 %v4237, 0.7978846
        %v4256 = vmul.f32 %v4238, 0.7978846
        %v4257 = vmul.f32 %v4239, 0.7978846
        %v4258 = vmul.f32 %v4240, 0.7978846
        %v4259 = vmul.f32 %v4241, 0.7978846
        %v4260 = vmul.f32 %v4242, 0.7978846
        %v4261 = vmul.f32 %v4243, 0.7978846
        %v4262 = vmul.f32 %v4244, 0.7978846
        %v4263 = vmul.f32 %v4245, 0.7978846
        %v4264 = vmul.f32 %v4246, 0.7978846
        %v4265 = vmul.f32 %v4247, 0.7978846
        %v4266 = vmul.f32 %v4248, 0.7978846
        %v4267 = vmul.f32 %v4249, 0.7978846
        %v4268 = vmul.f32 %v4250, 0.7978846
        %v4269 = vmul.f32 %v4251, 0.7978846
        %v4270 = vmul.f32 %v4252, 0.7978846
        %v4271 = vmul.f32 %v4253, 0.7978846
        %v4272 = vtanh.pop %v4254
        %v4273 = vtanh.pop %v4255
        %v4274 = vtanh.pop %v4256
        %v4275 = vtanh.pop %v4257
        %v4276 = vtanh.pop %v4258
        %v4277 = vtanh.pop %v4259
        %v4278 = vtanh.pop %v4260
        %v4279 = vtanh.pop %v4261
        %v4280 = vtanh.pop %v4262
        %v4281 = vtanh.pop %v4263
        %v4282 = vtanh.pop %v4264
        %v4283 = vtanh.pop %v4265
        %v4284 = vtanh.pop %v4266
        %v4285 = vtanh.pop %v4267
        %v4286 = vtanh.pop %v4268
        %v4287 = vtanh.pop %v4269
        %v4288 = vtanh.pop %v4270
        %v4289 = vtanh.pop %v4271
        %v4290 = vadd.f32 %v4272, 1.0
        %v4291 = vadd.f32 %v4273, 1.0
        %v4292 = vadd.f32 %v4274, 1.0
        %v4293 = vadd.f32 %v4275, 1.0
        %v4294 = vadd.f32 %v4276, 1.0
        %v4295 = vadd.f32 %v4277, 1.0
        %v4296 = vadd.f32 %v4278, 1.0
        %v4297 = vadd.f32 %v4279, 1.0
        %v4298 = vadd.f32 %v4280, 1.0
        %v4299 = vadd.f32 %v4281, 1.0
        %v4300 = vadd.f32 %v4282, 1.0
        %v4301 = vadd.f32 %v4283, 1.0
        %v4302 = vadd.f32 %v4284, 1.0
        %v4303 = vadd.f32 %v4285, 1.0
        %v4304 = vadd.f32 %v4286, 1.0
        %v4305 = vadd.f32 %v4287, 1.0
        %v4306 = vadd.f32 %v4288, 1.0
        %v4307 = vadd.f32 %v4289, 1.0
        %v4308 = vmul.f32 %v4164, %v4290
        %v4309 = vmul.f32 %v4165, %v4291
        %v4310 = vmul.f32 %v4166, %v4292
        %v4311 = vmul.f32 %v4167, %v4293
        %v4312 = vmul.f32 %v4168, %v4294
        %v4313 = vmul.f32 %v4169, %v4295
        %v4314 = vmul.f32 %v4170, %v4296
        %v4315 = vmul.f32 %v4171, %v4297
        %v4316 = vmul.f32 %v4172, %v4298
        %v4317 = vmul.f32 %v4173, %v4299
        %v4318 = vmul.f32 %v4174, %v4300
        %v4319 = vmul.f32 %v4175, %v4301
        %v4320 = vmul.f32 %v4176, %v4302
        %v4321 = vmul.f32 %v4177, %v4303
        %v4322 = vmul.f32 %v4178, %v4304
        %v4323 = vmul.f32 %v4179, %v4305
        %v4324 = vmul.f32 %v4180, %v4306
        %v4325 = vmul.f32 %v4181, %v4307
        %v4326 = vlaneseq
        %v4327 = vshrl.u32 %v4326, 7
        %v4328 = vsub.s32 1, %v4327
        %v4329 = vrot.slane %v897, %v4328
        %v4330 = vlaneseq
        %v4331 = vshrl.u32 %v4330, 7
        %v4332 = vsub.s32 1, %v4331
        %v4333 = vrot.slane %v898, %v4332
        %v4334 = vmul.f32 %v4308, %v4329
        %v4335 = vmul.f32 %v4309, %v4333
        %v4336 = vmul.f32 %v4310, %v4329
        %v4337 = vmul.f32 %v4311, %v4333
        %v4338 = vmul.f32 %v4312, %v4329
        %v4339 = vmul.f32 %v4313, %v4333
        %v4340 = vmul.f32 %v4314, %v4329
        %v4341 = vmul.f32 %v4315, %v4333
        %v4342 = vmul.f32 %v4316, %v4329
        %v4343 = vmul.f32 %v4317, %v4333
        %v4344 = vmul.f32 %v4318, %v4329
        %v4345 = vmul.f32 %v4319, %v4333
        %v4346 = vmul.f32 %v4320, %v4329
        %v4347 = vmul.f32 %v4321, %v4333
        %v4348 = vmul.f32 %v4322, %v4329
        %v4349 = vmul.f32 %v4323, %v4333
        %v4350 = vmul.f32 %v4324, %v4329
        %v4351 = vmul.f32 %v4325, %v4333
        %v4352 = vlaneseq
        %v4353 = vshrl.u32 %v4352, 7
        %v4354 = vsub.s32 2, %v4353
        %v4355 = vrot.slane %v897, %v4354
        %v4356 = vlaneseq
        %v4357 = vshrl.u32 %v4356, 7
        %v4358 = vsub.s32 2, %v4357
        %v4359 = vrot.slane %v898, %v4358
        %v4360 = vadd.f32 %v4334, %v4355
        %v4361 = vadd.f32 %v4335, %v4359
        %v4362 = vadd.f32 %v4336, %v4355
        %v4363 = vadd.f32 %v4337, %v4359
        %v4364 = vadd.f32 %v4338, %v4355
        %v4365 = vadd.f32 %v4339, %v4359
        %v4366 = vadd.f32 %v4340, %v4355
        %v4367 = vadd.f32 %v4341, %v4359
        %v4368 = vadd.f32 %v4342, %v4355
        %v4369 = vadd.f32 %v4343, %v4359
        %v4370 = vadd.f32 %v4344, %v4355
        %v4371 = vadd.f32 %v4345, %v4359
        %v4372 = vadd.f32 %v4346, %v4355
        %v4373 = vadd.f32 %v4347, %v4359
        %v4374 = vadd.f32 %v4348, %v4355
        %v4375 = vadd.f32 %v4349, %v4359
        %v4376 = vadd.f32 %v4350, %v4355
        %v4377 = vadd.f32 %v4351, %v4359
        %v4394 = vrot.slane %v905, 2
        %v4395 = vrot.slane %v906, 2
        %v4396 = vrot.slane %v907, 2
        %v4397 = vsel %vm973, %v4394, %v4396
        %v4398 = vrot.slane %v908, 2
        %v4399 = vsel %vm973, %v4395, %v4398
        %v4400 = vrot.slane %v909, 2
        %v4401 = vsel %vm973, %v4396, %v4400
        %v4402 = vrot.slane %v910, 2
        %v4403 = vsel %vm973, %v4398, %v4402
        %v4404 = vrot.slane %v911, 2
        %v4405 = vsel %vm973, %v4400, %v4404
        %v4406 = vrot.slane %v912, 2
        %v4407 = vsel %vm973, %v4402, %v4406
        %v4408 = vrot.slane %v913, 2
        %v4409 = vsel %vm973, %v4404, %v4408
        %v4410 = vrot.slane %v914, 2
        %v4411 = vsel %vm973, %v4406, %v4410
        %v4412 = vrot.slane %v915, 2
        %v4413 = vsel %vm973, %v4408, %v4412
        %v4414 = vrot.slane %v916, 2
        %v4415 = vsel %vm973, %v4410, %v4414
        %v4416 = vrot.slane %v917, 2
        %v4417 = vsel %vm973, %v4412, %v4416
        %v4418 = vrot.slane %v918, 2
        %v4419 = vsel %vm973, %v4414, %v4418
        %v4420 = vrot.slane %v919, 2
        %v4421 = vsel %vm973, %v4416, %v4420
        %v4422 = vrot.slane %v920, 2
        %v4423 = vsel %vm973, %v4418, %v4422
        %v4442 = vadd.f32 %v4360, %v4394
        %v4443 = vadd.f32 %v4361, %v4395
        %v4444 = vadd.f32 %v4362, %v4397
        %v4445 = vadd.f32 %v4363, %v4399
        %v4446 = vadd.f32 %v4364, %v4401
        %v4447 = vadd.f32 %v4365, %v4403
        %v4448 = vadd.f32 %v4366, %v4405
        %v4449 = vadd.f32 %v4367, %v4407
        %v4450 = vadd.f32 %v4368, %v4409
        %v4451 = vadd.f32 %v4369, %v4411
        %v4452 = vadd.f32 %v4370, %v4413
        %v4453 = vadd.f32 %v4371, %v4415
        %v4454 = vadd.f32 %v4372, %v4417
        %v4455 = vadd.f32 %v4373, %v4419
        %v4456 = vadd.f32 %v4374, %v4421
        %v4457 = vadd.f32 %v4375, %v4423
        %v4458 = vadd.f32 %v4376, %v4420
        %v4459 = vadd.f32 %v4377, %v4422
        %v4460 = vpack.c.bf16 %v4444, %v4442
        %v4461 = vpack.c.bf16 %v4445, %v4443
        %v4462 = vpack.c.bf16 %v4448, %v4446
        %v4463 = vpack.c.bf16 %v4449, %v4447
        %v4464 = vpack.c.bf16 %v4452, %v4450
        %v4465 = vpack.c.bf16 %v4453, %v4451
        %v4466 = vpack.c.bf16 %v4456, %v4454
        %v4467 = vpack.c.bf16 %v4457, %v4455
        %v4468 = vpack.c.bf16 %v4458, %v4458
        %v4469 = vpack.c.bf16 %v4459, %v4459
        %vm4480 = vcmask 1044480
        %v4481 = vrot.slane %v4460, 3
        %v4482 = vrot.slane %v4462, 3
        %v4483 = vsel %vm4480, %v4481, %v4482
        %v4484 = vrot.slane %v4461, 3
        %v4485 = vrot.slane %v4463, 3
        %v4486 = vsel %vm4480, %v4484, %v4485
        %v4487 = vrot.slane %v4464, 3
        %v4488 = vsel %vm4480, %v4482, %v4487
        %v4489 = vrot.slane %v4465, 3
        %v4490 = vsel %vm4480, %v4485, %v4489
        %v4491 = vrot.slane %v4466, 3
        %v4492 = vsel %vm4480, %v4487, %v4491
        %v4493 = vrot.slane %v4467, 3
        %v4494 = vsel %vm4480, %v4489, %v4493
        %v4495 = vrot.slane %v4468, 3
        %v4496 = vsel %vm4480, %v4491, %v4495
        %v4497 = vrot.slane %v4469, 3
        %v4498 = vsel %vm4480, %v4493, %v4497
        %4507 = vst [vmem:[#allocation3] sm:$0xff] %v4483
        %4508 = vst [vmem:[#allocation3 + $0x8] sm:$0xff] %v4486
        %4509 = vst [vmem:[#allocation3 + $0x10] sm:$0xff] %v4488
        %4510 = vst [vmem:[#allocation3 + $0x18] sm:$0xff] %v4490
        %4511 = vst [vmem:[#allocation3 + $0x20] sm:$0xff] %v4492
        %4512 = vst [vmem:[#allocation3 + $0x28] sm:$0xff] %v4494
        %4513 = vst [vmem:[#allocation3 + $0x30] sm:$0xff] %v4496
        %4514 = vst [vmem:[#allocation3 + $0x38] sm:$0xff] %v4498
        %v4515 = vld [vmem:[%s7] sm:$0xff]
        %v4516 = vld [vmem:[%s7 + $0x8] sm:$0xff]
        %v4517 = vld [vmem:[#allocation3] sm:$0xff]
        %v4518 = vld [vmem:[#allocation3 + $0x8] sm:$0xff]
        %v4519 = vld [vmem:[#allocation3 + $0x10] sm:$0xff]
        %v4520 = vld [vmem:[#allocation3 + $0x18] sm:$0xff]
        %v4521 = vld [vmem:[#allocation3 + $0x20] sm:$0xff]
        %v4522 = vld [vmem:[#allocation3 + $0x28] sm:$0xff]
        %v4523 = vld [vmem:[#allocation3 + $0x30] sm:$0xff]
        %v4524 = vld [vmem:[#allocation3 + $0x38] sm:$0xff]
        %v4525 = vld [vmem:[%s6] sm:$0xff]
        %v4526 = vld [vmem:[%s6 + $0x8] sm:$0xff]
        %v4527 = vld [vmem:[%s6 + $0x10] sm:$0xff]
        %v4528 = vld [vmem:[%s6 + $0x18] sm:$0xff]
        %v4529 = vld [vmem:[%s6 + $0x20] sm:$0xff]
        %v4530 = vld [vmem:[%s6 + $0x28] sm:$0xff]
        %v4531 = vld [vmem:[%s6 + $0x30] sm:$0xff]
        %v4532 = vld [vmem:[%s6 + $0x38] sm:$0xff]
        %v4533 = vld [vmem:[%s6 + $0x40] sm:$0xff]
        %v4534 = vld [vmem:[%s6 + $0x48] sm:$0xff]
        %v4535 = vld [vmem:[%s6 + $0x50] sm:$0xff]
        %v4536 = vld [vmem:[%s6 + $0x58] sm:$0xff]
        %v4537 = vld [vmem:[%s6 + $0x60] sm:$0xff]
        %v4538 = vld [vmem:[%s6 + $0x68] sm:$0xff]
        %v4539 = vld [vmem:[%s6 + $0x70] sm:$0xff]
        %v4540 = vld [vmem:[%s6 + $0x78] sm:$0xff]
        %v4541 = vld [vmem:[%s6 + $0x80] sm:$0xff]
        %v4542 = vld [vmem:[%s6 + $0x88] sm:$0xff]
        %v4543 = vld [vmem:[%s6 + $0x90] sm:$0xff]
        %v4544 = vld [vmem:[%s6 + $0x98] sm:$0xff]
        %v4545 = vld [vmem:[%s6 + $0xa0] sm:$0xff]
        %v4546 = vld [vmem:[%s6 + $0xa8] sm:$0xff]
        %v4547 = vld [vmem:[%s6 + $0xb0] sm:$0xff]
        %v4548 = vld [vmem:[%s6 + $0xb8] sm:$0xff]
        %v4549 = vld [vmem:[%s6 + $0xc0] sm:$0xff]
        %v4550 = vld [vmem:[%s6 + $0xc8] sm:$0xff]
        %v4551 = vld [vmem:[%s6 + $0xd0] sm:$0xff]
        %v4552 = vld [vmem:[%s6 + $0xd8] sm:$0xff]
        %v4553 = vld [vmem:[%s6 + $0xe0] sm:$0xff]
        %v4554 = vld [vmem:[%s6 + $0xe8] sm:$0xff]
        %v4555 = vld [vmem:[%s6 + $0xf0] sm:$0xff]
        %v4556 = vld [vmem:[%s6 + $0xf8] sm:$0xff]
        %v4557 = vlaneseq
        %v4558 = vshrl.u32 %v4557, 7
        %v4559 = vsub.s32 0, %v4558
        %v4560 = vrot.slane %v4515, %v4559
        %v4561 = vlaneseq
        %v4562 = vshrl.u32 %v4561, 7
        %v4563 = vsub.s32 0, %v4562
        %v4564 = vrot.slane %v4516, %v4563
        %v4597 = vunpack.c.l.b16 %v4525
        %v4598 = vunpack.c.h.b16 %v4525
        %v4599 = vunpack.c.l.b16 %v4526
        %v4600 = vunpack.c.h.b16 %v4526
        %v4601 = vunpack.c.l.b16 %v4527
        %v4602 = vunpack.c.h.b16 %v4527
        %v4603 = vunpack.c.l.b16 %v4528
        %v4604 = vunpack.c.h.b16 %v4528
        %v4605 = vunpack.c.l.b16 %v4529
        %v4606 = vunpack.c.h.b16 %v4529
        %v4607 = vunpack.c.l.b16 %v4530
        %v4608 = vunpack.c.h.b16 %v4530
        %v4609 = vunpack.c.l.b16 %v4531
        %v4610 = vunpack.c.h.b16 %v4531
        %v4611 = vunpack.c.l.b16 %v4532
        %v4612 = vunpack.c.h.b16 %v4532
        %v4613 = vunpack.c.l.b16 %v4533
        %v4614 = vunpack.c.h.b16 %v4533
        %v4615 = vunpack.c.l.b16 %v4534
        %v4616 = vunpack.c.h.b16 %v4534
        %v4617 = vunpack.c.l.b16 %v4535
        %v4618 = vunpack.c.h.b16 %v4535
        %v4619 = vunpack.c.l.b16 %v4536
        %v4620 = vunpack.c.h.b16 %v4536
        %v4621 = vunpack.c.l.b16 %v4537
        %v4622 = vunpack.c.h.b16 %v4537
        %v4623 = vunpack.c.l.b16 %v4538
        %v4624 = vunpack.c.h.b16 %v4538
        %v4625 = vunpack.c.l.b16 %v4539
        %v4626 = vunpack.c.h.b16 %v4539
        %v4627 = vunpack.c.l.b16 %v4540
        %v4628 = vunpack.c.h.b16 %v4540
        %v4629 = vunpack.c.l.b16 %v4541
        %v4630 = vunpack.c.h.b16 %v4541
        %v4631 = vunpack.c.l.b16 %v4542
        %v4632 = vunpack.c.h.b16 %v4542
        %v4633 = vunpack.c.l.b16 %v4543
        %v4634 = vunpack.c.h.b16 %v4543
        %v4635 = vunpack.c.l.b16 %v4544
        %v4636 = vunpack.c.h.b16 %v4544
        %v4637 = vunpack.c.l.b16 %v4545
        %v4638 = vunpack.c.h.b16 %v4545
        %v4639 = vunpack.c.l.b16 %v4546
        %v4640 = vunpack.c.h.b16 %v4546
        %v4641 = vunpack.c.l.b16 %v4547
        %v4642 = vunpack.c.h.b16 %v4547
        %v4643 = vunpack.c.l.b16 %v4548
        %v4644 = vunpack.c.h.b16 %v4548
        %v4645 = vunpack.c.l.b16 %v4549
        %v4646 = vunpack.c.h.b16 %v4549
        %v4647 = vunpack.c.l.b16 %v4550
        %v4648 = vunpack.c.h.b16 %v4550
        %v4649 = vunpack.c.l.b16 %v4551
        %v4650 = vunpack.c.h.b16 %v4551
        %v4651 = vunpack.c.l.b16 %v4552
        %v4652 = vunpack.c.h.b16 %v4552
        %v4653 = vunpack.c.l.b16 %v4553
        %v4654 = vunpack.c.h.b16 %v4553
        %v4655 = vunpack.c.l.b16 %v4554
        %v4656 = vunpack.c.h.b16 %v4554
        %v4657 = vunpack.c.l.b16 %v4555
        %v4658 = vunpack.c.h.b16 %v4555
        %v4659 = vunpack.c.l.b16 %v4556
        %v4660 = vunpack.c.h.b16 %v4556
        %v4661 = vpack.c.b16 %v4599, %v4597
        %v4662 = vpack.c.b16 %v4600, %v4598
        %v4663 = vpack.c.b16 %v4603, %v4601
        %v4664 = vpack.c.b16 %v4604, %v4602
        %v4665 = vpack.c.b16 %v4607, %v4605
        %v4666 = vpack.c.b16 %v4608, %v4606
        %v4667 = vpack.c.b16 %v4611, %v4609
        %v4668 = vpack.c.b16 %v4612, %v4610
        %v4669 = vpack.c.b16 %v4615, %v4613
        %v4670 = vpack.c.b16 %v4616, %v4614
        %v4671 = vpack.c.b16 %v4619, %v4617
        %v4672 = vpack.c.b16 %v4620, %v4618
        %v4673 = vpack.c.b16 %v4623, %v4621
        %v4674 = vpack.c.b16 %v4624, %v4622
        %v4675 = vpack.c.b16 %v4627, %v4625
        %v4676 = vpack.c.b16 %v4628, %v4626
        %v4677 = vpack.c.b16 %v4631, %v4629
        %v4678 = vpack.c.b16 %v4632, %v4630
        %v4679 = vpack.c.b16 %v4635, %v4633
        %v4680 = vpack.c.b16 %v4636, %v4634
        %v4681 = vpack.c.b16 %v4639, %v4637
        %v4682 = vpack.c.b16 %v4640, %v4638
        %v4683 = vpack.c.b16 %v4643, %v4641
        %v4684 = vpack.c.b16 %v4644, %v4642
        %v4685 = vpack.c.b16 %v4647, %v4645
        %v4686 = vpack.c.b16 %v4648, %v4646
        %v4687 = vpack.c.b16 %v4651, %v4649
        %v4688 = vpack.c.b16 %v4652, %v4650
        %v4689 = vpack.c.b16 %v4655, %v4653
        %v4690 = vpack.c.b16 %v4656, %v4654
        %v4691 = vpack.c.b16 %v4659, %v4657
        %v4692 = vpack.c.b16 %v4660, %v4658
        %4725 = vmatprep.subr.bf16.mxu0 %v4662
        %4726 = vmatpush1.bf16.msra.mxu0 %v4661
        %4727 = vmatprep.subr.bf16.mxu0 %v4664
        %4728 = vmatpush1.bf16.msra.mxu0 %v4663
        %4729 = vmatprep.subr.bf16.mxu0 %v4666
        %4730 = vmatpush1.bf16.msra.mxu0 %v4665
        %4731 = vmatprep.subr.bf16.mxu0 %v4668
        %4732 = vmatpush1.bf16.msra.mxu0 %v4667
        %4733 = vmatprep.subr.bf16.mxu0 %v4670
        %4734 = vmatpush1.bf16.msra.mxu0 %v4669
        %4735 = vmatprep.subr.bf16.mxu0 %v4672
        %4736 = vmatpush1.bf16.msra.mxu0 %v4671
        %4737 = vmatprep.subr.bf16.mxu0 %v4674
        %4738 = vmatpush1.bf16.msra.mxu0 %v4673
        %4739 = vmatprep.subr.bf16.mxu0 %v4676
        %4740 = vmatpush1.bf16.msra.mxu0 %v4675
        %4741 = vmatprep.subr.bf16.mxu0 %v4678
        %4742 = vmatpush1.bf16.msra.mxu0 %v4677
        %4743 = vmatprep.subr.bf16.mxu0 %v4680
        %4744 = vmatpush1.bf16.msra.mxu0 %v4679
        %4745 = vmatprep.subr.bf16.mxu0 %v4682
        %4746 = vmatpush1.bf16.msra.mxu0 %v4681
        %4747 = vmatprep.subr.bf16.mxu0 %v4684
        %4748 = vmatpush1.bf16.msra.mxu0 %v4683
        %4749 = vmatprep.subr.bf16.mxu0 %v4686
        %4750 = vmatpush1.bf16.msra.mxu0 %v4685
        %4751 = vmatprep.subr.bf16.mxu0 %v4688
        %4752 = vmatpush1.bf16.msra.mxu0 %v4687
        %4753 = vmatprep.subr.bf16.mxu0 %v4690
        %4754 = vmatpush1.bf16.msra.mxu0 %v4689
        %4755 = vmatprep.subr.bf16.mxu0 %v4692
        %4756 = vmatpush1.bf16.msra.mxu0 %v4691
        %4757 = vmatprep.mubr.bf16.mxu0 %v4518
        %4758 = vmatmul.mubr.bf16.gmra.mrb[0].mxu0 %v4517
        %v4759 = vpop.f32.mrb[0].mxu0
        %v4760 = vadd.f32 %v4560, %v4759
        %v4761 = vpop.f32.mrb[0].mxu0
        %v4762 = vadd.f32 %v4564, %v4761
        %v4763 = vpop.f32.mrb[0].mxu0
        %v4764 = vadd.f32 %v4560, %v4763
        %v4765 = vpop.f32.mrb[0].mxu0
        %v4766 = vadd.f32 %v4564, %v4765
        %4767 = vmatprep.mubr.bf16.mxu0 %v4520
        %4768 = vmatmul.mubr.bf16.gmra.mrb[0].mxu0 %v4519
        %v4769 = vpop.f32.mrb[0].mxu0
        %v4770 = vadd.f32 %v4560, %v4769
        %v4771 = vpop.f32.mrb[0].mxu0
        %v4772 = vadd.f32 %v4564, %v4771
        %v4773 = vpop.f32.mrb[0].mxu0
        %v4774 = vadd.f32 %v4560, %v4773
        %v4775 = vpop.f32.mrb[0].mxu0
        %v4776 = vadd.f32 %v4564, %v4775
        %4777 = vmatprep.mubr.bf16.mxu0 %v4522
        %4778 = vmatmul.mubr.bf16.gmra.mrb[0].mxu0 %v4521
        %v4779 = vpop.f32.mrb[0].mxu0
        %v4780 = vadd.f32 %v4560, %v4779
        %v4781 = vpop.f32.mrb[0].mxu0
        %v4782 = vadd.f32 %v4564, %v4781
        %v4783 = vpop.f32.mrb[0].mxu0
        %v4784 = vadd.f32 %v4560, %v4783
        %v4785 = vpop.f32.mrb[0].mxu0
        %v4786 = vadd.f32 %v4564, %v4785
        %4787 = vmatprep.mubr.bf16.mxu0 %v4524
        %4788 = vmatmul.mubr.bf16.gmra.mrb[0].mxu0 %v4523
        %v4789 = vpop.f32.mrb[0].mxu0
        %v4790 = vadd.f32 %v4560, %v4789
        %v4791 = vpop.f32.mrb[0].mxu0
        %v4792 = vadd.f32 %v4564, %v4791
        %v4793 = vpop.f32.mrb[0].mxu0
        %v4794 = vadd.f32 %v4560, %v4793
        %v4795 = vpop.f32.mrb[0].mxu0
        %v4796 = vadd.f32 %v4564, %v4795
        %4797 = vdwg.mxu0
        %v4798 = vmul.f32 %v4760, 0.5
        %v4799 = vmul.f32 %v4762, 0.5
        %v4800 = vmul.f32 %v4764, 0.5
        %v4801 = vmul.f32 %v4766, 0.5
        %v4802 = vmul.f32 %v4770, 0.5
        %v4803 = vmul.f32 %v4772, 0.5
        %v4804 = vmul.f32 %v4774, 0.5
        %v4805 = vmul.f32 %v4776, 0.5
        %v4806 = vmul.f32 %v4780, 0.5
        %v4807 = vmul.f32 %v4782, 0.5
        %v4808 = vmul.f32 %v4784, 0.5
        %v4809 = vmul.f32 %v4786, 0.5
        %v4810 = vmul.f32 %v4790, 0.5
        %v4811 = vmul.f32 %v4792, 0.5
        %v4812 = vmul.f32 %v4794, 0.5
        %v4813 = vmul.f32 %v4796, 0.5
        %v4814 = vmul.f32 %v4760, %v4760
        %v4815 = vmul.f32 %v4762, %v4762
        %v4816 = vmul.f32 %v4764, %v4764
        %v4817 = vmul.f32 %v4766, %v4766
        %v4818 = vmul.f32 %v4770, %v4770
        %v4819 = vmul.f32 %v4772, %v4772
        %v4820 = vmul.f32 %v4774, %v4774
        %v4821 = vmul.f32 %v4776, %v4776
        %v4822 = vmul.f32 %v4780, %v4780
        %v4823 = vmul.f32 %v4782, %v4782
        %v4824 = vmul.f32 %v4784, %v4784
        %v4825 = vmul.f32 %v4786, %v4786
        %v4826 = vmul.f32 %v4790, %v4790
        %v4827 = vmul.f32 %v4792, %v4792
        %v4828 = vmul.f32 %v4794, %v4794
        %v4829 = vmul.f32 %v4796, %v4796
        %v4830 = vmul.f32 %v4814, %v4760
        %v4831 = vmul.f32 %v4815, %v4762
        %v4832 = vmul.f32 %v4816, %v4764
        %v4833 = vmul.f32 %v4817, %v4766
        %v4834 = vmul.f32 %v4818, %v4770
        %v4835 = vmul.f32 %v4819, %v4772
        %v4836 = vmul.f32 %v4820, %v4774
        %v4837 = vmul.f32 %v4821, %v4776
        %v4838 = vmul.f32 %v4822, %v4780
        %v4839 = vmul.f32 %v4823, %v4782
        %v4840 = vmul.f32 %v4824, %v4784
        %v4841 = vmul.f32 %v4825, %v4786
        %v4842 = vmul.f32 %v4826, %v4790
        %v4843 = vmul.f32 %v4827, %v4792
        %v4844 = vmul.f32 %v4828, %v4794
        %v4845 = vmul.f32 %v4829, %v4796
        %v4846 = vmul.f32 %v4830, 0.044715
        %v4847 = vmul.f32 %v4831, 0.044715
        %v4848 = vmul.f32 %v4832, 0.044715
        %v4849 = vmul.f32 %v4833, 0.044715
        %v4850 = vmul.f32 %v4834, 0.044715
        %v4851 = vmul.f32 %v4835, 0.044715
        %v4852 = vmul.f32 %v4836, 0.044715
        %v4853 = vmul.f32 %v4837, 0.044715
        %v4854 = vmul.f32 %v4838, 0.044715
        %v4855 = vmul.f32 %v4839, 0.044715
        %v4856 = vmul.f32 %v4840, 0.044715
        %v4857 = vmul.f32 %v4841, 0.044715
        %v4858 = vmul.f32 %v4842, 0.044715
        %v4859 = vmul.f32 %v4843, 0.044715
        %v4860 = vmul.f32 %v4844, 0.044715
        %v4861 = vmul.f32 %v4845, 0.044715
        %v4862 = vadd.f32 %v4760, %v4846
        %v4863 = vadd.f32 %v4762, %v4847
        %v4864 = vadd.f32 %v4764, %v4848
        %v4865 = vadd.f32 %v4766, %v4849
        %v4866 = vadd.f32 %v4770, %v4850
        %v4867 = vadd.f32 %v4772, %v4851
        %v4868 = vadd.f32 %v4774, %v4852
        %v4869 = vadd.f32 %v4776, %v4853
        %v4870 = vadd.f32 %v4780, %v4854
        %v4871 = vadd.f32 %v4782, %v4855
        %v4872 = vadd.f32 %v4784, %v4856
        %v4873 = vadd.f32 %v4786, %v4857
        %v4874 = vadd.f32 %v4790, %v4858
        %v4875 = vadd.f32 %v4792, %v4859
        %v4876 = vadd.f32 %v4794, %v4860
        %v4877 = vadd.f32 %v4796, %v4861
        %v4878 = vmul.f32 %v4862, 0.7978846
        %v4879 = vmul.f32 %v4863, 0.7978846
        %v4880 = vmul.f32 %v4864, 0.7978846
        %v4881 = vmul.f32 %v4865, 0.7978846
        %v4882 = vmul.f32 %v4866, 0.7978846
        %v4883 = vmul.f32 %v4867, 0.7978846
        %v4884 = vmul.f32 %v4868, 0.7978846
        %v4885 = vmul.f32 %v4869, 0.7978846
        %v4886 = vmul.f32 %v4870, 0.7978846
        %v4887 = vmul.f32 %v4871, 0.7978846
        %v4888 = vmul.f32 %v4872, 0.7978846
        %v4889 = vmul.f32 %v4873, 0.7978846
        %v4890 = vmul.f32 %v4874, 0.7978846
        %v4891 = vmul.f32 %v4875, 0.7978846
        %v4892 = vmul.f32 %v4876, 0.7978846
        %v4893 = vmul.f32 %v4877, 0.7978846
        %v4894 = vtanh.pop %v4878
        %v4895 = vtanh.pop %v4879
        %v4896 = vtanh.pop %v4880
        %v4897 = vtanh.pop %v4881
        %v4898 = vtanh.pop %v4882
        %v4899 = vtanh.pop %v4883
        %v4900 = vtanh.pop %v4884
        %v4901 = vtanh.pop %v4885
        %v4902 = vtanh.pop %v4886
        %v4903 = vtanh.pop %v4887
        %v4904 = vtanh.pop %v4888
        %v4905 = vtanh.pop %v4889
        %v4906 = vtanh.pop %v4890
        %v4907 = vtanh.pop %v4891
        %v4908 = vtanh.pop %v4892
        %v4909 = vtanh.pop %v4893
        %v4910 = vadd.f32 %v4894, 1.0
        %v4911 = vadd.f32 %v4895, 1.0
        %v4912 = vadd.f32 %v4896, 1.0
        %v4913 = vadd.f32 %v4897, 1.0
        %v4914 = vadd.f32 %v4898, 1.0
        %v4915 = vadd.f32 %v4899, 1.0
        %v4916 = vadd.f32 %v4900, 1.0
        %v4917 = vadd.f32 %v4901, 1.0
        %v4918 = vadd.f32 %v4902, 1.0
        %v4919 = vadd.f32 %v4903, 1.0
        %v4920 = vadd.f32 %v4904, 1.0
        %v4921 = vadd.f32 %v4905, 1.0
        %v4922 = vadd.f32 %v4906, 1.0
        %v4923 = vadd.f32 %v4907, 1.0
        %v4924 = vadd.f32 %v4908, 1.0
        %v4925 = vadd.f32 %v4909, 1.0
        %v4926 = vmul.f32 %v4798, %v4910
        %v4927 = vmul.f32 %v4799, %v4911
        %v4928 = vmul.f32 %v4800, %v4912
        %v4929 = vmul.f32 %v4801, %v4913
        %v4930 = vmul.f32 %v4802, %v4914
        %v4931 = vmul.f32 %v4803, %v4915
        %v4932 = vmul.f32 %v4804, %v4916
        %v4933 = vmul.f32 %v4805, %v4917
        %v4934 = vmul.f32 %v4806, %v4918
        %v4935 = vmul.f32 %v4807, %v4919
        %v4936 = vmul.f32 %v4808, %v4920
        %v4937 = vmul.f32 %v4809, %v4921
        %v4938 = vmul.f32 %v4810, %v4922
        %v4939 = vmul.f32 %v4811, %v4923
        %v4940 = vmul.f32 %v4812, %v4924
        %v4941 = vmul.f32 %v4813, %v4925
        %v4942 = vlaneseq
        %v4943 = vshrl.u32 %v4942, 7
        %v4944 = vsub.s32 1, %v4943
        %v4945 = vrot.slane %v4515, %v4944
        %v4946 = vlaneseq
        %v4947 = vshrl.u32 %v4946, 7
        %v4948 = vsub.s32 1, %v4947
        %v4949 = vrot.slane %v4516, %v4948
        %v4950 = vmul.f32 %v4926, %v4945
        %v4951 = vmul.f32 %v4927, %v4949
        %v4952 = vmul.f32 %v4928, %v4945
        %v4953 = vmul.f32 %v4929, %v4949
        %v4954 = vmul.f32 %v4930, %v4945
        %v4955 = vmul.f32 %v4931, %v4949
        %v4956 = vmul.f32 %v4932, %v4945
        %v4957 = vmul.f32 %v4933, %v4949
        %v4958 = vmul.f32 %v4934, %v4945
        %v4959 = vmul.f32 %v4935, %v4949
        %v4960 = vmul.f32 %v4936, %v4945
        %v4961 = vmul.f32 %v4937, %v4949
        %v4962 = vmul.f32 %v4938, %v4945
        %v4963 = vmul.f32 %v4939, %v4949
        %v4964 = vmul.f32 %v4940, %v4945
        %v4965 = vmul.f32 %v4941, %v4949
        %v4966 = vlaneseq
        %v4967 = vshrl.u32 %v4966, 7
        %v4968 = vsub.s32 2, %v4967
        %v4969 = vrot.slane %v4515, %v4968
        %v4970 = vlaneseq
        %v4971 = vshrl.u32 %v4970, 7
        %v4972 = vsub.s32 2, %v4971
        %v4973 = vrot.slane %v4516, %v4972
        %v4974 = vadd.f32 %v4950, %v4969
        %v4975 = vadd.f32 %v4951, %v4973
        %v4976 = vadd.f32 %v4952, %v4969
        %v4977 = vadd.f32 %v4953, %v4973
        %v4978 = vadd.f32 %v4954, %v4969
        %v4979 = vadd.f32 %v4955, %v4973
        %v4980 = vadd.f32 %v4956, %v4969
        %v4981 = vadd.f32 %v4957, %v4973
        %v4982 = vadd.f32 %v4958, %v4969
        %v4983 = vadd.f32 %v4959, %v4973
        %v4984 = vadd.f32 %v4960, %v4969
        %v4985 = vadd.f32 %v4961, %v4973
        %v4986 = vadd.f32 %v4962, %v4969
        %v4987 = vadd.f32 %v4963, %v4973
        %v4988 = vadd.f32 %v4964, %v4969
        %v4989 = vadd.f32 %v4965, %v4973
        %4990 = vst [vmem:[#allocation2 + $0x30] sm:$0xff] %v4974
        %4991 = vst [vmem:[#allocation2 + $0x38] sm:$0xff] %v4975
        %4992 = vst [vmem:[#allocation2 + $0x40] sm:$0xff] %v4976
        %4993 = vst [vmem:[#allocation2 + $0x48] sm:$0xff] %v4977
        %4994 = vst [vmem:[#allocation2 + $0x50] sm:$0xff] %v4978
        %4995 = vst [vmem:[#allocation2 + $0x58] sm:$0xff] %v4979
        %4996 = vst [vmem:[#allocation2 + $0x60] sm:$0xff] %v4980
        %4997 = vst [vmem:[#allocation2 + $0x68] sm:$0xff] %v4981
        %4998 = vst [vmem:[#allocation2 + $0x70] sm:$0xff] %v4982
        %4999 = vst [vmem:[#allocation2 + $0x78] sm:$0xff] %v4983
        %5000 = vst [vmem:[#allocation2 + $0x80] sm:$0xff] %v4984
        %5001 = vst [vmem:[#allocation2 + $0x88] sm:$0xff] %v4985
        %5002 = vst [vmem:[#allocation2 + $0x90] sm:$0xff] %v4986
        %5003 = vst [vmem:[#allocation2 + $0x98] sm:$0xff] %v4987
        %5004 = vst [vmem:[#allocation2 + $0xa0] sm:$0xff] %v4988
        %5005 = vst [vmem:[#allocation2 + $0xa8] sm:$0xff] %v4989
        %v5006 = vld [vmem:[%s9] sm:$0xff]
        %v5007 = vld [vmem:[%s9 + $0x8] sm:$0xff]
        %v5008 = vld [vmem:[#allocation2] sm:$0xc0]
        %v5009 = vld [vmem:[#allocation2 + $0x8] sm:$0xc0]
        %v5010 = vld [vmem:[#allocation2 + $0x10] sm:$0xff]
        %v5011 = vld [vmem:[#allocation2 + $0x18] sm:$0xff]
        %v5012 = vld [vmem:[#allocation2 + $0x20] sm:$0xff]
        %v5013 = vld [vmem:[#allocation2 + $0x28] sm:$0xff]
        %v5014 = vld [vmem:[#allocation2 + $0x30] sm:$0xff]
        %v5015 = vld [vmem:[#allocation2 + $0x38] sm:$0xff]
        %v5016 = vld [vmem:[#allocation2 + $0x40] sm:$0xff]
        %v5017 = vld [vmem:[#allocation2 + $0x48] sm:$0xff]
        %v5018 = vld [vmem:[#allocation2 + $0x50] sm:$0xff]
        %v5019 = vld [vmem:[#allocation2 + $0x58] sm:$0xff]
        %v5020 = vld [vmem:[#allocation2 + $0x60] sm:$0xff]
        %v5021 = vld [vmem:[#allocation2 + $0x68] sm:$0xff]
        %v5022 = vld [vmem:[#allocation2 + $0x70] sm:$0xff]
        %v5023 = vld [vmem:[#allocation2 + $0x78] sm:$0xff]
        %v5024 = vld [vmem:[#allocation2 + $0x80] sm:$0xff]
        %v5025 = vld [vmem:[#allocation2 + $0x88] sm:$0xff]
        %v5026 = vld [vmem:[#allocation2 + $0x90] sm:$0xff]
        %v5027 = vld [vmem:[#allocation2 + $0x98] sm:$0xff]
        %v5028 = vld [vmem:[#allocation2 + $0xa0] sm:$0xff]
        %v5029 = vld [vmem:[#allocation2 + $0xa8] sm:$0xff]
        %v5030 = vld [vmem:[#allocation2 + $0xb0] sm:$0xff]
        %v5031 = vld [vmem:[#allocation2 + $0xb8] sm:$0xff]
        %v5032 = vld [vmem:[#allocation2 + $0xc0] sm:$0x3f]
        %v5033 = vld [vmem:[#allocation2 + $0xc8] sm:$0x3f]
        %v5034 = vld [vmem:[%s3] sm:$0xff]
        %v5035 = vld [vmem:[%s3 + $0x8] sm:$0xff]
        %v5036 = vld [vmem:[%s3 + $0x10] sm:$0xff]
        %v5037 = vld [vmem:[%s3 + $0x18] sm:$0xff]
        %v5038 = vld [vmem:[%s3 + $0x20] sm:$0xff]
        %v5039 = vld [vmem:[%s3 + $0x28] sm:$0xff]
        %v5040 = vld [vmem:[%s3 + $0x30] sm:$0xff]
        %v5041 = vld [vmem:[%s3 + $0x38] sm:$0xff]
        %v5042 = vld [vmem:[%s3 + $0x40] sm:$0xff]
        %v5043 = vld [vmem:[%s3 + $0x48] sm:$0xff]
        %v5044 = vld [vmem:[%s3 + $0x50] sm:$0xff]
        %v5045 = vld [vmem:[%s3 + $0x58] sm:$0xff]
        %v5046 = vld [vmem:[%s3 + $0x60] sm:$0xff]
        %v5047 = vld [vmem:[%s3 + $0x68] sm:$0xff]
        %v5048 = vld [vmem:[%s3 + $0x70] sm:$0xff]
        %v5049 = vld [vmem:[%s3 + $0x78] sm:$0xff]
        %v5050 = vld [vmem:[%s3 + $0x80] sm:$0xff]
        %v5051 = vld [vmem:[%s3 + $0x88] sm:$0xff]
        %v5052 = vld [vmem:[%s3 + $0x90] sm:$0xff]
        %v5053 = vld [vmem:[%s3 + $0x98] sm:$0xff]
        %v5054 = vld [vmem:[%s3 + $0xa0] sm:$0xff]
        %v5055 = vld [vmem:[%s3 + $0xa8] sm:$0xff]
        %v5056 = vld [vmem:[%s3 + $0xb0] sm:$0xff]
        %v5057 = vld [vmem:[%s3 + $0xb8] sm:$0xff]
        %v5082 = vrot.slane %v5034, 2
        %v5083 = vrot.slane %v5035, 2
        %v5084 = vrot.slane %v5036, 2
        %v5085 = vsel %vm973, %v5082, %v5084
        %v5086 = vrot.slane %v5037, 2
        %v5087 = vsel %vm973, %v5083, %v5086
        %v5088 = vrot.slane %v5038, 2
        %v5089 = vsel %vm973, %v5084, %v5088
        %v5090 = vrot.slane %v5039, 2
        %v5091 = vsel %vm973, %v5086, %v5090
        %v5092 = vrot.slane %v5040, 2
        %v5093 = vsel %vm973, %v5088, %v5092
        %v5094 = vrot.slane %v5041, 2
        %v5095 = vsel %vm973, %v5090, %v5094
        %v5096 = vrot.slane %v5042, 2
        %v5097 = vsel %vm973, %v5092, %v5096
        %v5098 = vrot.slane %v5043, 2
        %v5099 = vsel %vm973, %v5094, %v5098
        %v5100 = vrot.slane %v5044, 2
        %v5101 = vsel %vm973, %v5096, %v5100
        %v5102 = vrot.slane %v5045, 2
        %v5103 = vsel %vm973, %v5098, %v5102
        %v5104 = vrot.slane %v5046, 2
        %v5105 = vsel %vm973, %v5100, %v5104
        %v5106 = vrot.slane %v5047, 2
        %v5107 = vsel %vm973, %v5102, %v5106
        %v5108 = vrot.slane %v5048, 2
        %v5109 = vsel %vm973, %v5104, %v5108
        %v5110 = vrot.slane %v5049, 2
        %v5111 = vsel %vm973, %v5106, %v5110
        %v5112 = vrot.slane %v5050, 2
        %v5113 = vsel %vm973, %v5108, %v5112
        %v5114 = vrot.slane %v5051, 2
        %v5115 = vsel %vm973, %v5110, %v5114
        %v5116 = vrot.slane %v5052, 2
        %v5117 = vsel %vm973, %v5112, %v5116
        %v5118 = vrot.slane %v5053, 2
        %v5119 = vsel %vm973, %v5114, %v5118
        %v5120 = vrot.slane %v5054, 2
        %v5121 = vsel %vm973, %v5116, %v5120
        %v5122 = vrot.slane %v5055, 2
        %v5123 = vsel %vm973, %v5118, %v5122
        %v5124 = vrot.slane %v5056, 2
        %v5125 = vsel %vm973, %v5120, %v5124
        %v5126 = vrot.slane %v5057, 2
        %v5127 = vsel %vm973, %v5122, %v5126
        %v5154 = vmul.f32 %v5008, %v5082
        %v5155 = vmul.f32 %v5009, %v5083
        %v5156 = vmul.f32 %v5010, %v5085
        %v5157 = vmul.f32 %v5011, %v5087
        %v5158 = vmul.f32 %v5012, %v5089
        %v5159 = vmul.f32 %v5013, %v5091
        %v5160 = vmul.f32 %v5014, %v5093
        %v5161 = vmul.f32 %v5015, %v5095
        %v5162 = vmul.f32 %v5016, %v5097
        %v5163 = vmul.f32 %v5017, %v5099
        %v5164 = vmul.f32 %v5018, %v5101
        %v5165 = vmul.f32 %v5019, %v5103
        %v5166 = vmul.f32 %v5020, %v5105
        %v5167 = vmul.f32 %v5021, %v5107
        %v5168 = vmul.f32 %v5022, %v5109
        %v5169 = vmul.f32 %v5023, %v5111
        %v5170 = vmul.f32 %v5024, %v5113
        %v5171 = vmul.f32 %v5025, %v5115
        %v5172 = vmul.f32 %v5026, %v5117
        %v5173 = vmul.f32 %v5027, %v5119
        %v5174 = vmul.f32 %v5028, %v5121
        %v5175 = vmul.f32 %v5029, %v5123
        %v5176 = vmul.f32 %v5030, %v5125
        %v5177 = vmul.f32 %v5031, %v5127
        %v5178 = vmul.f32 %v5032, %v5124
        %v5179 = vmul.f32 %v5033, %v5126
        %v5180 = vld [vmem:[%s8] ss:$8 sm:$0x3]
        %v5182 = vlaneseq
        %v5183 = vshrl.u32 %v5182, 7
        %v5184 = vsub.s32 0, %v5183
        %v5185 = vrot.slane %v5180, %v5184
        %v5186 = vlaneseq
        %v5187 = vshrl.u32 %v5186, 7
        %v5188 = vsub.s32 1, %v5187
        %v5189 = vrot.slane %v5180, %v5188
        %v5192 = vmul.f32 %v5154, %v5185
        %v5193 = vmul.f32 %v5155, %v5189
        %v5194 = vmul.f32 %v5156, %v5185
        %v5195 = vmul.f32 %v5157, %v5189
        %v5196 = vmul.f32 %v5158, %v5185
        %v5197 = vmul.f32 %v5159, %v5189
        %v5198 = vmul.f32 %v5160, %v5185
        %v5199 = vmul.f32 %v5161, %v5189
        %v5200 = vmul.f32 %v5162, %v5185
        %v5201 = vmul.f32 %v5163, %v5189
        %v5202 = vmul.f32 %v5164, %v5185
        %v5203 = vmul.f32 %v5165, %v5189
        %v5204 = vmul.f32 %v5166, %v5185
        %v5205 = vmul.f32 %v5167, %v5189
        %v5206 = vmul.f32 %v5168, %v5185
        %v5207 = vmul.f32 %v5169, %v5189
        %v5208 = vmul.f32 %v5170, %v5185
        %v5209 = vmul.f32 %v5171, %v5189
        %v5210 = vadd.f32 %v5192, 0.0
        %v5211 = vadd.f32 %v5193, 0.0
        %v5212 = vadd.f32 %v5194, 0.0
        %v5213 = vadd.f32 %v5195, 0.0
        %v5214 = vadd.f32 %v5196, 0.0
        %v5215 = vadd.f32 %v5197, 0.0
        %v5216 = vadd.f32 %v5198, 0.0
        %v5217 = vadd.f32 %v5199, 0.0
        %v5218 = vadd.f32 %v5200, 0.0
        %v5219 = vadd.f32 %v5201, 0.0
        %v5220 = vadd.f32 %v5202, 0.0
        %v5221 = vadd.f32 %v5203, 0.0
        %v5222 = vadd.f32 %v5204, 0.0
        %v5223 = vadd.f32 %v5205, 0.0
        %v5224 = vadd.f32 %v5206, 0.0
        %v5225 = vadd.f32 %v5207, 0.0
        %v5226 = vadd.f32 %v5208, 0.0
        %v5227 = vadd.f32 %v5209, 0.0
        %s5228 = scalar_lea.vmem %s8, 5
        %v5229 = vld [vmem:[%s5228] ss:$8 sm:$0x3]
        %v5231 = vlaneseq
        %v5232 = vshrl.u32 %v5231, 7
        %v5233 = vsub.s32 0, %v5232
        %v5234 = vrot.slane %v5229, %v5233
        %v5235 = vlaneseq
        %v5236 = vshrl.u32 %v5235, 7
        %v5237 = vsub.s32 1, %v5236
        %v5238 = vrot.slane %v5229, %v5237
        %v5241 = vmul.f32 %v5156, %v5234
        %v5242 = vmul.f32 %v5157, %v5238
        %v5243 = vmul.f32 %v5158, %v5234
        %v5244 = vmul.f32 %v5159, %v5238
        %v5245 = vmul.f32 %v5160, %v5234
        %v5246 = vmul.f32 %v5161, %v5238
        %v5247 = vmul.f32 %v5162, %v5234
        %v5248 = vmul.f32 %v5163, %v5238
        %v5249 = vmul.f32 %v5164, %v5234
        %v5250 = vmul.f32 %v5165, %v5238
        %v5251 = vmul.f32 %v5166, %v5234
        %v5252 = vmul.f32 %v5167, %v5238
        %v5253 = vmul.f32 %v5168, %v5234
        %v5254 = vmul.f32 %v5169, %v5238
        %v5255 = vmul.f32 %v5170, %v5234
        %v5256 = vmul.f32 %v5171, %v5238
        %v5257 = vmul.f32 %v5172, %v5234
        %v5258 = vmul.f32 %v5173, %v5238
        %v5259 = vadd.f32 %v5210, %v5241
        %v5260 = vadd.f32 %v5211, %v5242
        %v5261 = vadd.f32 %v5212, %v5243
        %v5262 = vadd.f32 %v5213, %v5244
        %v5263 = vadd.f32 %v5214, %v5245
        %v5264 = vadd.f32 %v5215, %v5246
        %v5265 = vadd.f32 %v5216, %v5247
        %v5266 = vadd.f32 %v5217, %v5248
        %v5267 = vadd.f32 %v5218, %v5249
        %v5268 = vadd.f32 %v5219, %v5250
        %v5269 = vadd.f32 %v5220, %v5251
        %v5270 = vadd.f32 %v5221, %v5252
        %v5271 = vadd.f32 %v5222, %v5253
        %v5272 = vadd.f32 %v5223, %v5254
        %v5273 = vadd.f32 %v5224, %v5255
        %v5274 = vadd.f32 %v5225, %v5256
        %v5275 = vadd.f32 %v5226, %v5257
        %v5276 = vadd.f32 %v5227, %v5258
        %s5277 = scalar_lea.vmem %s8, 18
        %v5278 = vld [vmem:[%s5277] ss:$8 sm:$0x3]
        %v5280 = vlaneseq
        %v5281 = vshrl.u32 %v5280, 7
        %v5282 = vsub.s32 0, %v5281
        %v5283 = vrot.slane %v5278, %v5282
        %v5284 = vlaneseq
        %v5285 = vshrl.u32 %v5284, 7
        %v5286 = vsub.s32 1, %v5285
        %v5287 = vrot.slane %v5278, %v5286
        %v5290 = vmul.f32 %v5158, %v5283
        %v5291 = vmul.f32 %v5159, %v5287
        %v5292 = vmul.f32 %v5160, %v5283
        %v5293 = vmul.f32 %v5161, %v5287
        %v5294 = vmul.f32 %v5162, %v5283
        %v5295 = vmul.f32 %v5163, %v5287
        %v5296 = vmul.f32 %v5164, %v5283
        %v5297 = vmul.f32 %v5165, %v5287
        %v5298 = vmul.f32 %v5166, %v5283
        %v5299 = vmul.f32 %v5167, %v5287
        %v5300 = vmul.f32 %v5168, %v5283
        %v5301 = vmul.f32 %v5169, %v5287
        %v5302 = vmul.f32 %v5170, %v5283
        %v5303 = vmul.f32 %v5171, %v5287
        %v5304 = vmul.f32 %v5172, %v5283
        %v5305 = vmul.f32 %v5173, %v5287
        %v5306 = vmul.f32 %v5174, %v5283
        %v5307 = vmul.f32 %v5175, %v5287
        %v5308 = vadd.f32 %v5259, %v5290
        %v5309 = vadd.f32 %v5260, %v5291
        %v5310 = vadd.f32 %v5261, %v5292
        %v5311 = vadd.f32 %v5262, %v5293
        %v5312 = vadd.f32 %v5263, %v5294
        %v5313 = vadd.f32 %v5264, %v5295
        %v5314 = vadd.f32 %v5265, %v5296
        %v5315 = vadd.f32 %v5266, %v5297
        %v5316 = vadd.f32 %v5267, %v5298
        %v5317 = vadd.f32 %v5268, %v5299
        %v5318 = vadd.f32 %v5269, %v5300
        %v5319 = vadd.f32 %v5270, %v5301
        %v5320 = vadd.f32 %v5271, %v5302
        %v5321 = vadd.f32 %v5272, %v5303
        %v5322 = vadd.f32 %v5273, %v5304
        %v5323 = vadd.f32 %v5274, %v5305
        %v5324 = vadd.f32 %v5275, %v5306
        %v5325 = vadd.f32 %v5276, %v5307
        %s5326 = scalar_lea.vmem %s8, 23
        %v5327 = vld [vmem:[%s5326] ss:$8 sm:$0x3]
        %v5329 = vlaneseq
        %v5330 = vshrl.u32 %v5329, 7
        %v5331 = vsub.s32 0, %v5330
        %v5332 = vrot.slane %v5327, %v5331
        %v5333 = vlaneseq
        %v5334 = vshrl.u32 %v5333, 7
        %v5335 = vsub.s32 1, %v5334
        %v5336 = vrot.slane %v5327, %v5335
        %v5339 = vmul.f32 %v5160, %v5332
        %v5340 = vmul.f32 %v5161, %v5336
        %v5341 = vmul.f32 %v5162, %v5332
        %v5342 = vmul.f32 %v5163, %v5336
        %v5343 = vmul.f32 %v5164, %v5332
        %v5344 = vmul.f32 %v5165, %v5336
        %v5345 = vmul.f32 %v5166, %v5332
        %v5346 = vmul.f32 %v5167, %v5336
        %v5347 = vmul.f32 %v5168, %v5332
        %v5348 = vmul.f32 %v5169, %v5336
        %v5349 = vmul.f32 %v5170, %v5332
        %v5350 = vmul.f32 %v5171, %v5336
        %v5351 = vmul.f32 %v5172, %v5332
        %v5352 = vmul.f32 %v5173, %v5336
        %v5353 = vmul.f32 %v5174, %v5332
        %v5354 = vmul.f32 %v5175, %v5336
        %v5355 = vmul.f32 %v5176, %v5332
        %v5356 = vmul.f32 %v5177, %v5336
        %v5357 = vadd.f32 %v5308, %v5339
        %v5358 = vadd.f32 %v5309, %v5340
        %v5359 = vadd.f32 %v5310, %v5341
        %v5360 = vadd.f32 %v5311, %v5342
        %v5361 = vadd.f32 %v5312, %v5343
        %v5362 = vadd.f32 %v5313, %v5344
        %v5363 = vadd.f32 %v5314, %v5345
        %v5364 = vadd.f32 %v5315, %v5346
        %v5365 = vadd.f32 %v5316, %v5347
        %v5366 = vadd.f32 %v5317, %v5348
        %v5367 = vadd.f32 %v5318, %v5349
        %v5368 = vadd.f32 %v5319, %v5350
        %v5369 = vadd.f32 %v5320, %v5351
        %v5370 = vadd.f32 %v5321, %v5352
        %v5371 = vadd.f32 %v5322, %v5353
        %v5372 = vadd.f32 %v5323, %v5354
        %v5373 = vadd.f32 %v5324, %v5355
        %v5374 = vadd.f32 %v5325, %v5356
        %s5375 = scalar_lea.vmem %s8, 36
        %v5376 = vld [vmem:[%s5375] ss:$8 sm:$0x3]
        %v5378 = vlaneseq
        %v5379 = vshrl.u32 %v5378, 7
        %v5380 = vsub.s32 0, %v5379
        %v5381 = vrot.slane %v5376, %v5380
        %v5382 = vlaneseq
        %v5383 = vshrl.u32 %v5382, 7
        %v5384 = vsub.s32 1, %v5383
        %v5385 = vrot.slane %v5376, %v5384
        %v5388 = vmul.f32 %v5162, %v5381
        %v5389 = vmul.f32 %v5163, %v5385
        %v5390 = vmul.f32 %v5164, %v5381
        %v5391 = vmul.f32 %v5165, %v5385
        %v5392 = vmul.f32 %v5166, %v5381
        %v5393 = vmul.f32 %v5167, %v5385
        %v5394 = vmul.f32 %v5168, %v5381
        %v5395 = vmul.f32 %v5169, %v5385
        %v5396 = vmul.f32 %v5170, %v5381
        %v5397 = vmul.f32 %v5171, %v5385
        %v5398 = vmul.f32 %v5172, %v5381
        %v5399 = vmul.f32 %v5173, %v5385
        %v5400 = vmul.f32 %v5174, %v5381
        %v5401 = vmul.f32 %v5175, %v5385
        %v5402 = vmul.f32 %v5176, %v5381
        %v5403 = vmul.f32 %v5177, %v5385
        %v5404 = vmul.f32 %v5178, %v5381
        %v5405 = vmul.f32 %v5179, %v5385
        %v5406 = vadd.f32 %v5357, %v5388
        %v5407 = vadd.f32 %v5358, %v5389
        %v5408 = vadd.f32 %v5359, %v5390
        %v5409 = vadd.f32 %v5360, %v5391
        %v5410 = vadd.f32 %v5361, %v5392
        %v5411 = vadd.f32 %v5362, %v5393
        %v5412 = vadd.f32 %v5363, %v5394
        %v5413 = vadd.f32 %v5364, %v5395
        %v5414 = vadd.f32 %v5365, %v5396
        %v5415 = vadd.f32 %v5366, %v5397
        %v5416 = vadd.f32 %v5367, %v5398
        %v5417 = vadd.f32 %v5368, %v5399
        %v5418 = vadd.f32 %v5369, %v5400
        %v5419 = vadd.f32 %v5370, %v5401
        %v5420 = vadd.f32 %v5371, %v5402
        %v5421 = vadd.f32 %v5372, %v5403
        %v5422 = vadd.f32 %v5373, %v5404
        %v5423 = vadd.f32 %v5374, %v5405
        %v5424 = vld [vmem:[#allocation2] sm:$0x80]
        %v5425 = vld [vmem:[#allocation2 + $0x8] sm:$0x80]
        %v5426 = vld [vmem:[#allocation2 + $0xc0] sm:$0x7f]
        %v5427 = vld [vmem:[#allocation2 + $0xc8] sm:$0x7f]
        %v5428 = vld [vmem:[%s1320] sm:$0xff]
        %v5429 = vld [vmem:[%s1320 + $0x8] sm:$0xff]
        %v5430 = vld [vmem:[%s1320 + $0x10] sm:$0xff]
        %v5431 = vld [vmem:[%s1320 + $0x18] sm:$0xff]
        %v5432 = vld [vmem:[%s1320 + $0x20] sm:$0xff]
        %v5433 = vld [vmem:[%s1320 + $0x28] sm:$0xff]
        %v5434 = vld [vmem:[%s1320 + $0x30] sm:$0xff]
        %v5435 = vld [vmem:[%s1320 + $0x38] sm:$0xff]
        %v5436 = vld [vmem:[%s1320 + $0x40] sm:$0xff]
        %v5437 = vld [vmem:[%s1320 + $0x48] sm:$0xff]
        %v5438 = vld [vmem:[%s1320 + $0x50] sm:$0xff]
        %v5439 = vld [vmem:[%s1320 + $0x58] sm:$0xff]
        %v5440 = vld [vmem:[%s1320 + $0x60] sm:$0xff]
        %v5441 = vld [vmem:[%s1320 + $0x68] sm:$0xff]
        %v5442 = vld [vmem:[%s1320 + $0x70] sm:$0xff]
        %v5443 = vld [vmem:[%s1320 + $0x78] sm:$0xff]
        %v5444 = vld [vmem:[%s1320 + $0x80] sm:$0xff]
        %v5445 = vld [vmem:[%s1320 + $0x88] sm:$0xff]
        %v5446 = vld [vmem:[%s1320 + $0x90] sm:$0xff]
        %v5447 = vld [vmem:[%s1320 + $0x98] sm:$0xff]
        %v5448 = vld [vmem:[%s1320 + $0xa0] sm:$0xff]
        %v5449 = vld [vmem:[%s1320 + $0xa8] sm:$0xff]
        %v5450 = vld [vmem:[%s1320 + $0xb0] sm:$0xff]
        %v5451 = vld [vmem:[%s1320 + $0xb8] sm:$0xff]
        %v5476 = vrot.slane %v5428, 1
        %v5477 = vrot.slane %v5429, 1
        %v5478 = vrot.slane %v5430, 1
        %v5479 = vsel %vm1369, %v5476, %v5478
        %v5480 = vrot.slane %v5431, 1
        %v5481 = vsel %vm1369, %v5477, %v5480
        %v5482 = vrot.slane %v5432, 1
        %v5483 = vsel %vm1369, %v5478, %v5482
        %v5484 = vrot.slane %v5433, 1
        %v5485 = vsel %vm1369, %v5480, %v5484
        %v5486 = vrot.slane %v5434, 1
        %v5487 = vsel %vm1369, %v5482, %v5486
        %v5488 = vrot.slane %v5435, 1
        %v5489 = vsel %vm1369, %v5484, %v5488
        %v5490 = vrot.slane %v5436, 1
        %v5491 = vsel %vm1369, %v5486, %v5490
        %v5492 = vrot.slane %v5437, 1
        %v5493 = vsel %vm1369, %v5488, %v5492
        %v5494 = vrot.slane %v5438, 1
        %v5495 = vsel %vm1369, %v5490, %v5494
        %v5496 = vrot.slane %v5439, 1
        %v5497 = vsel %vm1369, %v5492, %v5496
        %v5498 = vrot.slane %v5440, 1
        %v5499 = vsel %vm1369, %v5494, %v5498
        %v5500 = vrot.slane %v5441, 1
        %v5501 = vsel %vm1369, %v5496, %v5500
        %v5502 = vrot.slane %v5442, 1
        %v5503 = vsel %vm1369, %v5498, %v5502
        %v5504 = vrot.slane %v5443, 1
        %v5505 = vsel %vm1369, %v5500, %v5504
        %v5506 = vrot.slane %v5444, 1
        %v5507 = vsel %vm1369, %v5502, %v5506
        %v5508 = vrot.slane %v5445, 1
        %v5509 = vsel %vm1369, %v5504, %v5508
        %v5510 = vrot.slane %v5446, 1
        %v5511 = vsel %vm1369, %v5506, %v5510
        %v5512 = vrot.slane %v5447, 1
        %v5513 = vsel %vm1369, %v5508, %v5512
        %v5514 = vrot.slane %v5448, 1
        %v5515 = vsel %vm1369, %v5510, %v5514
        %v5516 = vrot.slane %v5449, 1
        %v5517 = vsel %vm1369, %v5512, %v5516
        %v5518 = vrot.slane %v5450, 1
        %v5519 = vsel %vm1369, %v5514, %v5518
        %v5520 = vrot.slane %v5451, 1
        %v5521 = vsel %vm1369, %v5516, %v5520
        %v5548 = vmul.f32 %v5424, %v5476
        %v5549 = vmul.f32 %v5425, %v5477
        %v5550 = vmul.f32 %v5010, %v5479
        %v5551 = vmul.f32 %v5011, %v5481
        %v5552 = vmul.f32 %v5012, %v5483
        %v5553 = vmul.f32 %v5013, %v5485
        %v5554 = vmul.f32 %v5014, %v5487
        %v5555 = vmul.f32 %v5015, %v5489
        %v5556 = vmul.f32 %v5016, %v5491
        %v5557 = vmul.f32 %v5017, %v5493
        %v5558 = vmul.f32 %v5018, %v5495
        %v5559 = vmul.f32 %v5019, %v5497
        %v5560 = vmul.f32 %v5020, %v5499
        %v5561 = vmul.f32 %v5021, %v5501
        %v5562 = vmul.f32 %v5022, %v5503
        %v5563 = vmul.f32 %v5023, %v5505
        %v5564 = vmul.f32 %v5024, %v5507
        %v5565 = vmul.f32 %v5025, %v5509
        %v5566 = vmul.f32 %v5026, %v5511
        %v5567 = vmul.f32 %v5027, %v5513
        %v5568 = vmul.f32 %v5028, %v5515
        %v5569 = vmul.f32 %v5029, %v5517
        %v5570 = vmul.f32 %v5030, %v5519
        %v5571 = vmul.f32 %v5031, %v5521
        %v5572 = vmul.f32 %v5426, %v5518
        %v5573 = vmul.f32 %v5427, %v5520
        %s5574 = scalar_lea.vmem %s8, 1
        %v5575 = vld [vmem:[%s5574] ss:$8 sm:$0x3]
        %v5577 = vlaneseq
        %v5578 = vshrl.u32 %v5577, 7
        %v5579 = vsub.s32 0, %v5578
        %v5580 = vrot.slane %v5575, %v5579
        %v5581 = vlaneseq
        %v5582 = vshrl.u32 %v5581, 7
        %v5583 = vsub.s32 1, %v5582
        %v5584 = vrot.slane %v5575, %v5583
        %v5587 = vmul.f32 %v5548, %v5580
        %v5588 = vmul.f32 %v5549, %v5584
        %v5589 = vmul.f32 %v5550, %v5580
        %v5590 = vmul.f32 %v5551, %v5584
        %v5591 = vmul.f32 %v5552, %v5580
        %v5592 = vmul.f32 %v5553, %v5584
        %v5593 = vmul.f32 %v5554, %v5580
        %v5594 = vmul.f32 %v5555, %v5584
        %v5595 = vmul.f32 %v5556, %v5580
        %v5596 = vmul.f32 %v5557, %v5584
        %v5597 = vmul.f32 %v5558, %v5580
        %v5598 = vmul.f32 %v5559, %v5584
        %v5599 = vmul.f32 %v5560, %v5580
        %v5600 = vmul.f32 %v5561, %v5584
        %v5601 = vmul.f32 %v5562, %v5580
        %v5602 = vmul.f32 %v5563, %v5584
        %v5603 = vmul.f32 %v5564, %v5580
        %v5604 = vmul.f32 %v5565, %v5584
        %v5623 = vrot.slane %v5587, 1
        %v5624 = vrot.slane %v5589, 1
        %v5625 = vsel %vm1369, %v5623, %v5624
        %v5626 = vrot.slane %v5588, 1
        %v5627 = vrot.slane %v5590, 1
        %v5628 = vsel %vm1369, %v5626, %v5627
        %v5629 = vrot.slane %v5591, 1
        %v5630 = vsel %vm1369, %v5624, %v5629
        %v5631 = vrot.slane %v5592, 1
        %v5632 = vsel %vm1369, %v5627, %v5631
        %v5633 = vrot.slane %v5593, 1
        %v5634 = vsel %vm1369, %v5629, %v5633
        %v5635 = vrot.slane %v5594, 1
        %v5636 = vsel %vm1369, %v5631, %v5635
        %v5637 = vrot.slane %v5595, 1
        %v5638 = vsel %vm1369, %v5633, %v5637
        %v5639 = vrot.slane %v5596, 1
        %v5640 = vsel %vm1369, %v5635, %v5639
        %v5641 = vrot.slane %v5597, 1
        %v5642 = vsel %vm1369, %v5637, %v5641
        %v5643 = vrot.slane %v5598, 1
        %v5644 = vsel %vm1369, %v5639, %v5643
        %v5645 = vrot.slane %v5599, 1
        %v5646 = vsel %vm1369, %v5641, %v5645
        %v5647 = vrot.slane %v5600, 1
        %v5648 = vsel %vm1369, %v5643, %v5647
        %v5649 = vrot.slane %v5601, 1
        %v5650 = vsel %vm1369, %v5645, %v5649
        %v5651 = vrot.slane %v5602, 1
        %v5652 = vsel %vm1369, %v5647, %v5651
        %v5653 = vrot.slane %v5603, 1
        %v5654 = vsel %vm1369, %v5649, %v5653
        %v5655 = vrot.slane %v5604, 1
        %v5656 = vsel %vm1369, %v5651, %v5655
        %v5675 = vadd.f32 %v5406, %v5625
        %v5676 = vadd.f32 %v5407, %v5628
        %v5677 = vadd.f32 %v5408, %v5630
        %v5678 = vadd.f32 %v5409, %v5632
        %v5679 = vadd.f32 %v5410, %v5634
        %v5680 = vadd.f32 %v5411, %v5636
        %v5681 = vadd.f32 %v5412, %v5638
        %v5682 = vadd.f32 %v5413, %v5640
        %v5683 = vadd.f32 %v5414, %v5642
        %v5684 = vadd.f32 %v5415, %v5644
        %v5685 = vadd.f32 %v5416, %v5646
        %v5686 = vadd.f32 %v5417, %v5648
        %v5687 = vadd.f32 %v5418, %v5650
        %v5688 = vadd.f32 %v5419, %v5652
        %v5689 = vadd.f32 %v5420, %v5654
        %v5690 = vadd.f32 %v5421, %v5656
        %v5691 = vadd.f32 %v5422, %v5653
        %v5692 = vadd.f32 %v5423, %v5655
        %s5693 = scalar_lea.vmem %s8, 6
        %v5694 = vld [vmem:[%s5693] ss:$8 sm:$0x3]
        %v5696 = vlaneseq
        %v5697 = vshrl.u32 %v5696, 7
        %v5698 = vsub.s32 0, %v5697
        %v5699 = vrot.slane %v5694, %v5698
        %v5700 = vlaneseq
        %v5701 = vshrl.u32 %v5700, 7
        %v5702 = vsub.s32 1, %v5701
        %v5703 = vrot.slane %v5694, %v5702
        %v5706 = vmul.f32 %v5550, %v5699
        %v5707 = vmul.f32 %v5551, %v5703
        %v5708 = vmul.f32 %v5552, %v5699
        %v5709 = vmul.f32 %v5553, %v5703
        %v5710 = vmul.f32 %v5554, %v5699
        %v5711 = vmul.f32 %v5555, %v5703
        %v5712 = vmul.f32 %v5556, %v5699
        %v5713 = vmul.f32 %v5557, %v5703
        %v5714 = vmul.f32 %v5558, %v5699
        %v5715 = vmul.f32 %v5559, %v5703
        %v5716 = vmul.f32 %v5560, %v5699
        %v5717 = vmul.f32 %v5561, %v5703
        %v5718 = vmul.f32 %v5562, %v5699
        %v5719 = vmul.f32 %v5563, %v5703
        %v5720 = vmul.f32 %v5564, %v5699
        %v5721 = vmul.f32 %v5565, %v5703
        %v5722 = vmul.f32 %v5566, %v5699
        %v5723 = vmul.f32 %v5567, %v5703
        %v5742 = vrot.slane %v5706, 1
        %v5743 = vrot.slane %v5708, 1
        %v5744 = vsel %vm1369, %v5742, %v5743
        %v5745 = vrot.slane %v5707, 1
        %v5746 = vrot.slane %v5709, 1
        %v5747 = vsel %vm1369, %v5745, %v5746
        %v5748 = vrot.slane %v5710, 1
        %v5749 = vsel %vm1369, %v5743, %v5748
        %v5750 = vrot.slane %v5711, 1
        %v5751 = vsel %vm1369, %v5746, %v5750
        %v5752 = vrot.slane %v5712, 1
        %v5753 = vsel %vm1369, %v5748, %v5752
        %v5754 = vrot.slane %v5713, 1
        %v5755 = vsel %vm1369, %v5750, %v5754
        %v5756 = vrot.slane %v5714, 1
        %v5757 = vsel %vm1369, %v5752, %v5756
        %v5758 = vrot.slane %v5715, 1
        %v5759 = vsel %vm1369, %v5754, %v5758
        %v5760 = vrot.slane %v5716, 1
        %v5761 = vsel %vm1369, %v5756, %v5760
        %v5762 = vrot.slane %v5717, 1
        %v5763 = vsel %vm1369, %v5758, %v5762
        %v5764 = vrot.slane %v5718, 1
        %v5765 = vsel %vm1369, %v5760, %v5764
        %v5766 = vrot.slane %v5719, 1
        %v5767 = vsel %vm1369, %v5762, %v5766
        %v5768 = vrot.slane %v5720, 1
        %v5769 = vsel %vm1369, %v5764, %v5768
        %v5770 = vrot.slane %v5721, 1
        %v5771 = vsel %vm1369, %v5766, %v5770
        %v5772 = vrot.slane %v5722, 1
        %v5773 = vsel %vm1369, %v5768, %v5772
        %v5774 = vrot.slane %v5723, 1
        %v5775 = vsel %vm1369, %v5770, %v5774
        %v5794 = vadd.f32 %v5675, %v5744
        %v5795 = vadd.f32 %v5676, %v5747
        %v5796 = vadd.f32 %v5677, %v5749
        %v5797 = vadd.f32 %v5678, %v5751
        %v5798 = vadd.f32 %v5679, %v5753
        %v5799 = vadd.f32 %v5680, %v5755
        %v5800 = vadd.f32 %v5681, %v5757
        %v5801 = vadd.f32 %v5682, %v5759
        %v5802 = vadd.f32 %v5683, %v5761
        %v5803 = vadd.f32 %v5684, %v5763
        %v5804 = vadd.f32 %v5685, %v5765
        %v5805 = vadd.f32 %v5686, %v5767
        %v5806 = vadd.f32 %v5687, %v5769
        %v5807 = vadd.f32 %v5688, %v5771
        %v5808 = vadd.f32 %v5689, %v5773
        %v5809 = vadd.f32 %v5690, %v5775
        %v5810 = vadd.f32 %v5691, %v5772
        %v5811 = vadd.f32 %v5692, %v5774
        %s5812 = scalar_lea.vmem %s8, 19
        %v5813 = vld [vmem:[%s5812] ss:$8 sm:$0x3]
        %v5815 = vlaneseq
        %v5816 = vshrl.u32 %v5815, 7
        %v5817 = vsub.s32 0, %v5816
        %v5818 = vrot.slane %v5813, %v5817
        %v5819 = vlaneseq
        %v5820 = vshrl.u32 %v5819, 7
        %v5821 = vsub.s32 1, %v5820
        %v5822 = vrot.slane %v5813, %v5821
        %v5825 = vmul.f32 %v5552, %v5818
        %v5826 = vmul.f32 %v5553, %v5822
        %v5827 = vmul.f32 %v5554, %v5818
        %v5828 = vmul.f32 %v5555, %v5822
        %v5829 = vmul.f32 %v5556, %v5818
        %v5830 = vmul.f32 %v5557, %v5822
        %v5831 = vmul.f32 %v5558, %v5818
        %v5832 = vmul.f32 %v5559, %v5822
        %v5833 = vmul.f32 %v5560, %v5818
        %v5834 = vmul.f32 %v5561, %v5822
        %v5835 = vmul.f32 %v5562, %v5818
        %v5836 = vmul.f32 %v5563, %v5822
        %v5837 = vmul.f32 %v5564, %v5818
        %v5838 = vmul.f32 %v5565, %v5822
        %v5839 = vmul.f32 %v5566, %v5818
        %v5840 = vmul.f32 %v5567, %v5822
        %v5841 = vmul.f32 %v5568, %v5818
        %v5842 = vmul.f32 %v5569, %v5822
        %v5861 = vrot.slane %v5825, 1
        %v5862 = vrot.slane %v5827, 1
        %v5863 = vsel %vm1369, %v5861, %v5862
        %v5864 = vrot.slane %v5826, 1
        %v5865 = vrot.slane %v5828, 1
        %v5866 = vsel %vm1369, %v5864, %v5865
        %v5867 = vrot.slane %v5829, 1
        %v5868 = vsel %vm1369, %v5862, %v5867
        %v5869 = vrot.slane %v5830, 1
        %v5870 = vsel %vm1369, %v5865, %v5869
        %v5871 = vrot.slane %v5831, 1
        %v5872 = vsel %vm1369, %v5867, %v5871
        %v5873 = vrot.slane %v5832, 1
        %v5874 = vsel %vm1369, %v5869, %v5873
        %v5875 = vrot.slane %v5833, 1
        %v5876 = vsel %vm1369, %v5871, %v5875
        %v5877 = vrot.slane %v5834, 1
        %v5878 = vsel %vm1369, %v5873, %v5877
        %v5879 = vrot.slane %v5835, 1
        %v5880 = vsel %vm1369, %v5875, %v5879
        %v5881 = vrot.slane %v5836, 1
        %v5882 = vsel %vm1369, %v5877, %v5881
        %v5883 = vrot.slane %v5837, 1
        %v5884 = vsel %vm1369, %v5879, %v5883
        %v5885 = vrot.slane %v5838, 1
        %v5886 = vsel %vm1369, %v5881, %v5885
        %v5887 = vrot.slane %v5839, 1
        %v5888 = vsel %vm1369, %v5883, %v5887
        %v5889 = vrot.slane %v5840, 1
        %v5890 = vsel %vm1369, %v5885, %v5889
        %v5891 = vrot.slane %v5841, 1
        %v5892 = vsel %vm1369, %v5887, %v5891
        %v5893 = vrot.slane %v5842, 1
        %v5894 = vsel %vm1369, %v5889, %v5893
        %v5913 = vadd.f32 %v5794, %v5863
        %v5914 = vadd.f32 %v5795, %v5866
        %v5915 = vadd.f32 %v5796, %v5868
        %v5916 = vadd.f32 %v5797, %v5870
        %v5917 = vadd.f32 %v5798, %v5872
        %v5918 = vadd.f32 %v5799, %v5874
        %v5919 = vadd.f32 %v5800, %v5876
        %v5920 = vadd.f32 %v5801, %v5878
        %v5921 = vadd.f32 %v5802, %v5880
        %v5922 = vadd.f32 %v5803, %v5882
        %v5923 = vadd.f32 %v5804, %v5884
        %v5924 = vadd.f32 %v5805, %v5886
        %v5925 = vadd.f32 %v5806, %v5888
        %v5926 = vadd.f32 %v5807, %v5890
        %v5927 = vadd.f32 %v5808, %v5892
        %v5928 = vadd.f32 %v5809, %v5894
        %v5929 = vadd.f32 %v5810, %v5891
        %v5930 = vadd.f32 %v5811, %v5893
        %s5931 = scalar_lea.vmem %s8, 32
        %v5932 = vld [vmem:[%s5931] ss:$8 sm:$0x3]
        %v5934 = vlaneseq
        %v5935 = vshrl.u32 %v5934, 7
        %v5936 = vsub.s32 0, %v5935
        %v5937 = vrot.slane %v5932, %v5936
        %v5938 = vlaneseq
        %v5939 = vshrl.u32 %v5938, 7
        %v5940 = vsub.s32 1, %v5939
        %v5941 = vrot.slane %v5932, %v5940
        %v5944 = vmul.f32 %v5554, %v5937
        %v5945 = vmul.f32 %v5555, %v5941
        %v5946 = vmul.f32 %v5556, %v5937
        %v5947 = vmul.f32 %v5557, %v5941
        %v5948 = vmul.f32 %v5558, %v5937
        %v5949 = vmul.f32 %v5559, %v5941
        %v5950 = vmul.f32 %v5560, %v5937
        %v5951 = vmul.f32 %v5561, %v5941
        %v5952 = vmul.f32 %v5562, %v5937
        %v5953 = vmul.f32 %v5563, %v5941
        %v5954 = vmul.f32 %v5564, %v5937
        %v5955 = vmul.f32 %v5565, %v5941
        %v5956 = vmul.f32 %v5566, %v5937
        %v5957 = vmul.f32 %v5567, %v5941
        %v5958 = vmul.f32 %v5568, %v5937
        %v5959 = vmul.f32 %v5569, %v5941
        %v5960 = vmul.f32 %v5570, %v5937
        %v5961 = vmul.f32 %v5571, %v5941
        %v5980 = vrot.slane %v5944, 1
        %v5981 = vrot.slane %v5946, 1
        %v5982 = vsel %vm1369, %v5980, %v5981
        %v5983 = vrot.slane %v5945, 1
        %v5984 = vrot.slane %v5947, 1
        %v5985 = vsel %vm1369, %v5983, %v5984
        %v5986 = vrot.slane %v5948, 1
        %v5987 = vsel %vm1369, %v5981, %v5986
        %v5988 = vrot.slane %v5949, 1
        %v5989 = vsel %vm1369, %v5984, %v5988
        %v5990 = vrot.slane %v5950, 1
        %v5991 = vsel %vm1369, %v5986, %v5990
        %v5992 = vrot.slane %v5951, 1
        %v5993 = vsel %vm1369, %v5988, %v5992
        %v5994 = vrot.slane %v5952, 1
        %v5995 = vsel %vm1369, %v5990, %v5994
        %v5996 = vrot.slane %v5953, 1
        %v5997 = vsel %vm1369, %v5992, %v5996
        %v5998 = vrot.slane %v5954, 1
        %v5999 = vsel %vm1369, %v5994, %v5998
        %v6000 = vrot.slane %v5955, 1
        %v6001 = vsel %vm1369, %v5996, %v6000
        %v6002 = vrot.slane %v5956, 1
        %v6003 = vsel %vm1369, %v5998, %v6002
        %v6004 = vrot.slane %v5957, 1
        %v6005 = vsel %vm1369, %v6000, %v6004
        %v6006 = vrot.slane %v5958, 1
        %v6007 = vsel %vm1369, %v6002, %v6006
        %v6008 = vrot.slane %v5959, 1
        %v6009 = vsel %vm1369, %v6004, %v6008
        %v6010 = vrot.slane %v5960, 1
        %v6011 = vsel %vm1369, %v6006, %v6010
        %v6012 = vrot.slane %v5961, 1
        %v6013 = vsel %vm1369, %v6008, %v6012
        %v6032 = vadd.f32 %v5913, %v5982
        %v6033 = vadd.f32 %v5914, %v5985
        %v6034 = vadd.f32 %v5915, %v5987
        %v6035 = vadd.f32 %v5916, %v5989
        %v6036 = vadd.f32 %v5917, %v5991
        %v6037 = vadd.f32 %v5918, %v5993
        %v6038 = vadd.f32 %v5919, %v5995
        %v6039 = vadd.f32 %v5920, %v5997
        %v6040 = vadd.f32 %v5921, %v5999
        %v6041 = vadd.f32 %v5922, %v6001
        %v6042 = vadd.f32 %v5923, %v6003
        %v6043 = vadd.f32 %v5924, %v6005
        %v6044 = vadd.f32 %v5925, %v6007
        %v6045 = vadd.f32 %v5926, %v6009
        %v6046 = vadd.f32 %v5927, %v6011
        %v6047 = vadd.f32 %v5928, %v6013
        %v6048 = vadd.f32 %v5929, %v6010
        %v6049 = vadd.f32 %v5930, %v6012
        %s6050 = scalar_lea.vmem %s8, 37
        %v6051 = vld [vmem:[%s6050] ss:$8 sm:$0x3]
        %v6053 = vlaneseq
        %v6054 = vshrl.u32 %v6053, 7
        %v6055 = vsub.s32 0, %v6054
        %v6056 = vrot.slane %v6051, %v6055
        %v6057 = vlaneseq
        %v6058 = vshrl.u32 %v6057, 7
        %v6059 = vsub.s32 1, %v6058
        %v6060 = vrot.slane %v6051, %v6059
        %v6063 = vmul.f32 %v5556, %v6056
        %v6064 = vmul.f32 %v5557, %v6060
        %v6065 = vmul.f32 %v5558, %v6056
        %v6066 = vmul.f32 %v5559, %v6060
        %v6067 = vmul.f32 %v5560, %v6056
        %v6068 = vmul.f32 %v5561, %v6060
        %v6069 = vmul.f32 %v5562, %v6056
        %v6070 = vmul.f32 %v5563, %v6060
        %v6071 = vmul.f32 %v5564, %v6056
        %v6072 = vmul.f32 %v5565, %v6060
        %v6073 = vmul.f32 %v5566, %v6056
        %v6074 = vmul.f32 %v5567, %v6060
        %v6075 = vmul.f32 %v5568, %v6056
        %v6076 = vmul.f32 %v5569, %v6060
        %v6077 = vmul.f32 %v5570, %v6056
        %v6078 = vmul.f32 %v5571, %v6060
        %v6079 = vmul.f32 %v5572, %v6056
        %v6080 = vmul.f32 %v5573, %v6060
        %v6099 = vrot.slane %v6063, 1
        %v6100 = vrot.slane %v6065, 1
        %v6101 = vsel %vm1369, %v6099, %v6100
        %v6102 = vrot.slane %v6064, 1
        %v6103 = vrot.slane %v6066, 1
        %v6104 = vsel %vm1369, %v6102, %v6103
        %v6105 = vrot.slane %v6067, 1
        %v6106 = vsel %vm1369, %v6100, %v6105
        %v6107 = vrot.slane %v6068, 1
        %v6108 = vsel %vm1369, %v6103, %v6107
        %v6109 = vrot.slane %v6069, 1
        %v6110 = vsel %vm1369, %v6105, %v6109
        %v6111 = vrot.slane %v6070, 1
        %v6112 = vsel %vm1369, %v6107, %v6111
        %v6113 = vrot.slane %v6071, 1
        %v6114 = vsel %vm1369, %v6109, %v6113
        %v6115 = vrot.slane %v6072, 1
        %v6116 = vsel %vm1369, %v6111, %v6115
        %v6117 = vrot.slane %v6073, 1
        %v6118 = vsel %vm1369, %v6113, %v6117
        %v6119 = vrot.slane %v6074, 1
        %v6120 = vsel %vm1369, %v6115, %v6119
        %v6121 = vrot.slane %v6075, 1
        %v6122 = vsel %vm1369, %v6117, %v6121
        %v6123 = vrot.slane %v6076, 1
        %v6124 = vsel %vm1369, %v6119, %v6123
        %v6125 = vrot.slane %v6077, 1
        %v6126 = vsel %vm1369, %v6121, %v6125
        %v6127 = vrot.slane %v6078, 1
        %v6128 = vsel %vm1369, %v6123, %v6127
        %v6129 = vrot.slane %v6079, 1
        %v6130 = vsel %vm1369, %v6125, %v6129
        %v6131 = vrot.slane %v6080, 1
        %v6132 = vsel %vm1369, %v6127, %v6131
        %v6151 = vadd.f32 %v6032, %v6101
        %v6152 = vadd.f32 %v6033, %v6104
        %v6153 = vadd.f32 %v6034, %v6106
        %v6154 = vadd.f32 %v6035, %v6108
        %v6155 = vadd.f32 %v6036, %v6110
        %v6156 = vadd.f32 %v6037, %v6112
        %v6157 = vadd.f32 %v6038, %v6114
        %v6158 = vadd.f32 %v6039, %v6116
        %v6159 = vadd.f32 %v6040, %v6118
        %v6160 = vadd.f32 %v6041, %v6120
        %v6161 = vadd.f32 %v6042, %v6122
        %v6162 = vadd.f32 %v6043, %v6124
        %v6163 = vadd.f32 %v6044, %v6126
        %v6164 = vadd.f32 %v6045, %v6128
        %v6165 = vadd.f32 %v6046, %v6130
        %v6166 = vadd.f32 %v6047, %v6132
        %v6167 = vadd.f32 %v6048, %v6129
        %v6168 = vadd.f32 %v6049, %v6131
        %v6169 = vld [vmem:[#allocation2 + $0xc0] sm:$0xff]
        %v6170 = vld [vmem:[#allocation2 + $0xc8] sm:$0xff]
        %s6171 = scalar_lea.vmem %s8, 2
        %v6172 = vld [vmem:[%s6171] ss:$8 sm:$0x3]
        %v6174 = vlaneseq
        %v6175 = vshrl.u32 %v6174, 7
        %v6176 = vsub.s32 0, %v6175
        %v6177 = vrot.slane %v6172, %v6176
        %v6178 = vlaneseq
        %v6179 = vshrl.u32 %v6178, 7
        %v6180 = vsub.s32 1, %v6179
        %v6181 = vrot.slane %v6172, %v6180
        %v6184 = vmul.f32 %v5010, %v6177
        %v6185 = vmul.f32 %v5011, %v6181
        %v6186 = vmul.f32 %v5012, %v6177
        %v6187 = vmul.f32 %v5013, %v6181
        %v6188 = vmul.f32 %v5014, %v6177
        %v6189 = vmul.f32 %v5015, %v6181
        %v6190 = vmul.f32 %v5016, %v6177
        %v6191 = vmul.f32 %v5017, %v6181
        %v6192 = vmul.f32 %v5018, %v6177
        %v6193 = vmul.f32 %v5019, %v6181
        %v6194 = vmul.f32 %v5020, %v6177
        %v6195 = vmul.f32 %v5021, %v6181
        %v6196 = vmul.f32 %v5022, %v6177
        %v6197 = vmul.f32 %v5023, %v6181
        %v6198 = vmul.f32 %v5024, %v6177
        %v6199 = vmul.f32 %v5025, %v6181
        %v6216 = vrot.slane %v6184, 2
        %v6217 = vrot.slane %v6185, 2
        %v6218 = vrot.slane %v6186, 2
        %v6219 = vsel %vm973, %v6216, %v6218
        %v6220 = vrot.slane %v6187, 2
        %v6221 = vsel %vm973, %v6217, %v6220
        %v6222 = vrot.slane %v6188, 2
        %v6223 = vsel %vm973, %v6218, %v6222
        %v6224 = vrot.slane %v6189, 2
        %v6225 = vsel %vm973, %v6220, %v6224
        %v6226 = vrot.slane %v6190, 2
        %v6227 = vsel %vm973, %v6222, %v6226
        %v6228 = vrot.slane %v6191, 2
        %v6229 = vsel %vm973, %v6224, %v6228
        %v6230 = vrot.slane %v6192, 2
        %v6231 = vsel %vm973, %v6226, %v6230
        %v6232 = vrot.slane %v6193, 2
        %v6233 = vsel %vm973, %v6228, %v6232
        %v6234 = vrot.slane %v6194, 2
        %v6235 = vsel %vm973, %v6230, %v6234
        %v6236 = vrot.slane %v6195, 2
        %v6237 = vsel %vm973, %v6232, %v6236
        %v6238 = vrot.slane %v6196, 2
        %v6239 = vsel %vm973, %v6234, %v6238
        %v6240 = vrot.slane %v6197, 2
        %v6241 = vsel %vm973, %v6236, %v6240
        %v6242 = vrot.slane %v6198, 2
        %v6243 = vsel %vm973, %v6238, %v6242
        %v6244 = vrot.slane %v6199, 2
        %v6245 = vsel %vm973, %v6240, %v6244
        %v6264 = vadd.f32 %v6151, %v6216
        %v6265 = vadd.f32 %v6152, %v6217
        %v6266 = vadd.f32 %v6153, %v6219
        %v6267 = vadd.f32 %v6154, %v6221
        %v6268 = vadd.f32 %v6155, %v6223
        %v6269 = vadd.f32 %v6156, %v6225
        %v6270 = vadd.f32 %v6157, %v6227
        %v6271 = vadd.f32 %v6158, %v6229
        %v6272 = vadd.f32 %v6159, %v6231
        %v6273 = vadd.f32 %v6160, %v6233
        %v6274 = vadd.f32 %v6161, %v6235
        %v6275 = vadd.f32 %v6162, %v6237
        %v6276 = vadd.f32 %v6163, %v6239
        %v6277 = vadd.f32 %v6164, %v6241
        %v6278 = vadd.f32 %v6165, %v6243
        %v6279 = vadd.f32 %v6166, %v6245
        %v6280 = vadd.f32 %v6167, %v6242
        %v6281 = vadd.f32 %v6168, %v6244
        %s6282 = scalar_lea.vmem %s8, 7
        %v6283 = vld [vmem:[%s6282] ss:$8 sm:$0x3]
        %v6285 = vlaneseq
        %v6286 = vshrl.u32 %v6285, 7
        %v6287 = vsub.s32 0, %v6286
        %v6288 = vrot.slane %v6283, %v6287
        %v6289 = vlaneseq
        %v6290 = vshrl.u32 %v6289, 7
        %v6291 = vsub.s32 1, %v6290
        %v6292 = vrot.slane %v6283, %v6291
        %v6295 = vmul.f32 %v5012, %v6288
        %v6296 = vmul.f32 %v5013, %v6292
        %v6297 = vmul.f32 %v5014, %v6288
        %v6298 = vmul.f32 %v5015, %v6292
        %v6299 = vmul.f32 %v5016, %v6288
        %v6300 = vmul.f32 %v5017, %v6292
        %v6301 = vmul.f32 %v5018, %v6288
        %v6302 = vmul.f32 %v5019, %v6292
        %v6303 = vmul.f32 %v5020, %v6288
        %v6304 = vmul.f32 %v5021, %v6292
        %v6305 = vmul.f32 %v5022, %v6288
        %v6306 = vmul.f32 %v5023, %v6292
        %v6307 = vmul.f32 %v5024, %v6288
        %v6308 = vmul.f32 %v5025, %v6292
        %v6309 = vmul.f32 %v5026, %v6288
        %v6310 = vmul.f32 %v5027, %v6292
        %v6327 = vrot.slane %v6295, 2
        %v6328 = vrot.slane %v6296, 2
        %v6329 = vrot.slane %v6297, 2
        %v6330 = vsel %vm973, %v6327, %v6329
        %v6331 = vrot.slane %v6298, 2
        %v6332 = vsel %vm973, %v6328, %v6331
        %v6333 = vrot.slane %v6299, 2
        %v6334 = vsel %vm973, %v6329, %v6333
        %v6335 = vrot.slane %v6300, 2
        %v6336 = vsel %vm973, %v6331, %v6335
        %v6337 = vrot.slane %v6301, 2
        %v6338 = vsel %vm973, %v6333, %v6337
        %v6339 = vrot.slane %v6302, 2
        %v6340 = vsel %vm973, %v6335, %v6339
        %v6341 = vrot.slane %v6303, 2
        %v6342 = vsel %vm973, %v6337, %v6341
        %v6343 = vrot.slane %v6304, 2
        %v6344 = vsel %vm973, %v6339, %v6343
        %v6345 = vrot.slane %v6305, 2
        %v6346 = vsel %vm973, %v6341, %v6345
        %v6347 = vrot.slane %v6306, 2
        %v6348 = vsel %vm973, %v6343, %v6347
        %v6349 = vrot.slane %v6307, 2
        %v6350 = vsel %vm973, %v6345, %v6349
        %v6351 = vrot.slane %v6308, 2
        %v6352 = vsel %vm973, %v6347, %v6351
        %v6353 = vrot.slane %v6309, 2
        %v6354 = vsel %vm973, %v6349, %v6353
        %v6355 = vrot.slane %v6310, 2
        %v6356 = vsel %vm973, %v6351, %v6355
        %v6375 = vadd.f32 %v6264, %v6327
        %v6376 = vadd.f32 %v6265, %v6328
        %v6377 = vadd.f32 %v6266, %v6330
        %v6378 = vadd.f32 %v6267, %v6332
        %v6379 = vadd.f32 %v6268, %v6334
        %v6380 = vadd.f32 %v6269, %v6336
        %v6381 = vadd.f32 %v6270, %v6338
        %v6382 = vadd.f32 %v6271, %v6340
        %v6383 = vadd.f32 %v6272, %v6342
        %v6384 = vadd.f32 %v6273, %v6344
        %v6385 = vadd.f32 %v6274, %v6346
        %v6386 = vadd.f32 %v6275, %v6348
        %v6387 = vadd.f32 %v6276, %v6350
        %v6388 = vadd.f32 %v6277, %v6352
        %v6389 = vadd.f32 %v6278, %v6354
        %v6390 = vadd.f32 %v6279, %v6356
        %v6391 = vadd.f32 %v6280, %v6353
        %v6392 = vadd.f32 %v6281, %v6355
        %s6393 = scalar_lea.vmem %s8, 20
        %v6394 = vld [vmem:[%s6393] ss:$8 sm:$0x3]
        %v6396 = vlaneseq
        %v6397 = vshrl.u32 %v6396, 7
        %v6398 = vsub.s32 0, %v6397
        %v6399 = vrot.slane %v6394, %v6398
        %v6400 = vlaneseq
        %v6401 = vshrl.u32 %v6400, 7
        %v6402 = vsub.s32 1, %v6401
        %v6403 = vrot.slane %v6394, %v6402
        %v6406 = vmul.f32 %v5014, %v6399
        %v6407 = vmul.f32 %v5015, %v6403
        %v6408 = vmul.f32 %v5016, %v6399
        %v6409 = vmul.f32 %v5017, %v6403
        %v6410 = vmul.f32 %v5018, %v6399
        %v6411 = vmul.f32 %v5019, %v6403
        %v6412 = vmul.f32 %v5020, %v6399
        %v6413 = vmul.f32 %v5021, %v6403
        %v6414 = vmul.f32 %v5022, %v6399
        %v6415 = vmul.f32 %v5023, %v6403
        %v6416 = vmul.f32 %v5024, %v6399
        %v6417 = vmul.f32 %v5025, %v6403
        %v6418 = vmul.f32 %v5026, %v6399
        %v6419 = vmul.f32 %v5027, %v6403
        %v6420 = vmul.f32 %v5028, %v6399
        %v6421 = vmul.f32 %v5029, %v6403
        %v6438 = vrot.slane %v6406, 2
        %v6439 = vrot.slane %v6407, 2
        %v6440 = vrot.slane %v6408, 2
        %v6441 = vsel %vm973, %v6438, %v6440
        %v6442 = vrot.slane %v6409, 2
        %v6443 = vsel %vm973, %v6439, %v6442
        %v6444 = vrot.slane %v6410, 2
        %v6445 = vsel %vm973, %v6440, %v6444
        %v6446 = vrot.slane %v6411, 2
        %v6447 = vsel %vm973, %v6442, %v6446
        %v6448 = vrot.slane %v6412, 2
        %v6449 = vsel %vm973, %v6444, %v6448
        %v6450 = vrot.slane %v6413, 2
        %v6451 = vsel %vm973, %v6446, %v6450
        %v6452 = vrot.slane %v6414, 2
        %v6453 = vsel %vm973, %v6448, %v6452
        %v6454 = vrot.slane %v6415, 2
        %v6455 = vsel %vm973, %v6450, %v6454
        %v6456 = vrot.slane %v6416, 2
        %v6457 = vsel %vm973, %v6452, %v6456
        %v6458 = vrot.slane %v6417, 2
        %v6459 = vsel %vm973, %v6454, %v6458
        %v6460 = vrot.slane %v6418, 2
        %v6461 = vsel %vm973, %v6456, %v6460
        %v6462 = vrot.slane %v6419, 2
        %v6463 = vsel %vm973, %v6458, %v6462
        %v6464 = vrot.slane %v6420, 2
        %v6465 = vsel %vm973, %v6460, %v6464
        %v6466 = vrot.slane %v6421, 2
        %v6467 = vsel %vm973, %v6462, %v6466
        %v6486 = vadd.f32 %v6375, %v6438
        %v6487 = vadd.f32 %v6376, %v6439
        %v6488 = vadd.f32 %v6377, %v6441
        %v6489 = vadd.f32 %v6378, %v6443
        %v6490 = vadd.f32 %v6379, %v6445
        %v6491 = vadd.f32 %v6380, %v6447
        %v6492 = vadd.f32 %v6381, %v6449
        %v6493 = vadd.f32 %v6382, %v6451
        %v6494 = vadd.f32 %v6383, %v6453
        %v6495 = vadd.f32 %v6384, %v6455
        %v6496 = vadd.f32 %v6385, %v6457
        %v6497 = vadd.f32 %v6386, %v6459
        %v6498 = vadd.f32 %v6387, %v6461
        %v6499 = vadd.f32 %v6388, %v6463
        %v6500 = vadd.f32 %v6389, %v6465
        %v6501 = vadd.f32 %v6390, %v6467
        %v6502 = vadd.f32 %v6391, %v6464
        %v6503 = vadd.f32 %v6392, %v6466
        %s6504 = scalar_lea.vmem %s8, 33
        %v6505 = vld [vmem:[%s6504] ss:$8 sm:$0x3]
        %v6507 = vlaneseq
        %v6508 = vshrl.u32 %v6507, 7
        %v6509 = vsub.s32 0, %v6508
        %v6510 = vrot.slane %v6505, %v6509
        %v6511 = vlaneseq
        %v6512 = vshrl.u32 %v6511, 7
        %v6513 = vsub.s32 1, %v6512
        %v6514 = vrot.slane %v6505, %v6513
        %v6517 = vmul.f32 %v5016, %v6510
        %v6518 = vmul.f32 %v5017, %v6514
        %v6519 = vmul.f32 %v5018, %v6510
        %v6520 = vmul.f32 %v5019, %v6514
        %v6521 = vmul.f32 %v5020, %v6510
        %v6522 = vmul.f32 %v5021, %v6514
        %v6523 = vmul.f32 %v5022, %v6510
        %v6524 = vmul.f32 %v5023, %v6514
        %v6525 = vmul.f32 %v5024, %v6510
        %v6526 = vmul.f32 %v5025, %v6514
        %v6527 = vmul.f32 %v5026, %v6510
        %v6528 = vmul.f32 %v5027, %v6514
        %v6529 = vmul.f32 %v5028, %v6510
        %v6530 = vmul.f32 %v5029, %v6514
        %v6531 = vmul.f32 %v5030, %v6510
        %v6532 = vmul.f32 %v5031, %v6514
        %v6549 = vrot.slane %v6517, 2
        %v6550 = vrot.slane %v6518, 2
        %v6551 = vrot.slane %v6519, 2
        %v6552 = vsel %vm973, %v6549, %v6551
        %v6553 = vrot.slane %v6520, 2
        %v6554 = vsel %vm973, %v6550, %v6553
        %v6555 = vrot.slane %v6521, 2
        %v6556 = vsel %vm973, %v6551, %v6555
        %v6557 = vrot.slane %v6522, 2
        %v6558 = vsel %vm973, %v6553, %v6557
        %v6559 = vrot.slane %v6523, 2
        %v6560 = vsel %vm973, %v6555, %v6559
        %v6561 = vrot.slane %v6524, 2
        %v6562 = vsel %vm973, %v6557, %v6561
        %v6563 = vrot.slane %v6525, 2
        %v6564 = vsel %vm973, %v6559, %v6563
        %v6565 = vrot.slane %v6526, 2
        %v6566 = vsel %vm973, %v6561, %v6565
        %v6567 = vrot.slane %v6527, 2
        %v6568 = vsel %vm973, %v6563, %v6567
        %v6569 = vrot.slane %v6528, 2
        %v6570 = vsel %vm973, %v6565, %v6569
        %v6571 = vrot.slane %v6529, 2
        %v6572 = vsel %vm973, %v6567, %v6571
        %v6573 = vrot.slane %v6530, 2
        %v6574 = vsel %vm973, %v6569, %v6573
        %v6575 = vrot.slane %v6531, 2
        %v6576 = vsel %vm973, %v6571, %v6575
        %v6577 = vrot.slane %v6532, 2
        %v6578 = vsel %vm973, %v6573, %v6577
        %v6597 = vadd.f32 %v6486, %v6549
        %v6598 = vadd.f32 %v6487, %v6550
        %v6599 = vadd.f32 %v6488, %v6552
        %v6600 = vadd.f32 %v6489, %v6554
        %v6601 = vadd.f32 %v6490, %v6556
        %v6602 = vadd.f32 %v6491, %v6558
        %v6603 = vadd.f32 %v6492, %v6560
        %v6604 = vadd.f32 %v6493, %v6562
        %v6605 = vadd.f32 %v6494, %v6564
        %v6606 = vadd.f32 %v6495, %v6566
        %v6607 = vadd.f32 %v6496, %v6568
        %v6608 = vadd.f32 %v6497, %v6570
        %v6609 = vadd.f32 %v6498, %v6572
        %v6610 = vadd.f32 %v6499, %v6574
        %v6611 = vadd.f32 %v6500, %v6576
        %v6612 = vadd.f32 %v6501, %v6578
        %v6613 = vadd.f32 %v6502, %v6575
        %v6614 = vadd.f32 %v6503, %v6577
        %s6615 = scalar_lea.vmem %s8, 38
        %v6616 = vld [vmem:[%s6615] ss:$8 sm:$0x3]
        %v6618 = vlaneseq
        %v6619 = vshrl.u32 %v6618, 7
        %v6620 = vsub.s32 0, %v6619
        %v6621 = vrot.slane %v6616, %v6620
        %v6622 = vlaneseq
        %v6623 = vshrl.u32 %v6622, 7
        %v6624 = vsub.s32 1, %v6623
        %v6625 = vrot.slane %v6616, %v6624
        %v6628 = vmul.f32 %v5018, %v6621
        %v6629 = vmul.f32 %v5019, %v6625
        %v6630 = vmul.f32 %v5020, %v6621
        %v6631 = vmul.f32 %v5021, %v6625
        %v6632 = vmul.f32 %v5022, %v6621
        %v6633 = vmul.f32 %v5023, %v6625
        %v6634 = vmul.f32 %v5024, %v6621
        %v6635 = vmul.f32 %v5025, %v6625
        %v6636 = vmul.f32 %v5026, %v6621
        %v6637 = vmul.f32 %v5027, %v6625
        %v6638 = vmul.f32 %v5028, %v6621
        %v6639 = vmul.f32 %v5029, %v6625
        %v6640 = vmul.f32 %v5030, %v6621
        %v6641 = vmul.f32 %v5031, %v6625
        %v6642 = vmul.f32 %v6169, %v6621
        %v6643 = vmul.f32 %v6170, %v6625
        %v6660 = vrot.slane %v6628, 2
        %v6661 = vrot.slane %v6629, 2
        %v6662 = vrot.slane %v6630, 2
        %v6663 = vsel %vm973, %v6660, %v6662
        %v6664 = vrot.slane %v6631, 2
        %v6665 = vsel %vm973, %v6661, %v6664
        %v6666 = vrot.slane %v6632, 2
        %v6667 = vsel %vm973, %v6662, %v6666
        %v6668 = vrot.slane %v6633, 2
        %v6669 = vsel %vm973, %v6664, %v6668
        %v6670 = vrot.slane %v6634, 2
        %v6671 = vsel %vm973, %v6666, %v6670
        %v6672 = vrot.slane %v6635, 2
        %v6673 = vsel %vm973, %v6668, %v6672
        %v6674 = vrot.slane %v6636, 2
        %v6675 = vsel %vm973, %v6670, %v6674
        %v6676 = vrot.slane %v6637, 2
        %v6677 = vsel %vm973, %v6672, %v6676
        %v6678 = vrot.slane %v6638, 2
        %v6679 = vsel %vm973, %v6674, %v6678
        %v6680 = vrot.slane %v6639, 2
        %v6681 = vsel %vm973, %v6676, %v6680
        %v6682 = vrot.slane %v6640, 2
        %v6683 = vsel %vm973, %v6678, %v6682
        %v6684 = vrot.slane %v6641, 2
        %v6685 = vsel %vm973, %v6680, %v6684
        %v6686 = vrot.slane %v6642, 2
        %v6687 = vsel %vm973, %v6682, %v6686
        %v6688 = vrot.slane %v6643, 2
        %v6689 = vsel %vm973, %v6684, %v6688
        %v6708 = vadd.f32 %v6597, %v6660
        %v6709 = vadd.f32 %v6598, %v6661
        %v6710 = vadd.f32 %v6599, %v6663
        %v6711 = vadd.f32 %v6600, %v6665
        %v6712 = vadd.f32 %v6601, %v6667
        %v6713 = vadd.f32 %v6602, %v6669
        %v6714 = vadd.f32 %v6603, %v6671
        %v6715 = vadd.f32 %v6604, %v6673
        %v6716 = vadd.f32 %v6605, %v6675
        %v6717 = vadd.f32 %v6606, %v6677
        %v6718 = vadd.f32 %v6607, %v6679
        %v6719 = vadd.f32 %v6608, %v6681
        %v6720 = vadd.f32 %v6609, %v6683
        %v6721 = vadd.f32 %v6610, %v6685
        %v6722 = vadd.f32 %v6611, %v6687
        %v6723 = vadd.f32 %v6612, %v6689
        %v6724 = vadd.f32 %v6613, %v6686
        %v6725 = vadd.f32 %v6614, %v6688
        %v6726 = vld [vmem:[#allocation2 + $0x10] sm:$0xfe]
        %v6727 = vld [vmem:[#allocation2 + $0x18] sm:$0xfe]
        %v6728 = vld [vmem:[#allocation2 + $0x20] sm:$0xff]
        %v6729 = vld [vmem:[#allocation2 + $0x28] sm:$0xff]
        %v6730 = vld [vmem:[#allocation2 + $0x30] sm:$0xff]
        %v6731 = vld [vmem:[#allocation2 + $0x38] sm:$0xff]
        %v6732 = vld [vmem:[#allocation2 + $0x40] sm:$0xff]
        %v6733 = vld [vmem:[#allocation2 + $0x48] sm:$0xff]
        %v6734 = vld [vmem:[#allocation2 + $0x50] sm:$0xff]
        %v6735 = vld [vmem:[#allocation2 + $0x58] sm:$0xff]
        %v6736 = vld [vmem:[#allocation2 + $0x60] sm:$0xff]
        %v6737 = vld [vmem:[#allocation2 + $0x68] sm:$0xff]
        %v6738 = vld [vmem:[#allocation2 + $0x70] sm:$0xff]
        %v6739 = vld [vmem:[#allocation2 + $0x78] sm:$0xff]
        %v6740 = vld [vmem:[#allocation2 + $0x80] sm:$0xff]
        %v6741 = vld [vmem:[#allocation2 + $0x88] sm:$0xff]
        %v6742 = vld [vmem:[#allocation2 + $0x90] sm:$0xff]
        %v6743 = vld [vmem:[#allocation2 + $0x98] sm:$0xff]
        %v6744 = vld [vmem:[#allocation2 + $0xa0] sm:$0xff]
        %v6745 = vld [vmem:[#allocation2 + $0xa8] sm:$0xff]
        %v6746 = vld [vmem:[#allocation2 + $0xb0] sm:$0xff]
        %v6747 = vld [vmem:[#allocation2 + $0xb8] sm:$0xff]
        %v6748 = vld [vmem:[#allocation2 + $0xc0] sm:$0xff]
        %v6749 = vld [vmem:[#allocation2 + $0xc8] sm:$0xff]
        %v6750 = vld [vmem:[#allocation2 + $0xd0] sm:$0x1]
        %v6751 = vld [vmem:[#allocation2 + $0xd8] sm:$0x1]
        %v6752 = vld [vmem:[%s2646] sm:$0xff]
        %v6753 = vld [vmem:[%s2646 + $0x8] sm:$0xff]
        %v6754 = vld [vmem:[%s2646 + $0x10] sm:$0xff]
        %v6755 = vld [vmem:[%s2646 + $0x18] sm:$0xff]
        %v6756 = vld [vmem:[%s2646 + $0x20] sm:$0xff]
        %v6757 = vld [vmem:[%s2646 + $0x28] sm:$0xff]
        %v6758 = vld [vmem:[%s2646 + $0x30] sm:$0xff]
        %v6759 = vld [vmem:[%s2646 + $0x38] sm:$0xff]
        %v6760 = vld [vmem:[%s2646 + $0x40] sm:$0xff]
        %v6761 = vld [vmem:[%s2646 + $0x48] sm:$0xff]
        %v6762 = vld [vmem:[%s2646 + $0x50] sm:$0xff]
        %v6763 = vld [vmem:[%s2646 + $0x58] sm:$0xff]
        %v6764 = vld [vmem:[%s2646 + $0x60] sm:$0xff]
        %v6765 = vld [vmem:[%s2646 + $0x68] sm:$0xff]
        %v6766 = vld [vmem:[%s2646 + $0x70] sm:$0xff]
        %v6767 = vld [vmem:[%s2646 + $0x78] sm:$0xff]
        %v6768 = vld [vmem:[%s2646 + $0x80] sm:$0xff]
        %v6769 = vld [vmem:[%s2646 + $0x88] sm:$0xff]
        %v6770 = vld [vmem:[%s2646 + $0x90] sm:$0xff]
        %v6771 = vld [vmem:[%s2646 + $0x98] sm:$0xff]
        %v6772 = vld [vmem:[%s2646 + $0xa0] sm:$0xff]
        %v6773 = vld [vmem:[%s2646 + $0xa8] sm:$0xff]
        %v6774 = vld [vmem:[%s2646 + $0xb0] sm:$0xff]
        %v6775 = vld [vmem:[%s2646 + $0xb8] sm:$0xff]
        %v6800 = vrot.slane %v6752, 7
        %v6801 = vrot.slane %v6753, 7
        %v6802 = vrot.slane %v6754, 7
        %v6803 = vsel %vm2695, %v6800, %v6802
        %v6804 = vrot.slane %v6755, 7
        %v6805 = vsel %vm2695, %v6801, %v6804
        %v6806 = vrot.slane %v6756, 7
        %v6807 = vsel %vm2695, %v6802, %v6806
        %v6808 = vrot.slane %v6757, 7
        %v6809 = vsel %vm2695, %v6804, %v6808
        %v6810 = vrot.slane %v6758, 7
        %v6811 = vsel %vm2695, %v6806, %v6810
        %v6812 = vrot.slane %v6759, 7
        %v6813 = vsel %vm2695, %v6808, %v6812
        %v6814 = vrot.slane %v6760, 7
        %v6815 = vsel %vm2695, %v6810, %v6814
        %v6816 = vrot.slane %v6761, 7
        %v6817 = vsel %vm2695, %v6812, %v6816
        %v6818 = vrot.slane %v6762, 7
        %v6819 = vsel %vm2695, %v6814, %v6818
        %v6820 = vrot.slane %v6763, 7
        %v6821 = vsel %vm2695, %v6816, %v6820
        %v6822 = vrot.slane %v6764, 7
        %v6823 = vsel %vm2695, %v6818, %v6822
        %v6824 = vrot.slane %v6765, 7
        %v6825 = vsel %vm2695, %v6820, %v6824
        %v6826 = vrot.slane %v6766, 7
        %v6827 = vsel %vm2695, %v6822, %v6826
        %v6828 = vrot.slane %v6767, 7
        %v6829 = vsel %vm2695, %v6824, %v6828
        %v6830 = vrot.slane %v6768, 7
        %v6831 = vsel %vm2695, %v6826, %v6830
        %v6832 = vrot.slane %v6769, 7
        %v6833 = vsel %vm2695, %v6828, %v6832
        %v6834 = vrot.slane %v6770, 7
        %v6835 = vsel %vm2695, %v6830, %v6834
        %v6836 = vrot.slane %v6771, 7
        %v6837 = vsel %vm2695, %v6832, %v6836
        %v6838 = vrot.slane %v6772, 7
        %v6839 = vsel %vm2695, %v6834, %v6838
        %v6840 = vrot.slane %v6773, 7
        %v6841 = vsel %vm2695, %v6836, %v6840
        %v6842 = vrot.slane %v6774, 7
        %v6843 = vsel %vm2695, %v6838, %v6842
        %v6844 = vrot.slane %v6775, 7
        %v6845 = vsel %vm2695, %v6840, %v6844
        %v6872 = vmul.f32 %v6726, %v6800
        %v6873 = vmul.f32 %v6727, %v6801
        %v6874 = vmul.f32 %v6728, %v6803
        %v6875 = vmul.f32 %v6729, %v6805
        %v6876 = vmul.f32 %v6730, %v6807
        %v6877 = vmul.f32 %v6731, %v6809
        %v6878 = vmul.f32 %v6732, %v6811
        %v6879 = vmul.f32 %v6733, %v6813
        %v6880 = vmul.f32 %v6734, %v6815
        %v6881 = vmul.f32 %v6735, %v6817
        %v6882 = vmul.f32 %v6736, %v6819
        %v6883 = vmul.f32 %v6737, %v6821
        %v6884 = vmul.f32 %v6738, %v6823
        %v6885 = vmul.f32 %v6739, %v6825
        %v6886 = vmul.f32 %v6740, %v6827
        %v6887 = vmul.f32 %v6741, %v6829
        %v6888 = vmul.f32 %v6742, %v6831
        %v6889 = vmul.f32 %v6743, %v6833
        %v6890 = vmul.f32 %v6744, %v6835
        %v6891 = vmul.f32 %v6745, %v6837
        %v6892 = vmul.f32 %v6746, %v6839
        %v6893 = vmul.f32 %v6747, %v6841
        %v6894 = vmul.f32 %v6748, %v6843
        %v6895 = vmul.f32 %v6749, %v6845
        %v6896 = vmul.f32 %v6750, %v6842
        %v6897 = vmul.f32 %v6751, %v6844
        %s6898 = scalar_lea.vmem %s8, 3
        %v6899 = vld [vmem:[%s6898] ss:$8 sm:$0x3]
        %v6901 = vlaneseq
        %v6902 = vshrl.u32 %v6901, 7
        %v6903 = vsub.s32 0, %v6902
        %v6904 = vrot.slane %v6899, %v6903
        %v6905 = vlaneseq
        %v6906 = vshrl.u32 %v6905, 7
        %v6907 = vsub.s32 1, %v6906
        %v6908 = vrot.slane %v6899, %v6907
        %v6911 = vmul.f32 %v6872, %v6904
        %v6912 = vmul.f32 %v6873, %v6908
        %v6913 = vmul.f32 %v6874, %v6904
        %v6914 = vmul.f32 %v6875, %v6908
        %v6915 = vmul.f32 %v6876, %v6904
        %v6916 = vmul.f32 %v6877, %v6908
        %v6917 = vmul.f32 %v6878, %v6904
        %v6918 = vmul.f32 %v6879, %v6908
        %v6919 = vmul.f32 %v6880, %v6904
        %v6920 = vmul.f32 %v6881, %v6908
        %v6921 = vmul.f32 %v6882, %v6904
        %v6922 = vmul.f32 %v6883, %v6908
        %v6923 = vmul.f32 %v6884, %v6904
        %v6924 = vmul.f32 %v6885, %v6908
        %v6925 = vmul.f32 %v6886, %v6904
        %v6926 = vmul.f32 %v6887, %v6908
        %v6927 = vmul.f32 %v6888, %v6904
        %v6928 = vmul.f32 %v6889, %v6908
        %v6947 = vrot.slane %v6911, 3
        %v6948 = vrot.slane %v6912, 3
        %v6949 = vrot.slane %v6913, 3
        %v6950 = vsel %vm2843, %v6947, %v6949
        %v6951 = vrot.slane %v6914, 3
        %v6952 = vsel %vm2843, %v6948, %v6951
        %v6953 = vrot.slane %v6915, 3
        %v6954 = vsel %vm2843, %v6949, %v6953
        %v6955 = vrot.slane %v6916, 3
        %v6956 = vsel %vm2843, %v6951, %v6955
        %v6957 = vrot.slane %v6917, 3
        %v6958 = vsel %vm2843, %v6953, %v6957
        %v6959 = vrot.slane %v6918, 3
        %v6960 = vsel %vm2843, %v6955, %v6959
        %v6961 = vrot.slane %v6919, 3
        %v6962 = vsel %vm2843, %v6957, %v6961
        %v6963 = vrot.slane %v6920, 3
        %v6964 = vsel %vm2843, %v6959, %v6963
        %v6965 = vrot.slane %v6921, 3
        %v6966 = vsel %vm2843, %v6961, %v6965
        %v6967 = vrot.slane %v6922, 3
        %v6968 = vsel %vm2843, %v6963, %v6967
        %v6969 = vrot.slane %v6923, 3
        %v6970 = vsel %vm2843, %v6965, %v6969
        %v6971 = vrot.slane %v6924, 3
        %v6972 = vsel %vm2843, %v6967, %v6971
        %v6973 = vrot.slane %v6925, 3
        %v6974 = vsel %vm2843, %v6969, %v6973
        %v6975 = vrot.slane %v6926, 3
        %v6976 = vsel %vm2843, %v6971, %v6975
        %v6977 = vrot.slane %v6927, 3
        %v6978 = vsel %vm2843, %v6973, %v6977
        %v6979 = vrot.slane %v6928, 3
        %v6980 = vsel %vm2843, %v6975, %v6979
        %v6999 = vadd.f32 %v6708, %v6947
        %v7000 = vadd.f32 %v6709, %v6948
        %v7001 = vadd.f32 %v6710, %v6950
        %v7002 = vadd.f32 %v6711, %v6952
        %v7003 = vadd.f32 %v6712, %v6954
        %v7004 = vadd.f32 %v6713, %v6956
        %v7005 = vadd.f32 %v6714, %v6958
        %v7006 = vadd.f32 %v6715, %v6960
        %v7007 = vadd.f32 %v6716, %v6962
        %v7008 = vadd.f32 %v6717, %v6964
        %v7009 = vadd.f32 %v6718, %v6966
        %v7010 = vadd.f32 %v6719, %v6968
        %v7011 = vadd.f32 %v6720, %v6970
        %v7012 = vadd.f32 %v6721, %v6972
        %v7013 = vadd.f32 %v6722, %v6974
        %v7014 = vadd.f32 %v6723, %v6976
        %v7015 = vadd.f32 %v6724, %v6978
        %v7016 = vadd.f32 %v6725, %v6980
        %s7017 = scalar_lea.vmem %s8, 16
        %v7018 = vld [vmem:[%s7017] ss:$8 sm:$0x3]
        %v7020 = vlaneseq
        %v7021 = vshrl.u32 %v7020, 7
        %v7022 = vsub.s32 0, %v7021
        %v7023 = vrot.slane %v7018, %v7022
        %v7024 = vlaneseq
        %v7025 = vshrl.u32 %v7024, 7
        %v7026 = vsub.s32 1, %v7025
        %v7027 = vrot.slane %v7018, %v7026
        %v7030 = vmul.f32 %v6874, %v7023
        %v7031 = vmul.f32 %v6875, %v7027
        %v7032 = vmul.f32 %v6876, %v7023
        %v7033 = vmul.f32 %v6877, %v7027
        %v7034 = vmul.f32 %v6878, %v7023
        %v7035 = vmul.f32 %v6879, %v7027
        %v7036 = vmul.f32 %v6880, %v7023
        %v7037 = vmul.f32 %v6881, %v7027
        %v7038 = vmul.f32 %v6882, %v7023
        %v7039 = vmul.f32 %v6883, %v7027
        %v7040 = vmul.f32 %v6884, %v7023
        %v7041 = vmul.f32 %v6885, %v7027
        %v7042 = vmul.f32 %v6886, %v7023
        %v7043 = vmul.f32 %v6887, %v7027
        %v7044 = vmul.f32 %v6888, %v7023
        %v7045 = vmul.f32 %v6889, %v7027
        %v7046 = vmul.f32 %v6890, %v7023
        %v7047 = vmul.f32 %v6891, %v7027
        %v7066 = vrot.slane %v7030, 3
        %v7067 = vrot.slane %v7031, 3
        %v7068 = vrot.slane %v7032, 3
        %v7069 = vsel %vm2843, %v7066, %v7068
        %v7070 = vrot.slane %v7033, 3
        %v7071 = vsel %vm2843, %v7067, %v7070
        %v7072 = vrot.slane %v7034, 3
        %v7073 = vsel %vm2843, %v7068, %v7072
        %v7074 = vrot.slane %v7035, 3
        %v7075 = vsel %vm2843, %v7070, %v7074
        %v7076 = vrot.slane %v7036, 3
        %v7077 = vsel %vm2843, %v7072, %v7076
        %v7078 = vrot.slane %v7037, 3
        %v7079 = vsel %vm2843, %v7074, %v7078
        %v7080 = vrot.slane %v7038, 3
        %v7081 = vsel %vm2843, %v7076, %v7080
        %v7082 = vrot.slane %v7039, 3
        %v7083 = vsel %vm2843, %v7078, %v7082
        %v7084 = vrot.slane %v7040, 3
        %v7085 = vsel %vm2843, %v7080, %v7084
        %v7086 = vrot.slane %v7041, 3
        %v7087 = vsel %vm2843, %v7082, %v7086
        %v7088 = vrot.slane %v7042, 3
        %v7089 = vsel %vm2843, %v7084, %v7088
        %v7090 = vrot.slane %v7043, 3
        %v7091 = vsel %vm2843, %v7086, %v7090
        %v7092 = vrot.slane %v7044, 3
        %v7093 = vsel %vm2843, %v7088, %v7092
        %v7094 = vrot.slane %v7045, 3
        %v7095 = vsel %vm2843, %v7090, %v7094
        %v7096 = vrot.slane %v7046, 3
        %v7097 = vsel %vm2843, %v7092, %v7096
        %v7098 = vrot.slane %v7047, 3
        %v7099 = vsel %vm2843, %v7094, %v7098
        %v7118 = vadd.f32 %v6999, %v7066
        %v7119 = vadd.f32 %v7000, %v7067
        %v7120 = vadd.f32 %v7001, %v7069
        %v7121 = vadd.f32 %v7002, %v7071
        %v7122 = vadd.f32 %v7003, %v7073
        %v7123 = vadd.f32 %v7004, %v7075
        %v7124 = vadd.f32 %v7005, %v7077
        %v7125 = vadd.f32 %v7006, %v7079
        %v7126 = vadd.f32 %v7007, %v7081
        %v7127 = vadd.f32 %v7008, %v7083
        %v7128 = vadd.f32 %v7009, %v7085
        %v7129 = vadd.f32 %v7010, %v7087
        %v7130 = vadd.f32 %v7011, %v7089
        %v7131 = vadd.f32 %v7012, %v7091
        %v7132 = vadd.f32 %v7013, %v7093
        %v7133 = vadd.f32 %v7014, %v7095
        %v7134 = vadd.f32 %v7015, %v7097
        %v7135 = vadd.f32 %v7016, %v7099
        %s7136 = scalar_lea.vmem %s8, 21
        %v7137 = vld [vmem:[%s7136] ss:$8 sm:$0x3]
        %v7139 = vlaneseq
        %v7140 = vshrl.u32 %v7139, 7
        %v7141 = vsub.s32 0, %v7140
        %v7142 = vrot.slane %v7137, %v7141
        %v7143 = vlaneseq
        %v7144 = vshrl.u32 %v7143, 7
        %v7145 = vsub.s32 1, %v7144
        %v7146 = vrot.slane %v7137, %v7145
        %v7149 = vmul.f32 %v6876, %v7142
        %v7150 = vmul.f32 %v6877, %v7146
        %v7151 = vmul.f32 %v6878, %v7142
        %v7152 = vmul.f32 %v6879, %v7146
        %v7153 = vmul.f32 %v6880, %v7142
        %v7154 = vmul.f32 %v6881, %v7146
        %v7155 = vmul.f32 %v6882, %v7142
        %v7156 = vmul.f32 %v6883, %v7146
        %v7157 = vmul.f32 %v6884, %v7142
        %v7158 = vmul.f32 %v6885, %v7146
        %v7159 = vmul.f32 %v6886, %v7142
        %v7160 = vmul.f32 %v6887, %v7146
        %v7161 = vmul.f32 %v6888, %v7142
        %v7162 = vmul.f32 %v6889, %v7146
        %v7163 = vmul.f32 %v6890, %v7142
        %v7164 = vmul.f32 %v6891, %v7146
        %v7165 = vmul.f32 %v6892, %v7142
        %v7166 = vmul.f32 %v6893, %v7146
        %v7185 = vrot.slane %v7149, 3
        %v7186 = vrot.slane %v7150, 3
        %v7187 = vrot.slane %v7151, 3
        %v7188 = vsel %vm2843, %v7185, %v7187
        %v7189 = vrot.slane %v7152, 3
        %v7190 = vsel %vm2843, %v7186, %v7189
        %v7191 = vrot.slane %v7153, 3
        %v7192 = vsel %vm2843, %v7187, %v7191
        %v7193 = vrot.slane %v7154, 3
        %v7194 = vsel %vm2843, %v7189, %v7193
        %v7195 = vrot.slane %v7155, 3
        %v7196 = vsel %vm2843, %v7191, %v7195
        %v7197 = vrot.slane %v7156, 3
        %v7198 = vsel %vm2843, %v7193, %v7197
        %v7199 = vrot.slane %v7157, 3
        %v7200 = vsel %vm2843, %v7195, %v7199
        %v7201 = vrot.slane %v7158, 3
        %v7202 = vsel %vm2843, %v7197, %v7201
        %v7203 = vrot.slane %v7159, 3
        %v7204 = vsel %vm2843, %v7199, %v7203
        %v7205 = vrot.slane %v7160, 3
        %v7206 = vsel %vm2843, %v7201, %v7205
        %v7207 = vrot.slane %v7161, 3
        %v7208 = vsel %vm2843, %v7203, %v7207
        %v7209 = vrot.slane %v7162, 3
        %v7210 = vsel %vm2843, %v7205, %v7209
        %v7211 = vrot.slane %v7163, 3
        %v7212 = vsel %vm2843, %v7207, %v7211
        %v7213 = vrot.slane %v7164, 3
        %v7214 = vsel %vm2843, %v7209, %v7213
        %v7215 = vrot.slane %v7165, 3
        %v7216 = vsel %vm2843, %v7211, %v7215
        %v7217 = vrot.slane %v7166, 3
        %v7218 = vsel %vm2843, %v7213, %v7217
        %v7237 = vadd.f32 %v7118, %v7185
        %v7238 = vadd.f32 %v7119, %v7186
        %v7239 = vadd.f32 %v7120, %v7188
        %v7240 = vadd.f32 %v7121, %v7190
        %v7241 = vadd.f32 %v7122, %v7192
        %v7242 = vadd.f32 %v7123, %v7194
        %v7243 = vadd.f32 %v7124, %v7196
        %v7244 = vadd.f32 %v7125, %v7198
        %v7245 = vadd.f32 %v7126, %v7200
        %v7246 = vadd.f32 %v7127, %v7202
        %v7247 = vadd.f32 %v7128, %v7204
        %v7248 = vadd.f32 %v7129, %v7206
        %v7249 = vadd.f32 %v7130, %v7208
        %v7250 = vadd.f32 %v7131, %v7210
        %v7251 = vadd.f32 %v7132, %v7212
        %v7252 = vadd.f32 %v7133, %v7214
        %v7253 = vadd.f32 %v7134, %v7216
        %v7254 = vadd.f32 %v7135, %v7218
        %s7255 = scalar_lea.vmem %s8, 34
        %v7256 = vld [vmem:[%s7255] ss:$8 sm:$0x3]
        %v7258 = vlaneseq
        %v7259 = vshrl.u32 %v7258, 7
        %v7260 = vsub.s32 0, %v7259
        %v7261 = vrot.slane %v7256, %v7260
        %v7262 = vlaneseq
        %v7263 = vshrl.u32 %v7262, 7
        %v7264 = vsub.s32 1, %v7263
        %v7265 = vrot.slane %v7256, %v7264
        %v7268 = vmul.f32 %v6878, %v7261
        %v7269 = vmul.f32 %v6879, %v7265
        %v7270 = vmul.f32 %v6880, %v7261
        %v7271 = vmul.f32 %v6881, %v7265
        %v7272 = vmul.f32 %v6882, %v7261
        %v7273 = vmul.f32 %v6883, %v7265
        %v7274 = vmul.f32 %v6884, %v7261
        %v7275 = vmul.f32 %v6885, %v7265
        %v7276 = vmul.f32 %v6886, %v7261
        %v7277 = vmul.f32 %v6887, %v7265
        %v7278 = vmul.f32 %v6888, %v7261
        %v7279 = vmul.f32 %v6889, %v7265
        %v7280 = vmul.f32 %v6890, %v7261
        %v7281 = vmul.f32 %v6891, %v7265
        %v7282 = vmul.f32 %v6892, %v7261
        %v7283 = vmul.f32 %v6893, %v7265
        %v7284 = vmul.f32 %v6894, %v7261
        %v7285 = vmul.f32 %v6895, %v7265
        %v7304 = vrot.slane %v7268, 3
        %v7305 = vrot.slane %v7269, 3
        %v7306 = vrot.slane %v7270, 3
        %v7307 = vsel %vm2843, %v7304, %v7306
        %v7308 = vrot.slane %v7271, 3
        %v7309 = vsel %vm2843, %v7305, %v7308
        %v7310 = vrot.slane %v7272, 3
        %v7311 = vsel %vm2843, %v7306, %v7310
        %v7312 = vrot.slane %v7273, 3
        %v7313 = vsel %vm2843, %v7308, %v7312
        %v7314 = vrot.slane %v7274, 3
        %v7315 = vsel %vm2843, %v7310, %v7314
        %v7316 = vrot.slane %v7275, 3
        %v7317 = vsel %vm2843, %v7312, %v7316
        %v7318 = vrot.slane %v7276, 3
        %v7319 = vsel %vm2843, %v7314, %v7318
        %v7320 = vrot.slane %v7277, 3
        %v7321 = vsel %vm2843, %v7316, %v7320
        %v7322 = vrot.slane %v7278, 3
        %v7323 = vsel %vm2843, %v7318, %v7322
        %v7324 = vrot.slane %v7279, 3
        %v7325 = vsel %vm2843, %v7320, %v7324
        %v7326 = vrot.slane %v7280, 3
        %v7327 = vsel %vm2843, %v7322, %v7326
        %v7328 = vrot.slane %v7281, 3
        %v7329 = vsel %vm2843, %v7324, %v7328
        %v7330 = vrot.slane %v7282, 3
        %v7331 = vsel %vm2843, %v7326, %v7330
        %v7332 = vrot.slane %v7283, 3
        %v7333 = vsel %vm2843, %v7328, %v7332
        %v7334 = vrot.slane %v7284, 3
        %v7335 = vsel %vm2843, %v7330, %v7334
        %v7336 = vrot.slane %v7285, 3
        %v7337 = vsel %vm2843, %v7332, %v7336
        %v7356 = vadd.f32 %v7237, %v7304
        %v7357 = vadd.f32 %v7238, %v7305
        %v7358 = vadd.f32 %v7239, %v7307
        %v7359 = vadd.f32 %v7240, %v7309
        %v7360 = vadd.f32 %v7241, %v7311
        %v7361 = vadd.f32 %v7242, %v7313
        %v7362 = vadd.f32 %v7243, %v7315
        %v7363 = vadd.f32 %v7244, %v7317
        %v7364 = vadd.f32 %v7245, %v7319
        %v7365 = vadd.f32 %v7246, %v7321
        %v7366 = vadd.f32 %v7247, %v7323
        %v7367 = vadd.f32 %v7248, %v7325
        %v7368 = vadd.f32 %v7249, %v7327
        %v7369 = vadd.f32 %v7250, %v7329
        %v7370 = vadd.f32 %v7251, %v7331
        %v7371 = vadd.f32 %v7252, %v7333
        %v7372 = vadd.f32 %v7253, %v7335
        %v7373 = vadd.f32 %v7254, %v7337
        %s7374 = scalar_lea.vmem %s8, 39
        %v7375 = vld [vmem:[%s7374] ss:$8 sm:$0x3]
        %v7377 = vlaneseq
        %v7378 = vshrl.u32 %v7377, 7
        %v7379 = vsub.s32 0, %v7378
        %v7380 = vrot.slane %v7375, %v7379
        %v7381 = vlaneseq
        %v7382 = vshrl.u32 %v7381, 7
        %v7383 = vsub.s32 1, %v7382
        %v7384 = vrot.slane %v7375, %v7383
        %v7387 = vmul.f32 %v6880, %v7380
        %v7388 = vmul.f32 %v6881, %v7384
        %v7389 = vmul.f32 %v6882, %v7380
        %v7390 = vmul.f32 %v6883, %v7384
        %v7391 = vmul.f32 %v6884, %v7380
        %v7392 = vmul.f32 %v6885, %v7384
        %v7393 = vmul.f32 %v6886, %v7380
        %v7394 = vmul.f32 %v6887, %v7384
        %v7395 = vmul.f32 %v6888, %v7380
        %v7396 = vmul.f32 %v6889, %v7384
        %v7397 = vmul.f32 %v6890, %v7380
        %v7398 = vmul.f32 %v6891, %v7384
        %v7399 = vmul.f32 %v6892, %v7380
        %v7400 = vmul.f32 %v6893, %v7384
        %v7401 = vmul.f32 %v6894, %v7380
        %v7402 = vmul.f32 %v6895, %v7384
        %v7403 = vmul.f32 %v6896, %v7380
        %v7404 = vmul.f32 %v6897, %v7384
        %v7423 = vrot.slane %v7387, 3
        %v7424 = vrot.slane %v7388, 3
        %v7425 = vrot.slane %v7389, 3
        %v7426 = vsel %vm2843, %v7423, %v7425
        %v7427 = vrot.slane %v7390, 3
        %v7428 = vsel %vm2843, %v7424, %v7427
        %v7429 = vrot.slane %v7391, 3
        %v7430 = vsel %vm2843, %v7425, %v7429
        %v7431 = vrot.slane %v7392, 3
        %v7432 = vsel %vm2843, %v7427, %v7431
        %v7433 = vrot.slane %v7393, 3
        %v7434 = vsel %vm2843, %v7429, %v7433
        %v7435 = vrot.slane %v7394, 3
        %v7436 = vsel %vm2843, %v7431, %v7435
        %v7437 = vrot.slane %v7395, 3
        %v7438 = vsel %vm2843, %v7433, %v7437
        %v7439 = vrot.slane %v7396, 3
        %v7440 = vsel %vm2843, %v7435, %v7439
        %v7441 = vrot.slane %v7397, 3
        %v7442 = vsel %vm2843, %v7437, %v7441
        %v7443 = vrot.slane %v7398, 3
        %v7444 = vsel %vm2843, %v7439, %v7443
        %v7445 = vrot.slane %v7399, 3
        %v7446 = vsel %vm2843, %v7441, %v7445
        %v7447 = vrot.slane %v7400, 3
        %v7448 = vsel %vm2843, %v7443, %v7447
        %v7449 = vrot.slane %v7401, 3
        %v7450 = vsel %vm2843, %v7445, %v7449
        %v7451 = vrot.slane %v7402, 3
        %v7452 = vsel %vm2843, %v7447, %v7451
        %v7453 = vrot.slane %v7403, 3
        %v7454 = vsel %vm2843, %v7449, %v7453
        %v7455 = vrot.slane %v7404, 3
        %v7456 = vsel %vm2843, %v7451, %v7455
        %v7475 = vadd.f32 %v7356, %v7423
        %v7476 = vadd.f32 %v7357, %v7424
        %v7477 = vadd.f32 %v7358, %v7426
        %v7478 = vadd.f32 %v7359, %v7428
        %v7479 = vadd.f32 %v7360, %v7430
        %v7480 = vadd.f32 %v7361, %v7432
        %v7481 = vadd.f32 %v7362, %v7434
        %v7482 = vadd.f32 %v7363, %v7436
        %v7483 = vadd.f32 %v7364, %v7438
        %v7484 = vadd.f32 %v7365, %v7440
        %v7485 = vadd.f32 %v7366, %v7442
        %v7486 = vadd.f32 %v7367, %v7444
        %v7487 = vadd.f32 %v7368, %v7446
        %v7488 = vadd.f32 %v7369, %v7448
        %v7489 = vadd.f32 %v7370, %v7450
        %v7490 = vadd.f32 %v7371, %v7452
        %v7491 = vadd.f32 %v7372, %v7454
        %v7492 = vadd.f32 %v7373, %v7456
        %v7493 = vld [vmem:[#allocation2 + $0x10] sm:$0xfc]
        %v7494 = vld [vmem:[#allocation2 + $0x18] sm:$0xfc]
        %v7495 = vld [vmem:[#allocation2 + $0xd0] sm:$0x3]
        %v7496 = vld [vmem:[#allocation2 + $0xd8] sm:$0x3]
        %v7497 = vld [vmem:[%s3394] sm:$0xff]
        %v7498 = vld [vmem:[%s3394 + $0x8] sm:$0xff]
        %v7499 = vld [vmem:[%s3394 + $0x10] sm:$0xff]
        %v7500 = vld [vmem:[%s3394 + $0x18] sm:$0xff]
        %v7501 = vld [vmem:[%s3394 + $0x20] sm:$0xff]
        %v7502 = vld [vmem:[%s3394 + $0x28] sm:$0xff]
        %v7503 = vld [vmem:[%s3394 + $0x30] sm:$0xff]
        %v7504 = vld [vmem:[%s3394 + $0x38] sm:$0xff]
        %v7505 = vld [vmem:[%s3394 + $0x40] sm:$0xff]
        %v7506 = vld [vmem:[%s3394 + $0x48] sm:$0xff]
        %v7507 = vld [vmem:[%s3394 + $0x50] sm:$0xff]
        %v7508 = vld [vmem:[%s3394 + $0x58] sm:$0xff]
        %v7509 = vld [vmem:[%s3394 + $0x60] sm:$0xff]
        %v7510 = vld [vmem:[%s3394 + $0x68] sm:$0xff]
        %v7511 = vld [vmem:[%s3394 + $0x70] sm:$0xff]
        %v7512 = vld [vmem:[%s3394 + $0x78] sm:$0xff]
        %v7513 = vld [vmem:[%s3394 + $0x80] sm:$0xff]
        %v7514 = vld [vmem:[%s3394 + $0x88] sm:$0xff]
        %v7515 = vld [vmem:[%s3394 + $0x90] sm:$0xff]
        %v7516 = vld [vmem:[%s3394 + $0x98] sm:$0xff]
        %v7517 = vld [vmem:[%s3394 + $0xa0] sm:$0xff]
        %v7518 = vld [vmem:[%s3394 + $0xa8] sm:$0xff]
        %v7519 = vld [vmem:[%s3394 + $0xb0] sm:$0xff]
        %v7520 = vld [vmem:[%s3394 + $0xb8] sm:$0xff]
        %v7545 = vrot.slane %v7497, 6
        %v7546 = vrot.slane %v7498, 6
        %v7547 = vrot.slane %v7499, 6
        %v7548 = vsel %vm3443, %v7545, %v7547
        %v7549 = vrot.slane %v7500, 6
        %v7550 = vsel %vm3443, %v7546, %v7549
        %v7551 = vrot.slane %v7501, 6
        %v7552 = vsel %vm3443, %v7547, %v7551
        %v7553 = vrot.slane %v7502, 6
        %v7554 = vsel %vm3443, %v7549, %v7553
        %v7555 = vrot.slane %v7503, 6
        %v7556 = vsel %vm3443, %v7551, %v7555
        %v7557 = vrot.slane %v7504, 6
        %v7558 = vsel %vm3443, %v7553, %v7557
        %v7559 = vrot.slane %v7505, 6
        %v7560 = vsel %vm3443, %v7555, %v7559
        %v7561 = vrot.slane %v7506, 6
        %v7562 = vsel %vm3443, %v7557, %v7561
        %v7563 = vrot.slane %v7507, 6
        %v7564 = vsel %vm3443, %v7559, %v7563
        %v7565 = vrot.slane %v7508, 6
        %v7566 = vsel %vm3443, %v7561, %v7565
        %v7567 = vrot.slane %v7509, 6
        %v7568 = vsel %vm3443, %v7563, %v7567
        %v7569 = vrot.slane %v7510, 6
        %v7570 = vsel %vm3443, %v7565, %v7569
        %v7571 = vrot.slane %v7511, 6
        %v7572 = vsel %vm3443, %v7567, %v7571
        %v7573 = vrot.slane %v7512, 6
        %v7574 = vsel %vm3443, %v7569, %v7573
        %v7575 = vrot.slane %v7513, 6
        %v7576 = vsel %vm3443, %v7571, %v7575
        %v7577 = vrot.slane %v7514, 6
        %v7578 = vsel %vm3443, %v7573, %v7577
        %v7579 = vrot.slane %v7515, 6
        %v7580 = vsel %vm3443, %v7575, %v7579
        %v7581 = vrot.slane %v7516, 6
        %v7582 = vsel %vm3443, %v7577, %v7581
        %v7583 = vrot.slane %v7517, 6
        %v7584 = vsel %vm3443, %v7579, %v7583
        %v7585 = vrot.slane %v7518, 6
        %v7586 = vsel %vm3443, %v7581, %v7585
        %v7587 = vrot.slane %v7519, 6
        %v7588 = vsel %vm3443, %v7583, %v7587
        %v7589 = vrot.slane %v7520, 6
        %v7590 = vsel %vm3443, %v7585, %v7589
        %v7617 = vmul.f32 %v7493, %v7545
        %v7618 = vmul.f32 %v7494, %v7546
        %v7619 = vmul.f32 %v6728, %v7548
        %v7620 = vmul.f32 %v6729, %v7550
        %v7621 = vmul.f32 %v6730, %v7552
        %v7622 = vmul.f32 %v6731, %v7554
        %v7623 = vmul.f32 %v6732, %v7556
        %v7624 = vmul.f32 %v6733, %v7558
        %v7625 = vmul.f32 %v6734, %v7560
        %v7626 = vmul.f32 %v6735, %v7562
        %v7627 = vmul.f32 %v6736, %v7564
        %v7628 = vmul.f32 %v6737, %v7566
        %v7629 = vmul.f32 %v6738, %v7568
        %v7630 = vmul.f32 %v6739, %v7570
        %v7631 = vmul.f32 %v6740, %v7572
        %v7632 = vmul.f32 %v6741, %v7574
        %v7633 = vmul.f32 %v6742, %v7576
        %v7634 = vmul.f32 %v6743, %v7578
        %v7635 = vmul.f32 %v6744, %v7580
        %v7636 = vmul.f32 %v6745, %v7582
        %v7637 = vmul.f32 %v6746, %v7584
        %v7638 = vmul.f32 %v6747, %v7586
        %v7639 = vmul.f32 %v6748, %v7588
        %v7640 = vmul.f32 %v6749, %v7590
        %v7641 = vmul.f32 %v7495, %v7587
        %v7642 = vmul.f32 %v7496, %v7589
        %s7643 = scalar_lea.vmem %s8, 4
        %v7644 = vld [vmem:[%s7643] ss:$8 sm:$0x3]
        %v7646 = vlaneseq
        %v7647 = vshrl.u32 %v7646, 7
        %v7648 = vsub.s32 0, %v7647
        %v7649 = vrot.slane %v7644, %v7648
        %v7650 = vlaneseq
        %v7651 = vshrl.u32 %v7650, 7
        %v7652 = vsub.s32 1, %v7651
        %v7653 = vrot.slane %v7644, %v7652
        %v7656 = vmul.f32 %v7617, %v7649
        %v7657 = vmul.f32 %v7618, %v7653
        %v7658 = vmul.f32 %v7619, %v7649
        %v7659 = vmul.f32 %v7620, %v7653
        %v7660 = vmul.f32 %v7621, %v7649
        %v7661 = vmul.f32 %v7622, %v7653
        %v7662 = vmul.f32 %v7623, %v7649
        %v7663 = vmul.f32 %v7624, %v7653
        %v7664 = vmul.f32 %v7625, %v7649
        %v7665 = vmul.f32 %v7626, %v7653
        %v7666 = vmul.f32 %v7627, %v7649
        %v7667 = vmul.f32 %v7628, %v7653
        %v7668 = vmul.f32 %v7629, %v7649
        %v7669 = vmul.f32 %v7630, %v7653
        %v7670 = vmul.f32 %v7631, %v7649
        %v7671 = vmul.f32 %v7632, %v7653
        %v7672 = vmul.f32 %v7633, %v7649
        %v7673 = vmul.f32 %v7634, %v7653
        %v7692 = vrot.slane %v7656, 4
        %v7693 = vrot.slane %v7657, 4
        %v7694 = vrot.slane %v7658, 4
        %v7695 = vsel %vm3591, %v7692, %v7694
        %v7696 = vrot.slane %v7659, 4
        %v7697 = vsel %vm3591, %v7693, %v7696
        %v7698 = vrot.slane %v7660, 4
        %v7699 = vsel %vm3591, %v7694, %v7698
        %v7700 = vrot.slane %v7661, 4
        %v7701 = vsel %vm3591, %v7696, %v7700
        %v7702 = vrot.slane %v7662, 4
        %v7703 = vsel %vm3591, %v7698, %v7702
        %v7704 = vrot.slane %v7663, 4
        %v7705 = vsel %vm3591, %v7700, %v7704
        %v7706 = vrot.slane %v7664, 4
        %v7707 = vsel %vm3591, %v7702, %v7706
        %v7708 = vrot.slane %v7665, 4
        %v7709 = vsel %vm3591, %v7704, %v7708
        %v7710 = vrot.slane %v7666, 4
        %v7711 = vsel %vm3591, %v7706, %v7710
        %v7712 = vrot.slane %v7667, 4
        %v7713 = vsel %vm3591, %v7708, %v7712
        %v7714 = vrot.slane %v7668, 4
        %v7715 = vsel %vm3591, %v7710, %v7714
        %v7716 = vrot.slane %v7669, 4
        %v7717 = vsel %vm3591, %v7712, %v7716
        %v7718 = vrot.slane %v7670, 4
        %v7719 = vsel %vm3591, %v7714, %v7718
        %v7720 = vrot.slane %v7671, 4
        %v7721 = vsel %vm3591, %v7716, %v7720
        %v7722 = vrot.slane %v7672, 4
        %v7723 = vsel %vm3591, %v7718, %v7722
        %v7724 = vrot.slane %v7673, 4
        %v7725 = vsel %vm3591, %v7720, %v7724
        %v7744 = vadd.f32 %v7475, %v7692
        %v7745 = vadd.f32 %v7476, %v7693
        %v7746 = vadd.f32 %v7477, %v7695
        %v7747 = vadd.f32 %v7478, %v7697
        %v7748 = vadd.f32 %v7479, %v7699
        %v7749 = vadd.f32 %v7480, %v7701
        %v7750 = vadd.f32 %v7481, %v7703
        %v7751 = vadd.f32 %v7482, %v7705
        %v7752 = vadd.f32 %v7483, %v7707
        %v7753 = vadd.f32 %v7484, %v7709
        %v7754 = vadd.f32 %v7485, %v7711
        %v7755 = vadd.f32 %v7486, %v7713
        %v7756 = vadd.f32 %v7487, %v7715
        %v7757 = vadd.f32 %v7488, %v7717
        %v7758 = vadd.f32 %v7489, %v7719
        %v7759 = vadd.f32 %v7490, %v7721
        %v7760 = vadd.f32 %v7491, %v7723
        %v7761 = vadd.f32 %v7492, %v7725
        %s7762 = scalar_lea.vmem %s8, 17
        %v7763 = vld [vmem:[%s7762] ss:$8 sm:$0x3]
        %v7765 = vlaneseq
        %v7766 = vshrl.u32 %v7765, 7
        %v7767 = vsub.s32 0, %v7766
        %v7768 = vrot.slane %v7763, %v7767
        %v7769 = vlaneseq
        %v7770 = vshrl.u32 %v7769, 7
        %v7771 = vsub.s32 1, %v7770
        %v7772 = vrot.slane %v7763, %v7771
        %v7775 = vmul.f32 %v7619, %v7768
        %v7776 = vmul.f32 %v7620, %v7772
        %v7777 = vmul.f32 %v7621, %v7768
        %v7778 = vmul.f32 %v7622, %v7772
        %v7779 = vmul.f32 %v7623, %v7768
        %v7780 = vmul.f32 %v7624, %v7772
        %v7781 = vmul.f32 %v7625, %v7768
        %v7782 = vmul.f32 %v7626, %v7772
        %v7783 = vmul.f32 %v7627, %v7768
        %v7784 = vmul.f32 %v7628, %v7772
        %v7785 = vmul.f32 %v7629, %v7768
        %v7786 = vmul.f32 %v7630, %v7772
        %v7787 = vmul.f32 %v7631, %v7768
        %v7788 = vmul.f32 %v7632, %v7772
        %v7789 = vmul.f32 %v7633, %v7768
        %v7790 = vmul.f32 %v7634, %v7772
        %v7791 = vmul.f32 %v7635, %v7768
        %v7792 = vmul.f32 %v7636, %v7772
        %v7811 = vrot.slane %v7775, 4
        %v7812 = vrot.slane %v7776, 4
        %v7813 = vrot.slane %v7777, 4
        %v7814 = vsel %vm3591, %v7811, %v7813
        %v7815 = vrot.slane %v7778, 4
        %v7816 = vsel %vm3591, %v7812, %v7815
        %v7817 = vrot.slane %v7779, 4
        %v7818 = vsel %vm3591, %v7813, %v7817
        %v7819 = vrot.slane %v7780, 4
        %v7820 = vsel %vm3591, %v7815, %v7819
        %v7821 = vrot.slane %v7781, 4
        %v7822 = vsel %vm3591, %v7817, %v7821
        %v7823 = vrot.slane %v7782, 4
        %v7824 = vsel %vm3591, %v7819, %v7823
        %v7825 = vrot.slane %v7783, 4
        %v7826 = vsel %vm3591, %v7821, %v7825
        %v7827 = vrot.slane %v7784, 4
        %v7828 = vsel %vm3591, %v7823, %v7827
        %v7829 = vrot.slane %v7785, 4
        %v7830 = vsel %vm3591, %v7825, %v7829
        %v7831 = vrot.slane %v7786, 4
        %v7832 = vsel %vm3591, %v7827, %v7831
        %v7833 = vrot.slane %v7787, 4
        %v7834 = vsel %vm3591, %v7829, %v7833
        %v7835 = vrot.slane %v7788, 4
        %v7836 = vsel %vm3591, %v7831, %v7835
        %v7837 = vrot.slane %v7789, 4
        %v7838 = vsel %vm3591, %v7833, %v7837
        %v7839 = vrot.slane %v7790, 4
        %v7840 = vsel %vm3591, %v7835, %v7839
        %v7841 = vrot.slane %v7791, 4
        %v7842 = vsel %vm3591, %v7837, %v7841
        %v7843 = vrot.slane %v7792, 4
        %v7844 = vsel %vm3591, %v7839, %v7843
        %v7863 = vadd.f32 %v7744, %v7811
        %v7864 = vadd.f32 %v7745, %v7812
        %v7865 = vadd.f32 %v7746, %v7814
        %v7866 = vadd.f32 %v7747, %v7816
        %v7867 = vadd.f32 %v7748, %v7818
        %v7868 = vadd.f32 %v7749, %v7820
        %v7869 = vadd.f32 %v7750, %v7822
        %v7870 = vadd.f32 %v7751, %v7824
        %v7871 = vadd.f32 %v7752, %v7826
        %v7872 = vadd.f32 %v7753, %v7828
        %v7873 = vadd.f32 %v7754, %v7830
        %v7874 = vadd.f32 %v7755, %v7832
        %v7875 = vadd.f32 %v7756, %v7834
        %v7876 = vadd.f32 %v7757, %v7836
        %v7877 = vadd.f32 %v7758, %v7838
        %v7878 = vadd.f32 %v7759, %v7840
        %v7879 = vadd.f32 %v7760, %v7842
        %v7880 = vadd.f32 %v7761, %v7844
        %s7881 = scalar_lea.vmem %s8, 22
        %v7882 = vld [vmem:[%s7881] ss:$8 sm:$0x3]
        %v7884 = vlaneseq
        %v7885 = vshrl.u32 %v7884, 7
        %v7886 = vsub.s32 0, %v7885
        %v7887 = vrot.slane %v7882, %v7886
        %v7888 = vlaneseq
        %v7889 = vshrl.u32 %v7888, 7
        %v7890 = vsub.s32 1, %v7889
        %v7891 = vrot.slane %v7882, %v7890
        %v7894 = vmul.f32 %v7621, %v7887
        %v7895 = vmul.f32 %v7622, %v7891
        %v7896 = vmul.f32 %v7623, %v7887
        %v7897 = vmul.f32 %v7624, %v7891
        %v7898 = vmul.f32 %v7625, %v7887
        %v7899 = vmul.f32 %v7626, %v7891
        %v7900 = vmul.f32 %v7627, %v7887
        %v7901 = vmul.f32 %v7628, %v7891
        %v7902 = vmul.f32 %v7629, %v7887
        %v7903 = vmul.f32 %v7630, %v7891
        %v7904 = vmul.f32 %v7631, %v7887
        %v7905 = vmul.f32 %v7632, %v7891
        %v7906 = vmul.f32 %v7633, %v7887
        %v7907 = vmul.f32 %v7634, %v7891
        %v7908 = vmul.f32 %v7635, %v7887
        %v7909 = vmul.f32 %v7636, %v7891
        %v7910 = vmul.f32 %v7637, %v7887
        %v7911 = vmul.f32 %v7638, %v7891
        %v7930 = vrot.slane %v7894, 4
        %v7931 = vrot.slane %v7895, 4
        %v7932 = vrot.slane %v7896, 4
        %v7933 = vsel %vm3591, %v7930, %v7932
        %v7934 = vrot.slane %v7897, 4
        %v7935 = vsel %vm3591, %v7931, %v7934
        %v7936 = vrot.slane %v7898, 4
        %v7937 = vsel %vm3591, %v7932, %v7936
        %v7938 = vrot.slane %v7899, 4
        %v7939 = vsel %vm3591, %v7934, %v7938
        %v7940 = vrot.slane %v7900, 4
        %v7941 = vsel %vm3591, %v7936, %v7940
        %v7942 = vrot.slane %v7901, 4
        %v7943 = vsel %vm3591, %v7938, %v7942
        %v7944 = vrot.slane %v7902, 4
        %v7945 = vsel %vm3591, %v7940, %v7944
        %v7946 = vrot.slane %v7903, 4
        %v7947 = vsel %vm3591, %v7942, %v7946
        %v7948 = vrot.slane %v7904, 4
        %v7949 = vsel %vm3591, %v7944, %v7948
        %v7950 = vrot.slane %v7905, 4
        %v7951 = vsel %vm3591, %v7946, %v7950
        %v7952 = vrot.slane %v7906, 4
        %v7953 = vsel %vm3591, %v7948, %v7952
        %v7954 = vrot.slane %v7907, 4
        %v7955 = vsel %vm3591, %v7950, %v7954
        %v7956 = vrot.slane %v7908, 4
        %v7957 = vsel %vm3591, %v7952, %v7956
        %v7958 = vrot.slane %v7909, 4
        %v7959 = vsel %vm3591, %v7954, %v7958
        %v7960 = vrot.slane %v7910, 4
        %v7961 = vsel %vm3591, %v7956, %v7960
        %v7962 = vrot.slane %v7911, 4
        %v7963 = vsel %vm3591, %v7958, %v7962
        %v7982 = vadd.f32 %v7863, %v7930
        %v7983 = vadd.f32 %v7864, %v7931
        %v7984 = vadd.f32 %v7865, %v7933
        %v7985 = vadd.f32 %v7866, %v7935
        %v7986 = vadd.f32 %v7867, %v7937
        %v7987 = vadd.f32 %v7868, %v7939
        %v7988 = vadd.f32 %v7869, %v7941
        %v7989 = vadd.f32 %v7870, %v7943
        %v7990 = vadd.f32 %v7871, %v7945
        %v7991 = vadd.f32 %v7872, %v7947
        %v7992 = vadd.f32 %v7873, %v7949
        %v7993 = vadd.f32 %v7874, %v7951
        %v7994 = vadd.f32 %v7875, %v7953
        %v7995 = vadd.f32 %v7876, %v7955
        %v7996 = vadd.f32 %v7877, %v7957
        %v7997 = vadd.f32 %v7878, %v7959
        %v7998 = vadd.f32 %v7879, %v7961
        %v7999 = vadd.f32 %v7880, %v7963
        %s8000 = scalar_lea.vmem %s8, 35
        %v8001 = vld [vmem:[%s8000] ss:$8 sm:$0x3]
        %v8003 = vlaneseq
        %v8004 = vshrl.u32 %v8003, 7
        %v8005 = vsub.s32 0, %v8004
        %v8006 = vrot.slane %v8001, %v8005
        %v8007 = vlaneseq
        %v8008 = vshrl.u32 %v8007, 7
        %v8009 = vsub.s32 1, %v8008
        %v8010 = vrot.slane %v8001, %v8009
        %v8013 = vmul.f32 %v7623, %v8006
        %v8014 = vmul.f32 %v7624, %v8010
        %v8015 = vmul.f32 %v7625, %v8006
        %v8016 = vmul.f32 %v7626, %v8010
        %v8017 = vmul.f32 %v7627, %v8006
        %v8018 = vmul.f32 %v7628, %v8010
        %v8019 = vmul.f32 %v7629, %v8006
        %v8020 = vmul.f32 %v7630, %v8010
        %v8021 = vmul.f32 %v7631, %v8006
        %v8022 = vmul.f32 %v7632, %v8010
        %v8023 = vmul.f32 %v7633, %v8006
        %v8024 = vmul.f32 %v7634, %v8010
        %v8025 = vmul.f32 %v7635, %v8006
        %v8026 = vmul.f32 %v7636, %v8010
        %v8027 = vmul.f32 %v7637, %v8006
        %v8028 = vmul.f32 %v7638, %v8010
        %v8029 = vmul.f32 %v7639, %v8006
        %v8030 = vmul.f32 %v7640, %v8010
        %v8049 = vrot.slane %v8013, 4
        %v8050 = vrot.slane %v8014, 4
        %v8051 = vrot.slane %v8015, 4
        %v8052 = vsel %vm3591, %v8049, %v8051
        %v8053 = vrot.slane %v8016, 4
        %v8054 = vsel %vm3591, %v8050, %v8053
        %v8055 = vrot.slane %v8017, 4
        %v8056 = vsel %vm3591, %v8051, %v8055
        %v8057 = vrot.slane %v8018, 4
        %v8058 = vsel %vm3591, %v8053, %v8057
        %v8059 = vrot.slane %v8019, 4
        %v8060 = vsel %vm3591, %v8055, %v8059
        %v8061 = vrot.slane %v8020, 4
        %v8062 = vsel %vm3591, %v8057, %v8061
        %v8063 = vrot.slane %v8021, 4
        %v8064 = vsel %vm3591, %v8059, %v8063
        %v8065 = vrot.slane %v8022, 4
        %v8066 = vsel %vm3591, %v8061, %v8065
        %v8067 = vrot.slane %v8023, 4
        %v8068 = vsel %vm3591, %v8063, %v8067
        %v8069 = vrot.slane %v8024, 4
        %v8070 = vsel %vm3591, %v8065, %v8069
        %v8071 = vrot.slane %v8025, 4
        %v8072 = vsel %vm3591, %v8067, %v8071
        %v8073 = vrot.slane %v8026, 4
        %v8074 = vsel %vm3591, %v8069, %v8073
        %v8075 = vrot.slane %v8027, 4
        %v8076 = vsel %vm3591, %v8071, %v8075
        %v8077 = vrot.slane %v8028, 4
        %v8078 = vsel %vm3591, %v8073, %v8077
        %v8079 = vrot.slane %v8029, 4
        %v8080 = vsel %vm3591, %v8075, %v8079
        %v8081 = vrot.slane %v8030, 4
        %v8082 = vsel %vm3591, %v8077, %v8081
        %v8101 = vadd.f32 %v7982, %v8049
        %v8102 = vadd.f32 %v7983, %v8050
        %v8103 = vadd.f32 %v7984, %v8052
        %v8104 = vadd.f32 %v7985, %v8054
        %v8105 = vadd.f32 %v7986, %v8056
        %v8106 = vadd.f32 %v7987, %v8058
        %v8107 = vadd.f32 %v7988, %v8060
        %v8108 = vadd.f32 %v7989, %v8062
        %v8109 = vadd.f32 %v7990, %v8064
        %v8110 = vadd.f32 %v7991, %v8066
        %v8111 = vadd.f32 %v7992, %v8068
        %v8112 = vadd.f32 %v7993, %v8070
        %v8113 = vadd.f32 %v7994, %v8072
        %v8114 = vadd.f32 %v7995, %v8074
        %v8115 = vadd.f32 %v7996, %v8076
        %v8116 = vadd.f32 %v7997, %v8078
        %v8117 = vadd.f32 %v7998, %v8080
        %v8118 = vadd.f32 %v7999, %v8082
        %s8119 = scalar_lea.vmem %s8, 48
        %v8120 = vld [vmem:[%s8119] ss:$8 sm:$0x3]
        %v8122 = vlaneseq
        %v8123 = vshrl.u32 %v8122, 7
        %v8124 = vsub.s32 0, %v8123
        %v8125 = vrot.slane %v8120, %v8124
        %v8126 = vlaneseq
        %v8127 = vshrl.u32 %v8126, 7
        %v8128 = vsub.s32 1, %v8127
        %v8129 = vrot.slane %v8120, %v8128
        %v8132 = vmul.f32 %v7625, %v8125
        %v8133 = vmul.f32 %v7626, %v8129
        %v8134 = vmul.f32 %v7627, %v8125
        %v8135 = vmul.f32 %v7628, %v8129
        %v8136 = vmul.f32 %v7629, %v8125
        %v8137 = vmul.f32 %v7630, %v8129
        %v8138 = vmul.f32 %v7631, %v8125
        %v8139 = vmul.f32 %v7632, %v8129
        %v8140 = vmul.f32 %v7633, %v8125
        %v8141 = vmul.f32 %v7634, %v8129
        %v8142 = vmul.f32 %v7635, %v8125
        %v8143 = vmul.f32 %v7636, %v8129
        %v8144 = vmul.f32 %v7637, %v8125
        %v8145 = vmul.f32 %v7638, %v8129
        %v8146 = vmul.f32 %v7639, %v8125
        %v8147 = vmul.f32 %v7640, %v8129
        %v8148 = vmul.f32 %v7641, %v8125
        %v8149 = vmul.f32 %v7642, %v8129
        %v8168 = vrot.slane %v8132, 4
        %v8169 = vrot.slane %v8133, 4
        %v8170 = vrot.slane %v8134, 4
        %v8171 = vsel %vm3591, %v8168, %v8170
        %v8172 = vrot.slane %v8135, 4
        %v8173 = vsel %vm3591, %v8169, %v8172
        %v8174 = vrot.slane %v8136, 4
        %v8175 = vsel %vm3591, %v8170, %v8174
        %v8176 = vrot.slane %v8137, 4
        %v8177 = vsel %vm3591, %v8172, %v8176
        %v8178 = vrot.slane %v8138, 4
        %v8179 = vsel %vm3591, %v8174, %v8178
        %v8180 = vrot.slane %v8139, 4
        %v8181 = vsel %vm3591, %v8176, %v8180
        %v8182 = vrot.slane %v8140, 4
        %v8183 = vsel %vm3591, %v8178, %v8182
        %v8184 = vrot.slane %v8141, 4
        %v8185 = vsel %vm3591, %v8180, %v8184
        %v8186 = vrot.slane %v8142, 4
        %v8187 = vsel %vm3591, %v8182, %v8186
        %v8188 = vrot.slane %v8143, 4
        %v8189 = vsel %vm3591, %v8184, %v8188
        %v8190 = vrot.slane %v8144, 4
        %v8191 = vsel %vm3591, %v8186, %v8190
        %v8192 = vrot.slane %v8145, 4
        %v8193 = vsel %vm3591, %v8188, %v8192
        %v8194 = vrot.slane %v8146, 4
        %v8195 = vsel %vm3591, %v8190, %v8194
        %v8196 = vrot.slane %v8147, 4
        %v8197 = vsel %vm3591, %v8192, %v8196
        %v8198 = vrot.slane %v8148, 4
        %v8199 = vsel %vm3591, %v8194, %v8198
        %v8200 = vrot.slane %v8149, 4
        %v8201 = vsel %vm3591, %v8196, %v8200
        %v8220 = vadd.f32 %v8101, %v8168
        %v8221 = vadd.f32 %v8102, %v8169
        %v8222 = vadd.f32 %v8103, %v8171
        %v8223 = vadd.f32 %v8104, %v8173
        %v8224 = vadd.f32 %v8105, %v8175
        %v8225 = vadd.f32 %v8106, %v8177
        %v8226 = vadd.f32 %v8107, %v8179
        %v8227 = vadd.f32 %v8108, %v8181
        %v8228 = vadd.f32 %v8109, %v8183
        %v8229 = vadd.f32 %v8110, %v8185
        %v8230 = vadd.f32 %v8111, %v8187
        %v8231 = vadd.f32 %v8112, %v8189
        %v8232 = vadd.f32 %v8113, %v8191
        %v8233 = vadd.f32 %v8114, %v8193
        %v8234 = vadd.f32 %v8115, %v8195
        %v8235 = vadd.f32 %v8116, %v8197
        %v8236 = vadd.f32 %v8117, %v8199
        %v8237 = vadd.f32 %v8118, %v8201
        %v8238 = vlaneseq
        %v8239 = vshrl.u32 %v8238, 7
        %v8240 = vsub.s32 0, %v8239
        %v8241 = vrot.slane %v5006, %v8240
        %v8242 = vlaneseq
        %v8243 = vshrl.u32 %v8242, 7
        %v8244 = vsub.s32 0, %v8243
        %v8245 = vrot.slane %v5007, %v8244
        %v8246 = vadd.f32 %v8220, %v8241
        %v8247 = vadd.f32 %v8221, %v8245
        %v8248 = vadd.f32 %v8222, %v8241
        %v8249 = vadd.f32 %v8223, %v8245
        %v8250 = vadd.f32 %v8224, %v8241
        %v8251 = vadd.f32 %v8225, %v8245
        %v8252 = vadd.f32 %v8226, %v8241
        %v8253 = vadd.f32 %v8227, %v8245
        %v8254 = vadd.f32 %v8228, %v8241
        %v8255 = vadd.f32 %v8229, %v8245
        %v8256 = vadd.f32 %v8230, %v8241
        %v8257 = vadd.f32 %v8231, %v8245
        %v8258 = vadd.f32 %v8232, %v8241
        %v8259 = vadd.f32 %v8233, %v8245
        %v8260 = vadd.f32 %v8234, %v8241
        %v8261 = vadd.f32 %v8235, %v8245
        %v8262 = vadd.f32 %v8236, %v8241
        %v8263 = vadd.f32 %v8237, %v8245
        %v8264 = vmul.f32 %v8246, 0.5
        %v8265 = vmul.f32 %v8247, 0.5
        %v8266 = vmul.f32 %v8248, 0.5
        %v8267 = vmul.f32 %v8249, 0.5
        %v8268 = vmul.f32 %v8250, 0.5
        %v8269 = vmul.f32 %v8251, 0.5
        %v8270 = vmul.f32 %v8252, 0.5
        %v8271 = vmul.f32 %v8253, 0.5
        %v8272 = vmul.f32 %v8254, 0.5
        %v8273 = vmul.f32 %v8255, 0.5
        %v8274 = vmul.f32 %v8256, 0.5
        %v8275 = vmul.f32 %v8257, 0.5
        %v8276 = vmul.f32 %v8258, 0.5
        %v8277 = vmul.f32 %v8259, 0.5
        %v8278 = vmul.f32 %v8260, 0.5
        %v8279 = vmul.f32 %v8261, 0.5
        %v8280 = vmul.f32 %v8262, 0.5
        %v8281 = vmul.f32 %v8263, 0.5
        %v8282 = vmul.f32 %v8246, %v8246
        %v8283 = vmul.f32 %v8247, %v8247
        %v8284 = vmul.f32 %v8248, %v8248
        %v8285 = vmul.f32 %v8249, %v8249
        %v8286 = vmul.f32 %v8250, %v8250
        %v8287 = vmul.f32 %v8251, %v8251
        %v8288 = vmul.f32 %v8252, %v8252
        %v8289 = vmul.f32 %v8253, %v8253
        %v8290 = vmul.f32 %v8254, %v8254
        %v8291 = vmul.f32 %v8255, %v8255
        %v8292 = vmul.f32 %v8256, %v8256
        %v8293 = vmul.f32 %v8257, %v8257
        %v8294 = vmul.f32 %v8258, %v8258
        %v8295 = vmul.f32 %v8259, %v8259
        %v8296 = vmul.f32 %v8260, %v8260
        %v8297 = vmul.f32 %v8261, %v8261
        %v8298 = vmul.f32 %v8262, %v8262
        %v8299 = vmul.f32 %v8263, %v8263
        %v8300 = vmul.f32 %v8282, %v8246
        %v8301 = vmul.f32 %v8283, %v8247
        %v8302 = vmul.f32 %v8284, %v8248
        %v8303 = vmul.f32 %v8285, %v8249
        %v8304 = vmul.f32 %v8286, %v8250
        %v8305 = vmul.f32 %v8287, %v8251
        %v8306 = vmul.f32 %v8288, %v8252
        %v8307 = vmul.f32 %v8289, %v8253
        %v8308 = vmul.f32 %v8290, %v8254
        %v8309 = vmul.f32 %v8291, %v8255
        %v8310 = vmul.f32 %v8292, %v8256
        %v8311 = vmul.f32 %v8293, %v8257
        %v8312 = vmul.f32 %v8294, %v8258
        %v8313 = vmul.f32 %v8295, %v8259
        %v8314 = vmul.f32 %v8296, %v8260
        %v8315 = vmul.f32 %v8297, %v8261
        %v8316 = vmul.f32 %v8298, %v8262
        %v8317 = vmul.f32 %v8299, %v8263
        %v8318 = vmul.f32 %v8300, 0.044715
        %v8319 = vmul.f32 %v8301, 0.044715
        %v8320 = vmul.f32 %v8302, 0.044715
        %v8321 = vmul.f32 %v8303, 0.044715
        %v8322 = vmul.f32 %v8304, 0.044715
        %v8323 = vmul.f32 %v8305, 0.044715
        %v8324 = vmul.f32 %v8306, 0.044715
        %v8325 = vmul.f32 %v8307, 0.044715
        %v8326 = vmul.f32 %v8308, 0.044715
        %v8327 = vmul.f32 %v8309, 0.044715
        %v8328 = vmul.f32 %v8310, 0.044715
        %v8329 = vmul.f32 %v8311, 0.044715
        %v8330 = vmul.f32 %v8312, 0.044715
        %v8331 = vmul.f32 %v8313, 0.044715
        %v8332 = vmul.f32 %v8314, 0.044715
        %v8333 = vmul.f32 %v8315, 0.044715
        %v8334 = vmul.f32 %v8316, 0.044715
        %v8335 = vmul.f32 %v8317, 0.044715
        %v8336 = vadd.f32 %v8246, %v8318
        %v8337 = vadd.f32 %v8247, %v8319
        %v8338 = vadd.f32 %v8248, %v8320
        %v8339 = vadd.f32 %v8249, %v8321
        %v8340 = vadd.f32 %v8250, %v8322
        %v8341 = vadd.f32 %v8251, %v8323
        %v8342 = vadd.f32 %v8252, %v8324
        %v8343 = vadd.f32 %v8253, %v8325
        %v8344 = vadd.f32 %v8254, %v8326
        %v8345 = vadd.f32 %v8255, %v8327
        %v8346 = vadd.f32 %v8256, %v8328
        %v8347 = vadd.f32 %v8257, %v8329
        %v8348 = vadd.f32 %v8258, %v8330
        %v8349 = vadd.f32 %v8259, %v8331
        %v8350 = vadd.f32 %v8260, %v8332
        %v8351 = vadd.f32 %v8261, %v8333
        %v8352 = vadd.f32 %v8262, %v8334
        %v8353 = vadd.f32 %v8263, %v8335
        %v8354 = vmul.f32 %v8336, 0.7978846
        %v8355 = vmul.f32 %v8337, 0.7978846
        %v8356 = vmul.f32 %v8338, 0.7978846
        %v8357 = vmul.f32 %v8339, 0.7978846
        %v8358 = vmul.f32 %v8340, 0.7978846
        %v8359 = vmul.f32 %v8341, 0.7978846
        %v8360 = vmul.f32 %v8342, 0.7978846
        %v8361 = vmul.f32 %v8343, 0.7978846
        %v8362 = vmul.f32 %v8344, 0.7978846
        %v8363 = vmul.f32 %v8345, 0.7978846
        %v8364 = vmul.f32 %v8346, 0.7978846
        %v8365 = vmul.f32 %v8347, 0.7978846
        %v8366 = vmul.f32 %v8348, 0.7978846
        %v8367 = vmul.f32 %v8349, 0.7978846
        %v8368 = vmul.f32 %v8350, 0.7978846
        %v8369 = vmul.f32 %v8351, 0.7978846
        %v8370 = vmul.f32 %v8352, 0.7978846
        %v8371 = vmul.f32 %v8353, 0.7978846
        %v8372 = vtanh.pop %v8354
        %v8373 = vtanh.pop %v8355
        %v8374 = vtanh.pop %v8356
        %v8375 = vtanh.pop %v8357
        %v8376 = vtanh.pop %v8358
        %v8377 = vtanh.pop %v8359
        %v8378 = vtanh.pop %v8360
        %v8379 = vtanh.pop %v8361
        %v8380 = vtanh.pop %v8362
        %v8381 = vtanh.pop %v8363
        %v8382 = vtanh.pop %v8364
        %v8383 = vtanh.pop %v8365
        %v8384 = vtanh.pop %v8366
        %v8385 = vtanh.pop %v8367
        %v8386 = vtanh.pop %v8368
        %v8387 = vtanh.pop %v8369
        %v8388 = vtanh.pop %v8370
        %v8389 = vtanh.pop %v8371
        %v8390 = vadd.f32 %v8372, 1.0
        %v8391 = vadd.f32 %v8373, 1.0
        %v8392 = vadd.f32 %v8374, 1.0
        %v8393 = vadd.f32 %v8375, 1.0
        %v8394 = vadd.f32 %v8376, 1.0
        %v8395 = vadd.f32 %v8377, 1.0
        %v8396 = vadd.f32 %v8378, 1.0
        %v8397 = vadd.f32 %v8379, 1.0
        %v8398 = vadd.f32 %v8380, 1.0
        %v8399 = vadd.f32 %v8381, 1.0
        %v8400 = vadd.f32 %v8382, 1.0
        %v8401 = vadd.f32 %v8383, 1.0
        %v8402 = vadd.f32 %v8384, 1.0
        %v8403 = vadd.f32 %v8385, 1.0
        %v8404 = vadd.f32 %v8386, 1.0
        %v8405 = vadd.f32 %v8387, 1.0
        %v8406 = vadd.f32 %v8388, 1.0
        %v8407 = vadd.f32 %v8389, 1.0
        %v8408 = vmul.f32 %v8264, %v8390
        %v8409 = vmul.f32 %v8265, %v8391
        %v8410 = vmul.f32 %v8266, %v8392
        %v8411 = vmul.f32 %v8267, %v8393
        %v8412 = vmul.f32 %v8268, %v8394
        %v8413 = vmul.f32 %v8269, %v8395
        %v8414 = vmul.f32 %v8270, %v8396
        %v8415 = vmul.f32 %v8271, %v8397
        %v8416 = vmul.f32 %v8272, %v8398
        %v8417 = vmul.f32 %v8273, %v8399
        %v8418 = vmul.f32 %v8274, %v8400
        %v8419 = vmul.f32 %v8275, %v8401
        %v8420 = vmul.f32 %v8276, %v8402
        %v8421 = vmul.f32 %v8277, %v8403
        %v8422 = vmul.f32 %v8278, %v8404
        %v8423 = vmul.f32 %v8279, %v8405
        %v8424 = vmul.f32 %v8280, %v8406
        %v8425 = vmul.f32 %v8281, %v8407
        %v8426 = vlaneseq
        %v8427 = vshrl.u32 %v8426, 7
        %v8428 = vsub.s32 1, %v8427
        %v8429 = vrot.slane %v5006, %v8428
        %v8430 = vlaneseq
        %v8431 = vshrl.u32 %v8430, 7
        %v8432 = vsub.s32 1, %v8431
        %v8433 = vrot.slane %v5007, %v8432
        %v8434 = vmul.f32 %v8408, %v8429
        %v8435 = vmul.f32 %v8409, %v8433
        %v8436 = vmul.f32 %v8410, %v8429
        %v8437 = vmul.f32 %v8411, %v8433
        %v8438 = vmul.f32 %v8412, %v8429
        %v8439 = vmul.f32 %v8413, %v8433
        %v8440 = vmul.f32 %v8414, %v8429
        %v8441 = vmul.f32 %v8415, %v8433
        %v8442 = vmul.f32 %v8416, %v8429
        %v8443 = vmul.f32 %v8417, %v8433
        %v8444 = vmul.f32 %v8418, %v8429
        %v8445 = vmul.f32 %v8419, %v8433
        %v8446 = vmul.f32 %v8420, %v8429
        %v8447 = vmul.f32 %v8421, %v8433
        %v8448 = vmul.f32 %v8422, %v8429
        %v8449 = vmul.f32 %v8423, %v8433
        %v8450 = vmul.f32 %v8424, %v8429
        %v8451 = vmul.f32 %v8425, %v8433
        %v8452 = vlaneseq
        %v8453 = vshrl.u32 %v8452, 7
        %v8454 = vsub.s32 2, %v8453
        %v8455 = vrot.slane %v5006, %v8454
        %v8456 = vlaneseq
        %v8457 = vshrl.u32 %v8456, 7
        %v8458 = vsub.s32 2, %v8457
        %v8459 = vrot.slane %v5007, %v8458
        %v8460 = vadd.f32 %v8434, %v8455
        %v8461 = vadd.f32 %v8435, %v8459
        %v8462 = vadd.f32 %v8436, %v8455
        %v8463 = vadd.f32 %v8437, %v8459
        %v8464 = vadd.f32 %v8438, %v8455
        %v8465 = vadd.f32 %v8439, %v8459
        %v8466 = vadd.f32 %v8440, %v8455
        %v8467 = vadd.f32 %v8441, %v8459
        %v8468 = vadd.f32 %v8442, %v8455
        %v8469 = vadd.f32 %v8443, %v8459
        %v8470 = vadd.f32 %v8444, %v8455
        %v8471 = vadd.f32 %v8445, %v8459
        %v8472 = vadd.f32 %v8446, %v8455
        %v8473 = vadd.f32 %v8447, %v8459
        %v8474 = vadd.f32 %v8448, %v8455
        %v8475 = vadd.f32 %v8449, %v8459
        %v8476 = vadd.f32 %v8450, %v8455
        %v8477 = vadd.f32 %v8451, %v8459
        %v8494 = vrot.slane %v5014, 2
        %v8495 = vrot.slane %v5015, 2
        %v8496 = vrot.slane %v5016, 2
        %v8497 = vsel %vm973, %v8494, %v8496
        %v8498 = vrot.slane %v5017, 2
        %v8499 = vsel %vm973, %v8495, %v8498
        %v8500 = vrot.slane %v5018, 2
        %v8501 = vsel %vm973, %v8496, %v8500
        %v8502 = vrot.slane %v5019, 2
        %v8503 = vsel %vm973, %v8498, %v8502
        %v8504 = vrot.slane %v5020, 2
        %v8505 = vsel %vm973, %v8500, %v8504
        %v8506 = vrot.slane %v5021, 2
        %v8507 = vsel %vm973, %v8502, %v8506
        %v8508 = vrot.slane %v5022, 2
        %v8509 = vsel %vm973, %v8504, %v8508
        %v8510 = vrot.slane %v5023, 2
        %v8511 = vsel %vm973, %v8506, %v8510
        %v8512 = vrot.slane %v5024, 2
        %v8513 = vsel %vm973, %v8508, %v8512
        %v8514 = vrot.slane %v5025, 2
        %v8515 = vsel %vm973, %v8510, %v8514
        %v8516 = vrot.slane %v5026, 2
        %v8517 = vsel %vm973, %v8512, %v8516
        %v8518 = vrot.slane %v5027, 2
        %v8519 = vsel %vm973, %v8514, %v8518
        %v8520 = vrot.slane %v5028, 2
        %v8521 = vsel %vm973, %v8516, %v8520
        %v8522 = vrot.slane %v5029, 2
        %v8523 = vsel %vm973, %v8518, %v8522
        %v8542 = vadd.f32 %v8460, %v8494
        %v8543 = vadd.f32 %v8461, %v8495
        %v8544 = vadd.f32 %v8462, %v8497
        %v8545 = vadd.f32 %v8463, %v8499
        %v8546 = vadd.f32 %v8464, %v8501
        %v8547 = vadd.f32 %v8465, %v8503
        %v8548 = vadd.f32 %v8466, %v8505
        %v8549 = vadd.f32 %v8467, %v8507
        %v8550 = vadd.f32 %v8468, %v8509
        %v8551 = vadd.f32 %v8469, %v8511
        %v8552 = vadd.f32 %v8470, %v8513
        %v8553 = vadd.f32 %v8471, %v8515
        %v8554 = vadd.f32 %v8472, %v8517
        %v8555 = vadd.f32 %v8473, %v8519
        %v8556 = vadd.f32 %v8474, %v8521
        %v8557 = vadd.f32 %v8475, %v8523
        %v8558 = vadd.f32 %v8476, %v8520
        %v8559 = vadd.f32 %v8477, %v8522
        %v8560 = vpack.c.bf16 %v8544, %v8542
        %v8561 = vpack.c.bf16 %v8545, %v8543
        %v8562 = vpack.c.bf16 %v8548, %v8546
        %v8563 = vpack.c.bf16 %v8549, %v8547
        %v8564 = vpack.c.bf16 %v8552, %v8550
        %v8565 = vpack.c.bf16 %v8553, %v8551
        %v8566 = vpack.c.bf16 %v8556, %v8554
        %v8567 = vpack.c.bf16 %v8557, %v8555
        %v8568 = vpack.c.bf16 %v8558, %v8558
        %v8569 = vpack.c.bf16 %v8559, %v8559
        %v8580 = vrot.slane %v8560, 3
        %v8581 = vrot.slane %v8562, 3
        %v8582 = vsel %vm4480, %v8580, %v8581
        %v8583 = vrot.slane %v8561, 3
        %v8584 = vrot.slane %v8563, 3
        %v8585 = vsel %vm4480, %v8583, %v8584
        %v8586 = vrot.slane %v8564, 3
        %v8587 = vsel %vm4480, %v8581, %v8586
        %v8588 = vrot.slane %v8565, 3
        %v8589 = vsel %vm4480, %v8584, %v8588
        %v8590 = vrot.slane %v8566, 3
        %v8591 = vsel %vm4480, %v8586, %v8590
        %v8592 = vrot.slane %v8567, 3
        %v8593 = vsel %vm4480, %v8588, %v8592
        %v8594 = vrot.slane %v8568, 3
        %v8595 = vsel %vm4480, %v8590, %v8594
        %v8596 = vrot.slane %v8569, 3
        %v8597 = vsel %vm4480, %v8592, %v8596
        %8606 = vst [vmem:[#allocation3] sm:$0xff] %v8582
        %8607 = vst [vmem:[#allocation3 + $0x8] sm:$0xff] %v8585
        %8608 = vst [vmem:[#allocation3 + $0x10] sm:$0xff] %v8587
        %8609 = vst [vmem:[#allocation3 + $0x18] sm:$0xff] %v8589
        %8610 = vst [vmem:[#allocation3 + $0x20] sm:$0xff] %v8591
        %8611 = vst [vmem:[#allocation3 + $0x28] sm:$0xff] %v8593
        %8612 = vst [vmem:[#allocation3 + $0x30] sm:$0xff] %v8595
        %8613 = vst [vmem:[#allocation3 + $0x38] sm:$0xff] %v8597
        %v8614 = vld [vmem:[%s11] sm:$0xff]
        %v8615 = vld [vmem:[%s11 + $0x8] sm:$0xff]
        %v8616 = vld [vmem:[#allocation3] sm:$0xff]
        %v8617 = vld [vmem:[#allocation3 + $0x8] sm:$0xff]
        %v8618 = vld [vmem:[#allocation3 + $0x10] sm:$0xff]
        %v8619 = vld [vmem:[#allocation3 + $0x18] sm:$0xff]
        %v8620 = vld [vmem:[#allocation3 + $0x20] sm:$0xff]
        %v8621 = vld [vmem:[#allocation3 + $0x28] sm:$0xff]
        %v8622 = vld [vmem:[#allocation3 + $0x30] sm:$0xff]
        %v8623 = vld [vmem:[#allocation3 + $0x38] sm:$0xff]
        %v8624 = vld [vmem:[%s10] sm:$0xff]
        %v8625 = vld [vmem:[%s10 + $0x8] sm:$0xff]
        %v8626 = vld [vmem:[%s10 + $0x10] sm:$0xff]
        %v8627 = vld [vmem:[%s10 + $0x18] sm:$0xff]
        %v8628 = vld [vmem:[%s10 + $0x20] sm:$0xff]
        %v8629 = vld [vmem:[%s10 + $0x28] sm:$0xff]
        %v8630 = vld [vmem:[%s10 + $0x30] sm:$0xff]
        %v8631 = vld [vmem:[%s10 + $0x38] sm:$0xff]
        %v8632 = vld [vmem:[%s10 + $0x40] sm:$0xff]
        %v8633 = vld [vmem:[%s10 + $0x48] sm:$0xff]
        %v8634 = vld [vmem:[%s10 + $0x50] sm:$0xff]
        %v8635 = vld [vmem:[%s10 + $0x58] sm:$0xff]
        %v8636 = vld [vmem:[%s10 + $0x60] sm:$0xff]
        %v8637 = vld [vmem:[%s10 + $0x68] sm:$0xff]
        %v8638 = vld [vmem:[%s10 + $0x70] sm:$0xff]
        %v8639 = vld [vmem:[%s10 + $0x78] sm:$0xff]
        %v8640 = vld [vmem:[%s10 + $0x80] sm:$0xff]
        %v8641 = vld [vmem:[%s10 + $0x88] sm:$0xff]
        %v8642 = vld [vmem:[%s10 + $0x90] sm:$0xff]
        %v8643 = vld [vmem:[%s10 + $0x98] sm:$0xff]
        %v8644 = vld [vmem:[%s10 + $0xa0] sm:$0xff]
        %v8645 = vld [vmem:[%s10 + $0xa8] sm:$0xff]
        %v8646 = vld [vmem:[%s10 + $0xb0] sm:$0xff]
        %v8647 = vld [vmem:[%s10 + $0xb8] sm:$0xff]
        %v8648 = vld [vmem:[%s10 + $0xc0] sm:$0xff]
        %v8649 = vld [vmem:[%s10 + $0xc8] sm:$0xff]
        %v8650 = vld [vmem:[%s10 + $0xd0] sm:$0xff]
        %v8651 = vld [vmem:[%s10 + $0xd8] sm:$0xff]
        %v8652 = vld [vmem:[%s10 + $0xe0] sm:$0xff]
        %v8653 = vld [vmem:[%s10 + $0xe8] sm:$0xff]
        %v8654 = vld [vmem:[%s10 + $0xf0] sm:$0xff]
        %v8655 = vld [vmem:[%s10 + $0xf8] sm:$0xff]
        %v8656 = vlaneseq
        %v8657 = vshrl.u32 %v8656, 7
        %v8658 = vsub.s32 0, %v8657
        %v8659 = vrot.slane %v8614, %v8658
        %v8660 = vlaneseq
        %v8661 = vshrl.u32 %v8660, 7
        %v8662 = vsub.s32 0, %v8661
        %v8663 = vrot.slane %v8615, %v8662
        %v8696 = vunpack.c.l.b16 %v8624
        %v8697 = vunpack.c.h.b16 %v8624
        %v8698 = vunpack.c.l.b16 %v8625
        %v8699 = vunpack.c.h.b16 %v8625
        %v8700 = vunpack.c.l.b16 %v8626
        %v8701 = vunpack.c.h.b16 %v8626
        %v8702 = vunpack.c.l.b16 %v8627
        %v8703 = vunpack.c.h.b16 %v8627
        %v8704 = vunpack.c.l.b16 %v8628
        %v8705 = vunpack.c.h.b16 %v8628
        %v8706 = vunpack.c.l.b16 %v8629
        %v8707 = vunpack.c.h.b16 %v8629
        %v8708 = vunpack.c.l.b16 %v8630
        %v8709 = vunpack.c.h.b16 %v8630
        %v8710 = vunpack.c.l.b16 %v8631
        %v8711 = vunpack.c.h.b16 %v8631
        %v8712 = vunpack.c.l.b16 %v8632
        %v8713 = vunpack.c.h.b16 %v8632
        %v8714 = vunpack.c.l.b16 %v8633
        %v8715 = vunpack.c.h.b16 %v8633
        %v8716 = vunpack.c.l.b16 %v8634
        %v8717 = vunpack.c.h.b16 %v8634
        %v8718 = vunpack.c.l.b16 %v8635
        %v8719 = vunpack.c.h.b16 %v8635
        %v8720 = vunpack.c.l.b16 %v8636
        %v8721 = vunpack.c.h.b16 %v8636
        %v8722 = vunpack.c.l.b16 %v8637
        %v8723 = vunpack.c.h.b16 %v8637
        %v8724 = vunpack.c.l.b16 %v8638
        %v8725 = vunpack.c.h.b16 %v8638
        %v8726 = vunpack.c.l.b16 %v8639
        %v8727 = vunpack.c.h.b16 %v8639
        %v8728 = vunpack.c.l.b16 %v8640
        %v8729 = vunpack.c.h.b16 %v8640
        %v8730 = vunpack.c.l.b16 %v8641
        %v8731 = vunpack.c.h.b16 %v8641
        %v8732 = vunpack.c.l.b16 %v8642
        %v8733 = vunpack.c.h.b16 %v8642
        %v8734 = vunpack.c.l.b16 %v8643
        %v8735 = vunpack.c.h.b16 %v8643
        %v8736 = vunpack.c.l.b16 %v8644
        %v8737 = vunpack.c.h.b16 %v8644
        %v8738 = vunpack.c.l.b16 %v8645
        %v8739 = vunpack.c.h.b16 %v8645
        %v8740 = vunpack.c.l.b16 %v8646
        %v8741 = vunpack.c.h.b16 %v8646
        %v8742 = vunpack.c.l.b16 %v8647
        %v8743 = vunpack.c.h.b16 %v8647
        %v8744 = vunpack.c.l.b16 %v8648
        %v8745 = vunpack.c.h.b16 %v8648
        %v8746 = vunpack.c.l.b16 %v8649
        %v8747 = vunpack.c.h.b16 %v8649
        %v8748 = vunpack.c.l.b16 %v8650
        %v8749 = vunpack.c.h.b16 %v8650
        %v8750 = vunpack.c.l.b16 %v8651
        %v8751 = vunpack.c.h.b16 %v8651
        %v8752 = vunpack.c.l.b16 %v8652
        %v8753 = vunpack.c.h.b16 %v8652
        %v8754 = vunpack.c.l.b16 %v8653
        %v8755 = vunpack.c.h.b16 %v8653
        %v8756 = vunpack.c.l.b16 %v8654
        %v8757 = vunpack.c.h.b16 %v8654
        %v8758 = vunpack.c.l.b16 %v8655
        %v8759 = vunpack.c.h.b16 %v8655
        %v8760 = vpack.c.b16 %v8698, %v8696
        %v8761 = vpack.c.b16 %v8699, %v8697
        %v8762 = vpack.c.b16 %v8702, %v8700
        %v8763 = vpack.c.b16 %v8703, %v8701
        %v8764 = vpack.c.b16 %v8706, %v8704
        %v8765 = vpack.c.b16 %v8707, %v8705
        %v8766 = vpack.c.b16 %v8710, %v8708
        %v8767 = vpack.c.b16 %v8711, %v8709
        %v8768 = vpack.c.b16 %v8714, %v8712
        %v8769 = vpack.c.b16 %v8715, %v8713
        %v8770 = vpack.c.b16 %v8718, %v8716
        %v8771 = vpack.c.b16 %v8719, %v8717
        %v8772 = vpack.c.b16 %v8722, %v8720
        %v8773 = vpack.c.b16 %v8723, %v8721
        %v8774 = vpack.c.b16 %v8726, %v8724
        %v8775 = vpack.c.b16 %v8727, %v8725
        %v8776 = vpack.c.b16 %v8730, %v8728
        %v8777 = vpack.c.b16 %v8731, %v8729
        %v8778 = vpack.c.b16 %v8734, %v8732
        %v8779 = vpack.c.b16 %v8735, %v8733
        %v8780 = vpack.c.b16 %v8738, %v8736
        %v8781 = vpack.c.b16 %v8739, %v8737
        %v8782 = vpack.c.b16 %v8742, %v8740
        %v8783 = vpack.c.b16 %v8743, %v8741
        %v8784 = vpack.c.b16 %v8746, %v8744
        %v8785 = vpack.c.b16 %v8747, %v8745
        %v8786 = vpack.c.b16 %v8750, %v8748
        %v8787 = vpack.c.b16 %v8751, %v8749
        %v8788 = vpack.c.b16 %v8754, %v8752
        %v8789 = vpack.c.b16 %v8755, %v8753
        %v8790 = vpack.c.b16 %v8758, %v8756
        %v8791 = vpack.c.b16 %v8759, %v8757
        %8824 = vmatprep.subr.bf16.mxu0 %v8761
        %8825 = vmatpush1.bf16.msra.mxu0 %v8760
        %8826 = vmatprep.subr.bf16.mxu0 %v8763
        %8827 = vmatpush1.bf16.msra.mxu0 %v8762
        %8828 = vmatprep.subr.bf16.mxu0 %v8765
        %8829 = vmatpush1.bf16.msra.mxu0 %v8764
        %8830 = vmatprep.subr.bf16.mxu0 %v8767
        %8831 = vmatpush1.bf16.msra.mxu0 %v8766
        %8832 = vmatprep.subr.bf16.mxu0 %v8769
        %8833 = vmatpush1.bf16.msra.mxu0 %v8768
        %8834 = vmatprep.subr.bf16.mxu0 %v8771
        %8835 = vmatpush1.bf16.msra.mxu0 %v8770
        %8836 = vmatprep.subr.bf16.mxu0 %v8773
        %8837 = vmatpush1.bf16.msra.mxu0 %v8772
        %8838 = vmatprep.subr.bf16.mxu0 %v8775
        %8839 = vmatpush1.bf16.msra.mxu0 %v8774
        %8840 = vmatprep.subr.bf16.mxu0 %v8777
        %8841 = vmatpush1.bf16.msra.mxu0 %v8776
        %8842 = vmatprep.subr.bf16.mxu0 %v8779
        %8843 = vmatpush1.bf16.msra.mxu0 %v8778
        %8844 = vmatprep.subr.bf16.mxu0 %v8781
        %8845 = vmatpush1.bf16.msra.mxu0 %v8780
        %8846 = vmatprep.subr.bf16.mxu0 %v8783
        %8847 = vmatpush1.bf16.msra.mxu0 %v8782
        %8848 = vmatprep.subr.bf16.mxu0 %v8785
        %8849 = vmatpush1.bf16.msra.mxu0 %v8784
        %8850 = vmatprep.subr.bf16.mxu0 %v8787
        %8851 = vmatpush1.bf16.msra.mxu0 %v8786
        %8852 = vmatprep.subr.bf16.mxu0 %v8789
        %8853 = vmatpush1.bf16.msra.mxu0 %v8788
        %8854 = vmatprep.subr.bf16.mxu0 %v8791
        %8855 = vmatpush1.bf16.msra.mxu0 %v8790
        %8856 = vmatprep.mubr.bf16.mxu0 %v8617
        %8857 = vmatmul.mubr.bf16.gmra.mrb[0].mxu0 %v8616
        %v8858 = vpop.f32.mrb[0].mxu0
        %v8859 = vadd.f32 %v8659, %v8858
        %v8860 = vpop.f32.mrb[0].mxu0
        %v8861 = vadd.f32 %v8663, %v8860
        %v8862 = vpop.f32.mrb[0].mxu0
        %v8863 = vadd.f32 %v8659, %v8862
        %v8864 = vpop.f32.mrb[0].mxu0
        %v8865 = vadd.f32 %v8663, %v8864
        %8866 = vmatprep.mubr.bf16.mxu0 %v8619
        %8867 = vmatmul.mubr.bf16.gmra.mrb[0].mxu0 %v8618
        %v8868 = vpop.f32.mrb[0].mxu0
        %v8869 = vadd.f32 %v8659, %v8868
        %v8870 = vpop.f32.mrb[0].mxu0
        %v8871 = vadd.f32 %v8663, %v8870
        %v8872 = vpop.f32.mrb[0].mxu0
        %v8873 = vadd.f32 %v8659, %v8872
        %v8874 = vpop.f32.mrb[0].mxu0
        %v8875 = vadd.f32 %v8663, %v8874
        %8876 = vmatprep.mubr.bf16.mxu0 %v8621
        %8877 = vmatmul.mubr.bf16.gmra.mrb[0].mxu0 %v8620
        %v8878 = vpop.f32.mrb[0].mxu0
        %v8879 = vadd.f32 %v8659, %v8878
        %v8880 = vpop.f32.mrb[0].mxu0
        %v8881 = vadd.f32 %v8663, %v8880
        %v8882 = vpop.f32.mrb[0].mxu0
        %v8883 = vadd.f32 %v8659, %v8882
        %v8884 = vpop.f32.mrb[0].mxu0
        %v8885 = vadd.f32 %v8663, %v8884
        %8886 = vmatprep.mubr.bf16.mxu0 %v8623
        %8887 = vmatmul.mubr.bf16.gmra.mrb[0].mxu0 %v8622
        %v8888 = vpop.f32.mrb[0].mxu0
        %v8889 = vadd.f32 %v8659, %v8888
        %v8890 = vpop.f32.mrb[0].mxu0
        %v8891 = vadd.f32 %v8663, %v8890
        %v8892 = vpop.f32.mrb[0].mxu0
        %v8893 = vadd.f32 %v8659, %v8892
        %v8894 = vpop.f32.mrb[0].mxu0
        %v8895 = vadd.f32 %v8663, %v8894
        %8896 = vdwg.mxu0
        %v8897 = vmul.f32 %v8859, 0.5
        %v8898 = vmul.f32 %v8861, 0.5
        %v8899 = vmul.f32 %v8863, 0.5
        %v8900 = vmul.f32 %v8865, 0.5
        %v8901 = vmul.f32 %v8869, 0.5
        %v8902 = vmul.f32 %v8871, 0.5
        %v8903 = vmul.f32 %v8873, 0.5
        %v8904 = vmul.f32 %v8875, 0.5
        %v8905 = vmul.f32 %v8879, 0.5
        %v8906 = vmul.f32 %v8881, 0.5
        %v8907 = vmul.f32 %v8883, 0.5
        %v8908 = vmul.f32 %v8885, 0.5
        %v8909 = vmul.f32 %v8889, 0.5
        %v8910 = vmul.f32 %v8891, 0.5
        %v8911 = vmul.f32 %v8893, 0.5
        %v8912 = vmul.f32 %v8895, 0.5
        %v8913 = vmul.f32 %v8859, %v8859
        %v8914 = vmul.f32 %v8861, %v8861
        %v8915 = vmul.f32 %v8863, %v8863
        %v8916 = vmul.f32 %v8865, %v8865
        %v8917 = vmul.f32 %v8869, %v8869
        %v8918 = vmul.f32 %v8871, %v8871
        %v8919 = vmul.f32 %v8873, %v8873
        %v8920 = vmul.f32 %v8875, %v8875
        %v8921 = vmul.f32 %v8879, %v8879
        %v8922 = vmul.f32 %v8881, %v8881
        %v8923 = vmul.f32 %v8883, %v8883
        %v8924 = vmul.f32 %v8885, %v8885
        %v8925 = vmul.f32 %v8889, %v8889
        %v8926 = vmul.f32 %v8891, %v8891
        %v8927 = vmul.f32 %v8893, %v8893
        %v8928 = vmul.f32 %v8895, %v8895
        %v8929 = vmul.f32 %v8913, %v8859
        %v8930 = vmul.f32 %v8914, %v8861
        %v8931 = vmul.f32 %v8915, %v8863
        %v8932 = vmul.f32 %v8916, %v8865
        %v8933 = vmul.f32 %v8917, %v8869
        %v8934 = vmul.f32 %v8918, %v8871
        %v8935 = vmul.f32 %v8919, %v8873
        %v8936 = vmul.f32 %v8920, %v8875
        %v8937 = vmul.f32 %v8921, %v8879
        %v8938 = vmul.f32 %v8922, %v8881
        %v8939 = vmul.f32 %v8923, %v8883
        %v8940 = vmul.f32 %v8924, %v8885
        %v8941 = vmul.f32 %v8925, %v8889
        %v8942 = vmul.f32 %v8926, %v8891
        %v8943 = vmul.f32 %v8927, %v8893
        %v8944 = vmul.f32 %v8928, %v8895
        %v8945 = vmul.f32 %v8929, 0.044715
        %v8946 = vmul.f32 %v8930, 0.044715
        %v8947 = vmul.f32 %v8931, 0.044715
        %v8948 = vmul.f32 %v8932, 0.044715
        %v8949 = vmul.f32 %v8933, 0.044715
        %v8950 = vmul.f32 %v8934, 0.044715
        %v8951 = vmul.f32 %v8935, 0.044715
        %v8952 = vmul.f32 %v8936, 0.044715
        %v8953 = vmul.f32 %v8937, 0.044715
        %v8954 = vmul.f32 %v8938, 0.044715
        %v8955 = vmul.f32 %v8939, 0.044715
        %v8956 = vmul.f32 %v8940, 0.044715
        %v8957 = vmul.f32 %v8941, 0.044715
        %v8958 = vmul.f32 %v8942, 0.044715
        %v8959 = vmul.f32 %v8943, 0.044715
        %v8960 = vmul.f32 %v8944, 0.044715
        %v8961 = vadd.f32 %v8859, %v8945
        %v8962 = vadd.f32 %v8861, %v8946
        %v8963 = vadd.f32 %v8863, %v8947
        %v8964 = vadd.f32 %v8865, %v8948
        %v8965 = vadd.f32 %v8869, %v8949
        %v8966 = vadd.f32 %v8871, %v8950
        %v8967 = vadd.f32 %v8873, %v8951
        %v8968 = vadd.f32 %v8875, %v8952
        %v8969 = vadd.f32 %v8879, %v8953
        %v8970 = vadd.f32 %v8881, %v8954
        %v8971 = vadd.f32 %v8883, %v8955
        %v8972 = vadd.f32 %v8885, %v8956
        %v8973 = vadd.f32 %v8889, %v8957
        %v8974 = vadd.f32 %v8891, %v8958
        %v8975 = vadd.f32 %v8893, %v8959
        %v8976 = vadd.f32 %v8895, %v8960
        %v8977 = vmul.f32 %v8961, 0.7978846
        %v8978 = vmul.f32 %v8962, 0.7978846
        %v8979 = vmul.f32 %v8963, 0.7978846
        %v8980 = vmul.f32 %v8964, 0.7978846
        %v8981 = vmul.f32 %v8965, 0.7978846
        %v8982 = vmul.f32 %v8966, 0.7978846
        %v8983 = vmul.f32 %v8967, 0.7978846
        %v8984 = vmul.f32 %v8968, 0.7978846
        %v8985 = vmul.f32 %v8969, 0.7978846
        %v8986 = vmul.f32 %v8970, 0.7978846
        %v8987 = vmul.f32 %v8971, 0.7978846
        %v8988 = vmul.f32 %v8972, 0.7978846
        %v8989 = vmul.f32 %v8973, 0.7978846
        %v8990 = vmul.f32 %v8974, 0.7978846
        %v8991 = vmul.f32 %v8975, 0.7978846
        %v8992 = vmul.f32 %v8976, 0.7978846
        %v8993 = vtanh.pop %v8977
        %v8994 = vtanh.pop %v8978
        %v8995 = vtanh.pop %v8979
        %v8996 = vtanh.pop %v8980
        %v8997 = vtanh.pop %v8981
        %v8998 = vtanh.pop %v8982
        %v8999 = vtanh.pop %v8983
        %v9000 = vtanh.pop %v8984
        %v9001 = vtanh.pop %v8985
        %v9002 = vtanh.pop %v8986
        %v9003 = vtanh.pop %v8987
        %v9004 = vtanh.pop %v8988
        %v9005 = vtanh.pop %v8989
        %v9006 = vtanh.pop %v8990
        %v9007 = vtanh.pop %v8991
        %v9008 = vtanh.pop %v8992
        %v9009 = vadd.f32 %v8993, 1.0
        %v9010 = vadd.f32 %v8994, 1.0
        %v9011 = vadd.f32 %v8995, 1.0
        %v9012 = vadd.f32 %v8996, 1.0
        %v9013 = vadd.f32 %v8997, 1.0
        %v9014 = vadd.f32 %v8998, 1.0
        %v9015 = vadd.f32 %v8999, 1.0
        %v9016 = vadd.f32 %v9000, 1.0
        %v9017 = vadd.f32 %v9001, 1.0
        %v9018 = vadd.f32 %v9002, 1.0
        %v9019 = vadd.f32 %v9003, 1.0
        %v9020 = vadd.f32 %v9004, 1.0
        %v9021 = vadd.f32 %v9005, 1.0
        %v9022 = vadd.f32 %v9006, 1.0
        %v9023 = vadd.f32 %v9007, 1.0
        %v9024 = vadd.f32 %v9008, 1.0
        %v9025 = vmul.f32 %v8897, %v9009
        %v9026 = vmul.f32 %v8898, %v9010
        %v9027 = vmul.f32 %v8899, %v9011
        %v9028 = vmul.f32 %v8900, %v9012
        %v9029 = vmul.f32 %v8901, %v9013
        %v9030 = vmul.f32 %v8902, %v9014
        %v9031 = vmul.f32 %v8903, %v9015
        %v9032 = vmul.f32 %v8904, %v9016
        %v9033 = vmul.f32 %v8905, %v9017
        %v9034 = vmul.f32 %v8906, %v9018
        %v9035 = vmul.f32 %v8907, %v9019
        %v9036 = vmul.f32 %v8908, %v9020
        %v9037 = vmul.f32 %v8909, %v9021
        %v9038 = vmul.f32 %v8910, %v9022
        %v9039 = vmul.f32 %v8911, %v9023
        %v9040 = vmul.f32 %v8912, %v9024
        %v9041 = vadd.f32 %v9025, %v9027
        %v9042 = vadd.f32 %v9041, %v9029
        %v9043 = vadd.f32 %v9042, %v9031
        %v9044 = vadd.f32 %v9043, %v9033
        %v9045 = vadd.f32 %v9044, %v9035
        %v9046 = vadd.f32 %v9045, %v9037
        %v9047 = vadd.f32 %v9046, %v9039
        %v9048 = vrot.slane %v9047, 4
        %v9049 = vadd.f32 %v9047, %v9048
        %v9050 = vrot.slane %v9049, 2
        %v9051 = vadd.f32 %v9049, %v9050
        %v9052 = vrot.slane %v9051, 1
        %v9053 = vadd.f32 %v9051, %v9052
        %v9054 = vadd.f32 %v9026, %v9028
        %v9055 = vadd.f32 %v9054, %v9030
        %v9056 = vadd.f32 %v9055, %v9032
        %v9057 = vadd.f32 %v9056, %v9034
        %v9058 = vadd.f32 %v9057, %v9036
        %v9059 = vadd.f32 %v9058, %v9038
        %v9060 = vadd.f32 %v9059, %v9040
        %v9061 = vrot.slane %v9060, 4
        %v9062 = vadd.f32 %v9060, %v9061
        %v9063 = vrot.slane %v9062, 2
        %v9064 = vadd.f32 %v9062, %v9063
        %v9065 = vrot.slane %v9064, 1
        %v9066 = vadd.f32 %v9064, %v9065
        %v9067 = vrcp.pop 64.0
        %v9068 = vmul.f32 %v9053, %v9067
        %v9069 = vmul.f32 %v9066, %v9067
        %v9070 = vld [vmem:[%s12] sm:$0xff]
        %v9071 = vld [vmem:[%s12 + $0x8] sm:$0xff]
        %v9072 = vld [vmem:[%s12 + $0x10] sm:$0xff]
        %v9073 = vld [vmem:[%s12 + $0x18] sm:$0xff]
        %v9074 = vld [vmem:[%s12 + $0x20] sm:$0xff]
        %v9075 = vld [vmem:[%s12 + $0x28] sm:$0xff]
        %v9076 = vld [vmem:[%s12 + $0x30] sm:$0xff]
        %v9077 = vld [vmem:[%s12 + $0x38] sm:$0xff]
        %v9078 = vld [vmem:[%s12 + $0x40] sm:$0xff]
        %v9079 = vld [vmem:[%s12 + $0x48] sm:$0xff]
        %v9080 = vld [vmem:[%s12 + $0x50] sm:$0xff]
        %v9081 = vld [vmem:[%s12 + $0x58] sm:$0xff]
        %v9082 = vld [vmem:[%s12 + $0x60] sm:$0xff]
        %v9083 = vld [vmem:[%s12 + $0x68] sm:$0xff]
        %v9084 = vld [vmem:[%s12 + $0x70] sm:$0xff]
        %v9085 = vld [vmem:[%s12 + $0x78] sm:$0xff]
        %v9086 = vld [vmem:[%s12 + $0x80] sm:$0xff]
        %v9087 = vld [vmem:[%s12 + $0x88] sm:$0xff]
        %v9088 = vld [vmem:[%s12 + $0x90] sm:$0xff]
        %v9089 = vld [vmem:[%s12 + $0x98] sm:$0xff]
        %v9090 = vld [vmem:[%s12 + $0xa0] sm:$0xff]
        %v9091 = vld [vmem:[%s12 + $0xa8] sm:$0xff]
        %v9092 = vld [vmem:[%s12 + $0xb0] sm:$0xff]
        %v9093 = vld [vmem:[%s12 + $0xb8] sm:$0xff]
        %v9094 = vld [vmem:[%s12 + $0xc0] sm:$0xff]
        %v9095 = vld [vmem:[%s12 + $0xc8] sm:$0xff]
        %v9096 = vld [vmem:[%s12 + $0xd0] sm:$0xff]
        %v9097 = vld [vmem:[%s12 + $0xd8] sm:$0xff]
        %v9098 = vld [vmem:[%s12 + $0xe0] sm:$0xff]
        %v9099 = vld [vmem:[%s12 + $0xe8] sm:$0xff]
        %v9100 = vld [vmem:[%s12 + $0xf0] sm:$0xff]
        %v9101 = vld [vmem:[%s12 + $0xf8] sm:$0xff]
        %v9102 = vld [vmem:[%s13] sm:$0x1]
        %9103 = vmatprep.subr.mxu0 0.0
        %9104 = vmatpush1.msra.mxu0 %v9070
        %9105 = vmatprep.subr.mxu0 0.0
        %9106 = vmatpush1.msra.mxu0 %v9071
        %9107 = vmatprep.subr.mxu0 0.0
        %9108 = vmatpush1.msra.mxu0 %v9072
        %9109 = vmatprep.subr.mxu0 0.0
        %9110 = vmatpush1.msra.mxu0 %v9073
        %9111 = vmatprep.subr.mxu0 0.0
        %9112 = vmatpush1.msra.mxu0 %v9074
        %9113 = vmatprep.subr.mxu0 0.0
        %9114 = vmatpush1.msra.mxu0 %v9075
        %9115 = vmatprep.subr.mxu0 0.0
        %9116 = vmatpush1.msra.mxu0 %v9076
        %9117 = vmatprep.subr.mxu0 0.0
        %9118 = vmatpush1.msra.mxu0 %v9077
        %9119 = vmatprep.subr.mxu0 0.0
        %9120 = vmatpush1.msra.mxu0 %v9078
        %9121 = vmatprep.subr.mxu0 0.0
        %9122 = vmatpush1.msra.mxu0 %v9079
        %9123 = vmatprep.subr.mxu0 0.0
        %9124 = vmatpush1.msra.mxu0 %v9080
        %9125 = vmatprep.subr.mxu0 0.0
        %9126 = vmatpush1.msra.mxu0 %v9081
        %9127 = vmatprep.subr.mxu0 0.0
        %9128 = vmatpush1.msra.mxu0 %v9082
        %9129 = vmatprep.subr.mxu0 0.0
        %9130 = vmatpush1.msra.mxu0 %v9083
        %9131 = vmatprep.subr.mxu0 0.0
        %9132 = vmatpush1.msra.mxu0 %v9084
        %9133 = vmatprep.subr.mxu0 0.0
        %9134 = vmatpush1.msra.mxu0 %v9085
        %9135 = vmatprep.subr.mxu0 0.0
        %9136 = vmatpush1.msra.mxu0 %v9086
        %9137 = vmatprep.subr.mxu0 0.0
        %9138 = vmatpush1.msra.mxu0 %v9087
        %9139 = vmatprep.subr.mxu0 0.0
        %9140 = vmatpush1.msra.mxu0 %v9088
        %9141 = vmatprep.subr.mxu0 0.0
        %9142 = vmatpush1.msra.mxu0 %v9089
        %9143 = vmatprep.subr.mxu0 0.0
        %9144 = vmatpush1.msra.mxu0 %v9090
        %9145 = vmatprep.subr.mxu0 0.0
        %9146 = vmatpush1.msra.mxu0 %v9091
        %9147 = vmatprep.subr.mxu0 0.0
        %9148 = vmatpush1.msra.mxu0 %v9092
        %9149 = vmatprep.subr.mxu0 0.0
        %9150 = vmatpush1.msra.mxu0 %v9093
        %9151 = vmatprep.subr.mxu0 0.0
        %9152 = vmatpush1.msra.mxu0 %v9094
        %9153 = vmatprep.subr.mxu0 0.0
        %9154 = vmatpush1.msra.mxu0 %v9095
        %9155 = vmatprep.subr.mxu0 0.0
        %9156 = vmatpush1.msra.mxu0 %v9096
        %9157 = vmatprep.subr.mxu0 0.0
        %9158 = vmatpush1.msra.mxu0 %v9097
        %9159 = vmatprep.subr.mxu0 0.0
        %9160 = vmatpush1.msra.mxu0 %v9098
        %9161 = vmatprep.subr.mxu0 0.0
        %9162 = vmatpush1.msra.mxu0 %v9099
        %9163 = vmatprep.subr.mxu0 0.0
        %9164 = vmatpush1.msra.mxu0 %v9100
        %9165 = vmatprep.subr.mxu0 0.0
        %9166 = vmatpush1.msra.mxu0 %v9101
        %9167 = vmatprep.mubr.f32.mxu0 %v9069
        %9168 = vmatmul.mubr.f32.gmra.mrb[0].mxu0 %v9068
        %v9169 = vpop.f32.mrb[0].mxu0
        %v9170 = vadd.f32 %v9102, %v9169
        %v9171 = vpop.f32.mrb[0].mxu0
        %9172 = vdwg.mxu0
        %9173 = vst [vmem:[%s459] sm:$0x1] %v9170
        %s9174 = sand.u32 %s335, 1
        %s9175 = scalar_lea.sflag [#allocation5], %s9174
        %s9176 = sand.u32 %s335, 1
        %s9177 = scalar_lea.vmem [#allocation4], %s9176
        // Predicated region
        $region77: #{convmixer_forward.1} parent=75 // pred_check
          %p9178 = pneg %p345
        $region78: #{convmixer_forward.1} parent=75 // pred_check_branch
          %9180 = sbr.rel (%p9178) target = $region80
        $region79: #{convmixer_forward.1} parent=75 // pred_region
          %s9182 = ssub.s32 16, 16
          %9183 = vsyncadd %s9175, %s9182
          %s9184 = smul.addr %s28, 16
          %s9185 = scalar_lea.hbm %s14, %s9184
          %s9187 = sshll.u32 %s9177, 4
          %s9188 = int_to_ptr.vmem [resolvable:$true] %s9187
          %9190 = dma.vmem_to_hbm [thread:$0]  %s9188, 16, %s9185, %s9175
        $region80: #{convmixer_forward.1} parent=75 // pred_fallthru
          _
      $region76: #{convmixer_forward.1} parent=5 // pred_fallthru
        _
      %p9191 = scmp.le.s32.totalorder 2, %s23
      // Predicated region
      $region81: #{convmixer_forward.1} parent=5 // pred_check
        %p9192 = pneg %p9191
      $region82: #{convmixer_forward.1} parent=5 // pred_check_branch
        %9194 = sbr.rel (%p9192) target = $region84
      $region83: #{convmixer_forward.1} parent=5 // pred_region
        %s9195 = ssub.s32 %s23, 2
        // Predicated region
        $region85: #{convmixer_forward.1} parent=83 // pred_check
          %p9196 = pneg %p351
        $region86: #{convmixer_forward.1} parent=83 // pred_check_branch
          %9198 = sbr.rel (%p9196) target = $region88
        $region87: #{convmixer_forward.1} parent=83 // pred_region
          %s9199 = sand.u32 %s336, 1
          %s9200 = scalar_lea.sflag [#allocation5], %s9199
          %s9201 = sand.u32 %s336, 1
          %s9202 = scalar_lea.vmem [#allocation4], %s9201
          %9203 = dma.done %s9200, 16
        $region88: #{convmixer_forward.1} parent=83 // pred_fallthru
          _
      $region84: #{convmixer_forward.1} parent=5 // pred_fallthru
        _
    $region6: #{convmixer_forward.1} parent=1 // loop_footer
      %s27 = sadd.s32 1, %s23
    $region7: #{convmixer_forward.1} parent=1 // loop_footer_branch
      %22 = sbr.rel target = $region3
    $region8: #{convmixer_forward.1} parent=1 // loop_exit
      _
    %9204 = vsyncpa [#allocation5], 1
    %s9205 = scalar_lea.sflag [#allocation5], 1
    %9206 = vsyncpa %s9205, 1

</llo_original>
